<compile_context>
chip_gen: v7x
topology: tpu7x:2x2x1
jax: 0.10.0
libtpu: 0.0.40
codegen_flags: <defaults>
</compile_context>

<pallas_src>
import numpy as np
import jax
import jax.numpy as jnp
from jax.experimental import pallas as pl
from jax.experimental.pallas import tpu as pltpu

EPS = 1e-5


# ---------------------------------------------------------------------------
# Constant 0/1 gather matrices (built with numpy at trace time; folded as constants)
# ---------------------------------------------------------------------------
def _conv_gather_np(n, hin, win, k=3):
    """[k*k, n*ho*wo, n*hin*win]: tap (kh,kw) selects input row (b, i+kh, j+kw)."""
    ho, wo = hin - k + 1, win - k + 1
    g = np.zeros((k * k, n * ho * wo, n * hin * win), np.float32)
    for kh in range(k):
        for kw in range(k):
            t = kh * k + kw
            for b in range(n):
                for i in range(ho):
                    for j in range(wo):
                        g[t, (b * ho + i) * wo + j,
                          (b * hin + i + kh) * win + j + kw] = 1.0
    return g


def _pool_gather_np(n, hin, win):
    """[4, n*ho*wo, n*hin*win]: quadrant (dh,dw) of each 2x2 max-pool window."""
    ho, wo = hin // 2, win // 2
    p = np.zeros((4, n * ho * wo, n * hin * win), np.float32)
    for dh in range(2):
        for dw in range(2):
            t = dh * 2 + dw
            for b in range(n):
                for i in range(ho):
                    for j in range(wo):
                        p[t, (b * ho + i) * wo + j,
                          (b * hin + 2 * i + dh) * win + 2 * j + dw] = 1.0
    return p


# ---------------------------------------------------------------------------
# The fused kernel
# ---------------------------------------------------------------------------
def _relation_net_kernel(x_ref, g1_ref, w1_ref, b1_ref, gm1_ref, bt1_ref, p1_ref,
                         g2_ref, w2_ref, b2_ref, gm2_ref, bt2_ref, p2_ref,
                         fw1_ref, fb1_ref, fw2_ref, fb2_ref, o_ref):
    f32 = jnp.float32
    bf16 = jnp.bfloat16

    def conv_bn_relu(act_bf16, g_ref, w_ref, b_ref, gm_ref, bt_ref):
        # act_bf16: [rows_in, c_in]; g_ref: [9, rows_out, rows_in]; w_ref: [9, c_in, c_out]
        rows_out = g_ref.shape[1]
        c_out = w_ref.shape[2]
        acc = jnp.zeros((rows_out, c_out), f32)
        for k in range(9):                                  # 3x3 taps, (kh, kw) row-major
            patch = jnp.dot(g_ref[k], act_bf16, preferred_element_type=f32)   # exact gather
            acc = acc + jnp.dot(patch.astype(bf16), w_ref[k],
                                preferred_element_type=f32)
        acc = acc + b_ref[...]                              # conv bias
        inv_m = 1.0 / rows_out
        s = jnp.sum(acc, axis=0, keepdims=True)             # single-pass BN statistics
        ss = jnp.sum(acc * acc, axis=0, keepdims=True)
        mean = s * inv_m
        var = ss * inv_m - mean * mean                      # biased batch variance
        y = (acc - mean) * jax.lax.rsqrt(var + EPS) * gm_ref[...] + bt_ref[...]
        return jnp.maximum(y, 0.0).astype(bf16)             # ReLU; bf16 for next MXU stage

    def maxpool(act_bf16, p_ref):
        # p_ref: [4, rows_out, rows_in] -- one 0/1 selection matrix per window quadrant
        out = None
        for q in range(4):
            sel = jnp.dot(p_ref[q], act_bf16, preferred_element_type=f32)     # exact gather
            out = sel if out is None else jnp.maximum(out, sel)
        return out.astype(bf16)

    # layer1: conv(256->128)+BN+ReLU+pool2   [N*100,256] -> [N*16,128]
    a1 = maxpool(conv_bn_relu(x_ref[...], g1_ref, w1_ref, b1_ref, gm1_ref, bt1_ref),
                 p1_ref)
    # layer2: conv(128->64)+BN+ReLU+pool2    [N*16,128]  -> [N,64]
    feat = maxpool(conv_bn_relu(a1, g2_ref, w2_ref, b2_ref, gm2_ref, bt2_ref),
                   p2_ref)
    # fc head: relu(fc1); fc2 as a VPU reduction (no lane-1 MXU matmul); sigmoid
    h = jnp.dot(feat, fw1_ref[...], preferred_element_type=f32) + fb1_ref[...]
    h = jnp.maximum(h, 0.0)
    logit = jnp.sum(h * fw2_ref[...], axis=-1, keepdims=True) + fb2_ref[...]
    o_ref[...] = jax.nn.sigmoid(logit)


def _full_spec(shape):
    if len(shape) == 2:
        return pl.BlockSpec(shape, lambda i: (0, 0))
    return pl.BlockSpec(shape, lambda i: (0, 0, 0))


def relation_network_forward(x_nchw, params):
    bf16 = jnp.bfloat16
    N, Cin, H, W = x_nchw.shape                               # [N, 256, 10, 10]
    xflat = jnp.transpose(x_nchw, (0, 2, 3, 1)).astype(bf16).reshape(N * H * W, Cin)

    # gather constants for this (static) batch size / spatial layout
    h1, w1s = H - 2, W - 2                                    # 8, 8
    h2, w2s = h1 // 2, w1s // 2                               # 4, 4
    g1 = jnp.asarray(_conv_gather_np(N, H, W), bf16)          # [9, N*64, N*100]
    p1 = jnp.asarray(_pool_gather_np(N, h1, w1s), bf16)       # [4, N*16, N*64]
    g2 = jnp.asarray(_conv_gather_np(N, h2, w2s), bf16)       # [9, N*4,  N*16]
    p2 = jnp.asarray(_pool_gather_np(N, h2 - 2, w2s - 2), bf16)   # [4, N, N*4]

    c1 = params["conv1_w"].shape[-1]
    c2 = params["conv2_w"].shape[-1]
    cw1 = params["conv1_w"].reshape(9, Cin, c1)               # HWIO -> [tap, cin, cout]
    cw2 = params["conv2_w"].reshape(9, c1, c2)

    operands = (
        xflat, g1, cw1, params["conv1_b"], params["bn1_g"], params["bn1_b"], p1,
        g2, cw2, params["conv2_b"], params["bn2_g"], params["bn2_b"], p2,
        params["fc1_w"], params["fc1_b"], params["fc2_w"], params["fc2_b"],
    )
    return pl.pallas_call(
        _relation_net_kernel,
        out_shape=jax.ShapeDtypeStruct((N, 1), jnp.float32),
        grid=(1,),
        in_specs=[_full_spec(op.shape) for op in operands],
        out_specs=pl.BlockSpec((N, 1), lambda i: (0, 0)),
        compiler_params=pltpu.CompilerParams(dimension_semantics=("arbitrary",)),
    )(*operands)


# ---------------------------------------------------------------------------
# Parameters + pure-JAX reference (mirrors the kernel's bf16 matmul precision)
# ---------------------------------------------------------------------------
def init_params(key, hidden_size=8):
    ks = jax.random.split(key, 12)
    c_in, c1, c2 = 64 * 2 * 2, 64 * 2, 64
    bf16 = jnp.bfloat16
    return {
        "conv1_w": (jax.random.normal(ks[0], (3, 3, c_in, c1), jnp.float32) * 0.05).astype(bf16),
        "conv1_b": jax.random.normal(ks[1], (1, c1), jnp.float32) * 0.05,
        "bn1_g": 1.0 + 0.1 * jax.random.normal(ks[2], (1, c1), jnp.float32),
        "bn1_b": 0.1 * jax.random.normal(ks[3], (1, c1), jnp.float32),
        "conv2_w": (jax.random.normal(ks[4], (3, 3, c1, c2), jnp.float32) * 0.05).astype(bf16),
        "conv2_b": jax.random.normal(ks[5], (1, c2), jnp.float32) * 0.05,
        "bn2_g": 1.0 + 0.1 * jax.random.normal(ks[6], (1, c2), jnp.float32),
        "bn2_b": 0.1 * jax.random.normal(ks[7], (1, c2), jnp.float32),
        "fc1_w": (jax.random.normal(ks[8], (c2, hidden_size), jnp.float32) * 0.1).astype(bf16),
        "fc1_b": jax.random.normal(ks[9], (1, hidden_size), jnp.float32) * 0.1,
        "fc2_w": jax.random.normal(ks[10], (1, hidden_size), jnp.float32) * 0.1,  # (hidden,1)^T
        "fc2_b": jax.random.normal(ks[11], (1, 1), jnp.float32) * 0.1,
    }


def reference_forward(x_nchw, params):
    f32, bf16 = jnp.float32, jnp.bfloat16
    x = jnp.transpose(x_nchw, (0, 2, 3, 1)).astype(bf16).astype(f32)

    def block(x, w_hwio, b, g, bt):
        y = jax.lax.conv_general_dilated(
            x, w_hwio.astype(f32), window_strides=(1, 1), padding="VALID",
            dimension_numbers=("NHWC", "HWIO", "NHWC")) + b.reshape(1, 1, 1, -1)
        mean = jnp.mean(y, axis=(0, 1, 2), keepdims=True)
        var = jnp.mean((y - mean) ** 2, axis=(0, 1, 2), keepdims=True)
        y = (y - mean) * jax.lax.rsqrt(var + EPS) * g.reshape(1, 1, 1, -1) + bt.reshape(1, 1, 1, -1)
        y = jnp.maximum(y, 0.0)
        y = jax.lax.reduce_window(y, -jnp.inf, jax.lax.max,
                                  (1, 2, 2, 1), (1, 2, 2, 1), "VALID")
        return y.astype(bf16).astype(f32)   # mirror the kernel's bf16 stage boundary

    y = block(x, params["conv1_w"], params["conv1_b"], params["bn1_g"], params["bn1_b"])
    y = block(y, params["conv2_w"], params["conv2_b"], params["bn2_g"], params["bn2_b"])
    feat = y.reshape(y.shape[0], -1)
    h = jnp.maximum(feat @ params["fc1_w"].astype(f32) + params["fc1_b"], 0.0)
    logit = jnp.sum(h * params["fc2_w"], axis=-1, keepdims=True) + params["fc2_b"]
    return jax.nn.sigmoid(logit)


if __name__ == "__main__":
    key = jax.random.PRNGKey(0)
    k_x, k_p = jax.random.split(key)
    # NCHW input as in the PyTorch module: 64*2*2 = 256 channels, 10x10 spatial
    # (conv(3,pad0)+pool(2) twice -> 1x1x64, matching nn.Linear(64, hidden)).
    x = jax.random.normal(k_x, (2, 64 * 2 * 2, 10, 10), jnp.float32)
    params = init_params(k_p, hidden_size=8)

    out = jax.jit(relation_network_forward)(x, params)
    out = jax.block_until_ready(out)
    assert out.shape == (2, 1) and out.dtype == jnp.float32

    ref = reference_forward(x, params)
    np.testing.assert_allclose(np.asarray(out), np.asarray(ref), rtol=1e-2, atol=1e-2)
    print("KERNEL_OK")
</pallas_src>

<mosaic_0001>
module attributes {stable_mosaic.version = 11 : i64} {
  func.func @_relation_net_kernel(%arg0: i32, %arg1: memref<200x256xbf16, #tpu.memory_space<vmem>>, %arg2: memref<9x128x200xbf16, #tpu.memory_space<vmem>>, %arg3: memref<9x256x128xbf16, #tpu.memory_space<vmem>>, %arg4: memref<1x128xf32, #tpu.memory_space<vmem>>, %arg5: memref<1x128xf32, #tpu.memory_space<vmem>>, %arg6: memref<1x128xf32, #tpu.memory_space<vmem>>, %arg7: memref<4x32x128xbf16, #tpu.memory_space<vmem>>, %arg8: memref<9x8x32xbf16, #tpu.memory_space<vmem>>, %arg9: memref<9x128x64xbf16, #tpu.memory_space<vmem>>, %arg10: memref<1x64xf32, #tpu.memory_space<vmem>>, %arg11: memref<1x64xf32, #tpu.memory_space<vmem>>, %arg12: memref<1x64xf32, #tpu.memory_space<vmem>>, %arg13: memref<4x2x8xbf16, #tpu.memory_space<vmem>>, %arg14: memref<64x8xbf16, #tpu.memory_space<vmem>>, %arg15: memref<1x8xf32, #tpu.memory_space<vmem>>, %arg16: memref<1x8xf32, #tpu.memory_space<vmem>>, %arg17: memref<1x1xf32, #tpu.memory_space<vmem>>, %arg18: memref<2x1xf32, #tpu.memory_space<vmem>>) attributes {dimension_semantics = [#tpu.dimension_semantics<arbitrary>], iteration_bounds = array<i64: 1>, scalar_prefetch = 0 : i64, scratch_operands = 0 : i64, tpu.core_type = #tpu.core_type<tc>, window_params = [{pipeline_mode = #tpu.pipeline_mode<synchronous>, transform_indices = @transform_0, window_bounds = array<i64: 200, 256>}, {pipeline_mode = #tpu.pipeline_mode<synchronous>, transform_indices = @transform_1, window_bounds = array<i64: 9, 128, 200>}, {pipeline_mode = #tpu.pipeline_mode<synchronous>, transform_indices = @transform_2, window_bounds = array<i64: 9, 256, 128>}, {pipeline_mode = #tpu.pipeline_mode<synchronous>, transform_indices = @transform_3, window_bounds = array<i64: 1, 128>}, {pipeline_mode = #tpu.pipeline_mode<synchronous>, transform_indices = @transform_4, window_bounds = array<i64: 1, 128>}, {pipeline_mode = #tpu.pipeline_mode<synchronous>, transform_indices = @transform_5, window_bounds = array<i64: 1, 128>}, {pipeline_mode = #tpu.pipeline_mode<synchronous>, transform_indices = @transform_6, window_bounds = array<i64: 4, 32, 128>}, {pipeline_mode = #tpu.pipeline_mode<synchronous>, transform_indices = @transform_7, window_bounds = array<i64: 9, 8, 32>}, {pipeline_mode = #tpu.pipeline_mode<synchronous>, transform_indices = @transform_8, window_bounds = array<i64: 9, 128, 64>}, {pipeline_mode = #tpu.pipeline_mode<synchronous>, transform_indices = @transform_9, window_bounds = array<i64: 1, 64>}, {pipeline_mode = #tpu.pipeline_mode<synchronous>, transform_indices = @transform_10, window_bounds = array<i64: 1, 64>}, {pipeline_mode = #tpu.pipeline_mode<synchronous>, transform_indices = @transform_11, window_bounds = array<i64: 1, 64>}, {pipeline_mode = #tpu.pipeline_mode<synchronous>, transform_indices = @transform_12, window_bounds = array<i64: 4, 2, 8>}, {pipeline_mode = #tpu.pipeline_mode<synchronous>, transform_indices = @transform_13, window_bounds = array<i64: 64, 8>}, {pipeline_mode = #tpu.pipeline_mode<synchronous>, transform_indices = @transform_14, window_bounds = array<i64: 1, 8>}, {pipeline_mode = #tpu.pipeline_mode<synchronous>, transform_indices = @transform_15, window_bounds = array<i64: 1, 8>}, {pipeline_mode = #tpu.pipeline_mode<synchronous>, transform_indices = @transform_16, window_bounds = array<i64: 1, 1>}, {pipeline_mode = #tpu.pipeline_mode<synchronous>, transform_indices = @transform_17, window_bounds = array<i64: 2, 1>}]} {
    %c0 = arith.constant 0 : index
    %c0_0 = arith.constant 0 : index
    %0 = vector.load %arg1[%c0, %c0_0] : memref<200x256xbf16, #tpu.memory_space<vmem>>, vector<200x256xbf16>
    %cst = arith.constant 0.000000e+00 : f32
    %1 = vector.broadcast %cst : f32 to vector<128x128xf32>
    %c0_1 = arith.constant 0 : index
    %c0_2 = arith.constant 0 : index
    %c0_3 = arith.constant 0 : index
    %2 = vector.load %arg2[%c0_1, %c0_2, %c0_3] : memref<9x128x200xbf16, #tpu.memory_space<vmem>>, vector<1x128x200xbf16>
    %3 = vector.shape_cast %2 : vector<1x128x200xbf16> to vector<128x200xbf16>
    %cst_4 = arith.constant dense<0.000000e+00> : vector<128x256xf32>
    %4 = tpu.matmul %3, %0, %cst_4 {dimension_numbers = #tpu.dot_dimension_numbers<[1], [0], [0], [1], [0, 0, 1, 1], [], []>} : vector<128x200xbf16>, vector<200x256xbf16>, vector<128x256xf32> -> vector<128x256xf32>
    %5 = arith.truncf %4 : vector<128x256xf32> to vector<128x256xbf16>
    %c0_5 = arith.constant 0 : index
    %c0_6 = arith.constant 0 : index
    %c0_7 = arith.constant 0 : index
    %6 = vector.load %arg3[%c0_5, %c0_6, %c0_7] : memref<9x256x128xbf16, #tpu.memory_space<vmem>>, vector<1x256x128xbf16>
    %7 = vector.shape_cast %6 : vector<1x256x128xbf16> to vector<256x128xbf16>
    %cst_8 = arith.constant dense<0.000000e+00> : vector<128x128xf32>
    %8 = tpu.matmul %5, %7, %cst_8 {dimension_numbers = #tpu.dot_dimension_numbers<[1], [0], [0], [1], [0, 0, 1, 1], [], []>} : vector<128x256xbf16>, vector<256x128xbf16>, vector<128x128xf32> -> vector<128x128xf32>
    %9 = arith.addf %1, %8 : vector<128x128xf32>
    %c1 = arith.constant 1 : index
    %c0_9 = arith.constant 0 : index
    %c0_10 = arith.constant 0 : index
    %10 = vector.load %arg2[%c1, %c0_9, %c0_10] : memref<9x128x200xbf16, #tpu.memory_space<vmem>>, vector<1x128x200xbf16>
    %11 = vector.shape_cast %10 : vector<1x128x200xbf16> to vector<128x200xbf16>
    %cst_11 = arith.constant dense<0.000000e+00> : vector<128x256xf32>
    %12 = tpu.matmul %11, %0, %cst_11 {dimension_numbers = #tpu.dot_dimension_numbers<[1], [0], [0], [1], [0, 0, 1, 1], [], []>} : vector<128x200xbf16>, vector<200x256xbf16>, vector<128x256xf32> -> vector<128x256xf32>
    %13 = arith.truncf %12 : vector<128x256xf32> to vector<128x256xbf16>
    %c1_12 = arith.constant 1 : index
    %c0_13 = arith.constant 0 : index
    %c0_14 = arith.constant 0 : index
    %14 = vector.load %arg3[%c1_12, %c0_13, %c0_14] : memref<9x256x128xbf16, #tpu.memory_space<vmem>>, vector<1x256x128xbf16>
    %15 = vector.shape_cast %14 : vector<1x256x128xbf16> to vector<256x128xbf16>
    %cst_15 = arith.constant dense<0.000000e+00> : vector<128x128xf32>
    %16 = tpu.matmul %13, %15, %cst_15 {dimension_numbers = #tpu.dot_dimension_numbers<[1], [0], [0], [1], [0, 0, 1, 1], [], []>} : vector<128x256xbf16>, vector<256x128xbf16>, vector<128x128xf32> -> vector<128x128xf32>
    %17 = arith.addf %9, %16 : vector<128x128xf32>
    %c2 = arith.constant 2 : index
    %c0_16 = arith.constant 0 : index
    %c0_17 = arith.constant 0 : index
    %18 = vector.load %arg2[%c2, %c0_16, %c0_17] : memref<9x128x200xbf16, #tpu.memory_space<vmem>>, vector<1x128x200xbf16>
    %19 = vector.shape_cast %18 : vector<1x128x200xbf16> to vector<128x200xbf16>
    %cst_18 = arith.constant dense<0.000000e+00> : vector<128x256xf32>
    %20 = tpu.matmul %19, %0, %cst_18 {dimension_numbers = #tpu.dot_dimension_numbers<[1], [0], [0], [1], [0, 0, 1, 1], [], []>} : vector<128x200xbf16>, vector<200x256xbf16>, vector<128x256xf32> -> vector<128x256xf32>
    %21 = arith.truncf %20 : vector<128x256xf32> to vector<128x256xbf16>
    %c2_19 = arith.constant 2 : index
    %c0_20 = arith.constant 0 : index
    %c0_21 = arith.constant 0 : index
    %22 = vector.load %arg3[%c2_19, %c0_20, %c0_21] : memref<9x256x128xbf16, #tpu.memory_space<vmem>>, vector<1x256x128xbf16>
    %23 = vector.shape_cast %22 : vector<1x256x128xbf16> to vector<256x128xbf16>
    %cst_22 = arith.constant dense<0.000000e+00> : vector<128x128xf32>
    %24 = tpu.matmul %21, %23, %cst_22 {dimension_numbers = #tpu.dot_dimension_numbers<[1], [0], [0], [1], [0, 0, 1, 1], [], []>} : vector<128x256xbf16>, vector<256x128xbf16>, vector<128x128xf32> -> vector<128x128xf32>
    %25 = arith.addf %17, %24 : vector<128x128xf32>
    %c3 = arith.constant 3 : index
    %c0_23 = arith.constant 0 : index
    %c0_24 = arith.constant 0 : index
    %26 = vector.load %arg2[%c3, %c0_23, %c0_24] : memref<9x128x200xbf16, #tpu.memory_space<vmem>>, vector<1x128x200xbf16>
    %27 = vector.shape_cast %26 : vector<1x128x200xbf16> to vector<128x200xbf16>
    %cst_25 = arith.constant dense<0.000000e+00> : vector<128x256xf32>
    %28 = tpu.matmul %27, %0, %cst_25 {dimension_numbers = #tpu.dot_dimension_numbers<[1], [0], [0], [1], [0, 0, 1, 1], [], []>} : vector<128x200xbf16>, vector<200x256xbf16>, vector<128x256xf32> -> vector<128x256xf32>
    %29 = arith.truncf %28 : vector<128x256xf32> to vector<128x256xbf16>
    %c3_26 = arith.constant 3 : index
    %c0_27 = arith.constant 0 : index
    %c0_28 = arith.constant 0 : index
    %30 = vector.load %arg3[%c3_26, %c0_27, %c0_28] : memref<9x256x128xbf16, #tpu.memory_space<vmem>>, vector<1x256x128xbf16>
    %31 = vector.shape_cast %30 : vector<1x256x128xbf16> to vector<256x128xbf16>
    %cst_29 = arith.constant dense<0.000000e+00> : vector<128x128xf32>
    %32 = tpu.matmul %29, %31, %cst_29 {dimension_numbers = #tpu.dot_dimension_numbers<[1], [0], [0], [1], [0, 0, 1, 1], [], []>} : vector<128x256xbf16>, vector<256x128xbf16>, vector<128x128xf32> -> vector<128x128xf32>
    %33 = arith.addf %25, %32 : vector<128x128xf32>
    %c4 = arith.constant 4 : index
    %c0_30 = arith.constant 0 : index
    %c0_31 = arith.constant 0 : index
    %34 = vector.load %arg2[%c4, %c0_30, %c0_31] : memref<9x128x200xbf16, #tpu.memory_space<vmem>>, vector<1x128x200xbf16>
    %35 = vector.shape_cast %34 : vector<1x128x200xbf16> to vector<128x200xbf16>
    %cst_32 = arith.constant dense<0.000000e+00> : vector<128x256xf32>
    %36 = tpu.matmul %35, %0, %cst_32 {dimension_numbers = #tpu.dot_dimension_numbers<[1], [0], [0], [1], [0, 0, 1, 1], [], []>} : vector<128x200xbf16>, vector<200x256xbf16>, vector<128x256xf32> -> vector<128x256xf32>
    %37 = arith.truncf %36 : vector<128x256xf32> to vector<128x256xbf16>
    %c4_33 = arith.constant 4 : index
    %c0_34 = arith.constant 0 : index
    %c0_35 = arith.constant 0 : index
    %38 = vector.load %arg3[%c4_33, %c0_34, %c0_35] : memref<9x256x128xbf16, #tpu.memory_space<vmem>>, vector<1x256x128xbf16>
    %39 = vector.shape_cast %38 : vector<1x256x128xbf16> to vector<256x128xbf16>
    %cst_36 = arith.constant dense<0.000000e+00> : vector<128x128xf32>
    %40 = tpu.matmul %37, %39, %cst_36 {dimension_numbers = #tpu.dot_dimension_numbers<[1], [0], [0], [1], [0, 0, 1, 1], [], []>} : vector<128x256xbf16>, vector<256x128xbf16>, vector<128x128xf32> -> vector<128x128xf32>
    %41 = arith.addf %33, %40 : vector<128x128xf32>
    %c5 = arith.constant 5 : index
    %c0_37 = arith.constant 0 : index
    %c0_38 = arith.constant 0 : index
    %42 = vector.load %arg2[%c5, %c0_37, %c0_38] : memref<9x128x200xbf16, #tpu.memory_space<vmem>>, vector<1x128x200xbf16>
    %43 = vector.shape_cast %42 : vector<1x128x200xbf16> to vector<128x200xbf16>
    %cst_39 = arith.constant dense<0.000000e+00> : vector<128x256xf32>
    %44 = tpu.matmul %43, %0, %cst_39 {dimension_numbers = #tpu.dot_dimension_numbers<[1], [0], [0], [1], [0, 0, 1, 1], [], []>} : vector<128x200xbf16>, vector<200x256xbf16>, vector<128x256xf32> -> vector<128x256xf32>
    %45 = arith.truncf %44 : vector<128x256xf32> to vector<128x256xbf16>
    %c5_40 = arith.constant 5 : index
    %c0_41 = arith.constant 0 : index
    %c0_42 = arith.constant 0 : index
    %46 = vector.load %arg3[%c5_40, %c0_41, %c0_42] : memref<9x256x128xbf16, #tpu.memory_space<vmem>>, vector<1x256x128xbf16>
    %47 = vector.shape_cast %46 : vector<1x256x128xbf16> to vector<256x128xbf16>
    %cst_43 = arith.constant dense<0.000000e+00> : vector<128x128xf32>
    %48 = tpu.matmul %45, %47, %cst_43 {dimension_numbers = #tpu.dot_dimension_numbers<[1], [0], [0], [1], [0, 0, 1, 1], [], []>} : vector<128x256xbf16>, vector<256x128xbf16>, vector<128x128xf32> -> vector<128x128xf32>
    %49 = arith.addf %41, %48 : vector<128x128xf32>
    %c6 = arith.constant 6 : index
    %c0_44 = arith.constant 0 : index
    %c0_45 = arith.constant 0 : index
    %50 = vector.load %arg2[%c6, %c0_44, %c0_45] : memref<9x128x200xbf16, #tpu.memory_space<vmem>>, vector<1x128x200xbf16>
    %51 = vector.shape_cast %50 : vector<1x128x200xbf16> to vector<128x200xbf16>
    %cst_46 = arith.constant dense<0.000000e+00> : vector<128x256xf32>
    %52 = tpu.matmul %51, %0, %cst_46 {dimension_numbers = #tpu.dot_dimension_numbers<[1], [0], [0], [1], [0, 0, 1, 1], [], []>} : vector<128x200xbf16>, vector<200x256xbf16>, vector<128x256xf32> -> vector<128x256xf32>
    %53 = arith.truncf %52 : vector<128x256xf32> to vector<128x256xbf16>
    %c6_47 = arith.constant 6 : index
    %c0_48 = arith.constant 0 : index
    %c0_49 = arith.constant 0 : index
    %54 = vector.load %arg3[%c6_47, %c0_48, %c0_49] : memref<9x256x128xbf16, #tpu.memory_space<vmem>>, vector<1x256x128xbf16>
    %55 = vector.shape_cast %54 : vector<1x256x128xbf16> to vector<256x128xbf16>
    %cst_50 = arith.constant dense<0.000000e+00> : vector<128x128xf32>
    %56 = tpu.matmul %53, %55, %cst_50 {dimension_numbers = #tpu.dot_dimension_numbers<[1], [0], [0], [1], [0, 0, 1, 1], [], []>} : vector<128x256xbf16>, vector<256x128xbf16>, vector<128x128xf32> -> vector<128x128xf32>
    %57 = arith.addf %49, %56 : vector<128x128xf32>
    %c7 = arith.constant 7 : index
    %c0_51 = arith.constant 0 : index
    %c0_52 = arith.constant 0 : index
    %58 = vector.load %arg2[%c7, %c0_51, %c0_52] : memref<9x128x200xbf16, #tpu.memory_space<vmem>>, vector<1x128x200xbf16>
    %59 = vector.shape_cast %58 : vector<1x128x200xbf16> to vector<128x200xbf16>
    %cst_53 = arith.constant dense<0.000000e+00> : vector<128x256xf32>
    %60 = tpu.matmul %59, %0, %cst_53 {dimension_numbers = #tpu.dot_dimension_numbers<[1], [0], [0], [1], [0, 0, 1, 1], [], []>} : vector<128x200xbf16>, vector<200x256xbf16>, vector<128x256xf32> -> vector<128x256xf32>
    %61 = arith.truncf %60 : vector<128x256xf32> to vector<128x256xbf16>
    %c7_54 = arith.constant 7 : index
    %c0_55 = arith.constant 0 : index
    %c0_56 = arith.constant 0 : index
    %62 = vector.load %arg3[%c7_54, %c0_55, %c0_56] : memref<9x256x128xbf16, #tpu.memory_space<vmem>>, vector<1x256x128xbf16>
    %63 = vector.shape_cast %62 : vector<1x256x128xbf16> to vector<256x128xbf16>
    %cst_57 = arith.constant dense<0.000000e+00> : vector<128x128xf32>
    %64 = tpu.matmul %61, %63, %cst_57 {dimension_numbers = #tpu.dot_dimension_numbers<[1], [0], [0], [1], [0, 0, 1, 1], [], []>} : vector<128x256xbf16>, vector<256x128xbf16>, vector<128x128xf32> -> vector<128x128xf32>
    %65 = arith.addf %57, %64 : vector<128x128xf32>
    %c8 = arith.constant 8 : index
    %c0_58 = arith.constant 0 : index
    %c0_59 = arith.constant 0 : index
    %66 = vector.load %arg2[%c8, %c0_58, %c0_59] : memref<9x128x200xbf16, #tpu.memory_space<vmem>>, vector<1x128x200xbf16>
    %67 = vector.shape_cast %66 : vector<1x128x200xbf16> to vector<128x200xbf16>
    %cst_60 = arith.constant dense<0.000000e+00> : vector<128x256xf32>
    %68 = tpu.matmul %67, %0, %cst_60 {dimension_numbers = #tpu.dot_dimension_numbers<[1], [0], [0], [1], [0, 0, 1, 1], [], []>} : vector<128x200xbf16>, vector<200x256xbf16>, vector<128x256xf32> -> vector<128x256xf32>
    %69 = arith.truncf %68 : vector<128x256xf32> to vector<128x256xbf16>
    %c8_61 = arith.constant 8 : index
    %c0_62 = arith.constant 0 : index
    %c0_63 = arith.constant 0 : index
    %70 = vector.load %arg3[%c8_61, %c0_62, %c0_63] : memref<9x256x128xbf16, #tpu.memory_space<vmem>>, vector<1x256x128xbf16>
    %71 = vector.shape_cast %70 : vector<1x256x128xbf16> to vector<256x128xbf16>
    %cst_64 = arith.constant dense<0.000000e+00> : vector<128x128xf32>
    %72 = tpu.matmul %69, %71, %cst_64 {dimension_numbers = #tpu.dot_dimension_numbers<[1], [0], [0], [1], [0, 0, 1, 1], [], []>} : vector<128x256xbf16>, vector<256x128xbf16>, vector<128x128xf32> -> vector<128x128xf32>
    %73 = arith.addf %65, %72 : vector<128x128xf32>
    %c0_65 = arith.constant 0 : index
    %c0_66 = arith.constant 0 : index
    %74 = vector.load %arg4[%c0_65, %c0_66] : memref<1x128xf32, #tpu.memory_space<vmem>>, vector<1x128xf32>
    %75 = vector.broadcast %74 : vector<1x128xf32> to vector<128x128xf32>
    %76 = arith.addf %73, %75 : vector<128x128xf32>
    %cst_67 = arith.constant dense<0.000000e+00> : vector<128xf32>
    %77 = vector.multi_reduction <add>, %76, %cst_67 [0] : vector<128x128xf32> to vector<128xf32>
    %78 = vector.shape_cast %77 : vector<128xf32> to vector<1x128xf32>
    %79 = arith.mulf %76, %76 : vector<128x128xf32>
    %cst_68 = arith.constant dense<0.000000e+00> : vector<128xf32>
    %80 = vector.multi_reduction <add>, %79, %cst_68 [0] : vector<128x128xf32> to vector<128xf32>
    %81 = vector.shape_cast %80 : vector<128xf32> to vector<1x128xf32>
    %cst_69 = arith.constant 7.812500e-03 : f32
    %82 = vector.broadcast %cst_69 : f32 to vector<1x128xf32>
    %83 = arith.mulf %78, %82 : vector<1x128xf32>
    %cst_70 = arith.constant 7.812500e-03 : f32
    %84 = vector.broadcast %cst_70 : f32 to vector<1x128xf32>
    %85 = arith.mulf %81, %84 : vector<1x128xf32>
    %86 = arith.mulf %83, %83 : vector<1x128xf32>
    %87 = arith.subf %85, %86 : vector<1x128xf32>
    %88 = vector.broadcast %83 : vector<1x128xf32> to vector<128x128xf32>
    %89 = arith.subf %76, %88 : vector<128x128xf32>
    %cst_71 = arith.constant 9.99999974E-6 : f32
    %90 = vector.broadcast %cst_71 : f32 to vector<1x128xf32>
    %91 = arith.addf %87, %90 : vector<1x128xf32>
    %92 = math.rsqrt %91 : vector<1x128xf32>
    %93 = vector.broadcast %92 : vector<1x128xf32> to vector<128x128xf32>
    %94 = arith.mulf %89, %93 : vector<128x128xf32>
    %c0_72 = arith.constant 0 : index
    %c0_73 = arith.constant 0 : index
    %95 = vector.load %arg5[%c0_72, %c0_73] : memref<1x128xf32, #tpu.memory_space<vmem>>, vector<1x128xf32>
    %96 = vector.broadcast %95 : vector<1x128xf32> to vector<128x128xf32>
    %97 = arith.mulf %94, %96 : vector<128x128xf32>
    %c0_74 = arith.constant 0 : index
    %c0_75 = arith.constant 0 : index
    %98 = vector.load %arg6[%c0_74, %c0_75] : memref<1x128xf32, #tpu.memory_space<vmem>>, vector<1x128xf32>
    %99 = vector.broadcast %98 : vector<1x128xf32> to vector<128x128xf32>
    %100 = arith.addf %97, %99 : vector<128x128xf32>
    %cst_76 = arith.constant 0.000000e+00 : f32
    %101 = vector.broadcast %cst_76 : f32 to vector<128x128xf32>
    %102 = arith.maximumf %100, %101 : vector<128x128xf32>
    %103 = arith.truncf %102 : vector<128x128xf32> to vector<128x128xbf16>
    %c0_77 = arith.constant 0 : index
    %c0_78 = arith.constant 0 : index
    %c0_79 = arith.constant 0 : index
    %104 = vector.load %arg7[%c0_77, %c0_78, %c0_79] : memref<4x32x128xbf16, #tpu.memory_space<vmem>>, vector<1x32x128xbf16>
    %105 = vector.shape_cast %104 : vector<1x32x128xbf16> to vector<32x128xbf16>
    %cst_80 = arith.constant dense<0.000000e+00> : vector<32x128xf32>
    %106 = tpu.matmul %105, %103, %cst_80 {dimension_numbers = #tpu.dot_dimension_numbers<[1], [0], [0], [1], [0, 0, 1, 1], [], []>} : vector<32x128xbf16>, vector<128x128xbf16>, vector<32x128xf32> -> vector<32x128xf32>
    %c1_81 = arith.constant 1 : index
    %c0_82 = arith.constant 0 : index
    %c0_83 = arith.constant 0 : index
    %107 = vector.load %arg7[%c1_81, %c0_82, %c0_83] : memref<4x32x128xbf16, #tpu.memory_space<vmem>>, vector<1x32x128xbf16>
    %108 = vector.shape_cast %107 : vector<1x32x128xbf16> to vector<32x128xbf16>
    %cst_84 = arith.constant dense<0.000000e+00> : vector<32x128xf32>
    %109 = tpu.matmul %108, %103, %cst_84 {dimension_numbers = #tpu.dot_dimension_numbers<[1], [0], [0], [1], [0, 0, 1, 1], [], []>} : vector<32x128xbf16>, vector<128x128xbf16>, vector<32x128xf32> -> vector<32x128xf32>
    %110 = arith.maximumf %106, %109 : vector<32x128xf32>
    %c2_85 = arith.constant 2 : index
    %c0_86 = arith.constant 0 : index
    %c0_87 = arith.constant 0 : index
    %111 = vector.load %arg7[%c2_85, %c0_86, %c0_87] : memref<4x32x128xbf16, #tpu.memory_space<vmem>>, vector<1x32x128xbf16>
    %112 = vector.shape_cast %111 : vector<1x32x128xbf16> to vector<32x128xbf16>
    %cst_88 = arith.constant dense<0.000000e+00> : vector<32x128xf32>
    %113 = tpu.matmul %112, %103, %cst_88 {dimension_numbers = #tpu.dot_dimension_numbers<[1], [0], [0], [1], [0, 0, 1, 1], [], []>} : vector<32x128xbf16>, vector<128x128xbf16>, vector<32x128xf32> -> vector<32x128xf32>
    %114 = arith.maximumf %110, %113 : vector<32x128xf32>
    %c3_89 = arith.constant 3 : index
    %c0_90 = arith.constant 0 : index
    %c0_91 = arith.constant 0 : index
    %115 = vector.load %arg7[%c3_89, %c0_90, %c0_91] : memref<4x32x128xbf16, #tpu.memory_space<vmem>>, vector<1x32x128xbf16>
    %116 = vector.shape_cast %115 : vector<1x32x128xbf16> to vector<32x128xbf16>
    %cst_92 = arith.constant dense<0.000000e+00> : vector<32x128xf32>
    %117 = tpu.matmul %116, %103, %cst_92 {dimension_numbers = #tpu.dot_dimension_numbers<[1], [0], [0], [1], [0, 0, 1, 1], [], []>} : vector<32x128xbf16>, vector<128x128xbf16>, vector<32x128xf32> -> vector<32x128xf32>
    %118 = arith.maximumf %114, %117 : vector<32x128xf32>
    %119 = arith.truncf %118 : vector<32x128xf32> to vector<32x128xbf16>
    %cst_93 = arith.constant 0.000000e+00 : f32
    %120 = vector.broadcast %cst_93 : f32 to vector<8x64xf32>
    %c0_94 = arith.constant 0 : index
    %c0_95 = arith.constant 0 : index
    %c0_96 = arith.constant 0 : index
    %121 = vector.load %arg8[%c0_94, %c0_95, %c0_96] : memref<9x8x32xbf16, #tpu.memory_space<vmem>>, vector<1x8x32xbf16>
    %122 = vector.shape_cast %121 : vector<1x8x32xbf16> to vector<8x32xbf16>
    %cst_97 = arith.constant dense<0.000000e+00> : vector<8x128xf32>
    %123 = tpu.matmul %122, %119, %cst_97 {dimension_numbers = #tpu.dot_dimension_numbers<[1], [0], [0], [1], [0, 0, 1, 1], [], []>} : vector<8x32xbf16>, vector<32x128xbf16>, vector<8x128xf32> -> vector<8x128xf32>
    %124 = arith.truncf %123 : vector<8x128xf32> to vector<8x128xbf16>
    %c0_98 = arith.constant 0 : index
    %c0_99 = arith.constant 0 : index
    %c0_100 = arith.constant 0 : index
    %125 = vector.load %arg9[%c0_98, %c0_99, %c0_100] : memref<9x128x64xbf16, #tpu.memory_space<vmem>>, vector<1x128x64xbf16>
    %126 = vector.shape_cast %125 : vector<1x128x64xbf16> to vector<128x64xbf16>
    %cst_101 = arith.constant dense<0.000000e+00> : vector<8x64xf32>
    %127 = tpu.matmul %124, %126, %cst_101 {dimension_numbers = #tpu.dot_dimension_numbers<[1], [0], [0], [1], [0, 0, 1, 1], [], []>} : vector<8x128xbf16>, vector<128x64xbf16>, vector<8x64xf32> -> vector<8x64xf32>
    %128 = arith.addf %120, %127 : vector<8x64xf32>
    %c1_102 = arith.constant 1 : index
    %c0_103 = arith.constant 0 : index
    %c0_104 = arith.constant 0 : index
    %129 = vector.load %arg8[%c1_102, %c0_103, %c0_104] : memref<9x8x32xbf16, #tpu.memory_space<vmem>>, vector<1x8x32xbf16>
    %130 = vector.shape_cast %129 : vector<1x8x32xbf16> to vector<8x32xbf16>
    %cst_105 = arith.constant dense<0.000000e+00> : vector<8x128xf32>
    %131 = tpu.matmul %130, %119, %cst_105 {dimension_numbers = #tpu.dot_dimension_numbers<[1], [0], [0], [1], [0, 0, 1, 1], [], []>} : vector<8x32xbf16>, vector<32x128xbf16>, vector<8x128xf32> -> vector<8x128xf32>
    %132 = arith.truncf %131 : vector<8x128xf32> to vector<8x128xbf16>
    %c1_106 = arith.constant 1 : index
    %c0_107 = arith.constant 0 : index
    %c0_108 = arith.constant 0 : index
    %133 = vector.load %arg9[%c1_106, %c0_107, %c0_108] : memref<9x128x64xbf16, #tpu.memory_space<vmem>>, vector<1x128x64xbf16>
    %134 = vector.shape_cast %133 : vector<1x128x64xbf16> to vector<128x64xbf16>
    %cst_109 = arith.constant dense<0.000000e+00> : vector<8x64xf32>
    %135 = tpu.matmul %132, %134, %cst_109 {dimension_numbers = #tpu.dot_dimension_numbers<[1], [0], [0], [1], [0, 0, 1, 1], [], []>} : vector<8x128xbf16>, vector<128x64xbf16>, vector<8x64xf32> -> vector<8x64xf32>
    %136 = arith.addf %128, %135 : vector<8x64xf32>
    %c2_110 = arith.constant 2 : index
    %c0_111 = arith.constant 0 : index
    %c0_112 = arith.constant 0 : index
    %137 = vector.load %arg8[%c2_110, %c0_111, %c0_112] : memref<9x8x32xbf16, #tpu.memory_space<vmem>>, vector<1x8x32xbf16>
    %138 = vector.shape_cast %137 : vector<1x8x32xbf16> to vector<8x32xbf16>
    %cst_113 = arith.constant dense<0.000000e+00> : vector<8x128xf32>
    %139 = tpu.matmul %138, %119, %cst_113 {dimension_numbers = #tpu.dot_dimension_numbers<[1], [0], [0], [1], [0, 0, 1, 1], [], []>} : vector<8x32xbf16>, vector<32x128xbf16>, vector<8x128xf32> -> vector<8x128xf32>
    %140 = arith.truncf %139 : vector<8x128xf32> to vector<8x128xbf16>
    %c2_114 = arith.constant 2 : index
    %c0_115 = arith.constant 0 : index
    %c0_116 = arith.constant 0 : index
    %141 = vector.load %arg9[%c2_114, %c0_115, %c0_116] : memref<9x128x64xbf16, #tpu.memory_space<vmem>>, vector<1x128x64xbf16>
    %142 = vector.shape_cast %141 : vector<1x128x64xbf16> to vector<128x64xbf16>
    %cst_117 = arith.constant dense<0.000000e+00> : vector<8x64xf32>
    %143 = tpu.matmul %140, %142, %cst_117 {dimension_numbers = #tpu.dot_dimension_numbers<[1], [0], [0], [1], [0, 0, 1, 1], [], []>} : vector<8x128xbf16>, vector<128x64xbf16>, vector<8x64xf32> -> vector<8x64xf32>
    %144 = arith.addf %136, %143 : vector<8x64xf32>
    %c3_118 = arith.constant 3 : index
    %c0_119 = arith.constant 0 : index
    %c0_120 = arith.constant 0 : index
    %145 = vector.load %arg8[%c3_118, %c0_119, %c0_120] : memref<9x8x32xbf16, #tpu.memory_space<vmem>>, vector<1x8x32xbf16>
    %146 = vector.shape_cast %145 : vector<1x8x32xbf16> to vector<8x32xbf16>
    %cst_121 = arith.constant dense<0.000000e+00> : vector<8x128xf32>
    %147 = tpu.matmul %146, %119, %cst_121 {dimension_numbers = #tpu.dot_dimension_numbers<[1], [0], [0], [1], [0, 0, 1, 1], [], []>} : vector<8x32xbf16>, vector<32x128xbf16>, vector<8x128xf32> -> vector<8x128xf32>
    %148 = arith.truncf %147 : vector<8x128xf32> to vector<8x128xbf16>
    %c3_122 = arith.constant 3 : index
    %c0_123 = arith.constant 0 : index
    %c0_124 = arith.constant 0 : index
    %149 = vector.load %arg9[%c3_122, %c0_123, %c0_124] : memref<9x128x64xbf16, #tpu.memory_space<vmem>>, vector<1x128x64xbf16>
    %150 = vector.shape_cast %149 : vector<1x128x64xbf16> to vector<128x64xbf16>
    %cst_125 = arith.constant dense<0.000000e+00> : vector<8x64xf32>
    %151 = tpu.matmul %148, %150, %cst_125 {dimension_numbers = #tpu.dot_dimension_numbers<[1], [0], [0], [1], [0, 0, 1, 1], [], []>} : vector<8x128xbf16>, vector<128x64xbf16>, vector<8x64xf32> -> vector<8x64xf32>
    %152 = arith.addf %144, %151 : vector<8x64xf32>
    %c4_126 = arith.constant 4 : index
    %c0_127 = arith.constant 0 : index
    %c0_128 = arith.constant 0 : index
    %153 = vector.load %arg8[%c4_126, %c0_127, %c0_128] : memref<9x8x32xbf16, #tpu.memory_space<vmem>>, vector<1x8x32xbf16>
    %154 = vector.shape_cast %153 : vector<1x8x32xbf16> to vector<8x32xbf16>
    %cst_129 = arith.constant dense<0.000000e+00> : vector<8x128xf32>
    %155 = tpu.matmul %154, %119, %cst_129 {dimension_numbers = #tpu.dot_dimension_numbers<[1], [0], [0], [1], [0, 0, 1, 1], [], []>} : vector<8x32xbf16>, vector<32x128xbf16>, vector<8x128xf32> -> vector<8x128xf32>
    %156 = arith.truncf %155 : vector<8x128xf32> to vector<8x128xbf16>
    %c4_130 = arith.constant 4 : index
    %c0_131 = arith.constant 0 : index
    %c0_132 = arith.constant 0 : index
    %157 = vector.load %arg9[%c4_130, %c0_131, %c0_132] : memref<9x128x64xbf16, #tpu.memory_space<vmem>>, vector<1x128x64xbf16>
    %158 = vector.shape_cast %157 : vector<1x128x64xbf16> to vector<128x64xbf16>
    %cst_133 = arith.constant dense<0.000000e+00> : vector<8x64xf32>
    %159 = tpu.matmul %156, %158, %cst_133 {dimension_numbers = #tpu.dot_dimension_numbers<[1], [0], [0], [1], [0, 0, 1, 1], [], []>} : vector<8x128xbf16>, vector<128x64xbf16>, vector<8x64xf32> -> vector<8x64xf32>
    %160 = arith.addf %152, %159 : vector<8x64xf32>
    %c5_134 = arith.constant 5 : index
    %c0_135 = arith.constant 0 : index
    %c0_136 = arith.constant 0 : index
    %161 = vector.load %arg8[%c5_134, %c0_135, %c0_136] : memref<9x8x32xbf16, #tpu.memory_space<vmem>>, vector<1x8x32xbf16>
    %162 = vector.shape_cast %161 : vector<1x8x32xbf16> to vector<8x32xbf16>
    %cst_137 = arith.constant dense<0.000000e+00> : vector<8x128xf32>
    %163 = tpu.matmul %162, %119, %cst_137 {dimension_numbers = #tpu.dot_dimension_numbers<[1], [0], [0], [1], [0, 0, 1, 1], [], []>} : vector<8x32xbf16>, vector<32x128xbf16>, vector<8x128xf32> -> vector<8x128xf32>
    %164 = arith.truncf %163 : vector<8x128xf32> to vector<8x128xbf16>
    %c5_138 = arith.constant 5 : index
    %c0_139 = arith.constant 0 : index
    %c0_140 = arith.constant 0 : index
    %165 = vector.load %arg9[%c5_138, %c0_139, %c0_140] : memref<9x128x64xbf16, #tpu.memory_space<vmem>>, vector<1x128x64xbf16>
    %166 = vector.shape_cast %165 : vector<1x128x64xbf16> to vector<128x64xbf16>
    %cst_141 = arith.constant dense<0.000000e+00> : vector<8x64xf32>
    %167 = tpu.matmul %164, %166, %cst_141 {dimension_numbers = #tpu.dot_dimension_numbers<[1], [0], [0], [1], [0, 0, 1, 1], [], []>} : vector<8x128xbf16>, vector<128x64xbf16>, vector<8x64xf32> -> vector<8x64xf32>
    %168 = arith.addf %160, %167 : vector<8x64xf32>
    %c6_142 = arith.constant 6 : index
    %c0_143 = arith.constant 0 : index
    %c0_144 = arith.constant 0 : index
    %169 = vector.load %arg8[%c6_142, %c0_143, %c0_144] : memref<9x8x32xbf16, #tpu.memory_space<vmem>>, vector<1x8x32xbf16>
    %170 = vector.shape_cast %169 : vector<1x8x32xbf16> to vector<8x32xbf16>
    %cst_145 = arith.constant dense<0.000000e+00> : vector<8x128xf32>
    %171 = tpu.matmul %170, %119, %cst_145 {dimension_numbers = #tpu.dot_dimension_numbers<[1], [0], [0], [1], [0, 0, 1, 1], [], []>} : vector<8x32xbf16>, vector<32x128xbf16>, vector<8x128xf32> -> vector<8x128xf32>
    %172 = arith.truncf %171 : vector<8x128xf32> to vector<8x128xbf16>
    %c6_146 = arith.constant 6 : index
    %c0_147 = arith.constant 0 : index
    %c0_148 = arith.constant 0 : index
    %173 = vector.load %arg9[%c6_146, %c0_147, %c0_148] : memref<9x128x64xbf16, #tpu.memory_space<vmem>>, vector<1x128x64xbf16>
    %174 = vector.shape_cast %173 : vector<1x128x64xbf16> to vector<128x64xbf16>
    %cst_149 = arith.constant dense<0.000000e+00> : vector<8x64xf32>
    %175 = tpu.matmul %172, %174, %cst_149 {dimension_numbers = #tpu.dot_dimension_numbers<[1], [0], [0], [1], [0, 0, 1, 1], [], []>} : vector<8x128xbf16>, vector<128x64xbf16>, vector<8x64xf32> -> vector<8x64xf32>
    %176 = arith.addf %168, %175 : vector<8x64xf32>
    %c7_150 = arith.constant 7 : index
    %c0_151 = arith.constant 0 : index
    %c0_152 = arith.constant 0 : index
    %177 = vector.load %arg8[%c7_150, %c0_151, %c0_152] : memref<9x8x32xbf16, #tpu.memory_space<vmem>>, vector<1x8x32xbf16>
    %178 = vector.shape_cast %177 : vector<1x8x32xbf16> to vector<8x32xbf16>
    %cst_153 = arith.constant dense<0.000000e+00> : vector<8x128xf32>
    %179 = tpu.matmul %178, %119, %cst_153 {dimension_numbers = #tpu.dot_dimension_numbers<[1], [0], [0], [1], [0, 0, 1, 1], [], []>} : vector<8x32xbf16>, vector<32x128xbf16>, vector<8x128xf32> -> vector<8x128xf32>
    %180 = arith.truncf %179 : vector<8x128xf32> to vector<8x128xbf16>
    %c7_154 = arith.constant 7 : index
    %c0_155 = arith.constant 0 : index
    %c0_156 = arith.constant 0 : index
    %181 = vector.load %arg9[%c7_154, %c0_155, %c0_156] : memref<9x128x64xbf16, #tpu.memory_space<vmem>>, vector<1x128x64xbf16>
    %182 = vector.shape_cast %181 : vector<1x128x64xbf16> to vector<128x64xbf16>
    %cst_157 = arith.constant dense<0.000000e+00> : vector<8x64xf32>
    %183 = tpu.matmul %180, %182, %cst_157 {dimension_numbers = #tpu.dot_dimension_numbers<[1], [0], [0], [1], [0, 0, 1, 1], [], []>} : vector<8x128xbf16>, vector<128x64xbf16>, vector<8x64xf32> -> vector<8x64xf32>
    %184 = arith.addf %176, %183 : vector<8x64xf32>
    %c8_158 = arith.constant 8 : index
    %c0_159 = arith.constant 0 : index
    %c0_160 = arith.constant 0 : index
    %185 = vector.load %arg8[%c8_158, %c0_159, %c0_160] : memref<9x8x32xbf16, #tpu.memory_space<vmem>>, vector<1x8x32xbf16>
    %186 = vector.shape_cast %185 : vector<1x8x32xbf16> to vector<8x32xbf16>
    %cst_161 = arith.constant dense<0.000000e+00> : vector<8x128xf32>
    %187 = tpu.matmul %186, %119, %cst_161 {dimension_numbers = #tpu.dot_dimension_numbers<[1], [0], [0], [1], [0, 0, 1, 1], [], []>} : vector<8x32xbf16>, vector<32x128xbf16>, vector<8x128xf32> -> vector<8x128xf32>
    %188 = arith.truncf %187 : vector<8x128xf32> to vector<8x128xbf16>
    %c8_162 = arith.constant 8 : index
    %c0_163 = arith.constant 0 : index
    %c0_164 = arith.constant 0 : index
    %189 = vector.load %arg9[%c8_162, %c0_163, %c0_164] : memref<9x128x64xbf16, #tpu.memory_space<vmem>>, vector<1x128x64xbf16>
    %190 = vector.shape_cast %189 : vector<1x128x64xbf16> to vector<128x64xbf16>
    %cst_165 = arith.constant dense<0.000000e+00> : vector<8x64xf32>
    %191 = tpu.matmul %188, %190, %cst_165 {dimension_numbers = #tpu.dot_dimension_numbers<[1], [0], [0], [1], [0, 0, 1, 1], [], []>} : vector<8x128xbf16>, vector<128x64xbf16>, vector<8x64xf32> -> vector<8x64xf32>
    %192 = arith.addf %184, %191 : vector<8x64xf32>
    %c0_166 = arith.constant 0 : index
    %c0_167 = arith.constant 0 : index
    %193 = vector.load %arg10[%c0_166, %c0_167] : memref<1x64xf32, #tpu.memory_space<vmem>>, vector<1x64xf32>
    %194 = vector.broadcast %193 : vector<1x64xf32> to vector<8x64xf32>
    %195 = arith.addf %192, %194 : vector<8x64xf32>
    %cst_168 = arith.constant dense<0.000000e+00> : vector<64xf32>
    %196 = vector.multi_reduction <add>, %195, %cst_168 [0] : vector<8x64xf32> to vector<64xf32>
    %197 = vector.shape_cast %196 : vector<64xf32> to vector<1x64xf32>
    %198 = arith.mulf %195, %195 : vector<8x64xf32>
    %cst_169 = arith.constant dense<0.000000e+00> : vector<64xf32>
    %199 = vector.multi_reduction <add>, %198, %cst_169 [0] : vector<8x64xf32> to vector<64xf32>
    %200 = vector.shape_cast %199 : vector<64xf32> to vector<1x64xf32>
    %cst_170 = arith.constant 1.250000e-01 : f32
    %201 = vector.broadcast %cst_170 : f32 to vector<1x64xf32>
    %202 = arith.mulf %197, %201 : vector<1x64xf32>
    %cst_171 = arith.constant 1.250000e-01 : f32
    %203 = vector.broadcast %cst_171 : f32 to vector<1x64xf32>
    %204 = arith.mulf %200, %203 : vector<1x64xf32>
    %205 = arith.mulf %202, %202 : vector<1x64xf32>
    %206 = arith.subf %204, %205 : vector<1x64xf32>
    %207 = vector.broadcast %202 : vector<1x64xf32> to vector<8x64xf32>
    %208 = arith.subf %195, %207 : vector<8x64xf32>
    %cst_172 = arith.constant 9.99999974E-6 : f32
    %209 = vector.broadcast %cst_172 : f32 to vector<1x64xf32>
    %210 = arith.addf %206, %209 : vector<1x64xf32>
    %211 = math.rsqrt %210 : vector<1x64xf32>
    %212 = vector.broadcast %211 : vector<1x64xf32> to vector<8x64xf32>
    %213 = arith.mulf %208, %212 : vector<8x64xf32>
    %c0_173 = arith.constant 0 : index
    %c0_174 = arith.constant 0 : index
    %214 = vector.load %arg11[%c0_173, %c0_174] : memref<1x64xf32, #tpu.memory_space<vmem>>, vector<1x64xf32>
    %215 = vector.broadcast %214 : vector<1x64xf32> to vector<8x64xf32>
    %216 = arith.mulf %213, %215 : vector<8x64xf32>
    %c0_175 = arith.constant 0 : index
    %c0_176 = arith.constant 0 : index
    %217 = vector.load %arg12[%c0_175, %c0_176] : memref<1x64xf32, #tpu.memory_space<vmem>>, vector<1x64xf32>
    %218 = vector.broadcast %217 : vector<1x64xf32> to vector<8x64xf32>
    %219 = arith.addf %216, %218 : vector<8x64xf32>
    %cst_177 = arith.constant 0.000000e+00 : f32
    %220 = vector.broadcast %cst_177 : f32 to vector<8x64xf32>
    %221 = arith.maximumf %219, %220 : vector<8x64xf32>
    %222 = arith.truncf %221 : vector<8x64xf32> to vector<8x64xbf16>
    %c0_178 = arith.constant 0 : index
    %c0_179 = arith.constant 0 : index
    %c0_180 = arith.constant 0 : index
    %223 = vector.load %arg13[%c0_178, %c0_179, %c0_180] : memref<4x2x8xbf16, #tpu.memory_space<vmem>>, vector<1x2x8xbf16>
    %224 = vector.shape_cast %223 : vector<1x2x8xbf16> to vector<2x8xbf16>
    %cst_181 = arith.constant dense<0.000000e+00> : vector<2x64xf32>
    %225 = tpu.matmul %224, %222, %cst_181 {dimension_numbers = #tpu.dot_dimension_numbers<[1], [0], [0], [1], [0, 0, 1, 1], [], []>} : vector<2x8xbf16>, vector<8x64xbf16>, vector<2x64xf32> -> vector<2x64xf32>
    %c1_182 = arith.constant 1 : index
    %c0_183 = arith.constant 0 : index
    %c0_184 = arith.constant 0 : index
    %226 = vector.load %arg13[%c1_182, %c0_183, %c0_184] : memref<4x2x8xbf16, #tpu.memory_space<vmem>>, vector<1x2x8xbf16>
    %227 = vector.shape_cast %226 : vector<1x2x8xbf16> to vector<2x8xbf16>
    %cst_185 = arith.constant dense<0.000000e+00> : vector<2x64xf32>
    %228 = tpu.matmul %227, %222, %cst_185 {dimension_numbers = #tpu.dot_dimension_numbers<[1], [0], [0], [1], [0, 0, 1, 1], [], []>} : vector<2x8xbf16>, vector<8x64xbf16>, vector<2x64xf32> -> vector<2x64xf32>
    %229 = arith.maximumf %225, %228 : vector<2x64xf32>
    %c2_186 = arith.constant 2 : index
    %c0_187 = arith.constant 0 : index
    %c0_188 = arith.constant 0 : index
    %230 = vector.load %arg13[%c2_186, %c0_187, %c0_188] : memref<4x2x8xbf16, #tpu.memory_space<vmem>>, vector<1x2x8xbf16>
    %231 = vector.shape_cast %230 : vector<1x2x8xbf16> to vector<2x8xbf16>
    %cst_189 = arith.constant dense<0.000000e+00> : vector<2x64xf32>
    %232 = tpu.matmul %231, %222, %cst_189 {dimension_numbers = #tpu.dot_dimension_numbers<[1], [0], [0], [1], [0, 0, 1, 1], [], []>} : vector<2x8xbf16>, vector<8x64xbf16>, vector<2x64xf32> -> vector<2x64xf32>
    %233 = arith.maximumf %229, %232 : vector<2x64xf32>
    %c3_190 = arith.constant 3 : index
    %c0_191 = arith.constant 0 : index
    %c0_192 = arith.constant 0 : index
    %234 = vector.load %arg13[%c3_190, %c0_191, %c0_192] : memref<4x2x8xbf16, #tpu.memory_space<vmem>>, vector<1x2x8xbf16>
    %235 = vector.shape_cast %234 : vector<1x2x8xbf16> to vector<2x8xbf16>
    %cst_193 = arith.constant dense<0.000000e+00> : vector<2x64xf32>
    %236 = tpu.matmul %235, %222, %cst_193 {dimension_numbers = #tpu.dot_dimension_numbers<[1], [0], [0], [1], [0, 0, 1, 1], [], []>} : vector<2x8xbf16>, vector<8x64xbf16>, vector<2x64xf32> -> vector<2x64xf32>
    %237 = arith.maximumf %233, %236 : vector<2x64xf32>
    %238 = arith.truncf %237 : vector<2x64xf32> to vector<2x64xbf16>
    %c0_194 = arith.constant 0 : index
    %c0_195 = arith.constant 0 : index
    %239 = vector.load %arg14[%c0_194, %c0_195] : memref<64x8xbf16, #tpu.memory_space<vmem>>, vector<64x8xbf16>
    %cst_196 = arith.constant dense<0.000000e+00> : vector<2x8xf32>
    %240 = tpu.matmul %238, %239, %cst_196 {dimension_numbers = #tpu.dot_dimension_numbers<[1], [0], [0], [1], [0, 0, 1, 1], [], []>} : vector<2x64xbf16>, vector<64x8xbf16>, vector<2x8xf32> -> vector<2x8xf32>
    %c0_197 = arith.constant 0 : index
    %c0_198 = arith.constant 0 : index
    %241 = vector.load %arg15[%c0_197, %c0_198] : memref<1x8xf32, #tpu.memory_space<vmem>>, vector<1x8xf32>
    %242 = vector.broadcast %241 : vector<1x8xf32> to vector<2x8xf32>
    %243 = arith.addf %240, %242 : vector<2x8xf32>
    %cst_199 = arith.constant 0.000000e+00 : f32
    %244 = vector.broadcast %cst_199 : f32 to vector<2x8xf32>
    %245 = arith.maximumf %243, %244 : vector<2x8xf32>
    %c0_200 = arith.constant 0 : index
    %c0_201 = arith.constant 0 : index
    %246 = vector.load %arg16[%c0_200, %c0_201] : memref<1x8xf32, #tpu.memory_space<vmem>>, vector<1x8xf32>
    %247 = vector.broadcast %246 : vector<1x8xf32> to vector<2x8xf32>
    %248 = arith.mulf %245, %247 : vector<2x8xf32>
    %cst_202 = arith.constant dense<0.000000e+00> : vector<2xf32>
    %249 = vector.multi_reduction <add>, %248, %cst_202 [1] : vector<2x8xf32> to vector<2xf32>
    %250 = vector.shape_cast %249 : vector<2xf32> to vector<2x1xf32>
    %c0_203 = arith.constant 0 : index
    %c0_204 = arith.constant 0 : index
    %251 = vector.load %arg17[%c0_203, %c0_204] : memref<1x1xf32, #tpu.memory_space<vmem>>, vector<1x1xf32>
    %252 = vector.broadcast %251 : vector<1x1xf32> to vector<2x1xf32>
    %253 = arith.addf %250, %252 : vector<2x1xf32>
    %254 = arith.negf %253 : vector<2x1xf32>
    %255 = math.exp %254 : vector<2x1xf32>
    %cst_205 = arith.constant 1.000000e+00 : f32
    %256 = vector.broadcast %cst_205 : f32 to vector<2x1xf32>
    %257 = arith.addf %256, %255 : vector<2x1xf32>
    %258 = arith.divf %256, %257 : vector<2x1xf32>
    %c0_206 = arith.constant 0 : index
    %c0_207 = arith.constant 0 : index
    %259 = vector.load %arg18[%c0_206, %c0_207] : memref<2x1xf32, #tpu.memory_space<vmem>>, vector<2x1xf32>
    tpu.vector_store %arg18[%c0_206, %c0_207], %258 {strides = array<i32>} : memref<2x1xf32, #tpu.memory_space<vmem>>, vector<2x1xf32>,
    return
  }
  func.func @transform_0(%arg0: i32) -> (i32, i32) {
    %c0_i32 = arith.constant 0 : i32
    %c0_i32_0 = arith.constant 0 : i32
    %c0_i32_1 = arith.constant 0 : i32
    return %c0_i32, %c0_i32_0 : i32, i32
  }
  func.func @transform_1(%arg0: i32) -> (i32, i32, i32) {
    %c0_i32 = arith.constant 0 : i32
    %c0_i32_0 = arith.constant 0 : i32
    %c0_i32_1 = arith.constant 0 : i32
    %c0_i32_2 = arith.constant 0 : i32
    return %c0_i32, %c0_i32_0, %c0_i32_1 : i32, i32, i32
  }
  func.func @transform_2(%arg0: i32) -> (i32, i32, i32) {
    %c0_i32 = arith.constant 0 : i32
    %c0_i32_0 = arith.constant 0 : i32
    %c0_i32_1 = arith.constant 0 : i32
    %c0_i32_2 = arith.constant 0 : i32
    return %c0_i32, %c0_i32_0, %c0_i32_1 : i32, i32, i32
  }
  func.func @transform_3(%arg0: i32) -> (i32, i32) {
    %c0_i32 = arith.constant 0 : i32
    %c0_i32_0 = arith.constant 0 : i32
    %c0_i32_1 = arith.constant 0 : i32
    return %c0_i32, %c0_i32_0 : i32, i32
  }
  func.func @transform_4(%arg0: i32) -> (i32, i32) {
    %c0_i32 = arith.constant 0 : i32
    %c0_i32_0 = arith.constant 0 : i32
    %c0_i32_1 = arith.constant 0 : i32
    return %c0_i32, %c0_i32_0 : i32, i32
  }
  func.func @transform_5(%arg0: i32) -> (i32, i32) {
    %c0_i32 = arith.constant 0 : i32
    %c0_i32_0 = arith.constant 0 : i32
    %c0_i32_1 = arith.constant 0 : i32
    return %c0_i32, %c0_i32_0 : i32, i32
  }
  func.func @transform_6(%arg0: i32) -> (i32, i32, i32) {
    %c0_i32 = arith.constant 0 : i32
    %c0_i32_0 = arith.constant 0 : i32
    %c0_i32_1 = arith.constant 0 : i32
    %c0_i32_2 = arith.constant 0 : i32
    return %c0_i32, %c0_i32_0, %c0_i32_1 : i32, i32, i32
  }
  func.func @transform_7(%arg0: i32) -> (i32, i32, i32) {
    %c0_i32 = arith.constant 0 : i32
    %c0_i32_0 = arith.constant 0 : i32
    %c0_i32_1 = arith.constant 0 : i32
    %c0_i32_2 = arith.constant 0 : i32
    return %c0_i32, %c0_i32_0, %c0_i32_1 : i32, i32, i32
  }
  func.func @transform_8(%arg0: i32) -> (i32, i32, i32) {
    %c0_i32 = arith.constant 0 : i32
    %c0_i32_0 = arith.constant 0 : i32
    %c0_i32_1 = arith.constant 0 : i32
    %c0_i32_2 = arith.constant 0 : i32
    return %c0_i32, %c0_i32_0, %c0_i32_1 : i32, i32, i32
  }
  func.func @transform_9(%arg0: i32) -> (i32, i32) {
    %c0_i32 = arith.constant 0 : i32
    %c0_i32_0 = arith.constant 0 : i32
    %c0_i32_1 = arith.constant 0 : i32
    return %c0_i32, %c0_i32_0 : i32, i32
  }
  func.func @transform_10(%arg0: i32) -> (i32, i32) {
    %c0_i32 = arith.constant 0 : i32
    %c0_i32_0 = arith.constant 0 : i32
    %c0_i32_1 = arith.constant 0 : i32
    return %c0_i32, %c0_i32_0 : i32, i32
  }
  func.func @transform_11(%arg0: i32) -> (i32, i32) {
    %c0_i32 = arith.constant 0 : i32
    %c0_i32_0 = arith.constant 0 : i32
    %c0_i32_1 = arith.constant 0 : i32
    return %c0_i32, %c0_i32_0 : i32, i32
  }
  func.func @transform_12(%arg0: i32) -> (i32, i32, i32) {
    %c0_i32 = arith.constant 0 : i32
    %c0_i32_0 = arith.constant 0 : i32
    %c0_i32_1 = arith.constant 0 : i32
    %c0_i32_2 = arith.constant 0 : i32
    return %c0_i32, %c0_i32_0, %c0_i32_1 : i32, i32, i32
  }
  func.func @transform_13(%arg0: i32) -> (i32, i32) {
    %c0_i32 = arith.constant 0 : i32
    %c0_i32_0 = arith.constant 0 : i32
    %c0_i32_1 = arith.constant 0 : i32
    return %c0_i32, %c0_i32_0 : i32, i32
  }
  func.func @transform_14(%arg0: i32) -> (i32, i32) {
    %c0_i32 = arith.constant 0 : i32
    %c0_i32_0 = arith.constant 0 : i32
    %c0_i32_1 = arith.constant 0 : i32
    return %c0_i32, %c0_i32_0 : i32, i32
  }
  func.func @transform_15(%arg0: i32) -> (i32, i32) {
    %c0_i32 = arith.constant 0 : i32
    %c0_i32_0 = arith.constant 0 : i32
    %c0_i32_1 = arith.constant 0 : i32
    return %c0_i32, %c0_i32_0 : i32, i32
  }
  func.func @transform_16(%arg0: i32) -> (i32, i32) {
    %c0_i32 = arith.constant 0 : i32
    %c0_i32_0 = arith.constant 0 : i32
    %c0_i32_1 = arith.constant 0 : i32
    return %c0_i32, %c0_i32_0 : i32, i32
  }
  func.func @transform_17(%arg0: i32) -> (i32, i32) {
    %c0_i32 = arith.constant 0 : i32
    %c0_i32_0 = arith.constant 0 : i32
    %c0_i32_1 = arith.constant 0 : i32
    return %c0_i32, %c0_i32_0 : i32, i32
  }
}

</mosaic_0001>

<llo_original>
// kernel: relation_network_forward.1
$region0: #{relation_network_forward.1}
  #allocation0 [shape = 'u32[]', space=smem, size = 0x4, offset = 0x4, fixed_abs, tag = 'smem constant byte address 0x4 - core index']
  #allocation1 [shape = 'u32[144,128]{1,0:T(1,128)}', space=vmem, size = 0x12000, scoped, tag = 'internal scratch']
  #allocation2 [shape = 'f32[1,1]{1,0:T(1,128)S(1)}', space=vmem, size = 0x200, scoped, tag = 'scoped memory for relation_network_forward.1']
  %s0 = inlined_call_operand.vmem [shape: bf16[200,256], index: 0, kind: input, shape index: {}]
  %s1 = inlined_call_operand.vmem [shape: bf16[9,128,200], index: 1, kind: input, shape index: {}]
  %s2 = inlined_call_operand.vmem [shape: bf16[9,256,128], index: 2, kind: input, shape index: {}]
  %s3 = inlined_call_operand.vmem [shape: f32[1,128], index: 3, kind: input, shape index: {}]
  %s4 = inlined_call_operand.vmem [shape: f32[1,128], index: 4, kind: input, shape index: {}]
  %s5 = inlined_call_operand.vmem [shape: f32[1,128], index: 5, kind: input, shape index: {}]
  %s6 = inlined_call_operand.vmem [shape: bf16[4,32,128], index: 6, kind: input, shape index: {}]
  %s7 = inlined_call_operand.vmem [shape: bf16[9,8,32], index: 7, kind: input, shape index: {}]
  %s8 = inlined_call_operand.vmem [shape: bf16[9,128,64], index: 8, kind: input, shape index: {}]
  %s9 = inlined_call_operand.vmem [shape: f32[1,64], index: 9, kind: input, shape index: {}]
  %s10 = inlined_call_operand.vmem [shape: f32[1,64], index: 10, kind: input, shape index: {}]
  %s11 = inlined_call_operand.vmem [shape: f32[1,64], index: 11, kind: input, shape index: {}]
  %s12 = inlined_call_operand.vmem [shape: bf16[4,2,8], index: 12, kind: input, shape index: {}]
  %s13 = inlined_call_operand.vmem [shape: bf16[64,8], index: 13, kind: input, shape index: {}]
  %s14 = inlined_call_operand.vmem [shape: f32[1,8], index: 14, kind: input, shape index: {}]
  %s15 = inlined_call_operand.vmem [shape: f32[1,8], index: 15, kind: input, shape index: {}]
  %s16 = inlined_call_operand.<no memory space> [shape: f32[1,1], index: 16, kind: input, shape index: {}]
  %s17 = inlined_call_operand.vmem [shape: f32[2,1], index: 17, kind: output, shape index: {}]
  %s18 = sld [smem:[#allocation0]]
  $region78: #{relation_network_forward.1} parent=0
    _
  %s20 = ssub.s32 1, %s18
  %s21 = scalar_select 0, %s20, %s18
  %v22 = vstv %s16
  %23 = vst [vmem:[#allocation2] sm:$0x1] %v22
  // Predicated region
  $region2: #{relation_network_forward.1} parent=0 // pred_check
    _
  $region3: #{relation_network_forward.1} parent=0 // pred_check_branch
    %25 = sbr.rel (0) target = $region5
  $region4: #{relation_network_forward.1} parent=0 // pred_region
    _
  $region5: #{relation_network_forward.1} parent=0 // pred_fallthru
    _
  // Predicated region
  $region6: #{relation_network_forward.1} parent=0 // pred_check
    _
  $region7: #{relation_network_forward.1} parent=0 // pred_check_branch
    %27 = sbr.rel (0) target = $region9
  $region8: #{relation_network_forward.1} parent=0 // pred_region
    _
  $region9: #{relation_network_forward.1} parent=0 // pred_fallthru
    _
  // Predicated region
  $region10: #{relation_network_forward.1} parent=0 // pred_check
    _
  $region11: #{relation_network_forward.1} parent=0 // pred_check_branch
    %29 = sbr.rel (0) target = $region13
  $region12: #{relation_network_forward.1} parent=0 // pred_region
    _
  $region13: #{relation_network_forward.1} parent=0 // pred_fallthru
    _
  // Predicated region
  $region14: #{relation_network_forward.1} parent=0 // pred_check
    _
  $region15: #{relation_network_forward.1} parent=0 // pred_check_branch
    %31 = sbr.rel (0) target = $region17
  $region16: #{relation_network_forward.1} parent=0 // pred_region
    _
  $region17: #{relation_network_forward.1} parent=0 // pred_fallthru
    _
  // Predicated region
  $region18: #{relation_network_forward.1} parent=0 // pred_check
    _
  $region19: #{relation_network_forward.1} parent=0 // pred_check_branch
    %33 = sbr.rel (0) target = $region21
  $region20: #{relation_network_forward.1} parent=0 // pred_region
    _
  $region21: #{relation_network_forward.1} parent=0 // pred_fallthru
    _
  // Predicated region
  $region22: #{relation_network_forward.1} parent=0 // pred_check
    _
  $region23: #{relation_network_forward.1} parent=0 // pred_check_branch
    %35 = sbr.rel (0) target = $region25
  $region24: #{relation_network_forward.1} parent=0 // pred_region
    _
  $region25: #{relation_network_forward.1} parent=0 // pred_fallthru
    _
  // Predicated region
  $region26: #{relation_network_forward.1} parent=0 // pred_check
    _
  $region27: #{relation_network_forward.1} parent=0 // pred_check_branch
    %37 = sbr.rel (0) target = $region29
  $region28: #{relation_network_forward.1} parent=0 // pred_region
    _
  $region29: #{relation_network_forward.1} parent=0 // pred_fallthru
    _
  // Predicated region
  $region30: #{relation_network_forward.1} parent=0 // pred_check
    _
  $region31: #{relation_network_forward.1} parent=0 // pred_check_branch
    %39 = sbr.rel (0) target = $region33
  $region32: #{relation_network_forward.1} parent=0 // pred_region
    _
  $region33: #{relation_network_forward.1} parent=0 // pred_fallthru
    _
  // Predicated region
  $region34: #{relation_network_forward.1} parent=0 // pred_check
    _
  $region35: #{relation_network_forward.1} parent=0 // pred_check_branch
    %41 = sbr.rel (0) target = $region37
  $region36: #{relation_network_forward.1} parent=0 // pred_region
    _
  $region37: #{relation_network_forward.1} parent=0 // pred_fallthru
    _
  // Predicated region
  $region38: #{relation_network_forward.1} parent=0 // pred_check
    _
  $region39: #{relation_network_forward.1} parent=0 // pred_check_branch
    %43 = sbr.rel (0) target = $region41
  $region40: #{relation_network_forward.1} parent=0 // pred_region
    _
  $region41: #{relation_network_forward.1} parent=0 // pred_fallthru
    _
  // Predicated region
  $region42: #{relation_network_forward.1} parent=0 // pred_check
    _
  $region43: #{relation_network_forward.1} parent=0 // pred_check_branch
    %45 = sbr.rel (0) target = $region45
  $region44: #{relation_network_forward.1} parent=0 // pred_region
    _
  $region45: #{relation_network_forward.1} parent=0 // pred_fallthru
    _
  // Predicated region
  $region46: #{relation_network_forward.1} parent=0 // pred_check
    _
  $region47: #{relation_network_forward.1} parent=0 // pred_check_branch
    %47 = sbr.rel (0) target = $region49
  $region48: #{relation_network_forward.1} parent=0 // pred_region
    _
  $region49: #{relation_network_forward.1} parent=0 // pred_fallthru
    _
  // Predicated region
  $region50: #{relation_network_forward.1} parent=0 // pred_check
    _
  $region51: #{relation_network_forward.1} parent=0 // pred_check_branch
    %49 = sbr.rel (0) target = $region53
  $region52: #{relation_network_forward.1} parent=0 // pred_region
    _
  $region53: #{relation_network_forward.1} parent=0 // pred_fallthru
    _
  // Predicated region
  $region54: #{relation_network_forward.1} parent=0 // pred_check
    _
  $region55: #{relation_network_forward.1} parent=0 // pred_check_branch
    %51 = sbr.rel (0) target = $region57
  $region56: #{relation_network_forward.1} parent=0 // pred_region
    _
  $region57: #{relation_network_forward.1} parent=0 // pred_fallthru
    _
  // Predicated region
  $region58: #{relation_network_forward.1} parent=0 // pred_check
    _
  $region59: #{relation_network_forward.1} parent=0 // pred_check_branch
    %53 = sbr.rel (0) target = $region61
  $region60: #{relation_network_forward.1} parent=0 // pred_region
    _
  $region61: #{relation_network_forward.1} parent=0 // pred_fallthru
    _
  // Predicated region
  $region62: #{relation_network_forward.1} parent=0 // pred_check
    _
  $region63: #{relation_network_forward.1} parent=0 // pred_check_branch
    %55 = sbr.rel (0) target = $region65
  $region64: #{relation_network_forward.1} parent=0 // pred_region
    _
  $region65: #{relation_network_forward.1} parent=0 // pred_fallthru
    _
  // Predicated region
  $region66: #{relation_network_forward.1} parent=0 // pred_check
    _
  $region67: #{relation_network_forward.1} parent=0 // pred_check_branch
    %57 = sbr.rel (0) target = $region69
  $region68: #{relation_network_forward.1} parent=0 // pred_region
    _
  $region69: #{relation_network_forward.1} parent=0 // pred_fallthru
    _
  %v59 = vld [vmem:[%s0] sm:$0xff]
  %v60 = vld [vmem:[%s0 + $0x8] sm:$0xff]
  %v61 = vld [vmem:[%s0 + $0x10] sm:$0xff]
  %v62 = vld [vmem:[%s0 + $0x18] sm:$0xff]
  %v63 = vld [vmem:[%s0 + $0x20] sm:$0xff]
  %v64 = vld [vmem:[%s0 + $0x28] sm:$0xff]
  %v65 = vld [vmem:[%s0 + $0x30] sm:$0xff]
  %v66 = vld [vmem:[%s0 + $0x38] sm:$0xff]
  %v67 = vld [vmem:[%s0 + $0x40] sm:$0xff]
  %v68 = vld [vmem:[%s0 + $0x48] sm:$0xff]
  %v69 = vld [vmem:[%s0 + $0x50] sm:$0xff]
  %v70 = vld [vmem:[%s0 + $0x58] sm:$0xff]
  %v71 = vld [vmem:[%s0 + $0x60] sm:$0xff]
  %v72 = vld [vmem:[%s0 + $0x68] sm:$0xff]
  %v73 = vld [vmem:[%s0 + $0x70] sm:$0xff]
  %v74 = vld [vmem:[%s0 + $0x78] sm:$0xff]
  %v75 = vld [vmem:[%s0 + $0x80] sm:$0xff]
  %v76 = vld [vmem:[%s0 + $0x88] sm:$0xff]
  %v77 = vld [vmem:[%s0 + $0x90] sm:$0xff]
  %v78 = vld [vmem:[%s0 + $0x98] sm:$0xff]
  %v79 = vld [vmem:[%s0 + $0xa0] sm:$0xff]
  %v80 = vld [vmem:[%s0 + $0xa8] sm:$0xff]
  %v81 = vld [vmem:[%s0 + $0xb0] sm:$0xff]
  %v82 = vld [vmem:[%s0 + $0xb8] sm:$0xff]
  %v83 = vld [vmem:[%s0 + $0xc0] sm:$0xff]
  %v84 = vld [vmem:[%s1] sm:$0xff]
  %v85 = vld [vmem:[%s1 + $0x8] sm:$0xff]
  %v86 = vld [vmem:[%s1 + $0x10] sm:$0xff]
  %v87 = vld [vmem:[%s1 + $0x18] sm:$0xff]
  %v88 = vld [vmem:[%s1 + $0x20] sm:$0xff]
  %v89 = vld [vmem:[%s1 + $0x28] sm:$0xff]
  %v90 = vld [vmem:[%s1 + $0x30] sm:$0xff]
  %v91 = vld [vmem:[%s1 + $0x38] sm:$0xff]
  %v92 = vld [vmem:[%s1 + $0x40] sm:$0xff]
  %v93 = vld [vmem:[%s1 + $0x48] sm:$0xff]
  %v94 = vld [vmem:[%s1 + $0x50] sm:$0xff]
  %v95 = vld [vmem:[%s1 + $0x58] sm:$0xff]
  %v96 = vld [vmem:[%s1 + $0x60] sm:$0xff]
  %v97 = vld [vmem:[%s1 + $0x68] sm:$0xff]
  %v98 = vld [vmem:[%s1 + $0x70] sm:$0xff]
  %v99 = vld [vmem:[%s1 + $0x78] sm:$0xff]
  %v116 = vunpack.c.l.b16 %v84
  %v117 = vunpack.c.h.b16 %v84
  %v118 = vunpack.c.l.b16 %v85
  %v119 = vunpack.c.h.b16 %v85
  %v120 = vunpack.c.l.b16 %v86
  %v121 = vunpack.c.h.b16 %v86
  %v122 = vunpack.c.l.b16 %v87
  %v123 = vunpack.c.h.b16 %v87
  %v124 = vunpack.c.l.b16 %v88
  %v125 = vunpack.c.h.b16 %v88
  %v126 = vunpack.c.l.b16 %v89
  %v127 = vunpack.c.h.b16 %v89
  %v128 = vunpack.c.l.b16 %v90
  %v129 = vunpack.c.h.b16 %v90
  %v130 = vunpack.c.l.b16 %v91
  %v131 = vunpack.c.h.b16 %v91
  %v132 = vunpack.c.l.b16 %v92
  %v133 = vunpack.c.h.b16 %v92
  %v134 = vunpack.c.l.b16 %v93
  %v135 = vunpack.c.h.b16 %v93
  %v136 = vunpack.c.l.b16 %v94
  %v137 = vunpack.c.h.b16 %v94
  %v138 = vunpack.c.l.b16 %v95
  %v139 = vunpack.c.h.b16 %v95
  %v140 = vunpack.c.l.b16 %v96
  %v141 = vunpack.c.h.b16 %v96
  %v142 = vunpack.c.l.b16 %v97
  %v143 = vunpack.c.h.b16 %v97
  %v144 = vunpack.c.l.b16 %v98
  %v145 = vunpack.c.h.b16 %v98
  %v146 = vunpack.c.l.b16 %v99
  %v147 = vunpack.c.h.b16 %v99
  %v148 = vpack.c.b16 %v118, %v116
  %v149 = vpack.c.b16 %v119, %v117
  %v150 = vpack.c.b16 %v122, %v120
  %v151 = vpack.c.b16 %v123, %v121
  %v152 = vpack.c.b16 %v126, %v124
  %v153 = vpack.c.b16 %v127, %v125
  %v154 = vpack.c.b16 %v130, %v128
  %v155 = vpack.c.b16 %v131, %v129
  %v156 = vpack.c.b16 %v134, %v132
  %v157 = vpack.c.b16 %v135, %v133
  %v158 = vpack.c.b16 %v138, %v136
  %v159 = vpack.c.b16 %v139, %v137
  %v160 = vpack.c.b16 %v142, %v140
  %v161 = vpack.c.b16 %v143, %v141
  %v162 = vpack.c.b16 %v146, %v144
  %v163 = vpack.c.b16 %v147, %v145
  %v197 = vunpack.c.l.b16 %v59
  %v198 = vunpack.c.h.b16 %v59
  %v199 = vunpack.c.l.b16 %v60
  %v200 = vunpack.c.h.b16 %v60
  %v201 = vunpack.c.l.b16 %v61
  %v202 = vunpack.c.h.b16 %v61
  %v203 = vunpack.c.l.b16 %v62
  %v204 = vunpack.c.h.b16 %v62
  %v205 = vunpack.c.l.b16 %v63
  %v206 = vunpack.c.h.b16 %v63
  %v207 = vunpack.c.l.b16 %v64
  %v208 = vunpack.c.h.b16 %v64
  %v209 = vunpack.c.l.b16 %v65
  %v210 = vunpack.c.h.b16 %v65
  %v211 = vunpack.c.l.b16 %v66
  %v212 = vunpack.c.h.b16 %v66
  %v213 = vunpack.c.l.b16 %v67
  %v214 = vunpack.c.h.b16 %v67
  %v215 = vunpack.c.l.b16 %v68
  %v216 = vunpack.c.h.b16 %v68
  %v217 = vunpack.c.l.b16 %v69
  %v218 = vunpack.c.h.b16 %v69
  %v219 = vunpack.c.l.b16 %v70
  %v220 = vunpack.c.h.b16 %v70
  %v221 = vunpack.c.l.b16 %v71
  %v222 = vunpack.c.h.b16 %v71
  %v223 = vunpack.c.l.b16 %v72
  %v224 = vunpack.c.h.b16 %v72
  %v225 = vunpack.c.l.b16 %v73
  %v226 = vunpack.c.h.b16 %v73
  %v227 = vunpack.c.l.b16 %v74
  %v228 = vunpack.c.h.b16 %v74
  %v229 = vunpack.c.l.b16 %v75
  %v230 = vunpack.c.h.b16 %v75
  %v231 = vunpack.c.l.b16 %v76
  %v232 = vunpack.c.h.b16 %v76
  %v233 = vunpack.c.l.b16 %v77
  %v234 = vunpack.c.h.b16 %v77
  %v235 = vunpack.c.l.b16 %v78
  %v236 = vunpack.c.h.b16 %v78
  %v237 = vunpack.c.l.b16 %v79
  %v238 = vunpack.c.h.b16 %v79
  %v239 = vunpack.c.l.b16 %v80
  %v240 = vunpack.c.h.b16 %v80
  %v241 = vunpack.c.l.b16 %v81
  %v242 = vunpack.c.h.b16 %v81
  %v243 = vunpack.c.l.b16 %v82
  %v244 = vunpack.c.h.b16 %v82
  %v245 = vunpack.c.l.b16 %v83
  %v246 = vunpack.c.h.b16 %v83
  %v247 = vpack.c.b16 %v199, %v197
  %v248 = vpack.c.b16 %v200, %v198
  %v249 = vpack.c.b16 %v203, %v201
  %v250 = vpack.c.b16 %v204, %v202
  %v251 = vpack.c.b16 %v207, %v205
  %v252 = vpack.c.b16 %v208, %v206
  %v253 = vpack.c.b16 %v211, %v209
  %v254 = vpack.c.b16 %v212, %v210
  %v255 = vpack.c.b16 %v215, %v213
  %v256 = vpack.c.b16 %v216, %v214
  %v257 = vpack.c.b16 %v219, %v217
  %v258 = vpack.c.b16 %v220, %v218
  %v259 = vpack.c.b16 %v223, %v221
  %v260 = vpack.c.b16 %v224, %v222
  %v261 = vpack.c.b16 %v227, %v225
  %v262 = vpack.c.b16 %v228, %v226
  %v263 = vpack.c.b16 %v231, %v229
  %v264 = vpack.c.b16 %v232, %v230
  %v265 = vpack.c.b16 %v235, %v233
  %v266 = vpack.c.b16 %v236, %v234
  %v267 = vpack.c.b16 %v239, %v237
  %v268 = vpack.c.b16 %v240, %v238
  %v269 = vpack.c.b16 %v243, %v241
  %v270 = vpack.c.b16 %v244, %v242
  %v271 = vpack.c.b16 %v245, %v245
  %v272 = vpack.c.b16 %v246, %v246
  %vm297 = vcmask 588800
  %v299 = vsel %vm297, %v149, 0
  %v302 = vsel %vm297, %v151, 0
  %v305 = vsel %vm297, %v153, 0
  %v308 = vsel %vm297, %v155, 0
  %v311 = vsel %vm297, %v157, 0
  %v314 = vsel %vm297, %v159, 0
  %v317 = vsel %vm297, %v161, 0
  %v320 = vsel %vm297, %v163, 0
  %vm322 = vcmask 1043456
  %v324 = vsel %vm322, %v271, 0
  %v327 = vsel %vm322, %v272, 0
  %329 = vmatprep.subr.bf16.mxu0 %v248
  %330 = vmatpush1.bf16.msra.mxu0 %v247
  %331 = vmatprep.subr.bf16.mxu0 %v250
  %332 = vmatpush1.bf16.msra.mxu0 %v249
  %333 = vmatprep.subr.bf16.mxu0 %v252
  %334 = vmatpush1.bf16.msra.mxu0 %v251
  %335 = vmatprep.subr.bf16.mxu0 %v254
  %336 = vmatpush1.bf16.msra.mxu0 %v253
  %337 = vmatprep.subr.bf16.mxu0 %v256
  %338 = vmatpush1.bf16.msra.mxu0 %v255
  %339 = vmatprep.subr.bf16.mxu0 %v258
  %340 = vmatpush1.bf16.msra.mxu0 %v257
  %341 = vmatprep.subr.bf16.mxu0 %v260
  %342 = vmatpush1.bf16.msra.mxu0 %v259
  %343 = vmatprep.subr.bf16.mxu0 %v262
  %344 = vmatpush1.bf16.msra.mxu0 %v261
  %345 = vmatprep.subr.bf16.mxu0 %v264
  %346 = vmatpush1.bf16.msra.mxu0 %v263
  %347 = vmatprep.subr.bf16.mxu0 %v266
  %348 = vmatpush1.bf16.msra.mxu0 %v265
  %349 = vmatprep.subr.bf16.mxu0 %v268
  %350 = vmatpush1.bf16.msra.mxu0 %v267
  %351 = vmatprep.subr.bf16.mxu0 %v270
  %352 = vmatpush1.bf16.msra.mxu0 %v269
  %353 = vmatprep.subr.bf16.mxu0 %v327
  %354 = vmatpush1.bf16.msra.mxu0 %v324
  %355 = vmatprep.subr.bf16.mxu0 0
  %356 = vmatpush1.bf16.msra.mxu0 0
  %357 = vmatprep.subr.bf16.mxu0 0
  %358 = vmatpush1.bf16.msra.mxu0 0
  %359 = vmatprep.subr.bf16.mxu0 0
  %360 = vmatpush1.bf16.msra.mxu0 0
  %361 = vmatprep.mubr.bf16.mxu0 %v299
  %362 = vmatmul.mubr.bf16.gmra.mrb[0].mxu0 %v148
  %v363 = vpop.f32.mrb[0].mxu0
  %v364 = vadd.f32 0.0, %v363
  %v365 = vpop.f32.mrb[0].mxu0
  %v366 = vadd.f32 0.0, %v365
  %v367 = vpop.f32.mrb[0].mxu0
  %v368 = vadd.f32 0.0, %v367
  %v369 = vpop.f32.mrb[0].mxu0
  %v370 = vadd.f32 0.0, %v369
  %371 = vmatprep.mubr.bf16.mxu0 %v302
  %372 = vmatmul.mubr.bf16.gmra.mrb[0].mxu0 %v150
  %v373 = vpop.f32.mrb[0].mxu0
  %v374 = vadd.f32 0.0, %v373
  %v375 = vpop.f32.mrb[0].mxu0
  %v376 = vadd.f32 0.0, %v375
  %v377 = vpop.f32.mrb[0].mxu0
  %v378 = vadd.f32 0.0, %v377
  %v379 = vpop.f32.mrb[0].mxu0
  %v380 = vadd.f32 0.0, %v379
  %381 = vmatprep.mubr.bf16.mxu0 %v305
  %382 = vmatmul.mubr.bf16.gmra.mrb[0].mxu0 %v152
  %v383 = vpop.f32.mrb[0].mxu0
  %v384 = vadd.f32 0.0, %v383
  %v385 = vpop.f32.mrb[0].mxu0
  %v386 = vadd.f32 0.0, %v385
  %v387 = vpop.f32.mrb[0].mxu0
  %v388 = vadd.f32 0.0, %v387
  %v389 = vpop.f32.mrb[0].mxu0
  %v390 = vadd.f32 0.0, %v389
  %391 = vmatprep.mubr.bf16.mxu0 %v308
  %392 = vmatmul.mubr.bf16.gmra.mrb[0].mxu0 %v154
  %v393 = vpop.f32.mrb[0].mxu0
  %v394 = vadd.f32 0.0, %v393
  %v395 = vpop.f32.mrb[0].mxu0
  %v396 = vadd.f32 0.0, %v395
  %v397 = vpop.f32.mrb[0].mxu0
  %v398 = vadd.f32 0.0, %v397
  %v399 = vpop.f32.mrb[0].mxu0
  %v400 = vadd.f32 0.0, %v399
  %401 = vmatprep.mubr.bf16.mxu0 %v311
  %402 = vmatmul.mubr.bf16.gmra.mrb[0].mxu0 %v156
  %v403 = vpop.f32.mrb[0].mxu0
  %v404 = vadd.f32 0.0, %v403
  %v405 = vpop.f32.mrb[0].mxu0
  %v406 = vadd.f32 0.0, %v405
  %v407 = vpop.f32.mrb[0].mxu0
  %v408 = vadd.f32 0.0, %v407
  %v409 = vpop.f32.mrb[0].mxu0
  %v410 = vadd.f32 0.0, %v409
  %411 = vmatprep.mubr.bf16.mxu0 %v314
  %412 = vmatmul.mubr.bf16.gmra.mrb[0].mxu0 %v158
  %v413 = vpop.f32.mrb[0].mxu0
  %v414 = vadd.f32 0.0, %v413
  %v415 = vpop.f32.mrb[0].mxu0
  %v416 = vadd.f32 0.0, %v415
  %v417 = vpop.f32.mrb[0].mxu0
  %v418 = vadd.f32 0.0, %v417
  %v419 = vpop.f32.mrb[0].mxu0
  %v420 = vadd.f32 0.0, %v419
  %421 = vmatprep.mubr.bf16.mxu0 %v317
  %422 = vmatmul.mubr.bf16.gmra.mrb[0].mxu0 %v160
  %v423 = vpop.f32.mrb[0].mxu0
  %v424 = vadd.f32 0.0, %v423
  %v425 = vpop.f32.mrb[0].mxu0
  %v426 = vadd.f32 0.0, %v425
  %v427 = vpop.f32.mrb[0].mxu0
  %v428 = vadd.f32 0.0, %v427
  %v429 = vpop.f32.mrb[0].mxu0
  %v430 = vadd.f32 0.0, %v429
  %431 = vmatprep.mubr.bf16.mxu0 %v320
  %432 = vmatmul.mubr.bf16.gmra.mrb[0].mxu0 %v162
  %v433 = vpop.f32.mrb[0].mxu0
  %v434 = vadd.f32 0.0, %v433
  %v435 = vpop.f32.mrb[0].mxu0
  %v436 = vadd.f32 0.0, %v435
  %v437 = vpop.f32.mrb[0].mxu0
  %v438 = vadd.f32 0.0, %v437
  %v439 = vpop.f32.mrb[0].mxu0
  %v440 = vadd.f32 0.0, %v439
  %441 = vdwg.mxu0
  %v442 = vpack.c.bf16 %v368, %v364
  %v443 = vpack.c.bf16 %v370, %v366
  %v444 = vpack.c.bf16 %v378, %v374
  %v445 = vpack.c.bf16 %v380, %v376
  %v446 = vpack.c.bf16 %v388, %v384
  %v447 = vpack.c.bf16 %v390, %v386
  %v448 = vpack.c.bf16 %v398, %v394
  %v449 = vpack.c.bf16 %v400, %v396
  %v450 = vpack.c.bf16 %v408, %v404
  %v451 = vpack.c.bf16 %v410, %v406
  %v452 = vpack.c.bf16 %v418, %v414
  %v453 = vpack.c.bf16 %v420, %v416
  %v454 = vpack.c.bf16 %v428, %v424
  %v455 = vpack.c.bf16 %v430, %v426
  %v456 = vpack.c.bf16 %v438, %v434
  %v457 = vpack.c.bf16 %v440, %v436
  %v458 = vld [vmem:[%s2] sm:$0xf]
  %v459 = vld [vmem:[%s2 + $0x4] sm:$0xf]
  %v460 = vld [vmem:[%s2 + $0x8] sm:$0xf]
  %v461 = vld [vmem:[%s2 + $0xc] sm:$0xf]
  %v462 = vld [vmem:[%s2 + $0x10] sm:$0xf]
  %v463 = vld [vmem:[%s2 + $0x14] sm:$0xf]
  %v464 = vld [vmem:[%s2 + $0x18] sm:$0xf]
  %v465 = vld [vmem:[%s2 + $0x1c] sm:$0xf]
  %v466 = vld [vmem:[%s2 + $0x20] sm:$0xf]
  %v467 = vld [vmem:[%s2 + $0x24] sm:$0xf]
  %v468 = vld [vmem:[%s2 + $0x28] sm:$0xf]
  %v469 = vld [vmem:[%s2 + $0x2c] sm:$0xf]
  %v470 = vld [vmem:[%s2 + $0x30] sm:$0xf]
  %v471 = vld [vmem:[%s2 + $0x34] sm:$0xf]
  %v472 = vld [vmem:[%s2 + $0x38] sm:$0xf]
  %v473 = vld [vmem:[%s2 + $0x3c] sm:$0xf]
  %v474 = vld [vmem:[%s2 + $0x40] sm:$0xf]
  %v475 = vld [vmem:[%s2 + $0x44] sm:$0xf]
  %v476 = vld [vmem:[%s2 + $0x48] sm:$0xf]
  %v477 = vld [vmem:[%s2 + $0x4c] sm:$0xf]
  %v478 = vld [vmem:[%s2 + $0x50] sm:$0xf]
  %v479 = vld [vmem:[%s2 + $0x54] sm:$0xf]
  %v480 = vld [vmem:[%s2 + $0x58] sm:$0xf]
  %v481 = vld [vmem:[%s2 + $0x5c] sm:$0xf]
  %v482 = vld [vmem:[%s2 + $0x60] sm:$0xf]
  %v483 = vld [vmem:[%s2 + $0x64] sm:$0xf]
  %v484 = vld [vmem:[%s2 + $0x68] sm:$0xf]
  %v485 = vld [vmem:[%s2 + $0x6c] sm:$0xf]
  %v486 = vld [vmem:[%s2 + $0x70] sm:$0xf]
  %v487 = vld [vmem:[%s2 + $0x74] sm:$0xf]
  %v488 = vld [vmem:[%s2 + $0x78] sm:$0xf]
  %v489 = vld [vmem:[%s2 + $0x7c] sm:$0xf]
  %s490 = scalar_lea.vmem %s1, 128
  %v491 = vld [vmem:[%s490] sm:$0xff]
  %v492 = vld [vmem:[%s490 + $0x8] sm:$0xff]
  %v493 = vld [vmem:[%s490 + $0x10] sm:$0xff]
  %v494 = vld [vmem:[%s490 + $0x18] sm:$0xff]
  %v495 = vld [vmem:[%s490 + $0x20] sm:$0xff]
  %v496 = vld [vmem:[%s490 + $0x28] sm:$0xff]
  %v497 = vld [vmem:[%s490 + $0x30] sm:$0xff]
  %v498 = vld [vmem:[%s490 + $0x38] sm:$0xff]
  %v499 = vld [vmem:[%s490 + $0x40] sm:$0xff]
  %v500 = vld [vmem:[%s490 + $0x48] sm:$0xff]
  %v501 = vld [vmem:[%s490 + $0x50] sm:$0xff]
  %v502 = vld [vmem:[%s490 + $0x58] sm:$0xff]
  %v503 = vld [vmem:[%s490 + $0x60] sm:$0xff]
  %v504 = vld [vmem:[%s490 + $0x68] sm:$0xff]
  %v505 = vld [vmem:[%s490 + $0x70] sm:$0xff]
  %v506 = vld [vmem:[%s490 + $0x78] sm:$0xff]
  %v523 = vunpack.c.l.b16 %v491
  %v524 = vunpack.c.h.b16 %v491
  %v525 = vunpack.c.l.b16 %v492
  %v526 = vunpack.c.h.b16 %v492
  %v527 = vunpack.c.l.b16 %v493
  %v528 = vunpack.c.h.b16 %v493
  %v529 = vunpack.c.l.b16 %v494
  %v530 = vunpack.c.h.b16 %v494
  %v531 = vunpack.c.l.b16 %v495
  %v532 = vunpack.c.h.b16 %v495
  %v533 = vunpack.c.l.b16 %v496
  %v534 = vunpack.c.h.b16 %v496
  %v535 = vunpack.c.l.b16 %v497
  %v536 = vunpack.c.h.b16 %v497
  %v537 = vunpack.c.l.b16 %v498
  %v538 = vunpack.c.h.b16 %v498
  %v539 = vunpack.c.l.b16 %v499
  %v540 = vunpack.c.h.b16 %v499
  %v541 = vunpack.c.l.b16 %v500
  %v542 = vunpack.c.h.b16 %v500
  %v543 = vunpack.c.l.b16 %v501
  %v544 = vunpack.c.h.b16 %v501
  %v545 = vunpack.c.l.b16 %v502
  %v546 = vunpack.c.h.b16 %v502
  %v547 = vunpack.c.l.b16 %v503
  %v548 = vunpack.c.h.b16 %v503
  %v549 = vunpack.c.l.b16 %v504
  %v550 = vunpack.c.h.b16 %v504
  %v551 = vunpack.c.l.b16 %v505
  %v552 = vunpack.c.h.b16 %v505
  %v553 = vunpack.c.l.b16 %v506
  %v554 = vunpack.c.h.b16 %v506
  %v555 = vpack.c.b16 %v525, %v523
  %v556 = vpack.c.b16 %v526, %v524
  %v557 = vpack.c.b16 %v529, %v527
  %v558 = vpack.c.b16 %v530, %v528
  %v559 = vpack.c.b16 %v533, %v531
  %v560 = vpack.c.b16 %v534, %v532
  %v561 = vpack.c.b16 %v537, %v535
  %v562 = vpack.c.b16 %v538, %v536
  %v563 = vpack.c.b16 %v541, %v539
  %v564 = vpack.c.b16 %v542, %v540
  %v565 = vpack.c.b16 %v545, %v543
  %v566 = vpack.c.b16 %v546, %v544
  %v567 = vpack.c.b16 %v549, %v547
  %v568 = vpack.c.b16 %v550, %v548
  %v569 = vpack.c.b16 %v553, %v551
  %v570 = vpack.c.b16 %v554, %v552
  %v580 = vsel %vm297, %v556, 0
  %v583 = vsel %vm297, %v558, 0
  %v586 = vsel %vm297, %v560, 0
  %v589 = vsel %vm297, %v562, 0
  %v592 = vsel %vm297, %v564, 0
  %v595 = vsel %vm297, %v566, 0
  %v598 = vsel %vm297, %v568, 0
  %v601 = vsel %vm297, %v570, 0
  %603 = vmatprep.subr.bf16.mxu0 %v248
  %604 = vmatpush1.bf16.msra.mxu0 %v247
  %605 = vmatprep.subr.bf16.mxu0 %v250
  %606 = vmatpush1.bf16.msra.mxu0 %v249
  %607 = vmatprep.subr.bf16.mxu0 %v252
  %608 = vmatpush1.bf16.msra.mxu0 %v251
  %609 = vmatprep.subr.bf16.mxu0 %v254
  %610 = vmatpush1.bf16.msra.mxu0 %v253
  %611 = vmatprep.subr.bf16.mxu0 %v256
  %612 = vmatpush1.bf16.msra.mxu0 %v255
  %613 = vmatprep.subr.bf16.mxu0 %v258
  %614 = vmatpush1.bf16.msra.mxu0 %v257
  %615 = vmatprep.subr.bf16.mxu0 %v260
  %616 = vmatpush1.bf16.msra.mxu0 %v259
  %617 = vmatprep.subr.bf16.mxu0 %v262
  %618 = vmatpush1.bf16.msra.mxu0 %v261
  %619 = vmatprep.subr.bf16.mxu0 %v264
  %620 = vmatpush1.bf16.msra.mxu0 %v263
  %621 = vmatprep.subr.bf16.mxu0 %v266
  %622 = vmatpush1.bf16.msra.mxu0 %v265
  %623 = vmatprep.subr.bf16.mxu0 %v268
  %624 = vmatpush1.bf16.msra.mxu0 %v267
  %625 = vmatprep.subr.bf16.mxu0 %v270
  %626 = vmatpush1.bf16.msra.mxu0 %v269
  %627 = vmatprep.subr.bf16.mxu0 %v327
  %628 = vmatpush1.bf16.msra.mxu0 %v324
  %629 = vmatprep.subr.bf16.mxu0 0
  %630 = vmatpush1.bf16.msra.mxu0 0
  %631 = vmatprep.subr.bf16.mxu0 0
  %632 = vmatpush1.bf16.msra.mxu0 0
  %633 = vmatprep.subr.bf16.mxu0 0
  %634 = vmatpush1.bf16.msra.mxu0 0
  %635 = vmatprep.mubr.bf16.mxu0 %v580
  %636 = vmatmul.mubr.bf16.gmra.mrb[0].mxu0 %v555
  %v637 = vpop.f32.mrb[0].mxu0
  %v638 = vadd.f32 0.0, %v637
  %v639 = vpop.f32.mrb[0].mxu0
  %v640 = vadd.f32 0.0, %v639
  %v641 = vpop.f32.mrb[0].mxu0
  %v642 = vadd.f32 0.0, %v641
  %v643 = vpop.f32.mrb[0].mxu0
  %v644 = vadd.f32 0.0, %v643
  %645 = vmatprep.mubr.bf16.mxu0 %v583
  %646 = vmatmul.mubr.bf16.gmra.mrb[0].mxu0 %v557
  %v647 = vpop.f32.mrb[0].mxu0
  %v648 = vadd.f32 0.0, %v647
  %v649 = vpop.f32.mrb[0].mxu0
  %v650 = vadd.f32 0.0, %v649
  %v651 = vpop.f32.mrb[0].mxu0
  %v652 = vadd.f32 0.0, %v651
  %v653 = vpop.f32.mrb[0].mxu0
  %v654 = vadd.f32 0.0, %v653
  %655 = vmatprep.mubr.bf16.mxu0 %v586
  %656 = vmatmul.mubr.bf16.gmra.mrb[0].mxu0 %v559
  %v657 = vpop.f32.mrb[0].mxu0
  %v658 = vadd.f32 0.0, %v657
  %v659 = vpop.f32.mrb[0].mxu0
  %v660 = vadd.f32 0.0, %v659
  %v661 = vpop.f32.mrb[0].mxu0
  %v662 = vadd.f32 0.0, %v661
  %v663 = vpop.f32.mrb[0].mxu0
  %v664 = vadd.f32 0.0, %v663
  %665 = vmatprep.mubr.bf16.mxu0 %v589
  %666 = vmatmul.mubr.bf16.gmra.mrb[0].mxu0 %v561
  %v667 = vpop.f32.mrb[0].mxu0
  %v668 = vadd.f32 0.0, %v667
  %v669 = vpop.f32.mrb[0].mxu0
  %v670 = vadd.f32 0.0, %v669
  %v671 = vpop.f32.mrb[0].mxu0
  %v672 = vadd.f32 0.0, %v671
  %v673 = vpop.f32.mrb[0].mxu0
  %v674 = vadd.f32 0.0, %v673
  %675 = vmatprep.mubr.bf16.mxu0 %v592
  %676 = vmatmul.mubr.bf16.gmra.mrb[0].mxu0 %v563
  %v677 = vpop.f32.mrb[0].mxu0
  %v678 = vadd.f32 0.0, %v677
  %v679 = vpop.f32.mrb[0].mxu0
  %v680 = vadd.f32 0.0, %v679
  %v681 = vpop.f32.mrb[0].mxu0
  %v682 = vadd.f32 0.0, %v681
  %v683 = vpop.f32.mrb[0].mxu0
  %v684 = vadd.f32 0.0, %v683
  %685 = vmatprep.mubr.bf16.mxu0 %v595
  %686 = vmatmul.mubr.bf16.gmra.mrb[0].mxu0 %v565
  %v687 = vpop.f32.mrb[0].mxu0
  %v688 = vadd.f32 0.0, %v687
  %v689 = vpop.f32.mrb[0].mxu0
  %v690 = vadd.f32 0.0, %v689
  %v691 = vpop.f32.mrb[0].mxu0
  %v692 = vadd.f32 0.0, %v691
  %v693 = vpop.f32.mrb[0].mxu0
  %v694 = vadd.f32 0.0, %v693
  %695 = vmatprep.mubr.bf16.mxu0 %v598
  %696 = vmatmul.mubr.bf16.gmra.mrb[0].mxu0 %v567
  %v697 = vpop.f32.mrb[0].mxu0
  %v698 = vadd.f32 0.0, %v697
  %v699 = vpop.f32.mrb[0].mxu0
  %v700 = vadd.f32 0.0, %v699
  %v701 = vpop.f32.mrb[0].mxu0
  %v702 = vadd.f32 0.0, %v701
  %v703 = vpop.f32.mrb[0].mxu0
  %v704 = vadd.f32 0.0, %v703
  %705 = vmatprep.mubr.bf16.mxu0 %v601
  %706 = vmatmul.mubr.bf16.gmra.mrb[0].mxu0 %v569
  %v707 = vpop.f32.mrb[0].mxu0
  %v708 = vadd.f32 0.0, %v707
  %v709 = vpop.f32.mrb[0].mxu0
  %v710 = vadd.f32 0.0, %v709
  %v711 = vpop.f32.mrb[0].mxu0
  %v712 = vadd.f32 0.0, %v711
  %v713 = vpop.f32.mrb[0].mxu0
  %v714 = vadd.f32 0.0, %v713
  %715 = vdwg.mxu0
  %v716 = vpack.c.bf16 %v642, %v638
  %v717 = vpack.c.bf16 %v644, %v640
  %v718 = vpack.c.bf16 %v652, %v648
  %v719 = vpack.c.bf16 %v654, %v650
  %v720 = vpack.c.bf16 %v662, %v658
  %v721 = vpack.c.bf16 %v664, %v660
  %v722 = vpack.c.bf16 %v672, %v668
  %v723 = vpack.c.bf16 %v674, %v670
  %v724 = vpack.c.bf16 %v682, %v678
  %v725 = vpack.c.bf16 %v684, %v680
  %v726 = vpack.c.bf16 %v692, %v688
  %v727 = vpack.c.bf16 %v694, %v690
  %v728 = vpack.c.bf16 %v702, %v698
  %v729 = vpack.c.bf16 %v704, %v700
  %v730 = vpack.c.bf16 %v712, %v708
  %v731 = vpack.c.bf16 %v714, %v710
  %s732 = scalar_lea.vmem %s2, 128
  %v733 = vld [vmem:[%s732] sm:$0xf]
  %v734 = vld [vmem:[%s732 + $0x4] sm:$0xf]
  %v735 = vld [vmem:[%s732 + $0x8] sm:$0xf]
  %v736 = vld [vmem:[%s732 + $0xc] sm:$0xf]
  %v737 = vld [vmem:[%s732 + $0x10] sm:$0xf]
  %v738 = vld [vmem:[%s732 + $0x14] sm:$0xf]
  %v739 = vld [vmem:[%s732 + $0x18] sm:$0xf]
  %v740 = vld [vmem:[%s732 + $0x1c] sm:$0xf]
  %v741 = vld [vmem:[%s732 + $0x20] sm:$0xf]
  %v742 = vld [vmem:[%s732 + $0x24] sm:$0xf]
  %v743 = vld [vmem:[%s732 + $0x28] sm:$0xf]
  %v744 = vld [vmem:[%s732 + $0x2c] sm:$0xf]
  %v745 = vld [vmem:[%s732 + $0x30] sm:$0xf]
  %v746 = vld [vmem:[%s732 + $0x34] sm:$0xf]
  %v747 = vld [vmem:[%s732 + $0x38] sm:$0xf]
  %v748 = vld [vmem:[%s732 + $0x3c] sm:$0xf]
  %v749 = vld [vmem:[%s732 + $0x40] sm:$0xf]
  %v750 = vld [vmem:[%s732 + $0x44] sm:$0xf]
  %v751 = vld [vmem:[%s732 + $0x48] sm:$0xf]
  %v752 = vld [vmem:[%s732 + $0x4c] sm:$0xf]
  %v753 = vld [vmem:[%s732 + $0x50] sm:$0xf]
  %v754 = vld [vmem:[%s732 + $0x54] sm:$0xf]
  %v755 = vld [vmem:[%s732 + $0x58] sm:$0xf]
  %v756 = vld [vmem:[%s732 + $0x5c] sm:$0xf]
  %v757 = vld [vmem:[%s732 + $0x60] sm:$0xf]
  %v758 = vld [vmem:[%s732 + $0x64] sm:$0xf]
  %v759 = vld [vmem:[%s732 + $0x68] sm:$0xf]
  %v760 = vld [vmem:[%s732 + $0x6c] sm:$0xf]
  %v761 = vld [vmem:[%s732 + $0x70] sm:$0xf]
  %v762 = vld [vmem:[%s732 + $0x74] sm:$0xf]
  %v763 = vld [vmem:[%s732 + $0x78] sm:$0xf]
  %v764 = vld [vmem:[%s732 + $0x7c] sm:$0xf]
  %v797 = vunpack.c.l.b16 %v733
  %v798 = vunpack.c.l.b16 %v734
  %v799 = vunpack.c.l.b16 %v735
  %v800 = vunpack.c.l.b16 %v736
  %v801 = vunpack.c.l.b16 %v737
  %v802 = vunpack.c.l.b16 %v738
  %v803 = vunpack.c.l.b16 %v739
  %v804 = vunpack.c.l.b16 %v740
  %v805 = vunpack.c.l.b16 %v741
  %v806 = vunpack.c.l.b16 %v742
  %v807 = vunpack.c.l.b16 %v743
  %v808 = vunpack.c.l.b16 %v744
  %v809 = vunpack.c.l.b16 %v745
  %v810 = vunpack.c.l.b16 %v746
  %v811 = vunpack.c.l.b16 %v747
  %v812 = vunpack.c.l.b16 %v748
  %v813 = vunpack.c.l.b16 %v749
  %v814 = vunpack.c.l.b16 %v750
  %v815 = vunpack.c.l.b16 %v751
  %v816 = vunpack.c.l.b16 %v752
  %v817 = vunpack.c.l.b16 %v753
  %v818 = vunpack.c.l.b16 %v754
  %v819 = vunpack.c.l.b16 %v755
  %v820 = vunpack.c.l.b16 %v756
  %v821 = vunpack.c.l.b16 %v757
  %v822 = vunpack.c.l.b16 %v758
  %v823 = vunpack.c.l.b16 %v759
  %v824 = vunpack.c.l.b16 %v760
  %v825 = vunpack.c.l.b16 %v761
  %v826 = vunpack.c.l.b16 %v762
  %v827 = vunpack.c.l.b16 %v763
  %v828 = vunpack.c.l.b16 %v764
  %v829 = vpack.c.b16 %v798, %v797
  %v830 = vpack.c.b16 %v800, %v799
  %v831 = vpack.c.b16 %v802, %v801
  %v832 = vpack.c.b16 %v804, %v803
  %v833 = vpack.c.b16 %v806, %v805
  %v834 = vpack.c.b16 %v808, %v807
  %v835 = vpack.c.b16 %v810, %v809
  %v836 = vpack.c.b16 %v812, %v811
  %v837 = vpack.c.b16 %v814, %v813
  %v838 = vpack.c.b16 %v816, %v815
  %v839 = vpack.c.b16 %v818, %v817
  %v840 = vpack.c.b16 %v820, %v819
  %v841 = vpack.c.b16 %v822, %v821
  %v842 = vpack.c.b16 %v824, %v823
  %v843 = vpack.c.b16 %v826, %v825
  %v844 = vpack.c.b16 %v828, %v827
  %861 = vmatprep.subr.bf16.mxu0 0
  %862 = vmatpush1.bf16.msra.mxu0 %v829
  %863 = vmatprep.subr.bf16.mxu0 0
  %864 = vmatpush1.bf16.msra.mxu0 %v830
  %865 = vmatprep.subr.bf16.mxu0 0
  %866 = vmatpush1.bf16.msra.mxu0 %v831
  %867 = vmatprep.subr.bf16.mxu0 0
  %868 = vmatpush1.bf16.msra.mxu0 %v832
  %869 = vmatprep.subr.bf16.mxu0 0
  %870 = vmatpush1.bf16.msra.mxu0 %v833
  %871 = vmatprep.subr.bf16.mxu0 0
  %872 = vmatpush1.bf16.msra.mxu0 %v834
  %873 = vmatprep.subr.bf16.mxu0 0
  %874 = vmatpush1.bf16.msra.mxu0 %v835
  %875 = vmatprep.subr.bf16.mxu0 0
  %876 = vmatpush1.bf16.msra.mxu0 %v836
  %877 = vmatprep.subr.bf16.mxu0 0
  %878 = vmatpush1.bf16.msra.mxu0 %v837
  %879 = vmatprep.subr.bf16.mxu0 0
  %880 = vmatpush1.bf16.msra.mxu0 %v838
  %881 = vmatprep.subr.bf16.mxu0 0
  %882 = vmatpush1.bf16.msra.mxu0 %v839
  %883 = vmatprep.subr.bf16.mxu0 0
  %884 = vmatpush1.bf16.msra.mxu0 %v840
  %885 = vmatprep.subr.bf16.mxu0 0
  %886 = vmatpush1.bf16.msra.mxu0 %v841
  %887 = vmatprep.subr.bf16.mxu0 0
  %888 = vmatpush1.bf16.msra.mxu0 %v842
  %889 = vmatprep.subr.bf16.mxu0 0
  %890 = vmatpush1.bf16.msra.mxu0 %v843
  %891 = vmatprep.subr.bf16.mxu0 0
  %892 = vmatpush1.bf16.msra.mxu0 %v844
  %893 = vmatprep.mubr.bf16.mxu0 %v717
  %894 = vmatmul.mubr.bf16.gmra.mrb[0].mxu0 %v716
  %v895 = vpop.f32.mrb[0].mxu0
  %v896 = vadd.f32 0.0, %v895
  %v897 = vpop.f32.mrb[0].mxu0
  %v898 = vpop.f32.mrb[0].mxu0
  %v899 = vadd.f32 0.0, %v898
  %v900 = vpop.f32.mrb[0].mxu0
  %901 = vmatprep.mubr.bf16.mxu0 %v719
  %902 = vmatmul.mubr.bf16.gmra.mrb[0].mxu0 %v718
  %v903 = vpop.f32.mrb[0].mxu0
  %v904 = vadd.f32 0.0, %v903
  %v905 = vpop.f32.mrb[0].mxu0
  %v906 = vpop.f32.mrb[0].mxu0
  %v907 = vadd.f32 0.0, %v906
  %v908 = vpop.f32.mrb[0].mxu0
  %909 = vmatprep.mubr.bf16.mxu0 %v721
  %910 = vmatmul.mubr.bf16.gmra.mrb[0].mxu0 %v720
  %v911 = vpop.f32.mrb[0].mxu0
  %v912 = vadd.f32 0.0, %v911
  %v913 = vpop.f32.mrb[0].mxu0
  %v914 = vpop.f32.mrb[0].mxu0
  %v915 = vadd.f32 0.0, %v914
  %v916 = vpop.f32.mrb[0].mxu0
  %917 = vmatprep.mubr.bf16.mxu0 %v723
  %918 = vmatmul.mubr.bf16.gmra.mrb[0].mxu0 %v722
  %v919 = vpop.f32.mrb[0].mxu0
  %v920 = vadd.f32 0.0, %v919
  %v921 = vpop.f32.mrb[0].mxu0
  %v922 = vpop.f32.mrb[0].mxu0
  %v923 = vadd.f32 0.0, %v922
  %v924 = vpop.f32.mrb[0].mxu0
  %925 = vmatprep.mubr.bf16.mxu0 %v725
  %926 = vmatmul.mubr.bf16.gmra.mrb[0].mxu0 %v724
  %v927 = vpop.f32.mrb[0].mxu0
  %v928 = vadd.f32 0.0, %v927
  %v929 = vpop.f32.mrb[0].mxu0
  %v930 = vpop.f32.mrb[0].mxu0
  %v931 = vadd.f32 0.0, %v930
  %v932 = vpop.f32.mrb[0].mxu0
  %933 = vmatprep.mubr.bf16.mxu0 %v727
  %934 = vmatmul.mubr.bf16.gmra.mrb[0].mxu0 %v726
  %v935 = vpop.f32.mrb[0].mxu0
  %v936 = vadd.f32 0.0, %v935
  %v937 = vpop.f32.mrb[0].mxu0
  %v938 = vpop.f32.mrb[0].mxu0
  %v939 = vadd.f32 0.0, %v938
  %v940 = vpop.f32.mrb[0].mxu0
  %941 = vmatprep.mubr.bf16.mxu0 %v729
  %942 = vmatmul.mubr.bf16.gmra.mrb[0].mxu0 %v728
  %v943 = vpop.f32.mrb[0].mxu0
  %v944 = vadd.f32 0.0, %v943
  %v945 = vpop.f32.mrb[0].mxu0
  %v946 = vpop.f32.mrb[0].mxu0
  %v947 = vadd.f32 0.0, %v946
  %v948 = vpop.f32.mrb[0].mxu0
  %949 = vmatprep.mubr.bf16.mxu0 %v731
  %950 = vmatmul.mubr.bf16.gmra.mrb[0].mxu0 %v730
  %v951 = vpop.f32.mrb[0].mxu0
  %v952 = vadd.f32 0.0, %v951
  %v953 = vpop.f32.mrb[0].mxu0
  %v954 = vpop.f32.mrb[0].mxu0
  %v955 = vadd.f32 0.0, %v954
  %v956 = vpop.f32.mrb[0].mxu0
  %957 = vdwg.mxu0
  %v990 = vunpack.c.l.b16 %v458
  %v991 = vunpack.c.l.b16 %v459
  %v992 = vunpack.c.l.b16 %v460
  %v993 = vunpack.c.l.b16 %v461
  %v994 = vunpack.c.l.b16 %v462
  %v995 = vunpack.c.l.b16 %v463
  %v996 = vunpack.c.l.b16 %v464
  %v997 = vunpack.c.l.b16 %v465
  %v998 = vunpack.c.l.b16 %v466
  %v999 = vunpack.c.l.b16 %v467
  %v1000 = vunpack.c.l.b16 %v468
  %v1001 = vunpack.c.l.b16 %v469
  %v1002 = vunpack.c.l.b16 %v470
  %v1003 = vunpack.c.l.b16 %v471
  %v1004 = vunpack.c.l.b16 %v472
  %v1005 = vunpack.c.l.b16 %v473
  %v1006 = vunpack.c.l.b16 %v474
  %v1007 = vunpack.c.l.b16 %v475
  %v1008 = vunpack.c.l.b16 %v476
  %v1009 = vunpack.c.l.b16 %v477
  %v1010 = vunpack.c.l.b16 %v478
  %v1011 = vunpack.c.l.b16 %v479
  %v1012 = vunpack.c.l.b16 %v480
  %v1013 = vunpack.c.l.b16 %v481
  %v1014 = vunpack.c.l.b16 %v482
  %v1015 = vunpack.c.l.b16 %v483
  %v1016 = vunpack.c.l.b16 %v484
  %v1017 = vunpack.c.l.b16 %v485
  %v1018 = vunpack.c.l.b16 %v486
  %v1019 = vunpack.c.l.b16 %v487
  %v1020 = vunpack.c.l.b16 %v488
  %v1021 = vunpack.c.l.b16 %v489
  %v1022 = vpack.c.b16 %v991, %v990
  %v1023 = vpack.c.b16 %v993, %v992
  %v1024 = vpack.c.b16 %v995, %v994
  %v1025 = vpack.c.b16 %v997, %v996
  %v1026 = vpack.c.b16 %v999, %v998
  %v1027 = vpack.c.b16 %v1001, %v1000
  %v1028 = vpack.c.b16 %v1003, %v1002
  %v1029 = vpack.c.b16 %v1005, %v1004
  %v1030 = vpack.c.b16 %v1007, %v1006
  %v1031 = vpack.c.b16 %v1009, %v1008
  %v1032 = vpack.c.b16 %v1011, %v1010
  %v1033 = vpack.c.b16 %v1013, %v1012
  %v1034 = vpack.c.b16 %v1015, %v1014
  %v1035 = vpack.c.b16 %v1017, %v1016
  %v1036 = vpack.c.b16 %v1019, %v1018
  %v1037 = vpack.c.b16 %v1021, %v1020
  %1054 = vmatprep.subr.bf16.mxu0 0
  %1055 = vmatpush1.bf16.msra.mxu0 %v1022
  %1056 = vmatprep.subr.bf16.mxu0 0
  %1057 = vmatpush1.bf16.msra.mxu0 %v1023
  %1058 = vmatprep.subr.bf16.mxu0 0
  %1059 = vmatpush1.bf16.msra.mxu0 %v1024
  %1060 = vmatprep.subr.bf16.mxu0 0
  %1061 = vmatpush1.bf16.msra.mxu0 %v1025
  %1062 = vmatprep.subr.bf16.mxu0 0
  %1063 = vmatpush1.bf16.msra.mxu0 %v1026
  %1064 = vmatprep.subr.bf16.mxu0 0
  %1065 = vmatpush1.bf16.msra.mxu0 %v1027
  %1066 = vmatprep.subr.bf16.mxu0 0
  %1067 = vmatpush1.bf16.msra.mxu0 %v1028
  %1068 = vmatprep.subr.bf16.mxu0 0
  %1069 = vmatpush1.bf16.msra.mxu0 %v1029
  %1070 = vmatprep.subr.bf16.mxu0 0
  %1071 = vmatpush1.bf16.msra.mxu0 %v1030
  %1072 = vmatprep.subr.bf16.mxu0 0
  %1073 = vmatpush1.bf16.msra.mxu0 %v1031
  %1074 = vmatprep.subr.bf16.mxu0 0
  %1075 = vmatpush1.bf16.msra.mxu0 %v1032
  %1076 = vmatprep.subr.bf16.mxu0 0
  %1077 = vmatpush1.bf16.msra.mxu0 %v1033
  %1078 = vmatprep.subr.bf16.mxu0 0
  %1079 = vmatpush1.bf16.msra.mxu0 %v1034
  %1080 = vmatprep.subr.bf16.mxu0 0
  %1081 = vmatpush1.bf16.msra.mxu0 %v1035
  %1082 = vmatprep.subr.bf16.mxu0 0
  %1083 = vmatpush1.bf16.msra.mxu0 %v1036
  %1084 = vmatprep.subr.bf16.mxu0 0
  %1085 = vmatpush1.bf16.msra.mxu0 %v1037
  %1086 = vmatprep.mubr.bf16.mxu0 %v443
  %1087 = vmatmul.mubr.bf16.gmra.mrb[0].mxu0 %v442
  %v1088 = vpop.f32.mrb[0].mxu0
  %v1089 = vadd.f32 %v896, %v1088
  %v1090 = vpop.f32.mrb[0].mxu0
  %v1091 = vpop.f32.mrb[0].mxu0
  %v1092 = vadd.f32 %v899, %v1091
  %v1093 = vpop.f32.mrb[0].mxu0
  %1094 = vmatprep.mubr.bf16.mxu0 %v445
  %1095 = vmatmul.mubr.bf16.gmra.mrb[0].mxu0 %v444
  %v1096 = vpop.f32.mrb[0].mxu0
  %v1097 = vadd.f32 %v904, %v1096
  %v1098 = vpop.f32.mrb[0].mxu0
  %v1099 = vpop.f32.mrb[0].mxu0
  %v1100 = vadd.f32 %v907, %v1099
  %v1101 = vpop.f32.mrb[0].mxu0
  %1102 = vmatprep.mubr.bf16.mxu0 %v447
  %1103 = vmatmul.mubr.bf16.gmra.mrb[0].mxu0 %v446
  %v1104 = vpop.f32.mrb[0].mxu0
  %v1105 = vadd.f32 %v912, %v1104
  %v1106 = vpop.f32.mrb[0].mxu0
  %v1107 = vpop.f32.mrb[0].mxu0
  %v1108 = vadd.f32 %v915, %v1107
  %v1109 = vpop.f32.mrb[0].mxu0
  %1110 = vmatprep.mubr.bf16.mxu0 %v449
  %1111 = vmatmul.mubr.bf16.gmra.mrb[0].mxu0 %v448
  %v1112 = vpop.f32.mrb[0].mxu0
  %v1113 = vadd.f32 %v920, %v1112
  %v1114 = vpop.f32.mrb[0].mxu0
  %v1115 = vpop.f32.mrb[0].mxu0
  %v1116 = vadd.f32 %v923, %v1115
  %v1117 = vpop.f32.mrb[0].mxu0
  %1118 = vmatprep.mubr.bf16.mxu0 %v451
  %1119 = vmatmul.mubr.bf16.gmra.mrb[0].mxu0 %v450
  %v1120 = vpop.f32.mrb[0].mxu0
  %v1121 = vadd.f32 %v928, %v1120
  %v1122 = vpop.f32.mrb[0].mxu0
  %v1123 = vpop.f32.mrb[0].mxu0
  %v1124 = vadd.f32 %v931, %v1123
  %v1125 = vpop.f32.mrb[0].mxu0
  %1126 = vmatprep.mubr.bf16.mxu0 %v453
  %1127 = vmatmul.mubr.bf16.gmra.mrb[0].mxu0 %v452
  %v1128 = vpop.f32.mrb[0].mxu0
  %v1129 = vadd.f32 %v936, %v1128
  %v1130 = vpop.f32.mrb[0].mxu0
  %v1131 = vpop.f32.mrb[0].mxu0
  %v1132 = vadd.f32 %v939, %v1131
  %v1133 = vpop.f32.mrb[0].mxu0
  %1134 = vmatprep.mubr.bf16.mxu0 %v455
  %1135 = vmatmul.mubr.bf16.gmra.mrb[0].mxu0 %v454
  %v1136 = vpop.f32.mrb[0].mxu0
  %v1137 = vadd.f32 %v944, %v1136
  %v1138 = vpop.f32.mrb[0].mxu0
  %v1139 = vpop.f32.mrb[0].mxu0
  %v1140 = vadd.f32 %v947, %v1139
  %v1141 = vpop.f32.mrb[0].mxu0
  %1142 = vmatprep.mubr.bf16.mxu0 %v457
  %1143 = vmatmul.mubr.bf16.gmra.mrb[0].mxu0 %v456
  %v1144 = vpop.f32.mrb[0].mxu0
  %v1145 = vadd.f32 %v952, %v1144
  %v1146 = vpop.f32.mrb[0].mxu0
  %v1147 = vpop.f32.mrb[0].mxu0
  %v1148 = vadd.f32 %v955, %v1147
  %v1149 = vpop.f32.mrb[0].mxu0
  %1150 = vdwg.mxu0
  %s1151 = scalar_lea.vmem %s1, 256
  %v1152 = vld [vmem:[%s1151] sm:$0xff]
  %v1153 = vld [vmem:[%s1151 + $0x8] sm:$0xff]
  %v1154 = vld [vmem:[%s1151 + $0x10] sm:$0xff]
  %v1155 = vld [vmem:[%s1151 + $0x18] sm:$0xff]
  %v1156 = vld [vmem:[%s1151 + $0x20] sm:$0xff]
  %v1157 = vld [vmem:[%s1151 + $0x28] sm:$0xff]
  %v1158 = vld [vmem:[%s1151 + $0x30] sm:$0xff]
  %v1159 = vld [vmem:[%s1151 + $0x38] sm:$0xff]
  %v1160 = vld [vmem:[%s1151 + $0x40] sm:$0xff]
  %v1161 = vld [vmem:[%s1151 + $0x48] sm:$0xff]
  %v1162 = vld [vmem:[%s1151 + $0x50] sm:$0xff]
  %v1163 = vld [vmem:[%s1151 + $0x58] sm:$0xff]
  %v1164 = vld [vmem:[%s1151 + $0x60] sm:$0xff]
  %v1165 = vld [vmem:[%s1151 + $0x68] sm:$0xff]
  %v1166 = vld [vmem:[%s1151 + $0x70] sm:$0xff]
  %v1167 = vld [vmem:[%s1151 + $0x78] sm:$0xff]
  %v1184 = vunpack.c.l.b16 %v1152
  %v1185 = vunpack.c.h.b16 %v1152
  %v1186 = vunpack.c.l.b16 %v1153
  %v1187 = vunpack.c.h.b16 %v1153
  %v1188 = vunpack.c.l.b16 %v1154
  %v1189 = vunpack.c.h.b16 %v1154
  %v1190 = vunpack.c.l.b16 %v1155
  %v1191 = vunpack.c.h.b16 %v1155
  %v1192 = vunpack.c.l.b16 %v1156
  %v1193 = vunpack.c.h.b16 %v1156
  %v1194 = vunpack.c.l.b16 %v1157
  %v1195 = vunpack.c.h.b16 %v1157
  %v1196 = vunpack.c.l.b16 %v1158
  %v1197 = vunpack.c.h.b16 %v1158
  %v1198 = vunpack.c.l.b16 %v1159
  %v1199 = vunpack.c.h.b16 %v1159
  %v1200 = vunpack.c.l.b16 %v1160
  %v1201 = vunpack.c.h.b16 %v1160
  %v1202 = vunpack.c.l.b16 %v1161
  %v1203 = vunpack.c.h.b16 %v1161
  %v1204 = vunpack.c.l.b16 %v1162
  %v1205 = vunpack.c.h.b16 %v1162
  %v1206 = vunpack.c.l.b16 %v1163
  %v1207 = vunpack.c.h.b16 %v1163
  %v1208 = vunpack.c.l.b16 %v1164
  %v1209 = vunpack.c.h.b16 %v1164
  %v1210 = vunpack.c.l.b16 %v1165
  %v1211 = vunpack.c.h.b16 %v1165
  %v1212 = vunpack.c.l.b16 %v1166
  %v1213 = vunpack.c.h.b16 %v1166
  %v1214 = vunpack.c.l.b16 %v1167
  %v1215 = vunpack.c.h.b16 %v1167
  %v1216 = vpack.c.b16 %v1186, %v1184
  %v1217 = vpack.c.b16 %v1187, %v1185
  %v1218 = vpack.c.b16 %v1190, %v1188
  %v1219 = vpack.c.b16 %v1191, %v1189
  %v1220 = vpack.c.b16 %v1194, %v1192
  %v1221 = vpack.c.b16 %v1195, %v1193
  %v1222 = vpack.c.b16 %v1198, %v1196
  %v1223 = vpack.c.b16 %v1199, %v1197
  %v1224 = vpack.c.b16 %v1202, %v1200
  %v1225 = vpack.c.b16 %v1203, %v1201
  %v1226 = vpack.c.b16 %v1206, %v1204
  %v1227 = vpack.c.b16 %v1207, %v1205
  %v1228 = vpack.c.b16 %v1210, %v1208
  %v1229 = vpack.c.b16 %v1211, %v1209
  %v1230 = vpack.c.b16 %v1214, %v1212
  %v1231 = vpack.c.b16 %v1215, %v1213
  %v1241 = vsel %vm297, %v1217, 0
  %v1244 = vsel %vm297, %v1219, 0
  %v1247 = vsel %vm297, %v1221, 0
  %v1250 = vsel %vm297, %v1223, 0
  %v1253 = vsel %vm297, %v1225, 0
  %v1256 = vsel %vm297, %v1227, 0
  %v1259 = vsel %vm297, %v1229, 0
  %v1262 = vsel %vm297, %v1231, 0
  %1264 = vmatprep.subr.bf16.mxu0 %v248
  %1265 = vmatpush1.bf16.msra.mxu0 %v247
  %1266 = vmatprep.subr.bf16.mxu0 %v250
  %1267 = vmatpush1.bf16.msra.mxu0 %v249
  %1268 = vmatprep.subr.bf16.mxu0 %v252
  %1269 = vmatpush1.bf16.msra.mxu0 %v251
  %1270 = vmatprep.subr.bf16.mxu0 %v254
  %1271 = vmatpush1.bf16.msra.mxu0 %v253
  %1272 = vmatprep.subr.bf16.mxu0 %v256
  %1273 = vmatpush1.bf16.msra.mxu0 %v255
  %1274 = vmatprep.subr.bf16.mxu0 %v258
  %1275 = vmatpush1.bf16.msra.mxu0 %v257
  %1276 = vmatprep.subr.bf16.mxu0 %v260
  %1277 = vmatpush1.bf16.msra.mxu0 %v259
  %1278 = vmatprep.subr.bf16.mxu0 %v262
  %1279 = vmatpush1.bf16.msra.mxu0 %v261
  %1280 = vmatprep.subr.bf16.mxu0 %v264
  %1281 = vmatpush1.bf16.msra.mxu0 %v263
  %1282 = vmatprep.subr.bf16.mxu0 %v266
  %1283 = vmatpush1.bf16.msra.mxu0 %v265
  %1284 = vmatprep.subr.bf16.mxu0 %v268
  %1285 = vmatpush1.bf16.msra.mxu0 %v267
  %1286 = vmatprep.subr.bf16.mxu0 %v270
  %1287 = vmatpush1.bf16.msra.mxu0 %v269
  %1288 = vmatprep.subr.bf16.mxu0 %v327
  %1289 = vmatpush1.bf16.msra.mxu0 %v324
  %1290 = vmatprep.subr.bf16.mxu0 0
  %1291 = vmatpush1.bf16.msra.mxu0 0
  %1292 = vmatprep.subr.bf16.mxu0 0
  %1293 = vmatpush1.bf16.msra.mxu0 0
  %1294 = vmatprep.subr.bf16.mxu0 0
  %1295 = vmatpush1.bf16.msra.mxu0 0
  %1296 = vmatprep.mubr.bf16.mxu0 %v1241
  %1297 = vmatmul.mubr.bf16.gmra.mrb[0].mxu0 %v1216
  %v1298 = vpop.f32.mrb[0].mxu0
  %v1299 = vadd.f32 0.0, %v1298
  %v1300 = vpop.f32.mrb[0].mxu0
  %v1301 = vadd.f32 0.0, %v1300
  %v1302 = vpop.f32.mrb[0].mxu0
  %v1303 = vadd.f32 0.0, %v1302
  %v1304 = vpop.f32.mrb[0].mxu0
  %v1305 = vadd.f32 0.0, %v1304
  %1306 = vmatprep.mubr.bf16.mxu0 %v1244
  %1307 = vmatmul.mubr.bf16.gmra.mrb[0].mxu0 %v1218
  %v1308 = vpop.f32.mrb[0].mxu0
  %v1309 = vadd.f32 0.0, %v1308
  %v1310 = vpop.f32.mrb[0].mxu0
  %v1311 = vadd.f32 0.0, %v1310
  %v1312 = vpop.f32.mrb[0].mxu0
  %v1313 = vadd.f32 0.0, %v1312
  %v1314 = vpop.f32.mrb[0].mxu0
  %v1315 = vadd.f32 0.0, %v1314
  %1316 = vmatprep.mubr.bf16.mxu0 %v1247
  %1317 = vmatmul.mubr.bf16.gmra.mrb[0].mxu0 %v1220
  %v1318 = vpop.f32.mrb[0].mxu0
  %v1319 = vadd.f32 0.0, %v1318
  %v1320 = vpop.f32.mrb[0].mxu0
  %v1321 = vadd.f32 0.0, %v1320
  %v1322 = vpop.f32.mrb[0].mxu0
  %v1323 = vadd.f32 0.0, %v1322
  %v1324 = vpop.f32.mrb[0].mxu0
  %v1325 = vadd.f32 0.0, %v1324
  %1326 = vmatprep.mubr.bf16.mxu0 %v1250
  %1327 = vmatmul.mubr.bf16.gmra.mrb[0].mxu0 %v1222
  %v1328 = vpop.f32.mrb[0].mxu0
  %v1329 = vadd.f32 0.0, %v1328
  %v1330 = vpop.f32.mrb[0].mxu0
  %v1331 = vadd.f32 0.0, %v1330
  %v1332 = vpop.f32.mrb[0].mxu0
  %v1333 = vadd.f32 0.0, %v1332
  %v1334 = vpop.f32.mrb[0].mxu0
  %v1335 = vadd.f32 0.0, %v1334
  %1336 = vmatprep.mubr.bf16.mxu0 %v1253
  %1337 = vmatmul.mubr.bf16.gmra.mrb[0].mxu0 %v1224
  %v1338 = vpop.f32.mrb[0].mxu0
  %v1339 = vadd.f32 0.0, %v1338
  %v1340 = vpop.f32.mrb[0].mxu0
  %v1341 = vadd.f32 0.0, %v1340
  %v1342 = vpop.f32.mrb[0].mxu0
  %v1343 = vadd.f32 0.0, %v1342
  %v1344 = vpop.f32.mrb[0].mxu0
  %v1345 = vadd.f32 0.0, %v1344
  %1346 = vmatprep.mubr.bf16.mxu0 %v1256
  %1347 = vmatmul.mubr.bf16.gmra.mrb[0].mxu0 %v1226
  %v1348 = vpop.f32.mrb[0].mxu0
  %v1349 = vadd.f32 0.0, %v1348
  %v1350 = vpop.f32.mrb[0].mxu0
  %v1351 = vadd.f32 0.0, %v1350
  %v1352 = vpop.f32.mrb[0].mxu0
  %v1353 = vadd.f32 0.0, %v1352
  %v1354 = vpop.f32.mrb[0].mxu0
  %v1355 = vadd.f32 0.0, %v1354
  %1356 = vmatprep.mubr.bf16.mxu0 %v1259
  %1357 = vmatmul.mubr.bf16.gmra.mrb[0].mxu0 %v1228
  %v1358 = vpop.f32.mrb[0].mxu0
  %v1359 = vadd.f32 0.0, %v1358
  %v1360 = vpop.f32.mrb[0].mxu0
  %v1361 = vadd.f32 0.0, %v1360
  %v1362 = vpop.f32.mrb[0].mxu0
  %v1363 = vadd.f32 0.0, %v1362
  %v1364 = vpop.f32.mrb[0].mxu0
  %v1365 = vadd.f32 0.0, %v1364
  %1366 = vmatprep.mubr.bf16.mxu0 %v1262
  %1367 = vmatmul.mubr.bf16.gmra.mrb[0].mxu0 %v1230
  %v1368 = vpop.f32.mrb[0].mxu0
  %v1369 = vadd.f32 0.0, %v1368
  %v1370 = vpop.f32.mrb[0].mxu0
  %v1371 = vadd.f32 0.0, %v1370
  %v1372 = vpop.f32.mrb[0].mxu0
  %v1373 = vadd.f32 0.0, %v1372
  %v1374 = vpop.f32.mrb[0].mxu0
  %v1375 = vadd.f32 0.0, %v1374
  %1376 = vdwg.mxu0
  %v1377 = vpack.c.bf16 %v1303, %v1299
  %v1378 = vpack.c.bf16 %v1305, %v1301
  %v1379 = vpack.c.bf16 %v1313, %v1309
  %v1380 = vpack.c.bf16 %v1315, %v1311
  %v1381 = vpack.c.bf16 %v1323, %v1319
  %v1382 = vpack.c.bf16 %v1325, %v1321
  %v1383 = vpack.c.bf16 %v1333, %v1329
  %v1384 = vpack.c.bf16 %v1335, %v1331
  %v1385 = vpack.c.bf16 %v1343, %v1339
  %v1386 = vpack.c.bf16 %v1345, %v1341
  %v1387 = vpack.c.bf16 %v1353, %v1349
  %v1388 = vpack.c.bf16 %v1355, %v1351
  %v1389 = vpack.c.bf16 %v1363, %v1359
  %v1390 = vpack.c.bf16 %v1365, %v1361
  %v1391 = vpack.c.bf16 %v1373, %v1369
  %v1392 = vpack.c.bf16 %v1375, %v1371
  %s1393 = scalar_lea.vmem %s2, 256
  %v1394 = vld [vmem:[%s1393] sm:$0xf]
  %v1395 = vld [vmem:[%s1393 + $0x4] sm:$0xf]
  %v1396 = vld [vmem:[%s1393 + $0x8] sm:$0xf]
  %v1397 = vld [vmem:[%s1393 + $0xc] sm:$0xf]
  %v1398 = vld [vmem:[%s1393 + $0x10] sm:$0xf]
  %v1399 = vld [vmem:[%s1393 + $0x14] sm:$0xf]
  %v1400 = vld [vmem:[%s1393 + $0x18] sm:$0xf]
  %v1401 = vld [vmem:[%s1393 + $0x1c] sm:$0xf]
  %v1402 = vld [vmem:[%s1393 + $0x20] sm:$0xf]
  %v1403 = vld [vmem:[%s1393 + $0x24] sm:$0xf]
  %v1404 = vld [vmem:[%s1393 + $0x28] sm:$0xf]
  %v1405 = vld [vmem:[%s1393 + $0x2c] sm:$0xf]
  %v1406 = vld [vmem:[%s1393 + $0x30] sm:$0xf]
  %v1407 = vld [vmem:[%s1393 + $0x34] sm:$0xf]
  %v1408 = vld [vmem:[%s1393 + $0x38] sm:$0xf]
  %v1409 = vld [vmem:[%s1393 + $0x3c] sm:$0xf]
  %v1410 = vld [vmem:[%s1393 + $0x40] sm:$0xf]
  %v1411 = vld [vmem:[%s1393 + $0x44] sm:$0xf]
  %v1412 = vld [vmem:[%s1393 + $0x48] sm:$0xf]
  %v1413 = vld [vmem:[%s1393 + $0x4c] sm:$0xf]
  %v1414 = vld [vmem:[%s1393 + $0x50] sm:$0xf]
  %v1415 = vld [vmem:[%s1393 + $0x54] sm:$0xf]
  %v1416 = vld [vmem:[%s1393 + $0x58] sm:$0xf]
  %v1417 = vld [vmem:[%s1393 + $0x5c] sm:$0xf]
  %v1418 = vld [vmem:[%s1393 + $0x60] sm:$0xf]
  %v1419 = vld [vmem:[%s1393 + $0x64] sm:$0xf]
  %v1420 = vld [vmem:[%s1393 + $0x68] sm:$0xf]
  %v1421 = vld [vmem:[%s1393 + $0x6c] sm:$0xf]
  %v1422 = vld [vmem:[%s1393 + $0x70] sm:$0xf]
  %v1423 = vld [vmem:[%s1393 + $0x74] sm:$0xf]
  %v1424 = vld [vmem:[%s1393 + $0x78] sm:$0xf]
  %v1425 = vld [vmem:[%s1393 + $0x7c] sm:$0xf]
  %v1458 = vunpack.c.l.b16 %v1394
  %v1459 = vunpack.c.l.b16 %v1395
  %v1460 = vunpack.c.l.b16 %v1396
  %v1461 = vunpack.c.l.b16 %v1397
  %v1462 = vunpack.c.l.b16 %v1398
  %v1463 = vunpack.c.l.b16 %v1399
  %v1464 = vunpack.c.l.b16 %v1400
  %v1465 = vunpack.c.l.b16 %v1401
  %v1466 = vunpack.c.l.b16 %v1402
  %v1467 = vunpack.c.l.b16 %v1403
  %v1468 = vunpack.c.l.b16 %v1404
  %v1469 = vunpack.c.l.b16 %v1405
  %v1470 = vunpack.c.l.b16 %v1406
  %v1471 = vunpack.c.l.b16 %v1407
  %v1472 = vunpack.c.l.b16 %v1408
  %v1473 = vunpack.c.l.b16 %v1409
  %v1474 = vunpack.c.l.b16 %v1410
  %v1475 = vunpack.c.l.b16 %v1411
  %v1476 = vunpack.c.l.b16 %v1412
  %v1477 = vunpack.c.l.b16 %v1413
  %v1478 = vunpack.c.l.b16 %v1414
  %v1479 = vunpack.c.l.b16 %v1415
  %v1480 = vunpack.c.l.b16 %v1416
  %v1481 = vunpack.c.l.b16 %v1417
  %v1482 = vunpack.c.l.b16 %v1418
  %v1483 = vunpack.c.l.b16 %v1419
  %v1484 = vunpack.c.l.b16 %v1420
  %v1485 = vunpack.c.l.b16 %v1421
  %v1486 = vunpack.c.l.b16 %v1422
  %v1487 = vunpack.c.l.b16 %v1423
  %v1488 = vunpack.c.l.b16 %v1424
  %v1489 = vunpack.c.l.b16 %v1425
  %v1490 = vpack.c.b16 %v1459, %v1458
  %v1491 = vpack.c.b16 %v1461, %v1460
  %v1492 = vpack.c.b16 %v1463, %v1462
  %v1493 = vpack.c.b16 %v1465, %v1464
  %v1494 = vpack.c.b16 %v1467, %v1466
  %v1495 = vpack.c.b16 %v1469, %v1468
  %v1496 = vpack.c.b16 %v1471, %v1470
  %v1497 = vpack.c.b16 %v1473, %v1472
  %v1498 = vpack.c.b16 %v1475, %v1474
  %v1499 = vpack.c.b16 %v1477, %v1476
  %v1500 = vpack.c.b16 %v1479, %v1478
  %v1501 = vpack.c.b16 %v1481, %v1480
  %v1502 = vpack.c.b16 %v1483, %v1482
  %v1503 = vpack.c.b16 %v1485, %v1484
  %v1504 = vpack.c.b16 %v1487, %v1486
  %v1505 = vpack.c.b16 %v1489, %v1488
  %1522 = vmatprep.subr.bf16.mxu0 0
  %1523 = vmatpush1.bf16.msra.mxu0 %v1490
  %1524 = vmatprep.subr.bf16.mxu0 0
  %1525 = vmatpush1.bf16.msra.mxu0 %v1491
  %1526 = vmatprep.subr.bf16.mxu0 0
  %1527 = vmatpush1.bf16.msra.mxu0 %v1492
  %1528 = vmatprep.subr.bf16.mxu0 0
  %1529 = vmatpush1.bf16.msra.mxu0 %v1493
  %1530 = vmatprep.subr.bf16.mxu0 0
  %1531 = vmatpush1.bf16.msra.mxu0 %v1494
  %1532 = vmatprep.subr.bf16.mxu0 0
  %1533 = vmatpush1.bf16.msra.mxu0 %v1495
  %1534 = vmatprep.subr.bf16.mxu0 0
  %1535 = vmatpush1.bf16.msra.mxu0 %v1496
  %1536 = vmatprep.subr.bf16.mxu0 0
  %1537 = vmatpush1.bf16.msra.mxu0 %v1497
  %1538 = vmatprep.subr.bf16.mxu0 0
  %1539 = vmatpush1.bf16.msra.mxu0 %v1498
  %1540 = vmatprep.subr.bf16.mxu0 0
  %1541 = vmatpush1.bf16.msra.mxu0 %v1499
  %1542 = vmatprep.subr.bf16.mxu0 0
  %1543 = vmatpush1.bf16.msra.mxu0 %v1500
  %1544 = vmatprep.subr.bf16.mxu0 0
  %1545 = vmatpush1.bf16.msra.mxu0 %v1501
  %1546 = vmatprep.subr.bf16.mxu0 0
  %1547 = vmatpush1.bf16.msra.mxu0 %v1502
  %1548 = vmatprep.subr.bf16.mxu0 0
  %1549 = vmatpush1.bf16.msra.mxu0 %v1503
  %1550 = vmatprep.subr.bf16.mxu0 0
  %1551 = vmatpush1.bf16.msra.mxu0 %v1504
  %1552 = vmatprep.subr.bf16.mxu0 0
  %1553 = vmatpush1.bf16.msra.mxu0 %v1505
  %1554 = vmatprep.mubr.bf16.mxu0 %v1378
  %1555 = vmatmul.mubr.bf16.gmra.mrb[0].mxu0 %v1377
  %v1556 = vpop.f32.mrb[0].mxu0
  %v1557 = vadd.f32 0.0, %v1556
  %v1558 = vpop.f32.mrb[0].mxu0
  %v1559 = vpop.f32.mrb[0].mxu0
  %v1560 = vadd.f32 0.0, %v1559
  %v1561 = vpop.f32.mrb[0].mxu0
  %1562 = vmatprep.mubr.bf16.mxu0 %v1380
  %1563 = vmatmul.mubr.bf16.gmra.mrb[0].mxu0 %v1379
  %v1564 = vpop.f32.mrb[0].mxu0
  %v1565 = vadd.f32 0.0, %v1564
  %v1566 = vpop.f32.mrb[0].mxu0
  %v1567 = vpop.f32.mrb[0].mxu0
  %v1568 = vadd.f32 0.0, %v1567
  %v1569 = vpop.f32.mrb[0].mxu0
  %1570 = vmatprep.mubr.bf16.mxu0 %v1382
  %1571 = vmatmul.mubr.bf16.gmra.mrb[0].mxu0 %v1381
  %v1572 = vpop.f32.mrb[0].mxu0
  %v1573 = vadd.f32 0.0, %v1572
  %v1574 = vpop.f32.mrb[0].mxu0
  %v1575 = vpop.f32.mrb[0].mxu0
  %v1576 = vadd.f32 0.0, %v1575
  %v1577 = vpop.f32.mrb[0].mxu0
  %1578 = vmatprep.mubr.bf16.mxu0 %v1384
  %1579 = vmatmul.mubr.bf16.gmra.mrb[0].mxu0 %v1383
  %v1580 = vpop.f32.mrb[0].mxu0
  %v1581 = vadd.f32 0.0, %v1580
  %v1582 = vpop.f32.mrb[0].mxu0
  %v1583 = vpop.f32.mrb[0].mxu0
  %v1584 = vadd.f32 0.0, %v1583
  %v1585 = vpop.f32.mrb[0].mxu0
  %1586 = vmatprep.mubr.bf16.mxu0 %v1386
  %1587 = vmatmul.mubr.bf16.gmra.mrb[0].mxu0 %v1385
  %v1588 = vpop.f32.mrb[0].mxu0
  %v1589 = vadd.f32 0.0, %v1588
  %v1590 = vpop.f32.mrb[0].mxu0
  %v1591 = vpop.f32.mrb[0].mxu0
  %v1592 = vadd.f32 0.0, %v1591
  %v1593 = vpop.f32.mrb[0].mxu0
  %1594 = vmatprep.mubr.bf16.mxu0 %v1388
  %1595 = vmatmul.mubr.bf16.gmra.mrb[0].mxu0 %v1387
  %v1596 = vpop.f32.mrb[0].mxu0
  %v1597 = vadd.f32 0.0, %v1596
  %v1598 = vpop.f32.mrb[0].mxu0
  %v1599 = vpop.f32.mrb[0].mxu0
  %v1600 = vadd.f32 0.0, %v1599
  %v1601 = vpop.f32.mrb[0].mxu0
  %1602 = vmatprep.mubr.bf16.mxu0 %v1390
  %1603 = vmatmul.mubr.bf16.gmra.mrb[0].mxu0 %v1389
  %v1604 = vpop.f32.mrb[0].mxu0
  %v1605 = vadd.f32 0.0, %v1604
  %v1606 = vpop.f32.mrb[0].mxu0
  %v1607 = vpop.f32.mrb[0].mxu0
  %v1608 = vadd.f32 0.0, %v1607
  %v1609 = vpop.f32.mrb[0].mxu0
  %1610 = vmatprep.mubr.bf16.mxu0 %v1392
  %1611 = vmatmul.mubr.bf16.gmra.mrb[0].mxu0 %v1391
  %v1612 = vpop.f32.mrb[0].mxu0
  %v1613 = vadd.f32 0.0, %v1612
  %v1614 = vpop.f32.mrb[0].mxu0
  %v1615 = vpop.f32.mrb[0].mxu0
  %v1616 = vadd.f32 0.0, %v1615
  %v1617 = vpop.f32.mrb[0].mxu0
  %1618 = vdwg.mxu0
  %v1619 = vadd.f32 %v1089, %v1557
  %v1620 = vadd.f32 %v1092, %v1560
  %v1621 = vadd.f32 %v1097, %v1565
  %v1622 = vadd.f32 %v1100, %v1568
  %v1623 = vadd.f32 %v1105, %v1573
  %v1624 = vadd.f32 %v1108, %v1576
  %v1625 = vadd.f32 %v1113, %v1581
  %v1626 = vadd.f32 %v1116, %v1584
  %v1627 = vadd.f32 %v1121, %v1589
  %v1628 = vadd.f32 %v1124, %v1592
  %v1629 = vadd.f32 %v1129, %v1597
  %v1630 = vadd.f32 %v1132, %v1600
  %v1631 = vadd.f32 %v1137, %v1605
  %v1632 = vadd.f32 %v1140, %v1608
  %v1633 = vadd.f32 %v1145, %v1613
  %v1634 = vadd.f32 %v1148, %v1616
  %s1635 = scalar_lea.vmem %s1, 384
  %v1636 = vld [vmem:[%s1635] sm:$0xff]
  %v1637 = vld [vmem:[%s1635 + $0x8] sm:$0xff]
  %v1638 = vld [vmem:[%s1635 + $0x10] sm:$0xff]
  %v1639 = vld [vmem:[%s1635 + $0x18] sm:$0xff]
  %v1640 = vld [vmem:[%s1635 + $0x20] sm:$0xff]
  %v1641 = vld [vmem:[%s1635 + $0x28] sm:$0xff]
  %v1642 = vld [vmem:[%s1635 + $0x30] sm:$0xff]
  %v1643 = vld [vmem:[%s1635 + $0x38] sm:$0xff]
  %v1644 = vld [vmem:[%s1635 + $0x40] sm:$0xff]
  %v1645 = vld [vmem:[%s1635 + $0x48] sm:$0xff]
  %v1646 = vld [vmem:[%s1635 + $0x50] sm:$0xff]
  %v1647 = vld [vmem:[%s1635 + $0x58] sm:$0xff]
  %v1648 = vld [vmem:[%s1635 + $0x60] sm:$0xff]
  %v1649 = vld [vmem:[%s1635 + $0x68] sm:$0xff]
  %v1650 = vld [vmem:[%s1635 + $0x70] sm:$0xff]
  %v1651 = vld [vmem:[%s1635 + $0x78] sm:$0xff]
  %v1668 = vunpack.c.l.b16 %v1636
  %v1669 = vunpack.c.h.b16 %v1636
  %v1670 = vunpack.c.l.b16 %v1637
  %v1671 = vunpack.c.h.b16 %v1637
  %v1672 = vunpack.c.l.b16 %v1638
  %v1673 = vunpack.c.h.b16 %v1638
  %v1674 = vunpack.c.l.b16 %v1639
  %v1675 = vunpack.c.h.b16 %v1639
  %v1676 = vunpack.c.l.b16 %v1640
  %v1677 = vunpack.c.h.b16 %v1640
  %v1678 = vunpack.c.l.b16 %v1641
  %v1679 = vunpack.c.h.b16 %v1641
  %v1680 = vunpack.c.l.b16 %v1642
  %v1681 = vunpack.c.h.b16 %v1642
  %v1682 = vunpack.c.l.b16 %v1643
  %v1683 = vunpack.c.h.b16 %v1643
  %v1684 = vunpack.c.l.b16 %v1644
  %v1685 = vunpack.c.h.b16 %v1644
  %v1686 = vunpack.c.l.b16 %v1645
  %v1687 = vunpack.c.h.b16 %v1645
  %v1688 = vunpack.c.l.b16 %v1646
  %v1689 = vunpack.c.h.b16 %v1646
  %v1690 = vunpack.c.l.b16 %v1647
  %v1691 = vunpack.c.h.b16 %v1647
  %v1692 = vunpack.c.l.b16 %v1648
  %v1693 = vunpack.c.h.b16 %v1648
  %v1694 = vunpack.c.l.b16 %v1649
  %v1695 = vunpack.c.h.b16 %v1649
  %v1696 = vunpack.c.l.b16 %v1650
  %v1697 = vunpack.c.h.b16 %v1650
  %v1698 = vunpack.c.l.b16 %v1651
  %v1699 = vunpack.c.h.b16 %v1651
  %v1700 = vpack.c.b16 %v1670, %v1668
  %v1701 = vpack.c.b16 %v1671, %v1669
  %v1702 = vpack.c.b16 %v1674, %v1672
  %v1703 = vpack.c.b16 %v1675, %v1673
  %v1704 = vpack.c.b16 %v1678, %v1676
  %v1705 = vpack.c.b16 %v1679, %v1677
  %v1706 = vpack.c.b16 %v1682, %v1680
  %v1707 = vpack.c.b16 %v1683, %v1681
  %v1708 = vpack.c.b16 %v1686, %v1684
  %v1709 = vpack.c.b16 %v1687, %v1685
  %v1710 = vpack.c.b16 %v1690, %v1688
  %v1711 = vpack.c.b16 %v1691, %v1689
  %v1712 = vpack.c.b16 %v1694, %v1692
  %v1713 = vpack.c.b16 %v1695, %v1693
  %v1714 = vpack.c.b16 %v1698, %v1696
  %v1715 = vpack.c.b16 %v1699, %v1697
  %v1725 = vsel %vm297, %v1701, 0
  %v1728 = vsel %vm297, %v1703, 0
  %v1731 = vsel %vm297, %v1705, 0
  %v1734 = vsel %vm297, %v1707, 0
  %v1737 = vsel %vm297, %v1709, 0
  %v1740 = vsel %vm297, %v1711, 0
  %v1743 = vsel %vm297, %v1713, 0
  %v1746 = vsel %vm297, %v1715, 0
  %1748 = vmatprep.subr.bf16.mxu0 %v248
  %1749 = vmatpush1.bf16.msra.mxu0 %v247
  %1750 = vmatprep.subr.bf16.mxu0 %v250
  %1751 = vmatpush1.bf16.msra.mxu0 %v249
  %1752 = vmatprep.subr.bf16.mxu0 %v252
  %1753 = vmatpush1.bf16.msra.mxu0 %v251
  %1754 = vmatprep.subr.bf16.mxu0 %v254
  %1755 = vmatpush1.bf16.msra.mxu0 %v253
  %1756 = vmatprep.subr.bf16.mxu0 %v256
  %1757 = vmatpush1.bf16.msra.mxu0 %v255
  %1758 = vmatprep.subr.bf16.mxu0 %v258
  %1759 = vmatpush1.bf16.msra.mxu0 %v257
  %1760 = vmatprep.subr.bf16.mxu0 %v260
  %1761 = vmatpush1.bf16.msra.mxu0 %v259
  %1762 = vmatprep.subr.bf16.mxu0 %v262
  %1763 = vmatpush1.bf16.msra.mxu0 %v261
  %1764 = vmatprep.subr.bf16.mxu0 %v264
  %1765 = vmatpush1.bf16.msra.mxu0 %v263
  %1766 = vmatprep.subr.bf16.mxu0 %v266
  %1767 = vmatpush1.bf16.msra.mxu0 %v265
  %1768 = vmatprep.subr.bf16.mxu0 %v268
  %1769 = vmatpush1.bf16.msra.mxu0 %v267
  %1770 = vmatprep.subr.bf16.mxu0 %v270
  %1771 = vmatpush1.bf16.msra.mxu0 %v269
  %1772 = vmatprep.subr.bf16.mxu0 %v327
  %1773 = vmatpush1.bf16.msra.mxu0 %v324
  %1774 = vmatprep.subr.bf16.mxu0 0
  %1775 = vmatpush1.bf16.msra.mxu0 0
  %1776 = vmatprep.subr.bf16.mxu0 0
  %1777 = vmatpush1.bf16.msra.mxu0 0
  %1778 = vmatprep.subr.bf16.mxu0 0
  %1779 = vmatpush1.bf16.msra.mxu0 0
  %1780 = vmatprep.mubr.bf16.mxu0 %v1725
  %1781 = vmatmul.mubr.bf16.gmra.mrb[0].mxu0 %v1700
  %v1782 = vpop.f32.mrb[0].mxu0
  %v1783 = vadd.f32 0.0, %v1782
  %v1784 = vpop.f32.mrb[0].mxu0
  %v1785 = vadd.f32 0.0, %v1784
  %v1786 = vpop.f32.mrb[0].mxu0
  %v1787 = vadd.f32 0.0, %v1786
  %v1788 = vpop.f32.mrb[0].mxu0
  %v1789 = vadd.f32 0.0, %v1788
  %1790 = vmatprep.mubr.bf16.mxu0 %v1728
  %1791 = vmatmul.mubr.bf16.gmra.mrb[0].mxu0 %v1702
  %v1792 = vpop.f32.mrb[0].mxu0
  %v1793 = vadd.f32 0.0, %v1792
  %v1794 = vpop.f32.mrb[0].mxu0
  %v1795 = vadd.f32 0.0, %v1794
  %v1796 = vpop.f32.mrb[0].mxu0
  %v1797 = vadd.f32 0.0, %v1796
  %v1798 = vpop.f32.mrb[0].mxu0
  %v1799 = vadd.f32 0.0, %v1798
  %1800 = vmatprep.mubr.bf16.mxu0 %v1731
  %1801 = vmatmul.mubr.bf16.gmra.mrb[0].mxu0 %v1704
  %v1802 = vpop.f32.mrb[0].mxu0
  %v1803 = vadd.f32 0.0, %v1802
  %v1804 = vpop.f32.mrb[0].mxu0
  %v1805 = vadd.f32 0.0, %v1804
  %v1806 = vpop.f32.mrb[0].mxu0
  %v1807 = vadd.f32 0.0, %v1806
  %v1808 = vpop.f32.mrb[0].mxu0
  %v1809 = vadd.f32 0.0, %v1808
  %1810 = vmatprep.mubr.bf16.mxu0 %v1734
  %1811 = vmatmul.mubr.bf16.gmra.mrb[0].mxu0 %v1706
  %v1812 = vpop.f32.mrb[0].mxu0
  %v1813 = vadd.f32 0.0, %v1812
  %v1814 = vpop.f32.mrb[0].mxu0
  %v1815 = vadd.f32 0.0, %v1814
  %v1816 = vpop.f32.mrb[0].mxu0
  %v1817 = vadd.f32 0.0, %v1816
  %v1818 = vpop.f32.mrb[0].mxu0
  %v1819 = vadd.f32 0.0, %v1818
  %1820 = vmatprep.mubr.bf16.mxu0 %v1737
  %1821 = vmatmul.mubr.bf16.gmra.mrb[0].mxu0 %v1708
  %v1822 = vpop.f32.mrb[0].mxu0
  %v1823 = vadd.f32 0.0, %v1822
  %v1824 = vpop.f32.mrb[0].mxu0
  %v1825 = vadd.f32 0.0, %v1824
  %v1826 = vpop.f32.mrb[0].mxu0
  %v1827 = vadd.f32 0.0, %v1826
  %v1828 = vpop.f32.mrb[0].mxu0
  %v1829 = vadd.f32 0.0, %v1828
  %1830 = vmatprep.mubr.bf16.mxu0 %v1740
  %1831 = vmatmul.mubr.bf16.gmra.mrb[0].mxu0 %v1710
  %v1832 = vpop.f32.mrb[0].mxu0
  %v1833 = vadd.f32 0.0, %v1832
  %v1834 = vpop.f32.mrb[0].mxu0
  %v1835 = vadd.f32 0.0, %v1834
  %v1836 = vpop.f32.mrb[0].mxu0
  %v1837 = vadd.f32 0.0, %v1836
  %v1838 = vpop.f32.mrb[0].mxu0
  %v1839 = vadd.f32 0.0, %v1838
  %1840 = vmatprep.mubr.bf16.mxu0 %v1743
  %1841 = vmatmul.mubr.bf16.gmra.mrb[0].mxu0 %v1712
  %v1842 = vpop.f32.mrb[0].mxu0
  %v1843 = vadd.f32 0.0, %v1842
  %v1844 = vpop.f32.mrb[0].mxu0
  %v1845 = vadd.f32 0.0, %v1844
  %v1846 = vpop.f32.mrb[0].mxu0
  %v1847 = vadd.f32 0.0, %v1846
  %v1848 = vpop.f32.mrb[0].mxu0
  %v1849 = vadd.f32 0.0, %v1848
  %1850 = vmatprep.mubr.bf16.mxu0 %v1746
  %1851 = vmatmul.mubr.bf16.gmra.mrb[0].mxu0 %v1714
  %v1852 = vpop.f32.mrb[0].mxu0
  %v1853 = vadd.f32 0.0, %v1852
  %v1854 = vpop.f32.mrb[0].mxu0
  %v1855 = vadd.f32 0.0, %v1854
  %v1856 = vpop.f32.mrb[0].mxu0
  %v1857 = vadd.f32 0.0, %v1856
  %v1858 = vpop.f32.mrb[0].mxu0
  %v1859 = vadd.f32 0.0, %v1858
  %1860 = vdwg.mxu0
  %v1861 = vpack.c.bf16 %v1787, %v1783
  %v1862 = vpack.c.bf16 %v1789, %v1785
  %v1863 = vpack.c.bf16 %v1797, %v1793
  %v1864 = vpack.c.bf16 %v1799, %v1795
  %v1865 = vpack.c.bf16 %v1807, %v1803
  %v1866 = vpack.c.bf16 %v1809, %v1805
  %v1867 = vpack.c.bf16 %v1817, %v1813
  %v1868 = vpack.c.bf16 %v1819, %v1815
  %v1869 = vpack.c.bf16 %v1827, %v1823
  %v1870 = vpack.c.bf16 %v1829, %v1825
  %v1871 = vpack.c.bf16 %v1837, %v1833
  %v1872 = vpack.c.bf16 %v1839, %v1835
  %v1873 = vpack.c.bf16 %v1847, %v1843
  %v1874 = vpack.c.bf16 %v1849, %v1845
  %v1875 = vpack.c.bf16 %v1857, %v1853
  %v1876 = vpack.c.bf16 %v1859, %v1855
  %s1877 = scalar_lea.vmem %s2, 384
  %v1878 = vld [vmem:[%s1877] sm:$0xf]
  %v1879 = vld [vmem:[%s1877 + $0x4] sm:$0xf]
  %v1880 = vld [vmem:[%s1877 + $0x8] sm:$0xf]
  %v1881 = vld [vmem:[%s1877 + $0xc] sm:$0xf]
  %v1882 = vld [vmem:[%s1877 + $0x10] sm:$0xf]
  %v1883 = vld [vmem:[%s1877 + $0x14] sm:$0xf]
  %v1884 = vld [vmem:[%s1877 + $0x18] sm:$0xf]
  %v1885 = vld [vmem:[%s1877 + $0x1c] sm:$0xf]
  %v1886 = vld [vmem:[%s1877 + $0x20] sm:$0xf]
  %v1887 = vld [vmem:[%s1877 + $0x24] sm:$0xf]
  %v1888 = vld [vmem:[%s1877 + $0x28] sm:$0xf]
  %v1889 = vld [vmem:[%s1877 + $0x2c] sm:$0xf]
  %v1890 = vld [vmem:[%s1877 + $0x30] sm:$0xf]
  %v1891 = vld [vmem:[%s1877 + $0x34] sm:$0xf]
  %v1892 = vld [vmem:[%s1877 + $0x38] sm:$0xf]
  %v1893 = vld [vmem:[%s1877 + $0x3c] sm:$0xf]
  %v1894 = vld [vmem:[%s1877 + $0x40] sm:$0xf]
  %v1895 = vld [vmem:[%s1877 + $0x44] sm:$0xf]
  %v1896 = vld [vmem:[%s1877 + $0x48] sm:$0xf]
  %v1897 = vld [vmem:[%s1877 + $0x4c] sm:$0xf]
  %v1898 = vld [vmem:[%s1877 + $0x50] sm:$0xf]
  %v1899 = vld [vmem:[%s1877 + $0x54] sm:$0xf]
  %v1900 = vld [vmem:[%s1877 + $0x58] sm:$0xf]
  %v1901 = vld [vmem:[%s1877 + $0x5c] sm:$0xf]
  %v1902 = vld [vmem:[%s1877 + $0x60] sm:$0xf]
  %v1903 = vld [vmem:[%s1877 + $0x64] sm:$0xf]
  %v1904 = vld [vmem:[%s1877 + $0x68] sm:$0xf]
  %v1905 = vld [vmem:[%s1877 + $0x6c] sm:$0xf]
  %v1906 = vld [vmem:[%s1877 + $0x70] sm:$0xf]
  %v1907 = vld [vmem:[%s1877 + $0x74] sm:$0xf]
  %v1908 = vld [vmem:[%s1877 + $0x78] sm:$0xf]
  %v1909 = vld [vmem:[%s1877 + $0x7c] sm:$0xf]
  %v1942 = vunpack.c.l.b16 %v1878
  %v1943 = vunpack.c.l.b16 %v1879
  %v1944 = vunpack.c.l.b16 %v1880
  %v1945 = vunpack.c.l.b16 %v1881
  %v1946 = vunpack.c.l.b16 %v1882
  %v1947 = vunpack.c.l.b16 %v1883
  %v1948 = vunpack.c.l.b16 %v1884
  %v1949 = vunpack.c.l.b16 %v1885
  %v1950 = vunpack.c.l.b16 %v1886
  %v1951 = vunpack.c.l.b16 %v1887
  %v1952 = vunpack.c.l.b16 %v1888
  %v1953 = vunpack.c.l.b16 %v1889
  %v1954 = vunpack.c.l.b16 %v1890
  %v1955 = vunpack.c.l.b16 %v1891
  %v1956 = vunpack.c.l.b16 %v1892
  %v1957 = vunpack.c.l.b16 %v1893
  %v1958 = vunpack.c.l.b16 %v1894
  %v1959 = vunpack.c.l.b16 %v1895
  %v1960 = vunpack.c.l.b16 %v1896
  %v1961 = vunpack.c.l.b16 %v1897
  %v1962 = vunpack.c.l.b16 %v1898
  %v1963 = vunpack.c.l.b16 %v1899
  %v1964 = vunpack.c.l.b16 %v1900
  %v1965 = vunpack.c.l.b16 %v1901
  %v1966 = vunpack.c.l.b16 %v1902
  %v1967 = vunpack.c.l.b16 %v1903
  %v1968 = vunpack.c.l.b16 %v1904
  %v1969 = vunpack.c.l.b16 %v1905
  %v1970 = vunpack.c.l.b16 %v1906
  %v1971 = vunpack.c.l.b16 %v1907
  %v1972 = vunpack.c.l.b16 %v1908
  %v1973 = vunpack.c.l.b16 %v1909
  %v1974 = vpack.c.b16 %v1943, %v1942
  %v1975 = vpack.c.b16 %v1945, %v1944
  %v1976 = vpack.c.b16 %v1947, %v1946
  %v1977 = vpack.c.b16 %v1949, %v1948
  %v1978 = vpack.c.b16 %v1951, %v1950
  %v1979 = vpack.c.b16 %v1953, %v1952
  %v1980 = vpack.c.b16 %v1955, %v1954
  %v1981 = vpack.c.b16 %v1957, %v1956
  %v1982 = vpack.c.b16 %v1959, %v1958
  %v1983 = vpack.c.b16 %v1961, %v1960
  %v1984 = vpack.c.b16 %v1963, %v1962
  %v1985 = vpack.c.b16 %v1965, %v1964
  %v1986 = vpack.c.b16 %v1967, %v1966
  %v1987 = vpack.c.b16 %v1969, %v1968
  %v1988 = vpack.c.b16 %v1971, %v1970
  %v1989 = vpack.c.b16 %v1973, %v1972
  %2006 = vmatprep.subr.bf16.mxu0 0
  %2007 = vmatpush1.bf16.msra.mxu0 %v1974
  %2008 = vmatprep.subr.bf16.mxu0 0
  %2009 = vmatpush1.bf16.msra.mxu0 %v1975
  %2010 = vmatprep.subr.bf16.mxu0 0
  %2011 = vmatpush1.bf16.msra.mxu0 %v1976
  %2012 = vmatprep.subr.bf16.mxu0 0
  %2013 = vmatpush1.bf16.msra.mxu0 %v1977
  %2014 = vmatprep.subr.bf16.mxu0 0
  %2015 = vmatpush1.bf16.msra.mxu0 %v1978
  %2016 = vmatprep.subr.bf16.mxu0 0
  %2017 = vmatpush1.bf16.msra.mxu0 %v1979
  %2018 = vmatprep.subr.bf16.mxu0 0
  %2019 = vmatpush1.bf16.msra.mxu0 %v1980
  %2020 = vmatprep.subr.bf16.mxu0 0
  %2021 = vmatpush1.bf16.msra.mxu0 %v1981
  %2022 = vmatprep.subr.bf16.mxu0 0
  %2023 = vmatpush1.bf16.msra.mxu0 %v1982
  %2024 = vmatprep.subr.bf16.mxu0 0
  %2025 = vmatpush1.bf16.msra.mxu0 %v1983
  %2026 = vmatprep.subr.bf16.mxu0 0
  %2027 = vmatpush1.bf16.msra.mxu0 %v1984
  %2028 = vmatprep.subr.bf16.mxu0 0
  %2029 = vmatpush1.bf16.msra.mxu0 %v1985
  %2030 = vmatprep.subr.bf16.mxu0 0
  %2031 = vmatpush1.bf16.msra.mxu0 %v1986
  %2032 = vmatprep.subr.bf16.mxu0 0
  %2033 = vmatpush1.bf16.msra.mxu0 %v1987
  %2034 = vmatprep.subr.bf16.mxu0 0
  %2035 = vmatpush1.bf16.msra.mxu0 %v1988
  %2036 = vmatprep.subr.bf16.mxu0 0
  %2037 = vmatpush1.bf16.msra.mxu0 %v1989
  %2038 = vmatprep.mubr.bf16.mxu0 %v1862
  %2039 = vmatmul.mubr.bf16.gmra.mrb[0].mxu0 %v1861
  %v2040 = vpop.f32.mrb[0].mxu0
  %v2041 = vadd.f32 0.0, %v2040
  %v2042 = vpop.f32.mrb[0].mxu0
  %v2043 = vpop.f32.mrb[0].mxu0
  %v2044 = vadd.f32 0.0, %v2043
  %v2045 = vpop.f32.mrb[0].mxu0
  %2046 = vmatprep.mubr.bf16.mxu0 %v1864
  %2047 = vmatmul.mubr.bf16.gmra.mrb[0].mxu0 %v1863
  %v2048 = vpop.f32.mrb[0].mxu0
  %v2049 = vadd.f32 0.0, %v2048
  %v2050 = vpop.f32.mrb[0].mxu0
  %v2051 = vpop.f32.mrb[0].mxu0
  %v2052 = vadd.f32 0.0, %v2051
  %v2053 = vpop.f32.mrb[0].mxu0
  %2054 = vmatprep.mubr.bf16.mxu0 %v1866
  %2055 = vmatmul.mubr.bf16.gmra.mrb[0].mxu0 %v1865
  %v2056 = vpop.f32.mrb[0].mxu0
  %v2057 = vadd.f32 0.0, %v2056
  %v2058 = vpop.f32.mrb[0].mxu0
  %v2059 = vpop.f32.mrb[0].mxu0
  %v2060 = vadd.f32 0.0, %v2059
  %v2061 = vpop.f32.mrb[0].mxu0
  %2062 = vmatprep.mubr.bf16.mxu0 %v1868
  %2063 = vmatmul.mubr.bf16.gmra.mrb[0].mxu0 %v1867
  %v2064 = vpop.f32.mrb[0].mxu0
  %v2065 = vadd.f32 0.0, %v2064
  %v2066 = vpop.f32.mrb[0].mxu0
  %v2067 = vpop.f32.mrb[0].mxu0
  %v2068 = vadd.f32 0.0, %v2067
  %v2069 = vpop.f32.mrb[0].mxu0
  %2070 = vmatprep.mubr.bf16.mxu0 %v1870
  %2071 = vmatmul.mubr.bf16.gmra.mrb[0].mxu0 %v1869
  %v2072 = vpop.f32.mrb[0].mxu0
  %v2073 = vadd.f32 0.0, %v2072
  %v2074 = vpop.f32.mrb[0].mxu0
  %v2075 = vpop.f32.mrb[0].mxu0
  %v2076 = vadd.f32 0.0, %v2075
  %v2077 = vpop.f32.mrb[0].mxu0
  %2078 = vmatprep.mubr.bf16.mxu0 %v1872
  %2079 = vmatmul.mubr.bf16.gmra.mrb[0].mxu0 %v1871
  %v2080 = vpop.f32.mrb[0].mxu0
  %v2081 = vadd.f32 0.0, %v2080
  %v2082 = vpop.f32.mrb[0].mxu0
  %v2083 = vpop.f32.mrb[0].mxu0
  %v2084 = vadd.f32 0.0, %v2083
  %v2085 = vpop.f32.mrb[0].mxu0
  %2086 = vmatprep.mubr.bf16.mxu0 %v1874
  %2087 = vmatmul.mubr.bf16.gmra.mrb[0].mxu0 %v1873
  %v2088 = vpop.f32.mrb[0].mxu0
  %v2089 = vadd.f32 0.0, %v2088
  %v2090 = vpop.f32.mrb[0].mxu0
  %v2091 = vpop.f32.mrb[0].mxu0
  %v2092 = vadd.f32 0.0, %v2091
  %v2093 = vpop.f32.mrb[0].mxu0
  %2094 = vmatprep.mubr.bf16.mxu0 %v1876
  %2095 = vmatmul.mubr.bf16.gmra.mrb[0].mxu0 %v1875
  %v2096 = vpop.f32.mrb[0].mxu0
  %v2097 = vadd.f32 0.0, %v2096
  %v2098 = vpop.f32.mrb[0].mxu0
  %v2099 = vpop.f32.mrb[0].mxu0
  %v2100 = vadd.f32 0.0, %v2099
  %v2101 = vpop.f32.mrb[0].mxu0
  %2102 = vdwg.mxu0
  %v2103 = vadd.f32 %v1619, %v2041
  %v2104 = vadd.f32 %v1620, %v2044
  %v2105 = vadd.f32 %v1621, %v2049
  %v2106 = vadd.f32 %v1622, %v2052
  %v2107 = vadd.f32 %v1623, %v2057
  %v2108 = vadd.f32 %v1624, %v2060
  %v2109 = vadd.f32 %v1625, %v2065
  %v2110 = vadd.f32 %v1626, %v2068
  %v2111 = vadd.f32 %v1627, %v2073
  %v2112 = vadd.f32 %v1628, %v2076
  %v2113 = vadd.f32 %v1629, %v2081
  %v2114 = vadd.f32 %v1630, %v2084
  %v2115 = vadd.f32 %v1631, %v2089
  %v2116 = vadd.f32 %v1632, %v2092
  %v2117 = vadd.f32 %v1633, %v2097
  %v2118 = vadd.f32 %v1634, %v2100
  %s2119 = scalar_lea.vmem %s1, 512
  %v2120 = vld [vmem:[%s2119] sm:$0xff]
  %v2121 = vld [vmem:[%s2119 + $0x8] sm:$0xff]
  %v2122 = vld [vmem:[%s2119 + $0x10] sm:$0xff]
  %v2123 = vld [vmem:[%s2119 + $0x18] sm:$0xff]
  %v2124 = vld [vmem:[%s2119 + $0x20] sm:$0xff]
  %v2125 = vld [vmem:[%s2119 + $0x28] sm:$0xff]
  %v2126 = vld [vmem:[%s2119 + $0x30] sm:$0xff]
  %v2127 = vld [vmem:[%s2119 + $0x38] sm:$0xff]
  %v2128 = vld [vmem:[%s2119 + $0x40] sm:$0xff]
  %v2129 = vld [vmem:[%s2119 + $0x48] sm:$0xff]
  %v2130 = vld [vmem:[%s2119 + $0x50] sm:$0xff]
  %v2131 = vld [vmem:[%s2119 + $0x58] sm:$0xff]
  %v2132 = vld [vmem:[%s2119 + $0x60] sm:$0xff]
  %v2133 = vld [vmem:[%s2119 + $0x68] sm:$0xff]
  %v2134 = vld [vmem:[%s2119 + $0x70] sm:$0xff]
  %v2135 = vld [vmem:[%s2119 + $0x78] sm:$0xff]
  %v2152 = vunpack.c.l.b16 %v2120
  %v2153 = vunpack.c.h.b16 %v2120
  %v2154 = vunpack.c.l.b16 %v2121
  %v2155 = vunpack.c.h.b16 %v2121
  %v2156 = vunpack.c.l.b16 %v2122
  %v2157 = vunpack.c.h.b16 %v2122
  %v2158 = vunpack.c.l.b16 %v2123
  %v2159 = vunpack.c.h.b16 %v2123
  %v2160 = vunpack.c.l.b16 %v2124
  %v2161 = vunpack.c.h.b16 %v2124
  %v2162 = vunpack.c.l.b16 %v2125
  %v2163 = vunpack.c.h.b16 %v2125
  %v2164 = vunpack.c.l.b16 %v2126
  %v2165 = vunpack.c.h.b16 %v2126
  %v2166 = vunpack.c.l.b16 %v2127
  %v2167 = vunpack.c.h.b16 %v2127
  %v2168 = vunpack.c.l.b16 %v2128
  %v2169 = vunpack.c.h.b16 %v2128
  %v2170 = vunpack.c.l.b16 %v2129
  %v2171 = vunpack.c.h.b16 %v2129
  %v2172 = vunpack.c.l.b16 %v2130
  %v2173 = vunpack.c.h.b16 %v2130
  %v2174 = vunpack.c.l.b16 %v2131
  %v2175 = vunpack.c.h.b16 %v2131
  %v2176 = vunpack.c.l.b16 %v2132
  %v2177 = vunpack.c.h.b16 %v2132
  %v2178 = vunpack.c.l.b16 %v2133
  %v2179 = vunpack.c.h.b16 %v2133
  %v2180 = vunpack.c.l.b16 %v2134
  %v2181 = vunpack.c.h.b16 %v2134
  %v2182 = vunpack.c.l.b16 %v2135
  %v2183 = vunpack.c.h.b16 %v2135
  %v2184 = vpack.c.b16 %v2154, %v2152
  %v2185 = vpack.c.b16 %v2155, %v2153
  %v2186 = vpack.c.b16 %v2158, %v2156
  %v2187 = vpack.c.b16 %v2159, %v2157
  %v2188 = vpack.c.b16 %v2162, %v2160
  %v2189 = vpack.c.b16 %v2163, %v2161
  %v2190 = vpack.c.b16 %v2166, %v2164
  %v2191 = vpack.c.b16 %v2167, %v2165
  %v2192 = vpack.c.b16 %v2170, %v2168
  %v2193 = vpack.c.b16 %v2171, %v2169
  %v2194 = vpack.c.b16 %v2174, %v2172
  %v2195 = vpack.c.b16 %v2175, %v2173
  %v2196 = vpack.c.b16 %v2178, %v2176
  %v2197 = vpack.c.b16 %v2179, %v2177
  %v2198 = vpack.c.b16 %v2182, %v2180
  %v2199 = vpack.c.b16 %v2183, %v2181
  %v2209 = vsel %vm297, %v2185, 0
  %v2212 = vsel %vm297, %v2187, 0
  %v2215 = vsel %vm297, %v2189, 0
  %v2218 = vsel %vm297, %v2191, 0
  %v2221 = vsel %vm297, %v2193, 0
  %v2224 = vsel %vm297, %v2195, 0
  %v2227 = vsel %vm297, %v2197, 0
  %v2230 = vsel %vm297, %v2199, 0
  %2232 = vmatprep.subr.bf16.mxu0 %v248
  %2233 = vmatpush1.bf16.msra.mxu0 %v247
  %2234 = vmatprep.subr.bf16.mxu0 %v250
  %2235 = vmatpush1.bf16.msra.mxu0 %v249
  %2236 = vmatprep.subr.bf16.mxu0 %v252
  %2237 = vmatpush1.bf16.msra.mxu0 %v251
  %2238 = vmatprep.subr.bf16.mxu0 %v254
  %2239 = vmatpush1.bf16.msra.mxu0 %v253
  %2240 = vmatprep.subr.bf16.mxu0 %v256
  %2241 = vmatpush1.bf16.msra.mxu0 %v255
  %2242 = vmatprep.subr.bf16.mxu0 %v258
  %2243 = vmatpush1.bf16.msra.mxu0 %v257
  %2244 = vmatprep.subr.bf16.mxu0 %v260
  %2245 = vmatpush1.bf16.msra.mxu0 %v259
  %2246 = vmatprep.subr.bf16.mxu0 %v262
  %2247 = vmatpush1.bf16.msra.mxu0 %v261
  %2248 = vmatprep.subr.bf16.mxu0 %v264
  %2249 = vmatpush1.bf16.msra.mxu0 %v263
  %2250 = vmatprep.subr.bf16.mxu0 %v266
  %2251 = vmatpush1.bf16.msra.mxu0 %v265
  %2252 = vmatprep.subr.bf16.mxu0 %v268
  %2253 = vmatpush1.bf16.msra.mxu0 %v267
  %2254 = vmatprep.subr.bf16.mxu0 %v270
  %2255 = vmatpush1.bf16.msra.mxu0 %v269
  %2256 = vmatprep.subr.bf16.mxu0 %v327
  %2257 = vmatpush1.bf16.msra.mxu0 %v324
  %2258 = vmatprep.subr.bf16.mxu0 0
  %2259 = vmatpush1.bf16.msra.mxu0 0
  %2260 = vmatprep.subr.bf16.mxu0 0
  %2261 = vmatpush1.bf16.msra.mxu0 0
  %2262 = vmatprep.subr.bf16.mxu0 0
  %2263 = vmatpush1.bf16.msra.mxu0 0
  %2264 = vmatprep.mubr.bf16.mxu0 %v2209
  %2265 = vmatmul.mubr.bf16.gmra.mrb[0].mxu0 %v2184
  %v2266 = vpop.f32.mrb[0].mxu0
  %v2267 = vadd.f32 0.0, %v2266
  %v2268 = vpop.f32.mrb[0].mxu0
  %v2269 = vadd.f32 0.0, %v2268
  %v2270 = vpop.f32.mrb[0].mxu0
  %v2271 = vadd.f32 0.0, %v2270
  %v2272 = vpop.f32.mrb[0].mxu0
  %v2273 = vadd.f32 0.0, %v2272
  %2274 = vmatprep.mubr.bf16.mxu0 %v2212
  %2275 = vmatmul.mubr.bf16.gmra.mrb[0].mxu0 %v2186
  %v2276 = vpop.f32.mrb[0].mxu0
  %v2277 = vadd.f32 0.0, %v2276
  %v2278 = vpop.f32.mrb[0].mxu0
  %v2279 = vadd.f32 0.0, %v2278
  %v2280 = vpop.f32.mrb[0].mxu0
  %v2281 = vadd.f32 0.0, %v2280
  %v2282 = vpop.f32.mrb[0].mxu0
  %v2283 = vadd.f32 0.0, %v2282
  %2284 = vmatprep.mubr.bf16.mxu0 %v2215
  %2285 = vmatmul.mubr.bf16.gmra.mrb[0].mxu0 %v2188
  %v2286 = vpop.f32.mrb[0].mxu0
  %v2287 = vadd.f32 0.0, %v2286
  %v2288 = vpop.f32.mrb[0].mxu0
  %v2289 = vadd.f32 0.0, %v2288
  %v2290 = vpop.f32.mrb[0].mxu0
  %v2291 = vadd.f32 0.0, %v2290
  %v2292 = vpop.f32.mrb[0].mxu0
  %v2293 = vadd.f32 0.0, %v2292
  %2294 = vmatprep.mubr.bf16.mxu0 %v2218
  %2295 = vmatmul.mubr.bf16.gmra.mrb[0].mxu0 %v2190
  %v2296 = vpop.f32.mrb[0].mxu0
  %v2297 = vadd.f32 0.0, %v2296
  %v2298 = vpop.f32.mrb[0].mxu0
  %v2299 = vadd.f32 0.0, %v2298
  %v2300 = vpop.f32.mrb[0].mxu0
  %v2301 = vadd.f32 0.0, %v2300
  %v2302 = vpop.f32.mrb[0].mxu0
  %v2303 = vadd.f32 0.0, %v2302
  %2304 = vmatprep.mubr.bf16.mxu0 %v2221
  %2305 = vmatmul.mubr.bf16.gmra.mrb[0].mxu0 %v2192
  %v2306 = vpop.f32.mrb[0].mxu0
  %v2307 = vadd.f32 0.0, %v2306
  %v2308 = vpop.f32.mrb[0].mxu0
  %v2309 = vadd.f32 0.0, %v2308
  %v2310 = vpop.f32.mrb[0].mxu0
  %v2311 = vadd.f32 0.0, %v2310
  %v2312 = vpop.f32.mrb[0].mxu0
  %v2313 = vadd.f32 0.0, %v2312
  %2314 = vmatprep.mubr.bf16.mxu0 %v2224
  %2315 = vmatmul.mubr.bf16.gmra.mrb[0].mxu0 %v2194
  %v2316 = vpop.f32.mrb[0].mxu0
  %v2317 = vadd.f32 0.0, %v2316
  %v2318 = vpop.f32.mrb[0].mxu0
  %v2319 = vadd.f32 0.0, %v2318
  %v2320 = vpop.f32.mrb[0].mxu0
  %v2321 = vadd.f32 0.0, %v2320
  %v2322 = vpop.f32.mrb[0].mxu0
  %v2323 = vadd.f32 0.0, %v2322
  %2324 = vmatprep.mubr.bf16.mxu0 %v2227
  %2325 = vmatmul.mubr.bf16.gmra.mrb[0].mxu0 %v2196
  %v2326 = vpop.f32.mrb[0].mxu0
  %v2327 = vadd.f32 0.0, %v2326
  %v2328 = vpop.f32.mrb[0].mxu0
  %v2329 = vadd.f32 0.0, %v2328
  %v2330 = vpop.f32.mrb[0].mxu0
  %v2331 = vadd.f32 0.0, %v2330
  %v2332 = vpop.f32.mrb[0].mxu0
  %v2333 = vadd.f32 0.0, %v2332
  %2334 = vmatprep.mubr.bf16.mxu0 %v2230
  %2335 = vmatmul.mubr.bf16.gmra.mrb[0].mxu0 %v2198
  %v2336 = vpop.f32.mrb[0].mxu0
  %v2337 = vadd.f32 0.0, %v2336
  %v2338 = vpop.f32.mrb[0].mxu0
  %v2339 = vadd.f32 0.0, %v2338
  %v2340 = vpop.f32.mrb[0].mxu0
  %v2341 = vadd.f32 0.0, %v2340
  %v2342 = vpop.f32.mrb[0].mxu0
  %v2343 = vadd.f32 0.0, %v2342
  %2344 = vdwg.mxu0
  %v2345 = vpack.c.bf16 %v2271, %v2267
  %v2346 = vpack.c.bf16 %v2273, %v2269
  %v2347 = vpack.c.bf16 %v2281, %v2277
  %v2348 = vpack.c.bf16 %v2283, %v2279
  %v2349 = vpack.c.bf16 %v2291, %v2287
  %v2350 = vpack.c.bf16 %v2293, %v2289
  %v2351 = vpack.c.bf16 %v2301, %v2297
  %v2352 = vpack.c.bf16 %v2303, %v2299
  %v2353 = vpack.c.bf16 %v2311, %v2307
  %v2354 = vpack.c.bf16 %v2313, %v2309
  %v2355 = vpack.c.bf16 %v2321, %v2317
  %v2356 = vpack.c.bf16 %v2323, %v2319
  %v2357 = vpack.c.bf16 %v2331, %v2327
  %v2358 = vpack.c.bf16 %v2333, %v2329
  %v2359 = vpack.c.bf16 %v2341, %v2337
  %v2360 = vpack.c.bf16 %v2343, %v2339
  %s2361 = scalar_lea.vmem %s2, 512
  %v2362 = vld [vmem:[%s2361] sm:$0xf]
  %v2363 = vld [vmem:[%s2361 + $0x4] sm:$0xf]
  %v2364 = vld [vmem:[%s2361 + $0x8] sm:$0xf]
  %v2365 = vld [vmem:[%s2361 + $0xc] sm:$0xf]
  %v2366 = vld [vmem:[%s2361 + $0x10] sm:$0xf]
  %v2367 = vld [vmem:[%s2361 + $0x14] sm:$0xf]
  %v2368 = vld [vmem:[%s2361 + $0x18] sm:$0xf]
  %v2369 = vld [vmem:[%s2361 + $0x1c] sm:$0xf]
  %v2370 = vld [vmem:[%s2361 + $0x20] sm:$0xf]
  %v2371 = vld [vmem:[%s2361 + $0x24] sm:$0xf]
  %v2372 = vld [vmem:[%s2361 + $0x28] sm:$0xf]
  %v2373 = vld [vmem:[%s2361 + $0x2c] sm:$0xf]
  %v2374 = vld [vmem:[%s2361 + $0x30] sm:$0xf]
  %v2375 = vld [vmem:[%s2361 + $0x34] sm:$0xf]
  %v2376 = vld [vmem:[%s2361 + $0x38] sm:$0xf]
  %v2377 = vld [vmem:[%s2361 + $0x3c] sm:$0xf]
  %v2378 = vld [vmem:[%s2361 + $0x40] sm:$0xf]
  %v2379 = vld [vmem:[%s2361 + $0x44] sm:$0xf]
  %v2380 = vld [vmem:[%s2361 + $0x48] sm:$0xf]
  %v2381 = vld [vmem:[%s2361 + $0x4c] sm:$0xf]
  %v2382 = vld [vmem:[%s2361 + $0x50] sm:$0xf]
  %v2383 = vld [vmem:[%s2361 + $0x54] sm:$0xf]
  %v2384 = vld [vmem:[%s2361 + $0x58] sm:$0xf]
  %v2385 = vld [vmem:[%s2361 + $0x5c] sm:$0xf]
  %v2386 = vld [vmem:[%s2361 + $0x60] sm:$0xf]
  %v2387 = vld [vmem:[%s2361 + $0x64] sm:$0xf]
  %v2388 = vld [vmem:[%s2361 + $0x68] sm:$0xf]
  %v2389 = vld [vmem:[%s2361 + $0x6c] sm:$0xf]
  %v2390 = vld [vmem:[%s2361 + $0x70] sm:$0xf]
  %v2391 = vld [vmem:[%s2361 + $0x74] sm:$0xf]
  %v2392 = vld [vmem:[%s2361 + $0x78] sm:$0xf]
  %v2393 = vld [vmem:[%s2361 + $0x7c] sm:$0xf]
  %v2426 = vunpack.c.l.b16 %v2362
  %v2427 = vunpack.c.l.b16 %v2363
  %v2428 = vunpack.c.l.b16 %v2364
  %v2429 = vunpack.c.l.b16 %v2365
  %v2430 = vunpack.c.l.b16 %v2366
  %v2431 = vunpack.c.l.b16 %v2367
  %v2432 = vunpack.c.l.b16 %v2368
  %v2433 = vunpack.c.l.b16 %v2369
  %v2434 = vunpack.c.l.b16 %v2370
  %v2435 = vunpack.c.l.b16 %v2371
  %v2436 = vunpack.c.l.b16 %v2372
  %v2437 = vunpack.c.l.b16 %v2373
  %v2438 = vunpack.c.l.b16 %v2374
  %v2439 = vunpack.c.l.b16 %v2375
  %v2440 = vunpack.c.l.b16 %v2376
  %v2441 = vunpack.c.l.b16 %v2377
  %v2442 = vunpack.c.l.b16 %v2378
  %v2443 = vunpack.c.l.b16 %v2379
  %v2444 = vunpack.c.l.b16 %v2380
  %v2445 = vunpack.c.l.b16 %v2381
  %v2446 = vunpack.c.l.b16 %v2382
  %v2447 = vunpack.c.l.b16 %v2383
  %v2448 = vunpack.c.l.b16 %v2384
  %v2449 = vunpack.c.l.b16 %v2385
  %v2450 = vunpack.c.l.b16 %v2386
  %v2451 = vunpack.c.l.b16 %v2387
  %v2452 = vunpack.c.l.b16 %v2388
  %v2453 = vunpack.c.l.b16 %v2389
  %v2454 = vunpack.c.l.b16 %v2390
  %v2455 = vunpack.c.l.b16 %v2391
  %v2456 = vunpack.c.l.b16 %v2392
  %v2457 = vunpack.c.l.b16 %v2393
  %v2458 = vpack.c.b16 %v2427, %v2426
  %v2459 = vpack.c.b16 %v2429, %v2428
  %v2460 = vpack.c.b16 %v2431, %v2430
  %v2461 = vpack.c.b16 %v2433, %v2432
  %v2462 = vpack.c.b16 %v2435, %v2434
  %v2463 = vpack.c.b16 %v2437, %v2436
  %v2464 = vpack.c.b16 %v2439, %v2438
  %v2465 = vpack.c.b16 %v2441, %v2440
  %v2466 = vpack.c.b16 %v2443, %v2442
  %v2467 = vpack.c.b16 %v2445, %v2444
  %v2468 = vpack.c.b16 %v2447, %v2446
  %v2469 = vpack.c.b16 %v2449, %v2448
  %v2470 = vpack.c.b16 %v2451, %v2450
  %v2471 = vpack.c.b16 %v2453, %v2452
  %v2472 = vpack.c.b16 %v2455, %v2454
  %v2473 = vpack.c.b16 %v2457, %v2456
  %2490 = vmatprep.subr.bf16.mxu0 0
  %2491 = vmatpush1.bf16.msra.mxu0 %v2458
  %2492 = vmatprep.subr.bf16.mxu0 0
  %2493 = vmatpush1.bf16.msra.mxu0 %v2459
  %2494 = vmatprep.subr.bf16.mxu0 0
  %2495 = vmatpush1.bf16.msra.mxu0 %v2460
  %2496 = vmatprep.subr.bf16.mxu0 0
  %2497 = vmatpush1.bf16.msra.mxu0 %v2461
  %2498 = vmatprep.subr.bf16.mxu0 0
  %2499 = vmatpush1.bf16.msra.mxu0 %v2462
  %2500 = vmatprep.subr.bf16.mxu0 0
  %2501 = vmatpush1.bf16.msra.mxu0 %v2463
  %2502 = vmatprep.subr.bf16.mxu0 0
  %2503 = vmatpush1.bf16.msra.mxu0 %v2464
  %2504 = vmatprep.subr.bf16.mxu0 0
  %2505 = vmatpush1.bf16.msra.mxu0 %v2465
  %2506 = vmatprep.subr.bf16.mxu0 0
  %2507 = vmatpush1.bf16.msra.mxu0 %v2466
  %2508 = vmatprep.subr.bf16.mxu0 0
  %2509 = vmatpush1.bf16.msra.mxu0 %v2467
  %2510 = vmatprep.subr.bf16.mxu0 0
  %2511 = vmatpush1.bf16.msra.mxu0 %v2468
  %2512 = vmatprep.subr.bf16.mxu0 0
  %2513 = vmatpush1.bf16.msra.mxu0 %v2469
  %2514 = vmatprep.subr.bf16.mxu0 0
  %2515 = vmatpush1.bf16.msra.mxu0 %v2470
  %2516 = vmatprep.subr.bf16.mxu0 0
  %2517 = vmatpush1.bf16.msra.mxu0 %v2471
  %2518 = vmatprep.subr.bf16.mxu0 0
  %2519 = vmatpush1.bf16.msra.mxu0 %v2472
  %2520 = vmatprep.subr.bf16.mxu0 0
  %2521 = vmatpush1.bf16.msra.mxu0 %v2473
  %2522 = vmatprep.mubr.bf16.mxu0 %v2346
  %2523 = vmatmul.mubr.bf16.gmra.mrb[0].mxu0 %v2345
  %v2524 = vpop.f32.mrb[0].mxu0
  %v2525 = vadd.f32 0.0, %v2524
  %v2526 = vpop.f32.mrb[0].mxu0
  %v2527 = vpop.f32.mrb[0].mxu0
  %v2528 = vadd.f32 0.0, %v2527
  %v2529 = vpop.f32.mrb[0].mxu0
  %2530 = vmatprep.mubr.bf16.mxu0 %v2348
  %2531 = vmatmul.mubr.bf16.gmra.mrb[0].mxu0 %v2347
  %v2532 = vpop.f32.mrb[0].mxu0
  %v2533 = vadd.f32 0.0, %v2532
  %v2534 = vpop.f32.mrb[0].mxu0
  %v2535 = vpop.f32.mrb[0].mxu0
  %v2536 = vadd.f32 0.0, %v2535
  %v2537 = vpop.f32.mrb[0].mxu0
  %2538 = vmatprep.mubr.bf16.mxu0 %v2350
  %2539 = vmatmul.mubr.bf16.gmra.mrb[0].mxu0 %v2349
  %v2540 = vpop.f32.mrb[0].mxu0
  %v2541 = vadd.f32 0.0, %v2540
  %v2542 = vpop.f32.mrb[0].mxu0
  %v2543 = vpop.f32.mrb[0].mxu0
  %v2544 = vadd.f32 0.0, %v2543
  %v2545 = vpop.f32.mrb[0].mxu0
  %2546 = vmatprep.mubr.bf16.mxu0 %v2352
  %2547 = vmatmul.mubr.bf16.gmra.mrb[0].mxu0 %v2351
  %v2548 = vpop.f32.mrb[0].mxu0
  %v2549 = vadd.f32 0.0, %v2548
  %v2550 = vpop.f32.mrb[0].mxu0
  %v2551 = vpop.f32.mrb[0].mxu0
  %v2552 = vadd.f32 0.0, %v2551
  %v2553 = vpop.f32.mrb[0].mxu0
  %2554 = vmatprep.mubr.bf16.mxu0 %v2354
  %2555 = vmatmul.mubr.bf16.gmra.mrb[0].mxu0 %v2353
  %v2556 = vpop.f32.mrb[0].mxu0
  %v2557 = vadd.f32 0.0, %v2556
  %v2558 = vpop.f32.mrb[0].mxu0
  %v2559 = vpop.f32.mrb[0].mxu0
  %v2560 = vadd.f32 0.0, %v2559
  %v2561 = vpop.f32.mrb[0].mxu0
  %2562 = vmatprep.mubr.bf16.mxu0 %v2356
  %2563 = vmatmul.mubr.bf16.gmra.mrb[0].mxu0 %v2355
  %v2564 = vpop.f32.mrb[0].mxu0
  %v2565 = vadd.f32 0.0, %v2564
  %v2566 = vpop.f32.mrb[0].mxu0
  %v2567 = vpop.f32.mrb[0].mxu0
  %v2568 = vadd.f32 0.0, %v2567
  %v2569 = vpop.f32.mrb[0].mxu0
  %2570 = vmatprep.mubr.bf16.mxu0 %v2358
  %2571 = vmatmul.mubr.bf16.gmra.mrb[0].mxu0 %v2357
  %v2572 = vpop.f32.mrb[0].mxu0
  %v2573 = vadd.f32 0.0, %v2572
  %v2574 = vpop.f32.mrb[0].mxu0
  %v2575 = vpop.f32.mrb[0].mxu0
  %v2576 = vadd.f32 0.0, %v2575
  %v2577 = vpop.f32.mrb[0].mxu0
  %2578 = vmatprep.mubr.bf16.mxu0 %v2360
  %2579 = vmatmul.mubr.bf16.gmra.mrb[0].mxu0 %v2359
  %v2580 = vpop.f32.mrb[0].mxu0
  %v2581 = vadd.f32 0.0, %v2580
  %v2582 = vpop.f32.mrb[0].mxu0
  %v2583 = vpop.f32.mrb[0].mxu0
  %v2584 = vadd.f32 0.0, %v2583
  %v2585 = vpop.f32.mrb[0].mxu0
  %2586 = vdwg.mxu0
  %v2587 = vadd.f32 %v2103, %v2525
  %v2588 = vadd.f32 %v2104, %v2528
  %v2589 = vadd.f32 %v2105, %v2533
  %v2590 = vadd.f32 %v2106, %v2536
  %v2591 = vadd.f32 %v2107, %v2541
  %v2592 = vadd.f32 %v2108, %v2544
  %v2593 = vadd.f32 %v2109, %v2549
  %v2594 = vadd.f32 %v2110, %v2552
  %v2595 = vadd.f32 %v2111, %v2557
  %v2596 = vadd.f32 %v2112, %v2560
  %v2597 = vadd.f32 %v2113, %v2565
  %v2598 = vadd.f32 %v2114, %v2568
  %v2599 = vadd.f32 %v2115, %v2573
  %v2600 = vadd.f32 %v2116, %v2576
  %v2601 = vadd.f32 %v2117, %v2581
  %v2602 = vadd.f32 %v2118, %v2584
  %s2603 = scalar_lea.vmem %s1, 640
  %v2604 = vld [vmem:[%s2603] sm:$0xff]
  %v2605 = vld [vmem:[%s2603 + $0x8] sm:$0xff]
  %v2606 = vld [vmem:[%s2603 + $0x10] sm:$0xff]
  %v2607 = vld [vmem:[%s2603 + $0x18] sm:$0xff]
  %v2608 = vld [vmem:[%s2603 + $0x20] sm:$0xff]
  %v2609 = vld [vmem:[%s2603 + $0x28] sm:$0xff]
  %v2610 = vld [vmem:[%s2603 + $0x30] sm:$0xff]
  %v2611 = vld [vmem:[%s2603 + $0x38] sm:$0xff]
  %v2612 = vld [vmem:[%s2603 + $0x40] sm:$0xff]
  %v2613 = vld [vmem:[%s2603 + $0x48] sm:$0xff]
  %v2614 = vld [vmem:[%s2603 + $0x50] sm:$0xff]
  %v2615 = vld [vmem:[%s2603 + $0x58] sm:$0xff]
  %v2616 = vld [vmem:[%s2603 + $0x60] sm:$0xff]
  %v2617 = vld [vmem:[%s2603 + $0x68] sm:$0xff]
  %v2618 = vld [vmem:[%s2603 + $0x70] sm:$0xff]
  %v2619 = vld [vmem:[%s2603 + $0x78] sm:$0xff]
  %v2636 = vunpack.c.l.b16 %v2604
  %v2637 = vunpack.c.h.b16 %v2604
  %v2638 = vunpack.c.l.b16 %v2605
  %v2639 = vunpack.c.h.b16 %v2605
  %v2640 = vunpack.c.l.b16 %v2606
  %v2641 = vunpack.c.h.b16 %v2606
  %v2642 = vunpack.c.l.b16 %v2607
  %v2643 = vunpack.c.h.b16 %v2607
  %v2644 = vunpack.c.l.b16 %v2608
  %v2645 = vunpack.c.h.b16 %v2608
  %v2646 = vunpack.c.l.b16 %v2609
  %v2647 = vunpack.c.h.b16 %v2609
  %v2648 = vunpack.c.l.b16 %v2610
  %v2649 = vunpack.c.h.b16 %v2610
  %v2650 = vunpack.c.l.b16 %v2611
  %v2651 = vunpack.c.h.b16 %v2611
  %v2652 = vunpack.c.l.b16 %v2612
  %v2653 = vunpack.c.h.b16 %v2612
  %v2654 = vunpack.c.l.b16 %v2613
  %v2655 = vunpack.c.h.b16 %v2613
  %v2656 = vunpack.c.l.b16 %v2614
  %v2657 = vunpack.c.h.b16 %v2614
  %v2658 = vunpack.c.l.b16 %v2615
  %v2659 = vunpack.c.h.b16 %v2615
  %v2660 = vunpack.c.l.b16 %v2616
  %v2661 = vunpack.c.h.b16 %v2616
  %v2662 = vunpack.c.l.b16 %v2617
  %v2663 = vunpack.c.h.b16 %v2617
  %v2664 = vunpack.c.l.b16 %v2618
  %v2665 = vunpack.c.h.b16 %v2618
  %v2666 = vunpack.c.l.b16 %v2619
  %v2667 = vunpack.c.h.b16 %v2619
  %v2668 = vpack.c.b16 %v2638, %v2636
  %v2669 = vpack.c.b16 %v2639, %v2637
  %v2670 = vpack.c.b16 %v2642, %v2640
  %v2671 = vpack.c.b16 %v2643, %v2641
  %v2672 = vpack.c.b16 %v2646, %v2644
  %v2673 = vpack.c.b16 %v2647, %v2645
  %v2674 = vpack.c.b16 %v2650, %v2648
  %v2675 = vpack.c.b16 %v2651, %v2649
  %v2676 = vpack.c.b16 %v2654, %v2652
  %v2677 = vpack.c.b16 %v2655, %v2653
  %v2678 = vpack.c.b16 %v2658, %v2656
  %v2679 = vpack.c.b16 %v2659, %v2657
  %v2680 = vpack.c.b16 %v2662, %v2660
  %v2681 = vpack.c.b16 %v2663, %v2661
  %v2682 = vpack.c.b16 %v2666, %v2664
  %v2683 = vpack.c.b16 %v2667, %v2665
  %v2693 = vsel %vm297, %v2669, 0
  %v2696 = vsel %vm297, %v2671, 0
  %v2699 = vsel %vm297, %v2673, 0
  %v2702 = vsel %vm297, %v2675, 0
  %v2705 = vsel %vm297, %v2677, 0
  %v2708 = vsel %vm297, %v2679, 0
  %v2711 = vsel %vm297, %v2681, 0
  %v2714 = vsel %vm297, %v2683, 0
  %2716 = vmatprep.subr.bf16.mxu0 %v248
  %2717 = vmatpush1.bf16.msra.mxu0 %v247
  %2718 = vmatprep.subr.bf16.mxu0 %v250
  %2719 = vmatpush1.bf16.msra.mxu0 %v249
  %2720 = vmatprep.subr.bf16.mxu0 %v252
  %2721 = vmatpush1.bf16.msra.mxu0 %v251
  %2722 = vmatprep.subr.bf16.mxu0 %v254
  %2723 = vmatpush1.bf16.msra.mxu0 %v253
  %2724 = vmatprep.subr.bf16.mxu0 %v256
  %2725 = vmatpush1.bf16.msra.mxu0 %v255
  %2726 = vmatprep.subr.bf16.mxu0 %v258
  %2727 = vmatpush1.bf16.msra.mxu0 %v257
  %2728 = vmatprep.subr.bf16.mxu0 %v260
  %2729 = vmatpush1.bf16.msra.mxu0 %v259
  %2730 = vmatprep.subr.bf16.mxu0 %v262
  %2731 = vmatpush1.bf16.msra.mxu0 %v261
  %2732 = vmatprep.subr.bf16.mxu0 %v264
  %2733 = vmatpush1.bf16.msra.mxu0 %v263
  %2734 = vmatprep.subr.bf16.mxu0 %v266
  %2735 = vmatpush1.bf16.msra.mxu0 %v265
  %2736 = vmatprep.subr.bf16.mxu0 %v268
  %2737 = vmatpush1.bf16.msra.mxu0 %v267
  %2738 = vmatprep.subr.bf16.mxu0 %v270
  %2739 = vmatpush1.bf16.msra.mxu0 %v269
  %2740 = vmatprep.subr.bf16.mxu0 %v327
  %2741 = vmatpush1.bf16.msra.mxu0 %v324
  %2742 = vmatprep.subr.bf16.mxu0 0
  %2743 = vmatpush1.bf16.msra.mxu0 0
  %2744 = vmatprep.subr.bf16.mxu0 0
  %2745 = vmatpush1.bf16.msra.mxu0 0
  %2746 = vmatprep.subr.bf16.mxu0 0
  %2747 = vmatpush1.bf16.msra.mxu0 0
  %2748 = vmatprep.mubr.bf16.mxu0 %v2693
  %2749 = vmatmul.mubr.bf16.gmra.mrb[0].mxu0 %v2668
  %v2750 = vpop.f32.mrb[0].mxu0
  %v2751 = vadd.f32 0.0, %v2750
  %v2752 = vpop.f32.mrb[0].mxu0
  %v2753 = vadd.f32 0.0, %v2752
  %v2754 = vpop.f32.mrb[0].mxu0
  %v2755 = vadd.f32 0.0, %v2754
  %v2756 = vpop.f32.mrb[0].mxu0
  %v2757 = vadd.f32 0.0, %v2756
  %2758 = vmatprep.mubr.bf16.mxu0 %v2696
  %2759 = vmatmul.mubr.bf16.gmra.mrb[0].mxu0 %v2670
  %v2760 = vpop.f32.mrb[0].mxu0
  %v2761 = vadd.f32 0.0, %v2760
  %v2762 = vpop.f32.mrb[0].mxu0
  %v2763 = vadd.f32 0.0, %v2762
  %v2764 = vpop.f32.mrb[0].mxu0
  %v2765 = vadd.f32 0.0, %v2764
  %v2766 = vpop.f32.mrb[0].mxu0
  %v2767 = vadd.f32 0.0, %v2766
  %2768 = vmatprep.mubr.bf16.mxu0 %v2699
  %2769 = vmatmul.mubr.bf16.gmra.mrb[0].mxu0 %v2672
  %v2770 = vpop.f32.mrb[0].mxu0
  %v2771 = vadd.f32 0.0, %v2770
  %v2772 = vpop.f32.mrb[0].mxu0
  %v2773 = vadd.f32 0.0, %v2772
  %v2774 = vpop.f32.mrb[0].mxu0
  %v2775 = vadd.f32 0.0, %v2774
  %v2776 = vpop.f32.mrb[0].mxu0
  %v2777 = vadd.f32 0.0, %v2776
  %2778 = vmatprep.mubr.bf16.mxu0 %v2702
  %2779 = vmatmul.mubr.bf16.gmra.mrb[0].mxu0 %v2674
  %v2780 = vpop.f32.mrb[0].mxu0
  %v2781 = vadd.f32 0.0, %v2780
  %v2782 = vpop.f32.mrb[0].mxu0
  %v2783 = vadd.f32 0.0, %v2782
  %v2784 = vpop.f32.mrb[0].mxu0
  %v2785 = vadd.f32 0.0, %v2784
  %v2786 = vpop.f32.mrb[0].mxu0
  %v2787 = vadd.f32 0.0, %v2786
  %2788 = vmatprep.mubr.bf16.mxu0 %v2705
  %2789 = vmatmul.mubr.bf16.gmra.mrb[0].mxu0 %v2676
  %v2790 = vpop.f32.mrb[0].mxu0
  %v2791 = vadd.f32 0.0, %v2790
  %v2792 = vpop.f32.mrb[0].mxu0
  %v2793 = vadd.f32 0.0, %v2792
  %v2794 = vpop.f32.mrb[0].mxu0
  %v2795 = vadd.f32 0.0, %v2794
  %v2796 = vpop.f32.mrb[0].mxu0
  %v2797 = vadd.f32 0.0, %v2796
  %2798 = vmatprep.mubr.bf16.mxu0 %v2708
  %2799 = vmatmul.mubr.bf16.gmra.mrb[0].mxu0 %v2678
  %v2800 = vpop.f32.mrb[0].mxu0
  %v2801 = vadd.f32 0.0, %v2800
  %v2802 = vpop.f32.mrb[0].mxu0
  %v2803 = vadd.f32 0.0, %v2802
  %v2804 = vpop.f32.mrb[0].mxu0
  %v2805 = vadd.f32 0.0, %v2804
  %v2806 = vpop.f32.mrb[0].mxu0
  %v2807 = vadd.f32 0.0, %v2806
  %2808 = vmatprep.mubr.bf16.mxu0 %v2711
  %2809 = vmatmul.mubr.bf16.gmra.mrb[0].mxu0 %v2680
  %v2810 = vpop.f32.mrb[0].mxu0
  %v2811 = vadd.f32 0.0, %v2810
  %v2812 = vpop.f32.mrb[0].mxu0
  %v2813 = vadd.f32 0.0, %v2812
  %v2814 = vpop.f32.mrb[0].mxu0
  %v2815 = vadd.f32 0.0, %v2814
  %v2816 = vpop.f32.mrb[0].mxu0
  %v2817 = vadd.f32 0.0, %v2816
  %2818 = vmatprep.mubr.bf16.mxu0 %v2714
  %2819 = vmatmul.mubr.bf16.gmra.mrb[0].mxu0 %v2682
  %v2820 = vpop.f32.mrb[0].mxu0
  %v2821 = vadd.f32 0.0, %v2820
  %v2822 = vpop.f32.mrb[0].mxu0
  %v2823 = vadd.f32 0.0, %v2822
  %v2824 = vpop.f32.mrb[0].mxu0
  %v2825 = vadd.f32 0.0, %v2824
  %v2826 = vpop.f32.mrb[0].mxu0
  %v2827 = vadd.f32 0.0, %v2826
  %2828 = vdwg.mxu0
  %v2829 = vpack.c.bf16 %v2755, %v2751
  %v2830 = vpack.c.bf16 %v2757, %v2753
  %v2831 = vpack.c.bf16 %v2765, %v2761
  %v2832 = vpack.c.bf16 %v2767, %v2763
  %v2833 = vpack.c.bf16 %v2775, %v2771
  %v2834 = vpack.c.bf16 %v2777, %v2773
  %v2835 = vpack.c.bf16 %v2785, %v2781
  %v2836 = vpack.c.bf16 %v2787, %v2783
  %v2837 = vpack.c.bf16 %v2795, %v2791
  %v2838 = vpack.c.bf16 %v2797, %v2793
  %v2839 = vpack.c.bf16 %v2805, %v2801
  %v2840 = vpack.c.bf16 %v2807, %v2803
  %v2841 = vpack.c.bf16 %v2815, %v2811
  %v2842 = vpack.c.bf16 %v2817, %v2813
  %v2843 = vpack.c.bf16 %v2825, %v2821
  %v2844 = vpack.c.bf16 %v2827, %v2823
  %s2845 = scalar_lea.vmem %s2, 640
  %v2846 = vld [vmem:[%s2845] sm:$0xf]
  %v2847 = vld [vmem:[%s2845 + $0x4] sm:$0xf]
  %v2848 = vld [vmem:[%s2845 + $0x8] sm:$0xf]
  %v2849 = vld [vmem:[%s2845 + $0xc] sm:$0xf]
  %v2850 = vld [vmem:[%s2845 + $0x10] sm:$0xf]
  %v2851 = vld [vmem:[%s2845 + $0x14] sm:$0xf]
  %v2852 = vld [vmem:[%s2845 + $0x18] sm:$0xf]
  %v2853 = vld [vmem:[%s2845 + $0x1c] sm:$0xf]
  %v2854 = vld [vmem:[%s2845 + $0x20] sm:$0xf]
  %v2855 = vld [vmem:[%s2845 + $0x24] sm:$0xf]
  %v2856 = vld [vmem:[%s2845 + $0x28] sm:$0xf]
  %v2857 = vld [vmem:[%s2845 + $0x2c] sm:$0xf]
  %v2858 = vld [vmem:[%s2845 + $0x30] sm:$0xf]
  %v2859 = vld [vmem:[%s2845 + $0x34] sm:$0xf]
  %v2860 = vld [vmem:[%s2845 + $0x38] sm:$0xf]
  %v2861 = vld [vmem:[%s2845 + $0x3c] sm:$0xf]
  %v2862 = vld [vmem:[%s2845 + $0x40] sm:$0xf]
  %v2863 = vld [vmem:[%s2845 + $0x44] sm:$0xf]
  %v2864 = vld [vmem:[%s2845 + $0x48] sm:$0xf]
  %v2865 = vld [vmem:[%s2845 + $0x4c] sm:$0xf]
  %v2866 = vld [vmem:[%s2845 + $0x50] sm:$0xf]
  %v2867 = vld [vmem:[%s2845 + $0x54] sm:$0xf]
  %v2868 = vld [vmem:[%s2845 + $0x58] sm:$0xf]
  %v2869 = vld [vmem:[%s2845 + $0x5c] sm:$0xf]
  %v2870 = vld [vmem:[%s2845 + $0x60] sm:$0xf]
  %v2871 = vld [vmem:[%s2845 + $0x64] sm:$0xf]
  %v2872 = vld [vmem:[%s2845 + $0x68] sm:$0xf]
  %v2873 = vld [vmem:[%s2845 + $0x6c] sm:$0xf]
  %v2874 = vld [vmem:[%s2845 + $0x70] sm:$0xf]
  %v2875 = vld [vmem:[%s2845 + $0x74] sm:$0xf]
  %v2876 = vld [vmem:[%s2845 + $0x78] sm:$0xf]
  %v2877 = vld [vmem:[%s2845 + $0x7c] sm:$0xf]
  %v2910 = vunpack.c.l.b16 %v2846
  %v2911 = vunpack.c.l.b16 %v2847
  %v2912 = vunpack.c.l.b16 %v2848
  %v2913 = vunpack.c.l.b16 %v2849
  %v2914 = vunpack.c.l.b16 %v2850
  %v2915 = vunpack.c.l.b16 %v2851
  %v2916 = vunpack.c.l.b16 %v2852
  %v2917 = vunpack.c.l.b16 %v2853
  %v2918 = vunpack.c.l.b16 %v2854
  %v2919 = vunpack.c.l.b16 %v2855
  %v2920 = vunpack.c.l.b16 %v2856
  %v2921 = vunpack.c.l.b16 %v2857
  %v2922 = vunpack.c.l.b16 %v2858
  %v2923 = vunpack.c.l.b16 %v2859
  %v2924 = vunpack.c.l.b16 %v2860
  %v2925 = vunpack.c.l.b16 %v2861
  %v2926 = vunpack.c.l.b16 %v2862
  %v2927 = vunpack.c.l.b16 %v2863
  %v2928 = vunpack.c.l.b16 %v2864
  %v2929 = vunpack.c.l.b16 %v2865
  %v2930 = vunpack.c.l.b16 %v2866
  %v2931 = vunpack.c.l.b16 %v2867
  %v2932 = vunpack.c.l.b16 %v2868
  %v2933 = vunpack.c.l.b16 %v2869
  %v2934 = vunpack.c.l.b16 %v2870
  %v2935 = vunpack.c.l.b16 %v2871
  %v2936 = vunpack.c.l.b16 %v2872
  %v2937 = vunpack.c.l.b16 %v2873
  %v2938 = vunpack.c.l.b16 %v2874
  %v2939 = vunpack.c.l.b16 %v2875
  %v2940 = vunpack.c.l.b16 %v2876
  %v2941 = vunpack.c.l.b16 %v2877
  %v2942 = vpack.c.b16 %v2911, %v2910
  %v2943 = vpack.c.b16 %v2913, %v2912
  %v2944 = vpack.c.b16 %v2915, %v2914
  %v2945 = vpack.c.b16 %v2917, %v2916
  %v2946 = vpack.c.b16 %v2919, %v2918
  %v2947 = vpack.c.b16 %v2921, %v2920
  %v2948 = vpack.c.b16 %v2923, %v2922
  %v2949 = vpack.c.b16 %v2925, %v2924
  %v2950 = vpack.c.b16 %v2927, %v2926
  %v2951 = vpack.c.b16 %v2929, %v2928
  %v2952 = vpack.c.b16 %v2931, %v2930
  %v2953 = vpack.c.b16 %v2933, %v2932
  %v2954 = vpack.c.b16 %v2935, %v2934
  %v2955 = vpack.c.b16 %v2937, %v2936
  %v2956 = vpack.c.b16 %v2939, %v2938
  %v2957 = vpack.c.b16 %v2941, %v2940
  %2974 = vmatprep.subr.bf16.mxu0 0
  %2975 = vmatpush1.bf16.msra.mxu0 %v2942
  %2976 = vmatprep.subr.bf16.mxu0 0
  %2977 = vmatpush1.bf16.msra.mxu0 %v2943
  %2978 = vmatprep.subr.bf16.mxu0 0
  %2979 = vmatpush1.bf16.msra.mxu0 %v2944
  %2980 = vmatprep.subr.bf16.mxu0 0
  %2981 = vmatpush1.bf16.msra.mxu0 %v2945
  %2982 = vmatprep.subr.bf16.mxu0 0
  %2983 = vmatpush1.bf16.msra.mxu0 %v2946
  %2984 = vmatprep.subr.bf16.mxu0 0
  %2985 = vmatpush1.bf16.msra.mxu0 %v2947
  %2986 = vmatprep.subr.bf16.mxu0 0
  %2987 = vmatpush1.bf16.msra.mxu0 %v2948
  %2988 = vmatprep.subr.bf16.mxu0 0
  %2989 = vmatpush1.bf16.msra.mxu0 %v2949
  %2990 = vmatprep.subr.bf16.mxu0 0
  %2991 = vmatpush1.bf16.msra.mxu0 %v2950
  %2992 = vmatprep.subr.bf16.mxu0 0
  %2993 = vmatpush1.bf16.msra.mxu0 %v2951
  %2994 = vmatprep.subr.bf16.mxu0 0
  %2995 = vmatpush1.bf16.msra.mxu0 %v2952
  %2996 = vmatprep.subr.bf16.mxu0 0
  %2997 = vmatpush1.bf16.msra.mxu0 %v2953
  %2998 = vmatprep.subr.bf16.mxu0 0
  %2999 = vmatpush1.bf16.msra.mxu0 %v2954
  %3000 = vmatprep.subr.bf16.mxu0 0
  %3001 = vmatpush1.bf16.msra.mxu0 %v2955
  %3002 = vmatprep.subr.bf16.mxu0 0
  %3003 = vmatpush1.bf16.msra.mxu0 %v2956
  %3004 = vmatprep.subr.bf16.mxu0 0
  %3005 = vmatpush1.bf16.msra.mxu0 %v2957
  %3006 = vmatprep.mubr.bf16.mxu0 %v2830
  %3007 = vmatmul.mubr.bf16.gmra.mrb[0].mxu0 %v2829
  %v3008 = vpop.f32.mrb[0].mxu0
  %v3009 = vadd.f32 0.0, %v3008
  %v3010 = vpop.f32.mrb[0].mxu0
  %v3011 = vpop.f32.mrb[0].mxu0
  %v3012 = vadd.f32 0.0, %v3011
  %v3013 = vpop.f32.mrb[0].mxu0
  %3014 = vmatprep.mubr.bf16.mxu0 %v2832
  %3015 = vmatmul.mubr.bf16.gmra.mrb[0].mxu0 %v2831
  %v3016 = vpop.f32.mrb[0].mxu0
  %v3017 = vadd.f32 0.0, %v3016
  %v3018 = vpop.f32.mrb[0].mxu0
  %v3019 = vpop.f32.mrb[0].mxu0
  %v3020 = vadd.f32 0.0, %v3019
  %v3021 = vpop.f32.mrb[0].mxu0
  %3022 = vmatprep.mubr.bf16.mxu0 %v2834
  %3023 = vmatmul.mubr.bf16.gmra.mrb[0].mxu0 %v2833
  %v3024 = vpop.f32.mrb[0].mxu0
  %v3025 = vadd.f32 0.0, %v3024
  %v3026 = vpop.f32.mrb[0].mxu0
  %v3027 = vpop.f32.mrb[0].mxu0
  %v3028 = vadd.f32 0.0, %v3027
  %v3029 = vpop.f32.mrb[0].mxu0
  %3030 = vmatprep.mubr.bf16.mxu0 %v2836
  %3031 = vmatmul.mubr.bf16.gmra.mrb[0].mxu0 %v2835
  %v3032 = vpop.f32.mrb[0].mxu0
  %v3033 = vadd.f32 0.0, %v3032
  %v3034 = vpop.f32.mrb[0].mxu0
  %v3035 = vpop.f32.mrb[0].mxu0
  %v3036 = vadd.f32 0.0, %v3035
  %v3037 = vpop.f32.mrb[0].mxu0
  %3038 = vmatprep.mubr.bf16.mxu0 %v2838
  %3039 = vmatmul.mubr.bf16.gmra.mrb[0].mxu0 %v2837
  %v3040 = vpop.f32.mrb[0].mxu0
  %v3041 = vadd.f32 0.0, %v3040
  %v3042 = vpop.f32.mrb[0].mxu0
  %v3043 = vpop.f32.mrb[0].mxu0
  %v3044 = vadd.f32 0.0, %v3043
  %v3045 = vpop.f32.mrb[0].mxu0
  %3046 = vmatprep.mubr.bf16.mxu0 %v2840
  %3047 = vmatmul.mubr.bf16.gmra.mrb[0].mxu0 %v2839
  %v3048 = vpop.f32.mrb[0].mxu0
  %v3049 = vadd.f32 0.0, %v3048
  %v3050 = vpop.f32.mrb[0].mxu0
  %v3051 = vpop.f32.mrb[0].mxu0
  %v3052 = vadd.f32 0.0, %v3051
  %v3053 = vpop.f32.mrb[0].mxu0
  %3054 = vmatprep.mubr.bf16.mxu0 %v2842
  %3055 = vmatmul.mubr.bf16.gmra.mrb[0].mxu0 %v2841
  %v3056 = vpop.f32.mrb[0].mxu0
  %v3057 = vadd.f32 0.0, %v3056
  %v3058 = vpop.f32.mrb[0].mxu0
  %v3059 = vpop.f32.mrb[0].mxu0
  %v3060 = vadd.f32 0.0, %v3059
  %v3061 = vpop.f32.mrb[0].mxu0
  %3062 = vmatprep.mubr.bf16.mxu0 %v2844
  %3063 = vmatmul.mubr.bf16.gmra.mrb[0].mxu0 %v2843
  %v3064 = vpop.f32.mrb[0].mxu0
  %v3065 = vadd.f32 0.0, %v3064
  %v3066 = vpop.f32.mrb[0].mxu0
  %v3067 = vpop.f32.mrb[0].mxu0
  %v3068 = vadd.f32 0.0, %v3067
  %v3069 = vpop.f32.mrb[0].mxu0
  %3070 = vdwg.mxu0
  %v3071 = vadd.f32 %v2587, %v3009
  %v3072 = vadd.f32 %v2588, %v3012
  %v3073 = vadd.f32 %v2589, %v3017
  %v3074 = vadd.f32 %v2590, %v3020
  %v3075 = vadd.f32 %v2591, %v3025
  %v3076 = vadd.f32 %v2592, %v3028
  %v3077 = vadd.f32 %v2593, %v3033
  %v3078 = vadd.f32 %v2594, %v3036
  %v3079 = vadd.f32 %v2595, %v3041
  %v3080 = vadd.f32 %v2596, %v3044
  %v3081 = vadd.f32 %v2597, %v3049
  %v3082 = vadd.f32 %v2598, %v3052
  %v3083 = vadd.f32 %v2599, %v3057
  %v3084 = vadd.f32 %v2600, %v3060
  %v3085 = vadd.f32 %v2601, %v3065
  %v3086 = vadd.f32 %v2602, %v3068
  %s3087 = scalar_lea.vmem %s1, 768
  %v3088 = vld [vmem:[%s3087] sm:$0xff]
  %v3089 = vld [vmem:[%s3087 + $0x8] sm:$0xff]
  %v3090 = vld [vmem:[%s3087 + $0x10] sm:$0xff]
  %v3091 = vld [vmem:[%s3087 + $0x18] sm:$0xff]
  %v3092 = vld [vmem:[%s3087 + $0x20] sm:$0xff]
  %v3093 = vld [vmem:[%s3087 + $0x28] sm:$0xff]
  %v3094 = vld [vmem:[%s3087 + $0x30] sm:$0xff]
  %v3095 = vld [vmem:[%s3087 + $0x38] sm:$0xff]
  %v3096 = vld [vmem:[%s3087 + $0x40] sm:$0xff]
  %v3097 = vld [vmem:[%s3087 + $0x48] sm:$0xff]
  %v3098 = vld [vmem:[%s3087 + $0x50] sm:$0xff]
  %v3099 = vld [vmem:[%s3087 + $0x58] sm:$0xff]
  %v3100 = vld [vmem:[%s3087 + $0x60] sm:$0xff]
  %v3101 = vld [vmem:[%s3087 + $0x68] sm:$0xff]
  %v3102 = vld [vmem:[%s3087 + $0x70] sm:$0xff]
  %v3103 = vld [vmem:[%s3087 + $0x78] sm:$0xff]
  %v3120 = vunpack.c.l.b16 %v3088
  %v3121 = vunpack.c.h.b16 %v3088
  %v3122 = vunpack.c.l.b16 %v3089
  %v3123 = vunpack.c.h.b16 %v3089
  %v3124 = vunpack.c.l.b16 %v3090
  %v3125 = vunpack.c.h.b16 %v3090
  %v3126 = vunpack.c.l.b16 %v3091
  %v3127 = vunpack.c.h.b16 %v3091
  %v3128 = vunpack.c.l.b16 %v3092
  %v3129 = vunpack.c.h.b16 %v3092
  %v3130 = vunpack.c.l.b16 %v3093
  %v3131 = vunpack.c.h.b16 %v3093
  %v3132 = vunpack.c.l.b16 %v3094
  %v3133 = vunpack.c.h.b16 %v3094
  %v3134 = vunpack.c.l.b16 %v3095
  %v3135 = vunpack.c.h.b16 %v3095
  %v3136 = vunpack.c.l.b16 %v3096
  %v3137 = vunpack.c.h.b16 %v3096
  %v3138 = vunpack.c.l.b16 %v3097
  %v3139 = vunpack.c.h.b16 %v3097
  %v3140 = vunpack.c.l.b16 %v3098
  %v3141 = vunpack.c.h.b16 %v3098
  %v3142 = vunpack.c.l.b16 %v3099
  %v3143 = vunpack.c.h.b16 %v3099
  %v3144 = vunpack.c.l.b16 %v3100
  %v3145 = vunpack.c.h.b16 %v3100
  %v3146 = vunpack.c.l.b16 %v3101
  %v3147 = vunpack.c.h.b16 %v3101
  %v3148 = vunpack.c.l.b16 %v3102
  %v3149 = vunpack.c.h.b16 %v3102
  %v3150 = vunpack.c.l.b16 %v3103
  %v3151 = vunpack.c.h.b16 %v3103
  %v3152 = vpack.c.b16 %v3122, %v3120
  %v3153 = vpack.c.b16 %v3123, %v3121
  %v3154 = vpack.c.b16 %v3126, %v3124
  %v3155 = vpack.c.b16 %v3127, %v3125
  %v3156 = vpack.c.b16 %v3130, %v3128
  %v3157 = vpack.c.b16 %v3131, %v3129
  %v3158 = vpack.c.b16 %v3134, %v3132
  %v3159 = vpack.c.b16 %v3135, %v3133
  %v3160 = vpack.c.b16 %v3138, %v3136
  %v3161 = vpack.c.b16 %v3139, %v3137
  %v3162 = vpack.c.b16 %v3142, %v3140
  %v3163 = vpack.c.b16 %v3143, %v3141
  %v3164 = vpack.c.b16 %v3146, %v3144
  %v3165 = vpack.c.b16 %v3147, %v3145
  %v3166 = vpack.c.b16 %v3150, %v3148
  %v3167 = vpack.c.b16 %v3151, %v3149
  %v3177 = vsel %vm297, %v3153, 0
  %v3180 = vsel %vm297, %v3155, 0
  %v3183 = vsel %vm297, %v3157, 0
  %v3186 = vsel %vm297, %v3159, 0
  %v3189 = vsel %vm297, %v3161, 0
  %v3192 = vsel %vm297, %v3163, 0
  %v3195 = vsel %vm297, %v3165, 0
  %v3198 = vsel %vm297, %v3167, 0
  %3200 = vmatprep.subr.bf16.mxu0 %v248
  %3201 = vmatpush1.bf16.msra.mxu0 %v247
  %3202 = vmatprep.subr.bf16.mxu0 %v250
  %3203 = vmatpush1.bf16.msra.mxu0 %v249
  %3204 = vmatprep.subr.bf16.mxu0 %v252
  %3205 = vmatpush1.bf16.msra.mxu0 %v251
  %3206 = vmatprep.subr.bf16.mxu0 %v254
  %3207 = vmatpush1.bf16.msra.mxu0 %v253
  %3208 = vmatprep.subr.bf16.mxu0 %v256
  %3209 = vmatpush1.bf16.msra.mxu0 %v255
  %3210 = vmatprep.subr.bf16.mxu0 %v258
  %3211 = vmatpush1.bf16.msra.mxu0 %v257
  %3212 = vmatprep.subr.bf16.mxu0 %v260
  %3213 = vmatpush1.bf16.msra.mxu0 %v259
  %3214 = vmatprep.subr.bf16.mxu0 %v262
  %3215 = vmatpush1.bf16.msra.mxu0 %v261
  %3216 = vmatprep.subr.bf16.mxu0 %v264
  %3217 = vmatpush1.bf16.msra.mxu0 %v263
  %3218 = vmatprep.subr.bf16.mxu0 %v266
  %3219 = vmatpush1.bf16.msra.mxu0 %v265
  %3220 = vmatprep.subr.bf16.mxu0 %v268
  %3221 = vmatpush1.bf16.msra.mxu0 %v267
  %3222 = vmatprep.subr.bf16.mxu0 %v270
  %3223 = vmatpush1.bf16.msra.mxu0 %v269
  %3224 = vmatprep.subr.bf16.mxu0 %v327
  %3225 = vmatpush1.bf16.msra.mxu0 %v324
  %3226 = vmatprep.subr.bf16.mxu0 0
  %3227 = vmatpush1.bf16.msra.mxu0 0
  %3228 = vmatprep.subr.bf16.mxu0 0
  %3229 = vmatpush1.bf16.msra.mxu0 0
  %3230 = vmatprep.subr.bf16.mxu0 0
  %3231 = vmatpush1.bf16.msra.mxu0 0
  %3232 = vmatprep.mubr.bf16.mxu0 %v3177
  %3233 = vmatmul.mubr.bf16.gmra.mrb[0].mxu0 %v3152
  %v3234 = vpop.f32.mrb[0].mxu0
  %v3235 = vadd.f32 0.0, %v3234
  %v3236 = vpop.f32.mrb[0].mxu0
  %v3237 = vadd.f32 0.0, %v3236
  %v3238 = vpop.f32.mrb[0].mxu0
  %v3239 = vadd.f32 0.0, %v3238
  %v3240 = vpop.f32.mrb[0].mxu0
  %v3241 = vadd.f32 0.0, %v3240
  %3242 = vmatprep.mubr.bf16.mxu0 %v3180
  %3243 = vmatmul.mubr.bf16.gmra.mrb[0].mxu0 %v3154
  %v3244 = vpop.f32.mrb[0].mxu0
  %v3245 = vadd.f32 0.0, %v3244
  %v3246 = vpop.f32.mrb[0].mxu0
  %v3247 = vadd.f32 0.0, %v3246
  %v3248 = vpop.f32.mrb[0].mxu0
  %v3249 = vadd.f32 0.0, %v3248
  %v3250 = vpop.f32.mrb[0].mxu0
  %v3251 = vadd.f32 0.0, %v3250
  %3252 = vmatprep.mubr.bf16.mxu0 %v3183
  %3253 = vmatmul.mubr.bf16.gmra.mrb[0].mxu0 %v3156
  %v3254 = vpop.f32.mrb[0].mxu0
  %v3255 = vadd.f32 0.0, %v3254
  %v3256 = vpop.f32.mrb[0].mxu0
  %v3257 = vadd.f32 0.0, %v3256
  %v3258 = vpop.f32.mrb[0].mxu0
  %v3259 = vadd.f32 0.0, %v3258
  %v3260 = vpop.f32.mrb[0].mxu0
  %v3261 = vadd.f32 0.0, %v3260
  %3262 = vmatprep.mubr.bf16.mxu0 %v3186
  %3263 = vmatmul.mubr.bf16.gmra.mrb[0].mxu0 %v3158
  %v3264 = vpop.f32.mrb[0].mxu0
  %v3265 = vadd.f32 0.0, %v3264
  %v3266 = vpop.f32.mrb[0].mxu0
  %v3267 = vadd.f32 0.0, %v3266
  %v3268 = vpop.f32.mrb[0].mxu0
  %v3269 = vadd.f32 0.0, %v3268
  %v3270 = vpop.f32.mrb[0].mxu0
  %v3271 = vadd.f32 0.0, %v3270
  %3272 = vmatprep.mubr.bf16.mxu0 %v3189
  %3273 = vmatmul.mubr.bf16.gmra.mrb[0].mxu0 %v3160
  %v3274 = vpop.f32.mrb[0].mxu0
  %v3275 = vadd.f32 0.0, %v3274
  %v3276 = vpop.f32.mrb[0].mxu0
  %v3277 = vadd.f32 0.0, %v3276
  %v3278 = vpop.f32.mrb[0].mxu0
  %v3279 = vadd.f32 0.0, %v3278
  %v3280 = vpop.f32.mrb[0].mxu0
  %v3281 = vadd.f32 0.0, %v3280
  %3282 = vmatprep.mubr.bf16.mxu0 %v3192
  %3283 = vmatmul.mubr.bf16.gmra.mrb[0].mxu0 %v3162
  %v3284 = vpop.f32.mrb[0].mxu0
  %v3285 = vadd.f32 0.0, %v3284
  %v3286 = vpop.f32.mrb[0].mxu0
  %v3287 = vadd.f32 0.0, %v3286
  %v3288 = vpop.f32.mrb[0].mxu0
  %v3289 = vadd.f32 0.0, %v3288
  %v3290 = vpop.f32.mrb[0].mxu0
  %v3291 = vadd.f32 0.0, %v3290
  %3292 = vmatprep.mubr.bf16.mxu0 %v3195
  %3293 = vmatmul.mubr.bf16.gmra.mrb[0].mxu0 %v3164
  %v3294 = vpop.f32.mrb[0].mxu0
  %v3295 = vadd.f32 0.0, %v3294
  %v3296 = vpop.f32.mrb[0].mxu0
  %v3297 = vadd.f32 0.0, %v3296
  %v3298 = vpop.f32.mrb[0].mxu0
  %v3299 = vadd.f32 0.0, %v3298
  %v3300 = vpop.f32.mrb[0].mxu0
  %v3301 = vadd.f32 0.0, %v3300
  %3302 = vmatprep.mubr.bf16.mxu0 %v3198
  %3303 = vmatmul.mubr.bf16.gmra.mrb[0].mxu0 %v3166
  %v3304 = vpop.f32.mrb[0].mxu0
  %v3305 = vadd.f32 0.0, %v3304
  %v3306 = vpop.f32.mrb[0].mxu0
  %v3307 = vadd.f32 0.0, %v3306
  %v3308 = vpop.f32.mrb[0].mxu0
  %v3309 = vadd.f32 0.0, %v3308
  %v3310 = vpop.f32.mrb[0].mxu0
  %v3311 = vadd.f32 0.0, %v3310
  %3312 = vdwg.mxu0
  %v3313 = vpack.c.bf16 %v3239, %v3235
  %v3314 = vpack.c.bf16 %v3241, %v3237
  %v3315 = vpack.c.bf16 %v3249, %v3245
  %v3316 = vpack.c.bf16 %v3251, %v3247
  %v3317 = vpack.c.bf16 %v3259, %v3255
  %v3318 = vpack.c.bf16 %v3261, %v3257
  %v3319 = vpack.c.bf16 %v3269, %v3265
  %v3320 = vpack.c.bf16 %v3271, %v3267
  %v3321 = vpack.c.bf16 %v3279, %v3275
  %v3322 = vpack.c.bf16 %v3281, %v3277
  %v3323 = vpack.c.bf16 %v3289, %v3285
  %v3324 = vpack.c.bf16 %v3291, %v3287
  %v3325 = vpack.c.bf16 %v3299, %v3295
  %v3326 = vpack.c.bf16 %v3301, %v3297
  %v3327 = vpack.c.bf16 %v3309, %v3305
  %v3328 = vpack.c.bf16 %v3311, %v3307
  %s3329 = scalar_lea.vmem %s2, 768
  %v3330 = vld [vmem:[%s3329] sm:$0xf]
  %v3331 = vld [vmem:[%s3329 + $0x4] sm:$0xf]
  %v3332 = vld [vmem:[%s3329 + $0x8] sm:$0xf]
  %v3333 = vld [vmem:[%s3329 + $0xc] sm:$0xf]
  %v3334 = vld [vmem:[%s3329 + $0x10] sm:$0xf]
  %v3335 = vld [vmem:[%s3329 + $0x14] sm:$0xf]
  %v3336 = vld [vmem:[%s3329 + $0x18] sm:$0xf]
  %v3337 = vld [vmem:[%s3329 + $0x1c] sm:$0xf]
  %v3338 = vld [vmem:[%s3329 + $0x20] sm:$0xf]
  %v3339 = vld [vmem:[%s3329 + $0x24] sm:$0xf]
  %v3340 = vld [vmem:[%s3329 + $0x28] sm:$0xf]
  %v3341 = vld [vmem:[%s3329 + $0x2c] sm:$0xf]
  %v3342 = vld [vmem:[%s3329 + $0x30] sm:$0xf]
  %v3343 = vld [vmem:[%s3329 + $0x34] sm:$0xf]
  %v3344 = vld [vmem:[%s3329 + $0x38] sm:$0xf]
  %v3345 = vld [vmem:[%s3329 + $0x3c] sm:$0xf]
  %v3346 = vld [vmem:[%s3329 + $0x40] sm:$0xf]
  %v3347 = vld [vmem:[%s3329 + $0x44] sm:$0xf]
  %v3348 = vld [vmem:[%s3329 + $0x48] sm:$0xf]
  %v3349 = vld [vmem:[%s3329 + $0x4c] sm:$0xf]
  %v3350 = vld [vmem:[%s3329 + $0x50] sm:$0xf]
  %v3351 = vld [vmem:[%s3329 + $0x54] sm:$0xf]
  %v3352 = vld [vmem:[%s3329 + $0x58] sm:$0xf]
  %v3353 = vld [vmem:[%s3329 + $0x5c] sm:$0xf]
  %v3354 = vld [vmem:[%s3329 + $0x60] sm:$0xf]
  %v3355 = vld [vmem:[%s3329 + $0x64] sm:$0xf]
  %v3356 = vld [vmem:[%s3329 + $0x68] sm:$0xf]
  %v3357 = vld [vmem:[%s3329 + $0x6c] sm:$0xf]
  %v3358 = vld [vmem:[%s3329 + $0x70] sm:$0xf]
  %v3359 = vld [vmem:[%s3329 + $0x74] sm:$0xf]
  %v3360 = vld [vmem:[%s3329 + $0x78] sm:$0xf]
  %v3361 = vld [vmem:[%s3329 + $0x7c] sm:$0xf]
  %v3394 = vunpack.c.l.b16 %v3330
  %v3395 = vunpack.c.l.b16 %v3331
  %v3396 = vunpack.c.l.b16 %v3332
  %v3397 = vunpack.c.l.b16 %v3333
  %v3398 = vunpack.c.l.b16 %v3334
  %v3399 = vunpack.c.l.b16 %v3335
  %v3400 = vunpack.c.l.b16 %v3336
  %v3401 = vunpack.c.l.b16 %v3337
  %v3402 = vunpack.c.l.b16 %v3338
  %v3403 = vunpack.c.l.b16 %v3339
  %v3404 = vunpack.c.l.b16 %v3340
  %v3405 = vunpack.c.l.b16 %v3341
  %v3406 = vunpack.c.l.b16 %v3342
  %v3407 = vunpack.c.l.b16 %v3343
  %v3408 = vunpack.c.l.b16 %v3344
  %v3409 = vunpack.c.l.b16 %v3345
  %v3410 = vunpack.c.l.b16 %v3346
  %v3411 = vunpack.c.l.b16 %v3347
  %v3412 = vunpack.c.l.b16 %v3348
  %v3413 = vunpack.c.l.b16 %v3349
  %v3414 = vunpack.c.l.b16 %v3350
  %v3415 = vunpack.c.l.b16 %v3351
  %v3416 = vunpack.c.l.b16 %v3352
  %v3417 = vunpack.c.l.b16 %v3353
  %v3418 = vunpack.c.l.b16 %v3354
  %v3419 = vunpack.c.l.b16 %v3355
  %v3420 = vunpack.c.l.b16 %v3356
  %v3421 = vunpack.c.l.b16 %v3357
  %v3422 = vunpack.c.l.b16 %v3358
  %v3423 = vunpack.c.l.b16 %v3359
  %v3424 = vunpack.c.l.b16 %v3360
  %v3425 = vunpack.c.l.b16 %v3361
  %v3426 = vpack.c.b16 %v3395, %v3394
  %v3427 = vpack.c.b16 %v3397, %v3396
  %v3428 = vpack.c.b16 %v3399, %v3398
  %v3429 = vpack.c.b16 %v3401, %v3400
  %v3430 = vpack.c.b16 %v3403, %v3402
  %v3431 = vpack.c.b16 %v3405, %v3404
  %v3432 = vpack.c.b16 %v3407, %v3406
  %v3433 = vpack.c.b16 %v3409, %v3408
  %v3434 = vpack.c.b16 %v3411, %v3410
  %v3435 = vpack.c.b16 %v3413, %v3412
  %v3436 = vpack.c.b16 %v3415, %v3414
  %v3437 = vpack.c.b16 %v3417, %v3416
  %v3438 = vpack.c.b16 %v3419, %v3418
  %v3439 = vpack.c.b16 %v3421, %v3420
  %v3440 = vpack.c.b16 %v3423, %v3422
  %v3441 = vpack.c.b16 %v3425, %v3424
  %3458 = vmatprep.subr.bf16.mxu0 0
  %3459 = vmatpush1.bf16.msra.mxu0 %v3426
  %3460 = vmatprep.subr.bf16.mxu0 0
  %3461 = vmatpush1.bf16.msra.mxu0 %v3427
  %3462 = vmatprep.subr.bf16.mxu0 0
  %3463 = vmatpush1.bf16.msra.mxu0 %v3428
  %3464 = vmatprep.subr.bf16.mxu0 0
  %3465 = vmatpush1.bf16.msra.mxu0 %v3429
  %3466 = vmatprep.subr.bf16.mxu0 0
  %3467 = vmatpush1.bf16.msra.mxu0 %v3430
  %3468 = vmatprep.subr.bf16.mxu0 0
  %3469 = vmatpush1.bf16.msra.mxu0 %v3431
  %3470 = vmatprep.subr.bf16.mxu0 0
  %3471 = vmatpush1.bf16.msra.mxu0 %v3432
  %3472 = vmatprep.subr.bf16.mxu0 0
  %3473 = vmatpush1.bf16.msra.mxu0 %v3433
  %3474 = vmatprep.subr.bf16.mxu0 0
  %3475 = vmatpush1.bf16.msra.mxu0 %v3434
  %3476 = vmatprep.subr.bf16.mxu0 0
  %3477 = vmatpush1.bf16.msra.mxu0 %v3435
  %3478 = vmatprep.subr.bf16.mxu0 0
  %3479 = vmatpush1.bf16.msra.mxu0 %v3436
  %3480 = vmatprep.subr.bf16.mxu0 0
  %3481 = vmatpush1.bf16.msra.mxu0 %v3437
  %3482 = vmatprep.subr.bf16.mxu0 0
  %3483 = vmatpush1.bf16.msra.mxu0 %v3438
  %3484 = vmatprep.subr.bf16.mxu0 0
  %3485 = vmatpush1.bf16.msra.mxu0 %v3439
  %3486 = vmatprep.subr.bf16.mxu0 0
  %3487 = vmatpush1.bf16.msra.mxu0 %v3440
  %3488 = vmatprep.subr.bf16.mxu0 0
  %3489 = vmatpush1.bf16.msra.mxu0 %v3441
  %3490 = vmatprep.mubr.bf16.mxu0 %v3314
  %3491 = vmatmul.mubr.bf16.gmra.mrb[0].mxu0 %v3313
  %v3492 = vpop.f32.mrb[0].mxu0
  %v3493 = vadd.f32 0.0, %v3492
  %v3494 = vpop.f32.mrb[0].mxu0
  %v3495 = vpop.f32.mrb[0].mxu0
  %v3496 = vadd.f32 0.0, %v3495
  %v3497 = vpop.f32.mrb[0].mxu0
  %3498 = vmatprep.mubr.bf16.mxu0 %v3316
  %3499 = vmatmul.mubr.bf16.gmra.mrb[0].mxu0 %v3315
  %v3500 = vpop.f32.mrb[0].mxu0
  %v3501 = vadd.f32 0.0, %v3500
  %v3502 = vpop.f32.mrb[0].mxu0
  %v3503 = vpop.f32.mrb[0].mxu0
  %v3504 = vadd.f32 0.0, %v3503
  %v3505 = vpop.f32.mrb[0].mxu0
  %3506 = vmatprep.mubr.bf16.mxu0 %v3318
  %3507 = vmatmul.mubr.bf16.gmra.mrb[0].mxu0 %v3317
  %v3508 = vpop.f32.mrb[0].mxu0
  %v3509 = vadd.f32 0.0, %v3508
  %v3510 = vpop.f32.mrb[0].mxu0
  %v3511 = vpop.f32.mrb[0].mxu0
  %v3512 = vadd.f32 0.0, %v3511
  %v3513 = vpop.f32.mrb[0].mxu0
  %3514 = vmatprep.mubr.bf16.mxu0 %v3320
  %3515 = vmatmul.mubr.bf16.gmra.mrb[0].mxu0 %v3319
  %v3516 = vpop.f32.mrb[0].mxu0
  %v3517 = vadd.f32 0.0, %v3516
  %v3518 = vpop.f32.mrb[0].mxu0
  %v3519 = vpop.f32.mrb[0].mxu0
  %v3520 = vadd.f32 0.0, %v3519
  %v3521 = vpop.f32.mrb[0].mxu0
  %3522 = vmatprep.mubr.bf16.mxu0 %v3322
  %3523 = vmatmul.mubr.bf16.gmra.mrb[0].mxu0 %v3321
  %v3524 = vpop.f32.mrb[0].mxu0
  %v3525 = vadd.f32 0.0, %v3524
  %v3526 = vpop.f32.mrb[0].mxu0
  %v3527 = vpop.f32.mrb[0].mxu0
  %v3528 = vadd.f32 0.0, %v3527
  %v3529 = vpop.f32.mrb[0].mxu0
  %3530 = vmatprep.mubr.bf16.mxu0 %v3324
  %3531 = vmatmul.mubr.bf16.gmra.mrb[0].mxu0 %v3323
  %v3532 = vpop.f32.mrb[0].mxu0
  %v3533 = vadd.f32 0.0, %v3532
  %v3534 = vpop.f32.mrb[0].mxu0
  %v3535 = vpop.f32.mrb[0].mxu0
  %v3536 = vadd.f32 0.0, %v3535
  %v3537 = vpop.f32.mrb[0].mxu0
  %3538 = vmatprep.mubr.bf16.mxu0 %v3326
  %3539 = vmatmul.mubr.bf16.gmra.mrb[0].mxu0 %v3325
  %v3540 = vpop.f32.mrb[0].mxu0
  %v3541 = vadd.f32 0.0, %v3540
  %v3542 = vpop.f32.mrb[0].mxu0
  %v3543 = vpop.f32.mrb[0].mxu0
  %v3544 = vadd.f32 0.0, %v3543
  %v3545 = vpop.f32.mrb[0].mxu0
  %3546 = vmatprep.mubr.bf16.mxu0 %v3328
  %3547 = vmatmul.mubr.bf16.gmra.mrb[0].mxu0 %v3327
  %v3548 = vpop.f32.mrb[0].mxu0
  %v3549 = vadd.f32 0.0, %v3548
  %v3550 = vpop.f32.mrb[0].mxu0
  %v3551 = vpop.f32.mrb[0].mxu0
  %v3552 = vadd.f32 0.0, %v3551
  %v3553 = vpop.f32.mrb[0].mxu0
  %3554 = vdwg.mxu0
  %v3555 = vadd.f32 %v3071, %v3493
  %v3556 = vadd.f32 %v3072, %v3496
  %v3557 = vadd.f32 %v3073, %v3501
  %v3558 = vadd.f32 %v3074, %v3504
  %v3559 = vadd.f32 %v3075, %v3509
  %v3560 = vadd.f32 %v3076, %v3512
  %v3561 = vadd.f32 %v3077, %v3517
  %v3562 = vadd.f32 %v3078, %v3520
  %v3563 = vadd.f32 %v3079, %v3525
  %v3564 = vadd.f32 %v3080, %v3528
  %v3565 = vadd.f32 %v3081, %v3533
  %v3566 = vadd.f32 %v3082, %v3536
  %v3567 = vadd.f32 %v3083, %v3541
  %v3568 = vadd.f32 %v3084, %v3544
  %v3569 = vadd.f32 %v3085, %v3549
  %v3570 = vadd.f32 %v3086, %v3552
  %s3571 = scalar_lea.vmem %s1, 896
  %v3572 = vld [vmem:[%s3571] sm:$0xff]
  %v3573 = vld [vmem:[%s3571 + $0x8] sm:$0xff]
  %v3574 = vld [vmem:[%s3571 + $0x10] sm:$0xff]
  %v3575 = vld [vmem:[%s3571 + $0x18] sm:$0xff]
  %v3576 = vld [vmem:[%s3571 + $0x20] sm:$0xff]
  %v3577 = vld [vmem:[%s3571 + $0x28] sm:$0xff]
  %v3578 = vld [vmem:[%s3571 + $0x30] sm:$0xff]
  %v3579 = vld [vmem:[%s3571 + $0x38] sm:$0xff]
  %v3580 = vld [vmem:[%s3571 + $0x40] sm:$0xff]
  %v3581 = vld [vmem:[%s3571 + $0x48] sm:$0xff]
  %v3582 = vld [vmem:[%s3571 + $0x50] sm:$0xff]
  %v3583 = vld [vmem:[%s3571 + $0x58] sm:$0xff]
  %v3584 = vld [vmem:[%s3571 + $0x60] sm:$0xff]
  %v3585 = vld [vmem:[%s3571 + $0x68] sm:$0xff]
  %v3586 = vld [vmem:[%s3571 + $0x70] sm:$0xff]
  %v3587 = vld [vmem:[%s3571 + $0x78] sm:$0xff]
  %v3604 = vunpack.c.l.b16 %v3572
  %v3605 = vunpack.c.h.b16 %v3572
  %v3606 = vunpack.c.l.b16 %v3573
  %v3607 = vunpack.c.h.b16 %v3573
  %v3608 = vunpack.c.l.b16 %v3574
  %v3609 = vunpack.c.h.b16 %v3574
  %v3610 = vunpack.c.l.b16 %v3575
  %v3611 = vunpack.c.h.b16 %v3575
  %v3612 = vunpack.c.l.b16 %v3576
  %v3613 = vunpack.c.h.b16 %v3576
  %v3614 = vunpack.c.l.b16 %v3577
  %v3615 = vunpack.c.h.b16 %v3577
  %v3616 = vunpack.c.l.b16 %v3578
  %v3617 = vunpack.c.h.b16 %v3578
  %v3618 = vunpack.c.l.b16 %v3579
  %v3619 = vunpack.c.h.b16 %v3579
  %v3620 = vunpack.c.l.b16 %v3580
  %v3621 = vunpack.c.h.b16 %v3580
  %v3622 = vunpack.c.l.b16 %v3581
  %v3623 = vunpack.c.h.b16 %v3581
  %v3624 = vunpack.c.l.b16 %v3582
  %v3625 = vunpack.c.h.b16 %v3582
  %v3626 = vunpack.c.l.b16 %v3583
  %v3627 = vunpack.c.h.b16 %v3583
  %v3628 = vunpack.c.l.b16 %v3584
  %v3629 = vunpack.c.h.b16 %v3584
  %v3630 = vunpack.c.l.b16 %v3585
  %v3631 = vunpack.c.h.b16 %v3585
  %v3632 = vunpack.c.l.b16 %v3586
  %v3633 = vunpack.c.h.b16 %v3586
  %v3634 = vunpack.c.l.b16 %v3587
  %v3635 = vunpack.c.h.b16 %v3587
  %v3636 = vpack.c.b16 %v3606, %v3604
  %v3637 = vpack.c.b16 %v3607, %v3605
  %v3638 = vpack.c.b16 %v3610, %v3608
  %v3639 = vpack.c.b16 %v3611, %v3609
  %v3640 = vpack.c.b16 %v3614, %v3612
  %v3641 = vpack.c.b16 %v3615, %v3613
  %v3642 = vpack.c.b16 %v3618, %v3616
  %v3643 = vpack.c.b16 %v3619, %v3617
  %v3644 = vpack.c.b16 %v3622, %v3620
  %v3645 = vpack.c.b16 %v3623, %v3621
  %v3646 = vpack.c.b16 %v3626, %v3624
  %v3647 = vpack.c.b16 %v3627, %v3625
  %v3648 = vpack.c.b16 %v3630, %v3628
  %v3649 = vpack.c.b16 %v3631, %v3629
  %v3650 = vpack.c.b16 %v3634, %v3632
  %v3651 = vpack.c.b16 %v3635, %v3633
  %v3661 = vsel %vm297, %v3637, 0
  %v3664 = vsel %vm297, %v3639, 0
  %v3667 = vsel %vm297, %v3641, 0
  %v3670 = vsel %vm297, %v3643, 0
  %v3673 = vsel %vm297, %v3645, 0
  %v3676 = vsel %vm297, %v3647, 0
  %v3679 = vsel %vm297, %v3649, 0
  %v3682 = vsel %vm297, %v3651, 0
  %3684 = vmatprep.subr.bf16.mxu0 %v248
  %3685 = vmatpush1.bf16.msra.mxu0 %v247
  %3686 = vmatprep.subr.bf16.mxu0 %v250
  %3687 = vmatpush1.bf16.msra.mxu0 %v249
  %3688 = vmatprep.subr.bf16.mxu0 %v252
  %3689 = vmatpush1.bf16.msra.mxu0 %v251
  %3690 = vmatprep.subr.bf16.mxu0 %v254
  %3691 = vmatpush1.bf16.msra.mxu0 %v253
  %3692 = vmatprep.subr.bf16.mxu0 %v256
  %3693 = vmatpush1.bf16.msra.mxu0 %v255
  %3694 = vmatprep.subr.bf16.mxu0 %v258
  %3695 = vmatpush1.bf16.msra.mxu0 %v257
  %3696 = vmatprep.subr.bf16.mxu0 %v260
  %3697 = vmatpush1.bf16.msra.mxu0 %v259
  %3698 = vmatprep.subr.bf16.mxu0 %v262
  %3699 = vmatpush1.bf16.msra.mxu0 %v261
  %3700 = vmatprep.subr.bf16.mxu0 %v264
  %3701 = vmatpush1.bf16.msra.mxu0 %v263
  %3702 = vmatprep.subr.bf16.mxu0 %v266
  %3703 = vmatpush1.bf16.msra.mxu0 %v265
  %3704 = vmatprep.subr.bf16.mxu0 %v268
  %3705 = vmatpush1.bf16.msra.mxu0 %v267
  %3706 = vmatprep.subr.bf16.mxu0 %v270
  %3707 = vmatpush1.bf16.msra.mxu0 %v269
  %3708 = vmatprep.subr.bf16.mxu0 %v327
  %3709 = vmatpush1.bf16.msra.mxu0 %v324
  %3710 = vmatprep.subr.bf16.mxu0 0
  %3711 = vmatpush1.bf16.msra.mxu0 0
  %3712 = vmatprep.subr.bf16.mxu0 0
  %3713 = vmatpush1.bf16.msra.mxu0 0
  %3714 = vmatprep.subr.bf16.mxu0 0
  %3715 = vmatpush1.bf16.msra.mxu0 0
  %3716 = vmatprep.mubr.bf16.mxu0 %v3661
  %3717 = vmatmul.mubr.bf16.gmra.mrb[0].mxu0 %v3636
  %v3718 = vpop.f32.mrb[0].mxu0
  %v3719 = vadd.f32 0.0, %v3718
  %v3720 = vpop.f32.mrb[0].mxu0
  %v3721 = vadd.f32 0.0, %v3720
  %v3722 = vpop.f32.mrb[0].mxu0
  %v3723 = vadd.f32 0.0, %v3722
  %v3724 = vpop.f32.mrb[0].mxu0
  %v3725 = vadd.f32 0.0, %v3724
  %3726 = vmatprep.mubr.bf16.mxu0 %v3664
  %3727 = vmatmul.mubr.bf16.gmra.mrb[0].mxu0 %v3638
  %v3728 = vpop.f32.mrb[0].mxu0
  %v3729 = vadd.f32 0.0, %v3728
  %v3730 = vpop.f32.mrb[0].mxu0
  %v3731 = vadd.f32 0.0, %v3730
  %v3732 = vpop.f32.mrb[0].mxu0
  %v3733 = vadd.f32 0.0, %v3732
  %v3734 = vpop.f32.mrb[0].mxu0
  %v3735 = vadd.f32 0.0, %v3734
  %3736 = vmatprep.mubr.bf16.mxu0 %v3667
  %3737 = vmatmul.mubr.bf16.gmra.mrb[0].mxu0 %v3640
  %v3738 = vpop.f32.mrb[0].mxu0
  %v3739 = vadd.f32 0.0, %v3738
  %v3740 = vpop.f32.mrb[0].mxu0
  %v3741 = vadd.f32 0.0, %v3740
  %v3742 = vpop.f32.mrb[0].mxu0
  %v3743 = vadd.f32 0.0, %v3742
  %v3744 = vpop.f32.mrb[0].mxu0
  %v3745 = vadd.f32 0.0, %v3744
  %3746 = vmatprep.mubr.bf16.mxu0 %v3670
  %3747 = vmatmul.mubr.bf16.gmra.mrb[0].mxu0 %v3642
  %v3748 = vpop.f32.mrb[0].mxu0
  %v3749 = vadd.f32 0.0, %v3748
  %v3750 = vpop.f32.mrb[0].mxu0
  %v3751 = vadd.f32 0.0, %v3750
  %v3752 = vpop.f32.mrb[0].mxu0
  %v3753 = vadd.f32 0.0, %v3752
  %v3754 = vpop.f32.mrb[0].mxu0
  %v3755 = vadd.f32 0.0, %v3754
  %3756 = vmatprep.mubr.bf16.mxu0 %v3673
  %3757 = vmatmul.mubr.bf16.gmra.mrb[0].mxu0 %v3644
  %v3758 = vpop.f32.mrb[0].mxu0
  %v3759 = vadd.f32 0.0, %v3758
  %v3760 = vpop.f32.mrb[0].mxu0
  %v3761 = vadd.f32 0.0, %v3760
  %v3762 = vpop.f32.mrb[0].mxu0
  %v3763 = vadd.f32 0.0, %v3762
  %v3764 = vpop.f32.mrb[0].mxu0
  %v3765 = vadd.f32 0.0, %v3764
  %3766 = vmatprep.mubr.bf16.mxu0 %v3676
  %3767 = vmatmul.mubr.bf16.gmra.mrb[0].mxu0 %v3646
  %v3768 = vpop.f32.mrb[0].mxu0
  %v3769 = vadd.f32 0.0, %v3768
  %v3770 = vpop.f32.mrb[0].mxu0
  %v3771 = vadd.f32 0.0, %v3770
  %v3772 = vpop.f32.mrb[0].mxu0
  %v3773 = vadd.f32 0.0, %v3772
  %v3774 = vpop.f32.mrb[0].mxu0
  %v3775 = vadd.f32 0.0, %v3774
  %3776 = vmatprep.mubr.bf16.mxu0 %v3679
  %3777 = vmatmul.mubr.bf16.gmra.mrb[0].mxu0 %v3648
  %v3778 = vpop.f32.mrb[0].mxu0
  %v3779 = vadd.f32 0.0, %v3778
  %v3780 = vpop.f32.mrb[0].mxu0
  %v3781 = vadd.f32 0.0, %v3780
  %v3782 = vpop.f32.mrb[0].mxu0
  %v3783 = vadd.f32 0.0, %v3782
  %v3784 = vpop.f32.mrb[0].mxu0
  %v3785 = vadd.f32 0.0, %v3784
  %3786 = vmatprep.mubr.bf16.mxu0 %v3682
  %3787 = vmatmul.mubr.bf16.gmra.mrb[0].mxu0 %v3650
  %v3788 = vpop.f32.mrb[0].mxu0
  %v3789 = vadd.f32 0.0, %v3788
  %v3790 = vpop.f32.mrb[0].mxu0
  %v3791 = vadd.f32 0.0, %v3790
  %v3792 = vpop.f32.mrb[0].mxu0
  %v3793 = vadd.f32 0.0, %v3792
  %v3794 = vpop.f32.mrb[0].mxu0
  %v3795 = vadd.f32 0.0, %v3794
  %3796 = vdwg.mxu0
  %v3797 = vpack.c.bf16 %v3723, %v3719
  %v3798 = vpack.c.bf16 %v3725, %v3721
  %v3799 = vpack.c.bf16 %v3733, %v3729
  %v3800 = vpack.c.bf16 %v3735, %v3731
  %v3801 = vpack.c.bf16 %v3743, %v3739
  %v3802 = vpack.c.bf16 %v3745, %v3741
  %v3803 = vpack.c.bf16 %v3753, %v3749
  %v3804 = vpack.c.bf16 %v3755, %v3751
  %v3805 = vpack.c.bf16 %v3763, %v3759
  %v3806 = vpack.c.bf16 %v3765, %v3761
  %v3807 = vpack.c.bf16 %v3773, %v3769
  %v3808 = vpack.c.bf16 %v3775, %v3771
  %v3809 = vpack.c.bf16 %v3783, %v3779
  %v3810 = vpack.c.bf16 %v3785, %v3781
  %v3811 = vpack.c.bf16 %v3793, %v3789
  %v3812 = vpack.c.bf16 %v3795, %v3791
  %s3813 = scalar_lea.vmem %s2, 896
  %v3814 = vld [vmem:[%s3813] sm:$0xf]
  %v3815 = vld [vmem:[%s3813 + $0x4] sm:$0xf]
  %v3816 = vld [vmem:[%s3813 + $0x8] sm:$0xf]
  %v3817 = vld [vmem:[%s3813 + $0xc] sm:$0xf]
  %v3818 = vld [vmem:[%s3813 + $0x10] sm:$0xf]
  %v3819 = vld [vmem:[%s3813 + $0x14] sm:$0xf]
  %v3820 = vld [vmem:[%s3813 + $0x18] sm:$0xf]
  %v3821 = vld [vmem:[%s3813 + $0x1c] sm:$0xf]
  %v3822 = vld [vmem:[%s3813 + $0x20] sm:$0xf]
  %v3823 = vld [vmem:[%s3813 + $0x24] sm:$0xf]
  %v3824 = vld [vmem:[%s3813 + $0x28] sm:$0xf]
  %v3825 = vld [vmem:[%s3813 + $0x2c] sm:$0xf]
  %v3826 = vld [vmem:[%s3813 + $0x30] sm:$0xf]
  %v3827 = vld [vmem:[%s3813 + $0x34] sm:$0xf]
  %v3828 = vld [vmem:[%s3813 + $0x38] sm:$0xf]
  %v3829 = vld [vmem:[%s3813 + $0x3c] sm:$0xf]
  %v3830 = vld [vmem:[%s3813 + $0x40] sm:$0xf]
  %v3831 = vld [vmem:[%s3813 + $0x44] sm:$0xf]
  %v3832 = vld [vmem:[%s3813 + $0x48] sm:$0xf]
  %v3833 = vld [vmem:[%s3813 + $0x4c] sm:$0xf]
  %v3834 = vld [vmem:[%s3813 + $0x50] sm:$0xf]
  %v3835 = vld [vmem:[%s3813 + $0x54] sm:$0xf]
  %v3836 = vld [vmem:[%s3813 + $0x58] sm:$0xf]
  %v3837 = vld [vmem:[%s3813 + $0x5c] sm:$0xf]
  %v3838 = vld [vmem:[%s3813 + $0x60] sm:$0xf]
  %v3839 = vld [vmem:[%s3813 + $0x64] sm:$0xf]
  %v3840 = vld [vmem:[%s3813 + $0x68] sm:$0xf]
  %v3841 = vld [vmem:[%s3813 + $0x6c] sm:$0xf]
  %v3842 = vld [vmem:[%s3813 + $0x70] sm:$0xf]
  %v3843 = vld [vmem:[%s3813 + $0x74] sm:$0xf]
  %v3844 = vld [vmem:[%s3813 + $0x78] sm:$0xf]
  %v3845 = vld [vmem:[%s3813 + $0x7c] sm:$0xf]
  %v3878 = vunpack.c.l.b16 %v3814
  %v3879 = vunpack.c.l.b16 %v3815
  %v3880 = vunpack.c.l.b16 %v3816
  %v3881 = vunpack.c.l.b16 %v3817
  %v3882 = vunpack.c.l.b16 %v3818
  %v3883 = vunpack.c.l.b16 %v3819
  %v3884 = vunpack.c.l.b16 %v3820
  %v3885 = vunpack.c.l.b16 %v3821
  %v3886 = vunpack.c.l.b16 %v3822
  %v3887 = vunpack.c.l.b16 %v3823
  %v3888 = vunpack.c.l.b16 %v3824
  %v3889 = vunpack.c.l.b16 %v3825
  %v3890 = vunpack.c.l.b16 %v3826
  %v3891 = vunpack.c.l.b16 %v3827
  %v3892 = vunpack.c.l.b16 %v3828
  %v3893 = vunpack.c.l.b16 %v3829
  %v3894 = vunpack.c.l.b16 %v3830
  %v3895 = vunpack.c.l.b16 %v3831
  %v3896 = vunpack.c.l.b16 %v3832
  %v3897 = vunpack.c.l.b16 %v3833
  %v3898 = vunpack.c.l.b16 %v3834
  %v3899 = vunpack.c.l.b16 %v3835
  %v3900 = vunpack.c.l.b16 %v3836
  %v3901 = vunpack.c.l.b16 %v3837
  %v3902 = vunpack.c.l.b16 %v3838
  %v3903 = vunpack.c.l.b16 %v3839
  %v3904 = vunpack.c.l.b16 %v3840
  %v3905 = vunpack.c.l.b16 %v3841
  %v3906 = vunpack.c.l.b16 %v3842
  %v3907 = vunpack.c.l.b16 %v3843
  %v3908 = vunpack.c.l.b16 %v3844
  %v3909 = vunpack.c.l.b16 %v3845
  %v3910 = vpack.c.b16 %v3879, %v3878
  %v3911 = vpack.c.b16 %v3881, %v3880
  %v3912 = vpack.c.b16 %v3883, %v3882
  %v3913 = vpack.c.b16 %v3885, %v3884
  %v3914 = vpack.c.b16 %v3887, %v3886
  %v3915 = vpack.c.b16 %v3889, %v3888
  %v3916 = vpack.c.b16 %v3891, %v3890
  %v3917 = vpack.c.b16 %v3893, %v3892
  %v3918 = vpack.c.b16 %v3895, %v3894
  %v3919 = vpack.c.b16 %v3897, %v3896
  %v3920 = vpack.c.b16 %v3899, %v3898
  %v3921 = vpack.c.b16 %v3901, %v3900
  %v3922 = vpack.c.b16 %v3903, %v3902
  %v3923 = vpack.c.b16 %v3905, %v3904
  %v3924 = vpack.c.b16 %v3907, %v3906
  %v3925 = vpack.c.b16 %v3909, %v3908
  %3942 = vmatprep.subr.bf16.mxu0 0
  %3943 = vmatpush1.bf16.msra.mxu0 %v3910
  %3944 = vmatprep.subr.bf16.mxu0 0
  %3945 = vmatpush1.bf16.msra.mxu0 %v3911
  %3946 = vmatprep.subr.bf16.mxu0 0
  %3947 = vmatpush1.bf16.msra.mxu0 %v3912
  %3948 = vmatprep.subr.bf16.mxu0 0
  %3949 = vmatpush1.bf16.msra.mxu0 %v3913
  %3950 = vmatprep.subr.bf16.mxu0 0
  %3951 = vmatpush1.bf16.msra.mxu0 %v3914
  %3952 = vmatprep.subr.bf16.mxu0 0
  %3953 = vmatpush1.bf16.msra.mxu0 %v3915
  %3954 = vmatprep.subr.bf16.mxu0 0
  %3955 = vmatpush1.bf16.msra.mxu0 %v3916
  %3956 = vmatprep.subr.bf16.mxu0 0
  %3957 = vmatpush1.bf16.msra.mxu0 %v3917
  %3958 = vmatprep.subr.bf16.mxu0 0
  %3959 = vmatpush1.bf16.msra.mxu0 %v3918
  %3960 = vmatprep.subr.bf16.mxu0 0
  %3961 = vmatpush1.bf16.msra.mxu0 %v3919
  %3962 = vmatprep.subr.bf16.mxu0 0
  %3963 = vmatpush1.bf16.msra.mxu0 %v3920
  %3964 = vmatprep.subr.bf16.mxu0 0
  %3965 = vmatpush1.bf16.msra.mxu0 %v3921
  %3966 = vmatprep.subr.bf16.mxu0 0
  %3967 = vmatpush1.bf16.msra.mxu0 %v3922
  %3968 = vmatprep.subr.bf16.mxu0 0
  %3969 = vmatpush1.bf16.msra.mxu0 %v3923
  %3970 = vmatprep.subr.bf16.mxu0 0
  %3971 = vmatpush1.bf16.msra.mxu0 %v3924
  %3972 = vmatprep.subr.bf16.mxu0 0
  %3973 = vmatpush1.bf16.msra.mxu0 %v3925
  %3974 = vmatprep.mubr.bf16.mxu0 %v3798
  %3975 = vmatmul.mubr.bf16.gmra.mrb[0].mxu0 %v3797
  %v3976 = vpop.f32.mrb[0].mxu0
  %v3977 = vadd.f32 0.0, %v3976
  %v3978 = vpop.f32.mrb[0].mxu0
  %v3979 = vpop.f32.mrb[0].mxu0
  %v3980 = vadd.f32 0.0, %v3979
  %v3981 = vpop.f32.mrb[0].mxu0
  %3982 = vmatprep.mubr.bf16.mxu0 %v3800
  %3983 = vmatmul.mubr.bf16.gmra.mrb[0].mxu0 %v3799
  %v3984 = vpop.f32.mrb[0].mxu0
  %v3985 = vadd.f32 0.0, %v3984
  %v3986 = vpop.f32.mrb[0].mxu0
  %v3987 = vpop.f32.mrb[0].mxu0
  %v3988 = vadd.f32 0.0, %v3987
  %v3989 = vpop.f32.mrb[0].mxu0
  %3990 = vmatprep.mubr.bf16.mxu0 %v3802
  %3991 = vmatmul.mubr.bf16.gmra.mrb[0].mxu0 %v3801
  %v3992 = vpop.f32.mrb[0].mxu0
  %v3993 = vadd.f32 0.0, %v3992
  %v3994 = vpop.f32.mrb[0].mxu0
  %v3995 = vpop.f32.mrb[0].mxu0
  %v3996 = vadd.f32 0.0, %v3995
  %v3997 = vpop.f32.mrb[0].mxu0
  %3998 = vmatprep.mubr.bf16.mxu0 %v3804
  %3999 = vmatmul.mubr.bf16.gmra.mrb[0].mxu0 %v3803
  %v4000 = vpop.f32.mrb[0].mxu0
  %v4001 = vadd.f32 0.0, %v4000
  %v4002 = vpop.f32.mrb[0].mxu0
  %v4003 = vpop.f32.mrb[0].mxu0
  %v4004 = vadd.f32 0.0, %v4003
  %v4005 = vpop.f32.mrb[0].mxu0
  %4006 = vmatprep.mubr.bf16.mxu0 %v3806
  %4007 = vmatmul.mubr.bf16.gmra.mrb[0].mxu0 %v3805
  %v4008 = vpop.f32.mrb[0].mxu0
  %v4009 = vadd.f32 0.0, %v4008
  %v4010 = vpop.f32.mrb[0].mxu0
  %v4011 = vpop.f32.mrb[0].mxu0
  %v4012 = vadd.f32 0.0, %v4011
  %v4013 = vpop.f32.mrb[0].mxu0
  %4014 = vmatprep.mubr.bf16.mxu0 %v3808
  %4015 = vmatmul.mubr.bf16.gmra.mrb[0].mxu0 %v3807
  %v4016 = vpop.f32.mrb[0].mxu0
  %v4017 = vadd.f32 0.0, %v4016
  %v4018 = vpop.f32.mrb[0].mxu0
  %v4019 = vpop.f32.mrb[0].mxu0
  %v4020 = vadd.f32 0.0, %v4019
  %v4021 = vpop.f32.mrb[0].mxu0
  %4022 = vmatprep.mubr.bf16.mxu0 %v3810
  %4023 = vmatmul.mubr.bf16.gmra.mrb[0].mxu0 %v3809
  %v4024 = vpop.f32.mrb[0].mxu0
  %v4025 = vadd.f32 0.0, %v4024
  %v4026 = vpop.f32.mrb[0].mxu0
  %v4027 = vpop.f32.mrb[0].mxu0
  %v4028 = vadd.f32 0.0, %v4027
  %v4029 = vpop.f32.mrb[0].mxu0
  %4030 = vmatprep.mubr.bf16.mxu0 %v3812
  %4031 = vmatmul.mubr.bf16.gmra.mrb[0].mxu0 %v3811
  %v4032 = vpop.f32.mrb[0].mxu0
  %v4033 = vadd.f32 0.0, %v4032
  %v4034 = vpop.f32.mrb[0].mxu0
  %v4035 = vpop.f32.mrb[0].mxu0
  %v4036 = vadd.f32 0.0, %v4035
  %v4037 = vpop.f32.mrb[0].mxu0
  %4038 = vdwg.mxu0
  %v4039 = vadd.f32 %v3555, %v3977
  %v4040 = vadd.f32 %v3556, %v3980
  %v4041 = vadd.f32 %v3557, %v3985
  %v4042 = vadd.f32 %v3558, %v3988
  %v4043 = vadd.f32 %v3559, %v3993
  %v4044 = vadd.f32 %v3560, %v3996
  %v4045 = vadd.f32 %v3561, %v4001
  %v4046 = vadd.f32 %v3562, %v4004
  %v4047 = vadd.f32 %v3563, %v4009
  %v4048 = vadd.f32 %v3564, %v4012
  %v4049 = vadd.f32 %v3565, %v4017
  %v4050 = vadd.f32 %v3566, %v4020
  %v4051 = vadd.f32 %v3567, %v4025
  %v4052 = vadd.f32 %v3568, %v4028
  %v4053 = vadd.f32 %v3569, %v4033
  %v4054 = vadd.f32 %v3570, %v4036
  %s4055 = scalar_lea.vmem %s1, 1024
  %v4056 = vld [vmem:[%s4055] sm:$0xff]
  %v4057 = vld [vmem:[%s4055 + $0x8] sm:$0xff]
  %v4058 = vld [vmem:[%s4055 + $0x10] sm:$0xff]
  %v4059 = vld [vmem:[%s4055 + $0x18] sm:$0xff]
  %v4060 = vld [vmem:[%s4055 + $0x20] sm:$0xff]
  %v4061 = vld [vmem:[%s4055 + $0x28] sm:$0xff]
  %v4062 = vld [vmem:[%s4055 + $0x30] sm:$0xff]
  %v4063 = vld [vmem:[%s4055 + $0x38] sm:$0xff]
  %v4064 = vld [vmem:[%s4055 + $0x40] sm:$0xff]
  %v4065 = vld [vmem:[%s4055 + $0x48] sm:$0xff]
  %v4066 = vld [vmem:[%s4055 + $0x50] sm:$0xff]
  %v4067 = vld [vmem:[%s4055 + $0x58] sm:$0xff]
  %v4068 = vld [vmem:[%s4055 + $0x60] sm:$0xff]
  %v4069 = vld [vmem:[%s4055 + $0x68] sm:$0xff]
  %v4070 = vld [vmem:[%s4055 + $0x70] sm:$0xff]
  %v4071 = vld [vmem:[%s4055 + $0x78] sm:$0xff]
  %v4088 = vunpack.c.l.b16 %v4056
  %v4089 = vunpack.c.h.b16 %v4056
  %v4090 = vunpack.c.l.b16 %v4057
  %v4091 = vunpack.c.h.b16 %v4057
  %v4092 = vunpack.c.l.b16 %v4058
  %v4093 = vunpack.c.h.b16 %v4058
  %v4094 = vunpack.c.l.b16 %v4059
  %v4095 = vunpack.c.h.b16 %v4059
  %v4096 = vunpack.c.l.b16 %v4060
  %v4097 = vunpack.c.h.b16 %v4060
  %v4098 = vunpack.c.l.b16 %v4061
  %v4099 = vunpack.c.h.b16 %v4061
  %v4100 = vunpack.c.l.b16 %v4062
  %v4101 = vunpack.c.h.b16 %v4062
  %v4102 = vunpack.c.l.b16 %v4063
  %v4103 = vunpack.c.h.b16 %v4063
  %v4104 = vunpack.c.l.b16 %v4064
  %v4105 = vunpack.c.h.b16 %v4064
  %v4106 = vunpack.c.l.b16 %v4065
  %v4107 = vunpack.c.h.b16 %v4065
  %v4108 = vunpack.c.l.b16 %v4066
  %v4109 = vunpack.c.h.b16 %v4066
  %v4110 = vunpack.c.l.b16 %v4067
  %v4111 = vunpack.c.h.b16 %v4067
  %v4112 = vunpack.c.l.b16 %v4068
  %v4113 = vunpack.c.h.b16 %v4068
  %v4114 = vunpack.c.l.b16 %v4069
  %v4115 = vunpack.c.h.b16 %v4069
  %v4116 = vunpack.c.l.b16 %v4070
  %v4117 = vunpack.c.h.b16 %v4070
  %v4118 = vunpack.c.l.b16 %v4071
  %v4119 = vunpack.c.h.b16 %v4071
  %v4120 = vpack.c.b16 %v4090, %v4088
  %v4121 = vpack.c.b16 %v4091, %v4089
  %v4122 = vpack.c.b16 %v4094, %v4092
  %v4123 = vpack.c.b16 %v4095, %v4093
  %v4124 = vpack.c.b16 %v4098, %v4096
  %v4125 = vpack.c.b16 %v4099, %v4097
  %v4126 = vpack.c.b16 %v4102, %v4100
  %v4127 = vpack.c.b16 %v4103, %v4101
  %v4128 = vpack.c.b16 %v4106, %v4104
  %v4129 = vpack.c.b16 %v4107, %v4105
  %v4130 = vpack.c.b16 %v4110, %v4108
  %v4131 = vpack.c.b16 %v4111, %v4109
  %v4132 = vpack.c.b16 %v4114, %v4112
  %v4133 = vpack.c.b16 %v4115, %v4113
  %v4134 = vpack.c.b16 %v4118, %v4116
  %v4135 = vpack.c.b16 %v4119, %v4117
  %v4145 = vsel %vm297, %v4121, 0
  %v4148 = vsel %vm297, %v4123, 0
  %v4151 = vsel %vm297, %v4125, 0
  %v4154 = vsel %vm297, %v4127, 0
  %v4157 = vsel %vm297, %v4129, 0
  %v4160 = vsel %vm297, %v4131, 0
  %v4163 = vsel %vm297, %v4133, 0
  %v4166 = vsel %vm297, %v4135, 0
  %4168 = vmatprep.subr.bf16.mxu0 %v248
  %4169 = vmatpush1.bf16.msra.mxu0 %v247
  %4170 = vmatprep.subr.bf16.mxu0 %v250
  %4171 = vmatpush1.bf16.msra.mxu0 %v249
  %4172 = vmatprep.subr.bf16.mxu0 %v252
  %4173 = vmatpush1.bf16.msra.mxu0 %v251
  %4174 = vmatprep.subr.bf16.mxu0 %v254
  %4175 = vmatpush1.bf16.msra.mxu0 %v253
  %4176 = vmatprep.subr.bf16.mxu0 %v256
  %4177 = vmatpush1.bf16.msra.mxu0 %v255
  %4178 = vmatprep.subr.bf16.mxu0 %v258
  %4179 = vmatpush1.bf16.msra.mxu0 %v257
  %4180 = vmatprep.subr.bf16.mxu0 %v260
  %4181 = vmatpush1.bf16.msra.mxu0 %v259
  %4182 = vmatprep.subr.bf16.mxu0 %v262
  %4183 = vmatpush1.bf16.msra.mxu0 %v261
  %4184 = vmatprep.subr.bf16.mxu0 %v264
  %4185 = vmatpush1.bf16.msra.mxu0 %v263
  %4186 = vmatprep.subr.bf16.mxu0 %v266
  %4187 = vmatpush1.bf16.msra.mxu0 %v265
  %4188 = vmatprep.subr.bf16.mxu0 %v268
  %4189 = vmatpush1.bf16.msra.mxu0 %v267
  %4190 = vmatprep.subr.bf16.mxu0 %v270
  %4191 = vmatpush1.bf16.msra.mxu0 %v269
  %4192 = vmatprep.subr.bf16.mxu0 %v327
  %4193 = vmatpush1.bf16.msra.mxu0 %v324
  %4194 = vmatprep.subr.bf16.mxu0 0
  %4195 = vmatpush1.bf16.msra.mxu0 0
  %4196 = vmatprep.subr.bf16.mxu0 0
  %4197 = vmatpush1.bf16.msra.mxu0 0
  %4198 = vmatprep.subr.bf16.mxu0 0
  %4199 = vmatpush1.bf16.msra.mxu0 0
  %4200 = vmatprep.mubr.bf16.mxu0 %v4145
  %4201 = vmatmul.mubr.bf16.gmra.mrb[0].mxu0 %v4120
  %v4202 = vpop.f32.mrb[0].mxu0
  %v4203 = vadd.f32 0.0, %v4202
  %v4204 = vpop.f32.mrb[0].mxu0
  %v4205 = vadd.f32 0.0, %v4204
  %v4206 = vpop.f32.mrb[0].mxu0
  %v4207 = vadd.f32 0.0, %v4206
  %v4208 = vpop.f32.mrb[0].mxu0
  %v4209 = vadd.f32 0.0, %v4208
  %4210 = vmatprep.mubr.bf16.mxu0 %v4148
  %4211 = vmatmul.mubr.bf16.gmra.mrb[0].mxu0 %v4122
  %v4212 = vpop.f32.mrb[0].mxu0
  %v4213 = vadd.f32 0.0, %v4212
  %v4214 = vpop.f32.mrb[0].mxu0
  %v4215 = vadd.f32 0.0, %v4214
  %v4216 = vpop.f32.mrb[0].mxu0
  %v4217 = vadd.f32 0.0, %v4216
  %v4218 = vpop.f32.mrb[0].mxu0
  %v4219 = vadd.f32 0.0, %v4218
  %4220 = vmatprep.mubr.bf16.mxu0 %v4151
  %4221 = vmatmul.mubr.bf16.gmra.mrb[0].mxu0 %v4124
  %v4222 = vpop.f32.mrb[0].mxu0
  %v4223 = vadd.f32 0.0, %v4222
  %v4224 = vpop.f32.mrb[0].mxu0
  %v4225 = vadd.f32 0.0, %v4224
  %v4226 = vpop.f32.mrb[0].mxu0
  %v4227 = vadd.f32 0.0, %v4226
  %v4228 = vpop.f32.mrb[0].mxu0
  %v4229 = vadd.f32 0.0, %v4228
  %4230 = vmatprep.mubr.bf16.mxu0 %v4154
  %4231 = vmatmul.mubr.bf16.gmra.mrb[0].mxu0 %v4126
  %v4232 = vpop.f32.mrb[0].mxu0
  %v4233 = vadd.f32 0.0, %v4232
  %v4234 = vpop.f32.mrb[0].mxu0
  %v4235 = vadd.f32 0.0, %v4234
  %v4236 = vpop.f32.mrb[0].mxu0
  %v4237 = vadd.f32 0.0, %v4236
  %v4238 = vpop.f32.mrb[0].mxu0
  %v4239 = vadd.f32 0.0, %v4238
  %4240 = vmatprep.mubr.bf16.mxu0 %v4157
  %4241 = vmatmul.mubr.bf16.gmra.mrb[0].mxu0 %v4128
  %v4242 = vpop.f32.mrb[0].mxu0
  %v4243 = vadd.f32 0.0, %v4242
  %v4244 = vpop.f32.mrb[0].mxu0
  %v4245 = vadd.f32 0.0, %v4244
  %v4246 = vpop.f32.mrb[0].mxu0
  %v4247 = vadd.f32 0.0, %v4246
  %v4248 = vpop.f32.mrb[0].mxu0
  %v4249 = vadd.f32 0.0, %v4248
  %4250 = vmatprep.mubr.bf16.mxu0 %v4160
  %4251 = vmatmul.mubr.bf16.gmra.mrb[0].mxu0 %v4130
  %v4252 = vpop.f32.mrb[0].mxu0
  %v4253 = vadd.f32 0.0, %v4252
  %v4254 = vpop.f32.mrb[0].mxu0
  %v4255 = vadd.f32 0.0, %v4254
  %v4256 = vpop.f32.mrb[0].mxu0
  %v4257 = vadd.f32 0.0, %v4256
  %v4258 = vpop.f32.mrb[0].mxu0
  %v4259 = vadd.f32 0.0, %v4258
  %4260 = vmatprep.mubr.bf16.mxu0 %v4163
  %4261 = vmatmul.mubr.bf16.gmra.mrb[0].mxu0 %v4132
  %v4262 = vpop.f32.mrb[0].mxu0
  %v4263 = vadd.f32 0.0, %v4262
  %v4264 = vpop.f32.mrb[0].mxu0
  %v4265 = vadd.f32 0.0, %v4264
  %v4266 = vpop.f32.mrb[0].mxu0
  %v4267 = vadd.f32 0.0, %v4266
  %v4268 = vpop.f32.mrb[0].mxu0
  %v4269 = vadd.f32 0.0, %v4268
  %4270 = vmatprep.mubr.bf16.mxu0 %v4166
  %4271 = vmatmul.mubr.bf16.gmra.mrb[0].mxu0 %v4134
  %v4272 = vpop.f32.mrb[0].mxu0
  %v4273 = vadd.f32 0.0, %v4272
  %v4274 = vpop.f32.mrb[0].mxu0
  %v4275 = vadd.f32 0.0, %v4274
  %v4276 = vpop.f32.mrb[0].mxu0
  %v4277 = vadd.f32 0.0, %v4276
  %v4278 = vpop.f32.mrb[0].mxu0
  %v4279 = vadd.f32 0.0, %v4278
  %4280 = vdwg.mxu0
  %v4281 = vpack.c.bf16 %v4207, %v4203
  %v4282 = vpack.c.bf16 %v4209, %v4205
  %v4283 = vpack.c.bf16 %v4217, %v4213
  %v4284 = vpack.c.bf16 %v4219, %v4215
  %v4285 = vpack.c.bf16 %v4227, %v4223
  %v4286 = vpack.c.bf16 %v4229, %v4225
  %v4287 = vpack.c.bf16 %v4237, %v4233
  %v4288 = vpack.c.bf16 %v4239, %v4235
  %v4289 = vpack.c.bf16 %v4247, %v4243
  %v4290 = vpack.c.bf16 %v4249, %v4245
  %v4291 = vpack.c.bf16 %v4257, %v4253
  %v4292 = vpack.c.bf16 %v4259, %v4255
  %v4293 = vpack.c.bf16 %v4267, %v4263
  %v4294 = vpack.c.bf16 %v4269, %v4265
  %v4295 = vpack.c.bf16 %v4277, %v4273
  %v4296 = vpack.c.bf16 %v4279, %v4275
  %s4297 = scalar_lea.vmem %s2, 1024
  %v4298 = vld [vmem:[%s4297] sm:$0xf]
  %v4299 = vld [vmem:[%s4297 + $0x4] sm:$0xf]
  %v4300 = vld [vmem:[%s4297 + $0x8] sm:$0xf]
  %v4301 = vld [vmem:[%s4297 + $0xc] sm:$0xf]
  %v4302 = vld [vmem:[%s4297 + $0x10] sm:$0xf]
  %v4303 = vld [vmem:[%s4297 + $0x14] sm:$0xf]
  %v4304 = vld [vmem:[%s4297 + $0x18] sm:$0xf]
  %v4305 = vld [vmem:[%s4297 + $0x1c] sm:$0xf]
  %v4306 = vld [vmem:[%s4297 + $0x20] sm:$0xf]
  %v4307 = vld [vmem:[%s4297 + $0x24] sm:$0xf]
  %v4308 = vld [vmem:[%s4297 + $0x28] sm:$0xf]
  %v4309 = vld [vmem:[%s4297 + $0x2c] sm:$0xf]
  %v4310 = vld [vmem:[%s4297 + $0x30] sm:$0xf]
  %v4311 = vld [vmem:[%s4297 + $0x34] sm:$0xf]
  %v4312 = vld [vmem:[%s4297 + $0x38] sm:$0xf]
  %v4313 = vld [vmem:[%s4297 + $0x3c] sm:$0xf]
  %v4314 = vld [vmem:[%s4297 + $0x40] sm:$0xf]
  %v4315 = vld [vmem:[%s4297 + $0x44] sm:$0xf]
  %v4316 = vld [vmem:[%s4297 + $0x48] sm:$0xf]
  %v4317 = vld [vmem:[%s4297 + $0x4c] sm:$0xf]
  %v4318 = vld [vmem:[%s4297 + $0x50] sm:$0xf]
  %v4319 = vld [vmem:[%s4297 + $0x54] sm:$0xf]
  %v4320 = vld [vmem:[%s4297 + $0x58] sm:$0xf]
  %v4321 = vld [vmem:[%s4297 + $0x5c] sm:$0xf]
  %v4322 = vld [vmem:[%s4297 + $0x60] sm:$0xf]
  %v4323 = vld [vmem:[%s4297 + $0x64] sm:$0xf]
  %v4324 = vld [vmem:[%s4297 + $0x68] sm:$0xf]
  %v4325 = vld [vmem:[%s4297 + $0x6c] sm:$0xf]
  %v4326 = vld [vmem:[%s4297 + $0x70] sm:$0xf]
  %v4327 = vld [vmem:[%s4297 + $0x74] sm:$0xf]
  %v4328 = vld [vmem:[%s4297 + $0x78] sm:$0xf]
  %v4329 = vld [vmem:[%s4297 + $0x7c] sm:$0xf]
  %v4362 = vunpack.c.l.b16 %v4298
  %v4363 = vunpack.c.l.b16 %v4299
  %v4364 = vunpack.c.l.b16 %v4300
  %v4365 = vunpack.c.l.b16 %v4301
  %v4366 = vunpack.c.l.b16 %v4302
  %v4367 = vunpack.c.l.b16 %v4303
  %v4368 = vunpack.c.l.b16 %v4304
  %v4369 = vunpack.c.l.b16 %v4305
  %v4370 = vunpack.c.l.b16 %v4306
  %v4371 = vunpack.c.l.b16 %v4307
  %v4372 = vunpack.c.l.b16 %v4308
  %v4373 = vunpack.c.l.b16 %v4309
  %v4374 = vunpack.c.l.b16 %v4310
  %v4375 = vunpack.c.l.b16 %v4311
  %v4376 = vunpack.c.l.b16 %v4312
  %v4377 = vunpack.c.l.b16 %v4313
  %v4378 = vunpack.c.l.b16 %v4314
  %v4379 = vunpack.c.l.b16 %v4315
  %v4380 = vunpack.c.l.b16 %v4316
  %v4381 = vunpack.c.l.b16 %v4317
  %v4382 = vunpack.c.l.b16 %v4318
  %v4383 = vunpack.c.l.b16 %v4319
  %v4384 = vunpack.c.l.b16 %v4320
  %v4385 = vunpack.c.l.b16 %v4321
  %v4386 = vunpack.c.l.b16 %v4322
  %v4387 = vunpack.c.l.b16 %v4323
  %v4388 = vunpack.c.l.b16 %v4324
  %v4389 = vunpack.c.l.b16 %v4325
  %v4390 = vunpack.c.l.b16 %v4326
  %v4391 = vunpack.c.l.b16 %v4327
  %v4392 = vunpack.c.l.b16 %v4328
  %v4393 = vunpack.c.l.b16 %v4329
  %v4394 = vpack.c.b16 %v4363, %v4362
  %v4395 = vpack.c.b16 %v4365, %v4364
  %v4396 = vpack.c.b16 %v4367, %v4366
  %v4397 = vpack.c.b16 %v4369, %v4368
  %v4398 = vpack.c.b16 %v4371, %v4370
  %v4399 = vpack.c.b16 %v4373, %v4372
  %v4400 = vpack.c.b16 %v4375, %v4374
  %v4401 = vpack.c.b16 %v4377, %v4376
  %v4402 = vpack.c.b16 %v4379, %v4378
  %v4403 = vpack.c.b16 %v4381, %v4380
  %v4404 = vpack.c.b16 %v4383, %v4382
  %v4405 = vpack.c.b16 %v4385, %v4384
  %v4406 = vpack.c.b16 %v4387, %v4386
  %v4407 = vpack.c.b16 %v4389, %v4388
  %v4408 = vpack.c.b16 %v4391, %v4390
  %v4409 = vpack.c.b16 %v4393, %v4392
  %4426 = vmatprep.subr.bf16.mxu0 0
  %4427 = vmatpush1.bf16.msra.mxu0 %v4394
  %4428 = vmatprep.subr.bf16.mxu0 0
  %4429 = vmatpush1.bf16.msra.mxu0 %v4395
  %4430 = vmatprep.subr.bf16.mxu0 0
  %4431 = vmatpush1.bf16.msra.mxu0 %v4396
  %4432 = vmatprep.subr.bf16.mxu0 0
  %4433 = vmatpush1.bf16.msra.mxu0 %v4397
  %4434 = vmatprep.subr.bf16.mxu0 0
  %4435 = vmatpush1.bf16.msra.mxu0 %v4398
  %4436 = vmatprep.subr.bf16.mxu0 0
  %4437 = vmatpush1.bf16.msra.mxu0 %v4399
  %4438 = vmatprep.subr.bf16.mxu0 0
  %4439 = vmatpush1.bf16.msra.mxu0 %v4400
  %4440 = vmatprep.subr.bf16.mxu0 0
  %4441 = vmatpush1.bf16.msra.mxu0 %v4401
  %4442 = vmatprep.subr.bf16.mxu0 0
  %4443 = vmatpush1.bf16.msra.mxu0 %v4402
  %4444 = vmatprep.subr.bf16.mxu0 0
  %4445 = vmatpush1.bf16.msra.mxu0 %v4403
  %4446 = vmatprep.subr.bf16.mxu0 0
  %4447 = vmatpush1.bf16.msra.mxu0 %v4404
  %4448 = vmatprep.subr.bf16.mxu0 0
  %4449 = vmatpush1.bf16.msra.mxu0 %v4405
  %4450 = vmatprep.subr.bf16.mxu0 0
  %4451 = vmatpush1.bf16.msra.mxu0 %v4406
  %4452 = vmatprep.subr.bf16.mxu0 0
  %4453 = vmatpush1.bf16.msra.mxu0 %v4407
  %4454 = vmatprep.subr.bf16.mxu0 0
  %4455 = vmatpush1.bf16.msra.mxu0 %v4408
  %4456 = vmatprep.subr.bf16.mxu0 0
  %4457 = vmatpush1.bf16.msra.mxu0 %v4409
  %4458 = vmatprep.mubr.bf16.mxu0 %v4282
  %4459 = vmatmul.mubr.bf16.gmra.mrb[0].mxu0 %v4281
  %v4460 = vpop.f32.mrb[0].mxu0
  %v4461 = vadd.f32 0.0, %v4460
  %v4462 = vpop.f32.mrb[0].mxu0
  %v4463 = vpop.f32.mrb[0].mxu0
  %v4464 = vadd.f32 0.0, %v4463
  %v4465 = vpop.f32.mrb[0].mxu0
  %4466 = vmatprep.mubr.bf16.mxu0 %v4284
  %4467 = vmatmul.mubr.bf16.gmra.mrb[0].mxu0 %v4283
  %v4468 = vpop.f32.mrb[0].mxu0
  %v4469 = vadd.f32 0.0, %v4468
  %v4470 = vpop.f32.mrb[0].mxu0
  %v4471 = vpop.f32.mrb[0].mxu0
  %v4472 = vadd.f32 0.0, %v4471
  %v4473 = vpop.f32.mrb[0].mxu0
  %4474 = vmatprep.mubr.bf16.mxu0 %v4286
  %4475 = vmatmul.mubr.bf16.gmra.mrb[0].mxu0 %v4285
  %v4476 = vpop.f32.mrb[0].mxu0
  %v4477 = vadd.f32 0.0, %v4476
  %v4478 = vpop.f32.mrb[0].mxu0
  %v4479 = vpop.f32.mrb[0].mxu0
  %v4480 = vadd.f32 0.0, %v4479
  %v4481 = vpop.f32.mrb[0].mxu0
  %4482 = vmatprep.mubr.bf16.mxu0 %v4288
  %4483 = vmatmul.mubr.bf16.gmra.mrb[0].mxu0 %v4287
  %v4484 = vpop.f32.mrb[0].mxu0
  %v4485 = vadd.f32 0.0, %v4484
  %v4486 = vpop.f32.mrb[0].mxu0
  %v4487 = vpop.f32.mrb[0].mxu0
  %v4488 = vadd.f32 0.0, %v4487
  %v4489 = vpop.f32.mrb[0].mxu0
  %4490 = vmatprep.mubr.bf16.mxu0 %v4290
  %4491 = vmatmul.mubr.bf16.gmra.mrb[0].mxu0 %v4289
  %v4492 = vpop.f32.mrb[0].mxu0
  %v4493 = vadd.f32 0.0, %v4492
  %v4494 = vpop.f32.mrb[0].mxu0
  %v4495 = vpop.f32.mrb[0].mxu0
  %v4496 = vadd.f32 0.0, %v4495
  %v4497 = vpop.f32.mrb[0].mxu0
  %4498 = vmatprep.mubr.bf16.mxu0 %v4292
  %4499 = vmatmul.mubr.bf16.gmra.mrb[0].mxu0 %v4291
  %v4500 = vpop.f32.mrb[0].mxu0
  %v4501 = vadd.f32 0.0, %v4500
  %v4502 = vpop.f32.mrb[0].mxu0
  %v4503 = vpop.f32.mrb[0].mxu0
  %v4504 = vadd.f32 0.0, %v4503
  %v4505 = vpop.f32.mrb[0].mxu0
  %4506 = vmatprep.mubr.bf16.mxu0 %v4294
  %4507 = vmatmul.mubr.bf16.gmra.mrb[0].mxu0 %v4293
  %v4508 = vpop.f32.mrb[0].mxu0
  %v4509 = vadd.f32 0.0, %v4508
  %v4510 = vpop.f32.mrb[0].mxu0
  %v4511 = vpop.f32.mrb[0].mxu0
  %v4512 = vadd.f32 0.0, %v4511
  %v4513 = vpop.f32.mrb[0].mxu0
  %4514 = vmatprep.mubr.bf16.mxu0 %v4296
  %4515 = vmatmul.mubr.bf16.gmra.mrb[0].mxu0 %v4295
  %v4516 = vpop.f32.mrb[0].mxu0
  %v4517 = vadd.f32 0.0, %v4516
  %v4518 = vpop.f32.mrb[0].mxu0
  %v4519 = vpop.f32.mrb[0].mxu0
  %v4520 = vadd.f32 0.0, %v4519
  %v4521 = vpop.f32.mrb[0].mxu0
  %4522 = vdwg.mxu0
  %v4523 = vadd.f32 %v4039, %v4461
  %v4524 = vadd.f32 %v4040, %v4464
  %v4525 = vadd.f32 %v4041, %v4469
  %v4526 = vadd.f32 %v4042, %v4472
  %v4527 = vadd.f32 %v4043, %v4477
  %v4528 = vadd.f32 %v4044, %v4480
  %v4529 = vadd.f32 %v4045, %v4485
  %v4530 = vadd.f32 %v4046, %v4488
  %v4531 = vadd.f32 %v4047, %v4493
  %v4532 = vadd.f32 %v4048, %v4496
  %v4533 = vadd.f32 %v4049, %v4501
  %v4534 = vadd.f32 %v4050, %v4504
  %v4535 = vadd.f32 %v4051, %v4509
  %v4536 = vadd.f32 %v4052, %v4512
  %v4537 = vadd.f32 %v4053, %v4517
  %v4538 = vadd.f32 %v4054, %v4520
  %v4539 = vld [vmem:[%s3] sm:$0x1]
  %v4541 = vlaneseq
  %v4542 = vshrl.u32 %v4541, 7
  %v4543 = vsub.s32 0, %v4542
  %v4544 = vrot.slane %v4539, %v4543
  %v4546 = vadd.f32 %v4523, %v4544
  %v4547 = vadd.f32 %v4524, %v4544
  %v4548 = vadd.f32 %v4525, %v4544
  %v4549 = vadd.f32 %v4526, %v4544
  %v4550 = vadd.f32 %v4527, %v4544
  %v4551 = vadd.f32 %v4528, %v4544
  %v4552 = vadd.f32 %v4529, %v4544
  %v4553 = vadd.f32 %v4530, %v4544
  %v4554 = vadd.f32 %v4531, %v4544
  %v4555 = vadd.f32 %v4532, %v4544
  %v4556 = vadd.f32 %v4533, %v4544
  %v4557 = vadd.f32 %v4534, %v4544
  %v4558 = vadd.f32 %v4535, %v4544
  %v4559 = vadd.f32 %v4536, %v4544
  %v4560 = vadd.f32 %v4537, %v4544
  %v4561 = vadd.f32 %v4538, %v4544
  %v4562 = vadd.f32 %v4546, %v4547
  %v4563 = vadd.f32 %v4562, %v4548
  %v4564 = vadd.f32 %v4563, %v4549
  %v4565 = vadd.f32 %v4564, %v4550
  %v4566 = vadd.f32 %v4565, %v4551
  %v4567 = vadd.f32 %v4566, %v4552
  %v4568 = vadd.f32 %v4567, %v4553
  %v4569 = vadd.f32 %v4568, %v4554
  %v4570 = vadd.f32 %v4569, %v4555
  %v4571 = vadd.f32 %v4570, %v4556
  %v4572 = vadd.f32 %v4571, %v4557
  %v4573 = vadd.f32 %v4572, %v4558
  %v4574 = vadd.f32 %v4573, %v4559
  %v4575 = vadd.f32 %v4574, %v4560
  %v4576 = vadd.f32 %v4575, %v4561
  %v4577 = vrot.slane %v4576, 4
  %v4578 = vadd.f32 %v4576, %v4577
  %v4579 = vrot.slane %v4578, 2
  %v4580 = vadd.f32 %v4578, %v4579
  %v4581 = vrot.slane %v4580, 1
  %v4582 = vadd.f32 %v4580, %v4581
  %v4583 = vmul.f32 %v4546, %v4546
  %v4584 = vmul.f32 %v4547, %v4547
  %v4585 = vmul.f32 %v4548, %v4548
  %v4586 = vmul.f32 %v4549, %v4549
  %v4587 = vmul.f32 %v4550, %v4550
  %v4588 = vmul.f32 %v4551, %v4551
  %v4589 = vmul.f32 %v4552, %v4552
  %v4590 = vmul.f32 %v4553, %v4553
  %v4591 = vmul.f32 %v4554, %v4554
  %v4592 = vmul.f32 %v4555, %v4555
  %v4593 = vmul.f32 %v4556, %v4556
  %v4594 = vmul.f32 %v4557, %v4557
  %v4595 = vmul.f32 %v4558, %v4558
  %v4596 = vmul.f32 %v4559, %v4559
  %v4597 = vmul.f32 %v4560, %v4560
  %v4598 = vmul.f32 %v4561, %v4561
  %v4599 = vadd.f32 %v4583, %v4584
  %v4600 = vadd.f32 %v4599, %v4585
  %v4601 = vadd.f32 %v4600, %v4586
  %v4602 = vadd.f32 %v4601, %v4587
  %v4603 = vadd.f32 %v4602, %v4588
  %v4604 = vadd.f32 %v4603, %v4589
  %v4605 = vadd.f32 %v4604, %v4590
  %v4606 = vadd.f32 %v4605, %v4591
  %v4607 = vadd.f32 %v4606, %v4592
  %v4608 = vadd.f32 %v4607, %v4593
  %v4609 = vadd.f32 %v4608, %v4594
  %v4610 = vadd.f32 %v4609, %v4595
  %v4611 = vadd.f32 %v4610, %v4596
  %v4612 = vadd.f32 %v4611, %v4597
  %v4613 = vadd.f32 %v4612, %v4598
  %v4614 = vrot.slane %v4613, 4
  %v4615 = vadd.f32 %v4613, %v4614
  %v4616 = vrot.slane %v4615, 2
  %v4617 = vadd.f32 %v4615, %v4616
  %v4618 = vrot.slane %v4617, 1
  %v4619 = vadd.f32 %v4617, %v4618
  %v4620 = vmul.f32 %v4582, 0.0078125
  %v4621 = vmul.f32 %v4619, 0.0078125
  %v4622 = vmul.f32 %v4620, %v4620
  %v4623 = vsub.f32 %v4621, %v4622
  %v4624 = vsub.f32 %v4546, %v4620
  %v4625 = vsub.f32 %v4547, %v4620
  %v4626 = vsub.f32 %v4548, %v4620
  %v4627 = vsub.f32 %v4549, %v4620
  %v4628 = vsub.f32 %v4550, %v4620
  %v4629 = vsub.f32 %v4551, %v4620
  %v4630 = vsub.f32 %v4552, %v4620
  %v4631 = vsub.f32 %v4553, %v4620
  %v4632 = vsub.f32 %v4554, %v4620
  %v4633 = vsub.f32 %v4555, %v4620
  %v4634 = vsub.f32 %v4556, %v4620
  %v4635 = vsub.f32 %v4557, %v4620
  %v4636 = vsub.f32 %v4558, %v4620
  %v4637 = vsub.f32 %v4559, %v4620
  %v4638 = vsub.f32 %v4560, %v4620
  %v4639 = vsub.f32 %v4561, %v4620
  %v4640 = vadd.f32 %v4623, 1e-05
  %v4641 = vrsqrt.pop %v4640
  %v4642 = vmul.f32 %v4624, %v4641
  %v4643 = vmul.f32 %v4625, %v4641
  %v4644 = vmul.f32 %v4626, %v4641
  %v4645 = vmul.f32 %v4627, %v4641
  %v4646 = vmul.f32 %v4628, %v4641
  %v4647 = vmul.f32 %v4629, %v4641
  %v4648 = vmul.f32 %v4630, %v4641
  %v4649 = vmul.f32 %v4631, %v4641
  %v4650 = vmul.f32 %v4632, %v4641
  %v4651 = vmul.f32 %v4633, %v4641
  %v4652 = vmul.f32 %v4634, %v4641
  %v4653 = vmul.f32 %v4635, %v4641
  %v4654 = vmul.f32 %v4636, %v4641
  %v4655 = vmul.f32 %v4637, %v4641
  %v4656 = vmul.f32 %v4638, %v4641
  %v4657 = vmul.f32 %v4639, %v4641
  %v4658 = vld [vmem:[%s4] sm:$0x1]
  %v4660 = vlaneseq
  %v4661 = vshrl.u32 %v4660, 7
  %v4662 = vsub.s32 0, %v4661
  %v4663 = vrot.slane %v4658, %v4662
  %v4665 = vmul.f32 %v4642, %v4663
  %v4666 = vmul.f32 %v4643, %v4663
  %v4667 = vmul.f32 %v4644, %v4663
  %v4668 = vmul.f32 %v4645, %v4663
  %v4669 = vmul.f32 %v4646, %v4663
  %v4670 = vmul.f32 %v4647, %v4663
  %v4671 = vmul.f32 %v4648, %v4663
  %v4672 = vmul.f32 %v4649, %v4663
  %v4673 = vmul.f32 %v4650, %v4663
  %v4674 = vmul.f32 %v4651, %v4663
  %v4675 = vmul.f32 %v4652, %v4663
  %v4676 = vmul.f32 %v4653, %v4663
  %v4677 = vmul.f32 %v4654, %v4663
  %v4678 = vmul.f32 %v4655, %v4663
  %v4679 = vmul.f32 %v4656, %v4663
  %v4680 = vmul.f32 %v4657, %v4663
  %v4681 = vld [vmem:[%s5] sm:$0x1]
  %v4683 = vlaneseq
  %v4684 = vshrl.u32 %v4683, 7
  %v4685 = vsub.s32 0, %v4684
  %v4686 = vrot.slane %v4681, %v4685
  %v4688 = vadd.f32 %v4665, %v4686
  %v4689 = vadd.f32 %v4666, %v4686
  %v4690 = vadd.f32 %v4667, %v4686
  %v4691 = vadd.f32 %v4668, %v4686
  %v4692 = vadd.f32 %v4669, %v4686
  %v4693 = vadd.f32 %v4670, %v4686
  %v4694 = vadd.f32 %v4671, %v4686
  %v4695 = vadd.f32 %v4672, %v4686
  %v4696 = vadd.f32 %v4673, %v4686
  %v4697 = vadd.f32 %v4674, %v4686
  %v4698 = vadd.f32 %v4675, %v4686
  %v4699 = vadd.f32 %v4676, %v4686
  %v4700 = vadd.f32 %v4677, %v4686
  %v4701 = vadd.f32 %v4678, %v4686
  %v4702 = vadd.f32 %v4679, %v4686
  %v4703 = vadd.f32 %v4680, %v4686
  %v4704 = vmax.f32 %v4688, 0.0
  %v4705 = vmax.f32 %v4689, 0.0
  %v4706 = vmax.f32 %v4690, 0.0
  %v4707 = vmax.f32 %v4691, 0.0
  %v4708 = vmax.f32 %v4692, 0.0
  %v4709 = vmax.f32 %v4693, 0.0
  %v4710 = vmax.f32 %v4694, 0.0
  %v4711 = vmax.f32 %v4695, 0.0
  %v4712 = vmax.f32 %v4696, 0.0
  %v4713 = vmax.f32 %v4697, 0.0
  %v4714 = vmax.f32 %v4698, 0.0
  %v4715 = vmax.f32 %v4699, 0.0
  %v4716 = vmax.f32 %v4700, 0.0
  %v4717 = vmax.f32 %v4701, 0.0
  %v4718 = vmax.f32 %v4702, 0.0
  %v4719 = vmax.f32 %v4703, 0.0
  %v4720 = vpack.c.bf16 %v4705, %v4704
  %v4721 = vpack.c.bf16 %v4707, %v4706
  %v4722 = vpack.c.bf16 %v4709, %v4708
  %v4723 = vpack.c.bf16 %v4711, %v4710
  %v4724 = vpack.c.bf16 %v4713, %v4712
  %v4725 = vpack.c.bf16 %v4715, %v4714
  %v4726 = vpack.c.bf16 %v4717, %v4716
  %v4727 = vpack.c.bf16 %v4719, %v4718
  %v4728 = vld [vmem:[%s6] sm:$0xf]
  %v4729 = vld [vmem:[%s6 + $0x4] sm:$0xf]
  %v4730 = vld [vmem:[%s6 + $0x8] sm:$0xf]
  %v4731 = vld [vmem:[%s6 + $0xc] sm:$0xf]
  %v4736 = vunpack.c.l.b16 %v4728
  %v4737 = vunpack.c.l.b16 %v4729
  %v4738 = vunpack.c.l.b16 %v4730
  %v4739 = vunpack.c.l.b16 %v4731
  %v4740 = vpack.c.b16 %v4737, %v4736
  %v4741 = vpack.c.b16 %v4739, %v4738
  %4744 = vmatprep.subr.bf16.mxu0 0
  %4745 = vmatpush1.bf16.msra.mxu0 %v4720
  %4746 = vmatprep.subr.bf16.mxu0 0
  %4747 = vmatpush1.bf16.msra.mxu0 %v4721
  %4748 = vmatprep.subr.bf16.mxu0 0
  %4749 = vmatpush1.bf16.msra.mxu0 %v4722
  %4750 = vmatprep.subr.bf16.mxu0 0
  %4751 = vmatpush1.bf16.msra.mxu0 %v4723
  %4752 = vmatprep.subr.bf16.mxu0 0
  %4753 = vmatpush1.bf16.msra.mxu0 %v4724
  %4754 = vmatprep.subr.bf16.mxu0 0
  %4755 = vmatpush1.bf16.msra.mxu0 %v4725
  %4756 = vmatprep.subr.bf16.mxu0 0
  %4757 = vmatpush1.bf16.msra.mxu0 %v4726
  %4758 = vmatprep.subr.bf16.mxu0 0
  %4759 = vmatpush1.bf16.msra.mxu0 %v4727
  %4760 = vmatprep.subr.bf16.mxu0 0
  %4761 = vmatpush1.bf16.msra.mxu0 0
  %4762 = vmatprep.subr.bf16.mxu0 0
  %4763 = vmatpush1.bf16.msra.mxu0 0
  %4764 = vmatprep.subr.bf16.mxu0 0
  %4765 = vmatpush1.bf16.msra.mxu0 0
  %4766 = vmatprep.subr.bf16.mxu0 0
  %4767 = vmatpush1.bf16.msra.mxu0 0
  %4768 = vmatprep.subr.bf16.mxu0 0
  %4769 = vmatpush1.bf16.msra.mxu0 0
  %4770 = vmatprep.subr.bf16.mxu0 0
  %4771 = vmatpush1.bf16.msra.mxu0 0
  %4772 = vmatprep.subr.bf16.mxu0 0
  %4773 = vmatpush1.bf16.msra.mxu0 0
  %4774 = vmatprep.subr.bf16.mxu0 0
  %4775 = vmatpush1.bf16.msra.mxu0 0
  %4776 = vmatprep.mubr.bf16.mxu0 0
  %4777 = vmatmul.mubr.bf16.gmra.mrb[0].mxu0 %v4740
  %v4778 = vpop.f32.mrb[0].mxu0
  %v4779 = vadd.f32 0.0, %v4778
  %v4780 = vpop.f32.mrb[0].mxu0
  %v4781 = vpop.f32.mrb[0].mxu0
  %v4782 = vadd.f32 0.0, %v4781
  %v4783 = vpop.f32.mrb[0].mxu0
  %4784 = vmatprep.mubr.bf16.mxu0 0
  %4785 = vmatmul.mubr.bf16.gmra.mrb[0].mxu0 %v4741
  %v4786 = vpop.f32.mrb[0].mxu0
  %v4787 = vadd.f32 0.0, %v4786
  %v4788 = vpop.f32.mrb[0].mxu0
  %v4789 = vpop.f32.mrb[0].mxu0
  %v4790 = vadd.f32 0.0, %v4789
  %v4791 = vpop.f32.mrb[0].mxu0
  %4792 = vdwg.mxu0
  %s4793 = scalar_lea.vmem %s6, 16
  %v4794 = vld [vmem:[%s4793] sm:$0xf]
  %v4795 = vld [vmem:[%s4793 + $0x4] sm:$0xf]
  %v4796 = vld [vmem:[%s4793 + $0x8] sm:$0xf]
  %v4797 = vld [vmem:[%s4793 + $0xc] sm:$0xf]
  %v4802 = vunpack.c.l.b16 %v4794
  %v4803 = vunpack.c.l.b16 %v4795
  %v4804 = vunpack.c.l.b16 %v4796
  %v4805 = vunpack.c.l.b16 %v4797
  %v4806 = vpack.c.b16 %v4803, %v4802
  %v4807 = vpack.c.b16 %v4805, %v4804
  %4810 = vmatprep.subr.bf16.mxu0 0
  %4811 = vmatpush1.bf16.msra.mxu0 %v4720
  %4812 = vmatprep.subr.bf16.mxu0 0
  %4813 = vmatpush1.bf16.msra.mxu0 %v4721
  %4814 = vmatprep.subr.bf16.mxu0 0
  %4815 = vmatpush1.bf16.msra.mxu0 %v4722
  %4816 = vmatprep.subr.bf16.mxu0 0
  %4817 = vmatpush1.bf16.msra.mxu0 %v4723
  %4818 = vmatprep.subr.bf16.mxu0 0
  %4819 = vmatpush1.bf16.msra.mxu0 %v4724
  %4820 = vmatprep.subr.bf16.mxu0 0
  %4821 = vmatpush1.bf16.msra.mxu0 %v4725
  %4822 = vmatprep.subr.bf16.mxu0 0
  %4823 = vmatpush1.bf16.msra.mxu0 %v4726
  %4824 = vmatprep.subr.bf16.mxu0 0
  %4825 = vmatpush1.bf16.msra.mxu0 %v4727
  %4826 = vmatprep.subr.bf16.mxu0 0
  %4827 = vmatpush1.bf16.msra.mxu0 0
  %4828 = vmatprep.subr.bf16.mxu0 0
  %4829 = vmatpush1.bf16.msra.mxu0 0
  %4830 = vmatprep.subr.bf16.mxu0 0
  %4831 = vmatpush1.bf16.msra.mxu0 0
  %4832 = vmatprep.subr.bf16.mxu0 0
  %4833 = vmatpush1.bf16.msra.mxu0 0
  %4834 = vmatprep.subr.bf16.mxu0 0
  %4835 = vmatpush1.bf16.msra.mxu0 0
  %4836 = vmatprep.subr.bf16.mxu0 0
  %4837 = vmatpush1.bf16.msra.mxu0 0
  %4838 = vmatprep.subr.bf16.mxu0 0
  %4839 = vmatpush1.bf16.msra.mxu0 0
  %4840 = vmatprep.subr.bf16.mxu0 0
  %4841 = vmatpush1.bf16.msra.mxu0 0
  %4842 = vmatprep.mubr.bf16.mxu0 0
  %4843 = vmatmul.mubr.bf16.gmra.mrb[0].mxu0 %v4806
  %v4844 = vpop.f32.mrb[0].mxu0
  %v4845 = vadd.f32 0.0, %v4844
  %v4846 = vpop.f32.mrb[0].mxu0
  %v4847 = vpop.f32.mrb[0].mxu0
  %v4848 = vadd.f32 0.0, %v4847
  %v4849 = vpop.f32.mrb[0].mxu0
  %4850 = vmatprep.mubr.bf16.mxu0 0
  %4851 = vmatmul.mubr.bf16.gmra.mrb[0].mxu0 %v4807
  %v4852 = vpop.f32.mrb[0].mxu0
  %v4853 = vadd.f32 0.0, %v4852
  %v4854 = vpop.f32.mrb[0].mxu0
  %v4855 = vpop.f32.mrb[0].mxu0
  %v4856 = vadd.f32 0.0, %v4855
  %v4857 = vpop.f32.mrb[0].mxu0
  %4858 = vdwg.mxu0
  %v4859 = vmax.f32 %v4779, %v4845
  %v4860 = vmax.f32 %v4782, %v4848
  %v4861 = vmax.f32 %v4787, %v4853
  %v4862 = vmax.f32 %v4790, %v4856
  %s4863 = scalar_lea.vmem %s6, 32
  %v4864 = vld [vmem:[%s4863] sm:$0xf]
  %v4865 = vld [vmem:[%s4863 + $0x4] sm:$0xf]
  %v4866 = vld [vmem:[%s4863 + $0x8] sm:$0xf]
  %v4867 = vld [vmem:[%s4863 + $0xc] sm:$0xf]
  %v4872 = vunpack.c.l.b16 %v4864
  %v4873 = vunpack.c.l.b16 %v4865
  %v4874 = vunpack.c.l.b16 %v4866
  %v4875 = vunpack.c.l.b16 %v4867
  %v4876 = vpack.c.b16 %v4873, %v4872
  %v4877 = vpack.c.b16 %v4875, %v4874
  %4880 = vmatprep.subr.bf16.mxu0 0
  %4881 = vmatpush1.bf16.msra.mxu0 %v4720
  %4882 = vmatprep.subr.bf16.mxu0 0
  %4883 = vmatpush1.bf16.msra.mxu0 %v4721
  %4884 = vmatprep.subr.bf16.mxu0 0
  %4885 = vmatpush1.bf16.msra.mxu0 %v4722
  %4886 = vmatprep.subr.bf16.mxu0 0
  %4887 = vmatpush1.bf16.msra.mxu0 %v4723
  %4888 = vmatprep.subr.bf16.mxu0 0
  %4889 = vmatpush1.bf16.msra.mxu0 %v4724
  %4890 = vmatprep.subr.bf16.mxu0 0
  %4891 = vmatpush1.bf16.msra.mxu0 %v4725
  %4892 = vmatprep.subr.bf16.mxu0 0
  %4893 = vmatpush1.bf16.msra.mxu0 %v4726
  %4894 = vmatprep.subr.bf16.mxu0 0
  %4895 = vmatpush1.bf16.msra.mxu0 %v4727
  %4896 = vmatprep.subr.bf16.mxu0 0
  %4897 = vmatpush1.bf16.msra.mxu0 0
  %4898 = vmatprep.subr.bf16.mxu0 0
  %4899 = vmatpush1.bf16.msra.mxu0 0
  %4900 = vmatprep.subr.bf16.mxu0 0
  %4901 = vmatpush1.bf16.msra.mxu0 0
  %4902 = vmatprep.subr.bf16.mxu0 0
  %4903 = vmatpush1.bf16.msra.mxu0 0
  %4904 = vmatprep.subr.bf16.mxu0 0
  %4905 = vmatpush1.bf16.msra.mxu0 0
  %4906 = vmatprep.subr.bf16.mxu0 0
  %4907 = vmatpush1.bf16.msra.mxu0 0
  %4908 = vmatprep.subr.bf16.mxu0 0
  %4909 = vmatpush1.bf16.msra.mxu0 0
  %4910 = vmatprep.subr.bf16.mxu0 0
  %4911 = vmatpush1.bf16.msra.mxu0 0
  %4912 = vmatprep.mubr.bf16.mxu0 0
  %4913 = vmatmul.mubr.bf16.gmra.mrb[0].mxu0 %v4876
  %v4914 = vpop.f32.mrb[0].mxu0
  %v4915 = vadd.f32 0.0, %v4914
  %v4916 = vpop.f32.mrb[0].mxu0
  %v4917 = vpop.f32.mrb[0].mxu0
  %v4918 = vadd.f32 0.0, %v4917
  %v4919 = vpop.f32.mrb[0].mxu0
  %4920 = vmatprep.mubr.bf16.mxu0 0
  %4921 = vmatmul.mubr.bf16.gmra.mrb[0].mxu0 %v4877
  %v4922 = vpop.f32.mrb[0].mxu0
  %v4923 = vadd.f32 0.0, %v4922
  %v4924 = vpop.f32.mrb[0].mxu0
  %v4925 = vpop.f32.mrb[0].mxu0
  %v4926 = vadd.f32 0.0, %v4925
  %v4927 = vpop.f32.mrb[0].mxu0
  %4928 = vdwg.mxu0
  %v4929 = vmax.f32 %v4859, %v4915
  %v4930 = vmax.f32 %v4860, %v4918
  %v4931 = vmax.f32 %v4861, %v4923
  %v4932 = vmax.f32 %v4862, %v4926
  %s4933 = scalar_lea.vmem %s6, 48
  %v4934 = vld [vmem:[%s4933] sm:$0xf]
  %v4935 = vld [vmem:[%s4933 + $0x4] sm:$0xf]
  %v4936 = vld [vmem:[%s4933 + $0x8] sm:$0xf]
  %v4937 = vld [vmem:[%s4933 + $0xc] sm:$0xf]
  %v4942 = vunpack.c.l.b16 %v4934
  %v4943 = vunpack.c.l.b16 %v4935
  %v4944 = vunpack.c.l.b16 %v4936
  %v4945 = vunpack.c.l.b16 %v4937
  %v4946 = vpack.c.b16 %v4943, %v4942
  %v4947 = vpack.c.b16 %v4945, %v4944
  %4950 = vmatprep.subr.bf16.mxu0 0
  %4951 = vmatpush1.bf16.msra.mxu0 %v4720
  %4952 = vmatprep.subr.bf16.mxu0 0
  %4953 = vmatpush1.bf16.msra.mxu0 %v4721
  %4954 = vmatprep.subr.bf16.mxu0 0
  %4955 = vmatpush1.bf16.msra.mxu0 %v4722
  %4956 = vmatprep.subr.bf16.mxu0 0
  %4957 = vmatpush1.bf16.msra.mxu0 %v4723
  %4958 = vmatprep.subr.bf16.mxu0 0
  %4959 = vmatpush1.bf16.msra.mxu0 %v4724
  %4960 = vmatprep.subr.bf16.mxu0 0
  %4961 = vmatpush1.bf16.msra.mxu0 %v4725
  %4962 = vmatprep.subr.bf16.mxu0 0
  %4963 = vmatpush1.bf16.msra.mxu0 %v4726
  %4964 = vmatprep.subr.bf16.mxu0 0
  %4965 = vmatpush1.bf16.msra.mxu0 %v4727
  %4966 = vmatprep.subr.bf16.mxu0 0
  %4967 = vmatpush1.bf16.msra.mxu0 0
  %4968 = vmatprep.subr.bf16.mxu0 0
  %4969 = vmatpush1.bf16.msra.mxu0 0
  %4970 = vmatprep.subr.bf16.mxu0 0
  %4971 = vmatpush1.bf16.msra.mxu0 0
  %4972 = vmatprep.subr.bf16.mxu0 0
  %4973 = vmatpush1.bf16.msra.mxu0 0
  %4974 = vmatprep.subr.bf16.mxu0 0
  %4975 = vmatpush1.bf16.msra.mxu0 0
  %4976 = vmatprep.subr.bf16.mxu0 0
  %4977 = vmatpush1.bf16.msra.mxu0 0
  %4978 = vmatprep.subr.bf16.mxu0 0
  %4979 = vmatpush1.bf16.msra.mxu0 0
  %4980 = vmatprep.subr.bf16.mxu0 0
  %4981 = vmatpush1.bf16.msra.mxu0 0
  %4982 = vmatprep.mubr.bf16.mxu0 0
  %4983 = vmatmul.mubr.bf16.gmra.mrb[0].mxu0 %v4946
  %v4984 = vpop.f32.mrb[0].mxu0
  %v4985 = vadd.f32 0.0, %v4984
  %v4986 = vpop.f32.mrb[0].mxu0
  %v4987 = vpop.f32.mrb[0].mxu0
  %v4988 = vadd.f32 0.0, %v4987
  %v4989 = vpop.f32.mrb[0].mxu0
  %4990 = vmatprep.mubr.bf16.mxu0 0
  %4991 = vmatmul.mubr.bf16.gmra.mrb[0].mxu0 %v4947
  %v4992 = vpop.f32.mrb[0].mxu0
  %v4993 = vadd.f32 0.0, %v4992
  %v4994 = vpop.f32.mrb[0].mxu0
  %v4995 = vpop.f32.mrb[0].mxu0
  %v4996 = vadd.f32 0.0, %v4995
  %v4997 = vpop.f32.mrb[0].mxu0
  %4998 = vdwg.mxu0
  %v4999 = vmax.f32 %v4929, %v4985
  %v5000 = vmax.f32 %v4930, %v4988
  %v5001 = vmax.f32 %v4931, %v4993
  %v5002 = vmax.f32 %v4932, %v4996
  %v5003 = vpack.c.bf16 %v5000, %v4999
  %v5004 = vpack.c.bf16 %v5002, %v5001
  %v5005 = vld [vmem:[%s7] sm:$0xf]
  %vm5006 = vcmask 261120
  %v5008 = vsel %vm5006, %v5005, 0
  %5010 = vmatprep.subr.bf16.mxu0 0
  %5011 = vmatpush1.bf16.msra.mxu0 %v5003
  %5012 = vmatprep.subr.bf16.mxu0 0
  %5013 = vmatpush1.bf16.msra.mxu0 %v5004
  %5014 = vmatprep.subr.bf16.mxu0 0
  %5015 = vmatpush1.bf16.msra.mxu0 0
  %5016 = vmatprep.subr.bf16.mxu0 0
  %5017 = vmatpush1.bf16.msra.mxu0 0
  %5018 = vmatprep.subr.bf16.mxu0 0
  %5019 = vmatpush1.bf16.msra.mxu0 0
  %5020 = vmatprep.subr.bf16.mxu0 0
  %5021 = vmatpush1.bf16.msra.mxu0 0
  %5022 = vmatprep.subr.bf16.mxu0 0
  %5023 = vmatpush1.bf16.msra.mxu0 0
  %5024 = vmatprep.subr.bf16.mxu0 0
  %5025 = vmatpush1.bf16.msra.mxu0 0
  %5026 = vmatprep.subr.bf16.mxu0 0
  %5027 = vmatpush1.bf16.msra.mxu0 0
  %5028 = vmatprep.subr.bf16.mxu0 0
  %5029 = vmatpush1.bf16.msra.mxu0 0
  %5030 = vmatprep.subr.bf16.mxu0 0
  %5031 = vmatpush1.bf16.msra.mxu0 0
  %5032 = vmatprep.subr.bf16.mxu0 0
  %5033 = vmatpush1.bf16.msra.mxu0 0
  %5034 = vmatprep.subr.bf16.mxu0 0
  %5035 = vmatpush1.bf16.msra.mxu0 0
  %5036 = vmatprep.subr.bf16.mxu0 0
  %5037 = vmatpush1.bf16.msra.mxu0 0
  %5038 = vmatprep.subr.bf16.mxu0 0
  %5039 = vmatpush1.bf16.msra.mxu0 0
  %5040 = vmatprep.subr.bf16.mxu0 0
  %5041 = vmatpush1.bf16.msra.mxu0 0
  %5042 = vmatprep.mubr.bf16.mxu0 0
  %5043 = vmatmul.mubr.bf16.gmra.mrb[0].mxu0 %v5008
  %v5044 = vpop.f32.mrb[0].mxu0
  %v5045 = vadd.f32 0.0, %v5044
  %v5046 = vpop.f32.mrb[0].mxu0
  %v5047 = vpop.f32.mrb[0].mxu0
  %v5048 = vpop.f32.mrb[0].mxu0
  %5049 = vdwg.mxu0
  %v5050 = vpack.c.bf16 %v5045, %v5045
  %v5051 = vld [vmem:[%s8] sm:$0xf]
  %v5052 = vld [vmem:[%s8 + $0x4] sm:$0xf]
  %v5053 = vld [vmem:[%s8 + $0x8] sm:$0xf]
  %v5054 = vld [vmem:[%s8 + $0xc] sm:$0xf]
  %v5055 = vld [vmem:[%s8 + $0x10] sm:$0xf]
  %v5056 = vld [vmem:[%s8 + $0x14] sm:$0xf]
  %v5057 = vld [vmem:[%s8 + $0x18] sm:$0xf]
  %v5058 = vld [vmem:[%s8 + $0x1c] sm:$0xf]
  %v5059 = vld [vmem:[%s8 + $0x20] sm:$0xf]
  %v5060 = vld [vmem:[%s8 + $0x24] sm:$0xf]
  %v5061 = vld [vmem:[%s8 + $0x28] sm:$0xf]
  %v5062 = vld [vmem:[%s8 + $0x2c] sm:$0xf]
  %v5063 = vld [vmem:[%s8 + $0x30] sm:$0xf]
  %v5064 = vld [vmem:[%s8 + $0x34] sm:$0xf]
  %v5065 = vld [vmem:[%s8 + $0x38] sm:$0xf]
  %v5066 = vld [vmem:[%s8 + $0x3c] sm:$0xf]
  %s5067 = scalar_lea.vmem %s7, 4
  %v5068 = vld [vmem:[%s5067] sm:$0xf]
  %v5070 = vsel %vm5006, %v5068, 0
  %5072 = vmatprep.subr.bf16.mxu0 0
  %5073 = vmatpush1.bf16.msra.mxu0 %v5003
  %5074 = vmatprep.subr.bf16.mxu0 0
  %5075 = vmatpush1.bf16.msra.mxu0 %v5004
  %5076 = vmatprep.subr.bf16.mxu0 0
  %5077 = vmatpush1.bf16.msra.mxu0 0
  %5078 = vmatprep.subr.bf16.mxu0 0
  %5079 = vmatpush1.bf16.msra.mxu0 0
  %5080 = vmatprep.subr.bf16.mxu0 0
  %5081 = vmatpush1.bf16.msra.mxu0 0
  %5082 = vmatprep.subr.bf16.mxu0 0
  %5083 = vmatpush1.bf16.msra.mxu0 0
  %5084 = vmatprep.subr.bf16.mxu0 0
  %5085 = vmatpush1.bf16.msra.mxu0 0
  %5086 = vmatprep.subr.bf16.mxu0 0
  %5087 = vmatpush1.bf16.msra.mxu0 0
  %5088 = vmatprep.subr.bf16.mxu0 0
  %5089 = vmatpush1.bf16.msra.mxu0 0
  %5090 = vmatprep.subr.bf16.mxu0 0
  %5091 = vmatpush1.bf16.msra.mxu0 0
  %5092 = vmatprep.subr.bf16.mxu0 0
  %5093 = vmatpush1.bf16.msra.mxu0 0
  %5094 = vmatprep.subr.bf16.mxu0 0
  %5095 = vmatpush1.bf16.msra.mxu0 0
  %5096 = vmatprep.subr.bf16.mxu0 0
  %5097 = vmatpush1.bf16.msra.mxu0 0
  %5098 = vmatprep.subr.bf16.mxu0 0
  %5099 = vmatpush1.bf16.msra.mxu0 0
  %5100 = vmatprep.subr.bf16.mxu0 0
  %5101 = vmatpush1.bf16.msra.mxu0 0
  %5102 = vmatprep.subr.bf16.mxu0 0
  %5103 = vmatpush1.bf16.msra.mxu0 0
  %5104 = vmatprep.mubr.bf16.mxu0 0
  %5105 = vmatmul.mubr.bf16.gmra.mrb[0].mxu0 %v5070
  %v5106 = vpop.f32.mrb[0].mxu0
  %v5107 = vadd.f32 0.0, %v5106
  %v5108 = vpop.f32.mrb[0].mxu0
  %v5109 = vpop.f32.mrb[0].mxu0
  %v5110 = vpop.f32.mrb[0].mxu0
  %5111 = vdwg.mxu0
  %v5112 = vpack.c.bf16 %v5107, %v5107
  %s5113 = scalar_lea.vmem %s8, 64
  %v5114 = vld [vmem:[%s5113] sm:$0xf]
  %v5115 = vld [vmem:[%s5113 + $0x4] sm:$0xf]
  %v5116 = vld [vmem:[%s5113 + $0x8] sm:$0xf]
  %v5117 = vld [vmem:[%s5113 + $0xc] sm:$0xf]
  %v5118 = vld [vmem:[%s5113 + $0x10] sm:$0xf]
  %v5119 = vld [vmem:[%s5113 + $0x14] sm:$0xf]
  %v5120 = vld [vmem:[%s5113 + $0x18] sm:$0xf]
  %v5121 = vld [vmem:[%s5113 + $0x1c] sm:$0xf]
  %v5122 = vld [vmem:[%s5113 + $0x20] sm:$0xf]
  %v5123 = vld [vmem:[%s5113 + $0x24] sm:$0xf]
  %v5124 = vld [vmem:[%s5113 + $0x28] sm:$0xf]
  %v5125 = vld [vmem:[%s5113 + $0x2c] sm:$0xf]
  %v5126 = vld [vmem:[%s5113 + $0x30] sm:$0xf]
  %v5127 = vld [vmem:[%s5113 + $0x34] sm:$0xf]
  %v5128 = vld [vmem:[%s5113 + $0x38] sm:$0xf]
  %v5129 = vld [vmem:[%s5113 + $0x3c] sm:$0xf]
  %v5146 = vunpack.c.l.b16 %v5114
  %v5147 = vunpack.c.l.b16 %v5115
  %v5148 = vunpack.c.l.b16 %v5116
  %v5149 = vunpack.c.l.b16 %v5117
  %v5150 = vunpack.c.l.b16 %v5118
  %v5151 = vunpack.c.l.b16 %v5119
  %v5152 = vunpack.c.l.b16 %v5120
  %v5153 = vunpack.c.l.b16 %v5121
  %v5154 = vunpack.c.l.b16 %v5122
  %v5155 = vunpack.c.l.b16 %v5123
  %v5156 = vunpack.c.l.b16 %v5124
  %v5157 = vunpack.c.l.b16 %v5125
  %v5158 = vunpack.c.l.b16 %v5126
  %v5159 = vunpack.c.l.b16 %v5127
  %v5160 = vunpack.c.l.b16 %v5128
  %v5161 = vunpack.c.l.b16 %v5129
  %v5162 = vpack.c.b16 %v5147, %v5146
  %v5163 = vpack.c.b16 %v5149, %v5148
  %v5164 = vpack.c.b16 %v5151, %v5150
  %v5165 = vpack.c.b16 %v5153, %v5152
  %v5166 = vpack.c.b16 %v5155, %v5154
  %v5167 = vpack.c.b16 %v5157, %v5156
  %v5168 = vpack.c.b16 %v5159, %v5158
  %v5169 = vpack.c.b16 %v5161, %v5160
  %5178 = vmatprep.subr.bf16.mxu0 0
  %5179 = vmatpush1.bf16.msra.mxu0 %v5162
  %5180 = vmatprep.subr.bf16.mxu0 0
  %5181 = vmatpush1.bf16.msra.mxu0 %v5163
  %5182 = vmatprep.subr.bf16.mxu0 0
  %5183 = vmatpush1.bf16.msra.mxu0 %v5164
  %5184 = vmatprep.subr.bf16.mxu0 0
  %5185 = vmatpush1.bf16.msra.mxu0 %v5165
  %5186 = vmatprep.subr.bf16.mxu0 0
  %5187 = vmatpush1.bf16.msra.mxu0 %v5166
  %5188 = vmatprep.subr.bf16.mxu0 0
  %5189 = vmatpush1.bf16.msra.mxu0 %v5167
  %5190 = vmatprep.subr.bf16.mxu0 0
  %5191 = vmatpush1.bf16.msra.mxu0 %v5168
  %5192 = vmatprep.subr.bf16.mxu0 0
  %5193 = vmatpush1.bf16.msra.mxu0 %v5169
  %5194 = vmatprep.subr.bf16.mxu0 0
  %5195 = vmatpush1.bf16.msra.mxu0 0
  %5196 = vmatprep.subr.bf16.mxu0 0
  %5197 = vmatpush1.bf16.msra.mxu0 0
  %5198 = vmatprep.subr.bf16.mxu0 0
  %5199 = vmatpush1.bf16.msra.mxu0 0
  %5200 = vmatprep.subr.bf16.mxu0 0
  %5201 = vmatpush1.bf16.msra.mxu0 0
  %5202 = vmatprep.subr.bf16.mxu0 0
  %5203 = vmatpush1.bf16.msra.mxu0 0
  %5204 = vmatprep.subr.bf16.mxu0 0
  %5205 = vmatpush1.bf16.msra.mxu0 0
  %5206 = vmatprep.subr.bf16.mxu0 0
  %5207 = vmatpush1.bf16.msra.mxu0 0
  %5208 = vmatprep.subr.bf16.mxu0 0
  %5209 = vmatpush1.bf16.msra.mxu0 0
  %5210 = vmatprep.mubr.bf16.mxu0 0
  %5211 = vmatmul.mubr.bf16.gmra.mrb[0].mxu0 %v5112
  %v5212 = vpop.f32.mrb[0].mxu0
  %v5213 = vadd.f32 0.0, %v5212
  %v5214 = vpop.f32.mrb[0].mxu0
  %v5215 = vpop.f32.mrb[0].mxu0
  %v5216 = vpop.f32.mrb[0].mxu0
  %5217 = vdwg.mxu0
  %v5234 = vunpack.c.l.b16 %v5051
  %v5235 = vunpack.c.l.b16 %v5052
  %v5236 = vunpack.c.l.b16 %v5053
  %v5237 = vunpack.c.l.b16 %v5054
  %v5238 = vunpack.c.l.b16 %v5055
  %v5239 = vunpack.c.l.b16 %v5056
  %v5240 = vunpack.c.l.b16 %v5057
  %v5241 = vunpack.c.l.b16 %v5058
  %v5242 = vunpack.c.l.b16 %v5059
  %v5243 = vunpack.c.l.b16 %v5060
  %v5244 = vunpack.c.l.b16 %v5061
  %v5245 = vunpack.c.l.b16 %v5062
  %v5246 = vunpack.c.l.b16 %v5063
  %v5247 = vunpack.c.l.b16 %v5064
  %v5248 = vunpack.c.l.b16 %v5065
  %v5249 = vunpack.c.l.b16 %v5066
  %v5250 = vpack.c.b16 %v5235, %v5234
  %v5251 = vpack.c.b16 %v5237, %v5236
  %v5252 = vpack.c.b16 %v5239, %v5238
  %v5253 = vpack.c.b16 %v5241, %v5240
  %v5254 = vpack.c.b16 %v5243, %v5242
  %v5255 = vpack.c.b16 %v5245, %v5244
  %v5256 = vpack.c.b16 %v5247, %v5246
  %v5257 = vpack.c.b16 %v5249, %v5248
  %5266 = vmatprep.subr.bf16.mxu0 0
  %5267 = vmatpush1.bf16.msra.mxu0 %v5250
  %5268 = vmatprep.subr.bf16.mxu0 0
  %5269 = vmatpush1.bf16.msra.mxu0 %v5251
  %5270 = vmatprep.subr.bf16.mxu0 0
  %5271 = vmatpush1.bf16.msra.mxu0 %v5252
  %5272 = vmatprep.subr.bf16.mxu0 0
  %5273 = vmatpush1.bf16.msra.mxu0 %v5253
  %5274 = vmatprep.subr.bf16.mxu0 0
  %5275 = vmatpush1.bf16.msra.mxu0 %v5254
  %5276 = vmatprep.subr.bf16.mxu0 0
  %5277 = vmatpush1.bf16.msra.mxu0 %v5255
  %5278 = vmatprep.subr.bf16.mxu0 0
  %5279 = vmatpush1.bf16.msra.mxu0 %v5256
  %5280 = vmatprep.subr.bf16.mxu0 0
  %5281 = vmatpush1.bf16.msra.mxu0 %v5257
  %5282 = vmatprep.subr.bf16.mxu0 0
  %5283 = vmatpush1.bf16.msra.mxu0 0
  %5284 = vmatprep.subr.bf16.mxu0 0
  %5285 = vmatpush1.bf16.msra.mxu0 0
  %5286 = vmatprep.subr.bf16.mxu0 0
  %5287 = vmatpush1.bf16.msra.mxu0 0
  %5288 = vmatprep.subr.bf16.mxu0 0
  %5289 = vmatpush1.bf16.msra.mxu0 0
  %5290 = vmatprep.subr.bf16.mxu0 0
  %5291 = vmatpush1.bf16.msra.mxu0 0
  %5292 = vmatprep.subr.bf16.mxu0 0
  %5293 = vmatpush1.bf16.msra.mxu0 0
  %5294 = vmatprep.subr.bf16.mxu0 0
  %5295 = vmatpush1.bf16.msra.mxu0 0
  %5296 = vmatprep.subr.bf16.mxu0 0
  %5297 = vmatpush1.bf16.msra.mxu0 0
  %5298 = vmatprep.mubr.bf16.mxu0 0
  %5299 = vmatmul.mubr.bf16.gmra.mrb[0].mxu0 %v5050
  %v5300 = vpop.f32.mrb[0].mxu0
  %v5301 = vadd.f32 %v5213, %v5300
  %v5302 = vpop.f32.mrb[0].mxu0
  %v5303 = vpop.f32.mrb[0].mxu0
  %v5304 = vpop.f32.mrb[0].mxu0
  %5305 = vdwg.mxu0
  %s5306 = scalar_lea.vmem %s7, 8
  %v5307 = vld [vmem:[%s5306] sm:$0xf]
  %v5309 = vsel %vm5006, %v5307, 0
  %5311 = vmatprep.subr.bf16.mxu0 0
  %5312 = vmatpush1.bf16.msra.mxu0 %v5003
  %5313 = vmatprep.subr.bf16.mxu0 0
  %5314 = vmatpush1.bf16.msra.mxu0 %v5004
  %5315 = vmatprep.subr.bf16.mxu0 0
  %5316 = vmatpush1.bf16.msra.mxu0 0
  %5317 = vmatprep.subr.bf16.mxu0 0
  %5318 = vmatpush1.bf16.msra.mxu0 0
  %5319 = vmatprep.subr.bf16.mxu0 0
  %5320 = vmatpush1.bf16.msra.mxu0 0
  %5321 = vmatprep.subr.bf16.mxu0 0
  %5322 = vmatpush1.bf16.msra.mxu0 0
  %5323 = vmatprep.subr.bf16.mxu0 0
  %5324 = vmatpush1.bf16.msra.mxu0 0
  %5325 = vmatprep.subr.bf16.mxu0 0
  %5326 = vmatpush1.bf16.msra.mxu0 0
  %5327 = vmatprep.subr.bf16.mxu0 0
  %5328 = vmatpush1.bf16.msra.mxu0 0
  %5329 = vmatprep.subr.bf16.mxu0 0
  %5330 = vmatpush1.bf16.msra.mxu0 0
  %5331 = vmatprep.subr.bf16.mxu0 0
  %5332 = vmatpush1.bf16.msra.mxu0 0
  %5333 = vmatprep.subr.bf16.mxu0 0
  %5334 = vmatpush1.bf16.msra.mxu0 0
  %5335 = vmatprep.subr.bf16.mxu0 0
  %5336 = vmatpush1.bf16.msra.mxu0 0
  %5337 = vmatprep.subr.bf16.mxu0 0
  %5338 = vmatpush1.bf16.msra.mxu0 0
  %5339 = vmatprep.subr.bf16.mxu0 0
  %5340 = vmatpush1.bf16.msra.mxu0 0
  %5341 = vmatprep.subr.bf16.mxu0 0
  %5342 = vmatpush1.bf16.msra.mxu0 0
  %5343 = vmatprep.mubr.bf16.mxu0 0
  %5344 = vmatmul.mubr.bf16.gmra.mrb[0].mxu0 %v5309
  %v5345 = vpop.f32.mrb[0].mxu0
  %v5346 = vadd.f32 0.0, %v5345
  %v5347 = vpop.f32.mrb[0].mxu0
  %v5348 = vpop.f32.mrb[0].mxu0
  %v5349 = vpop.f32.mrb[0].mxu0
  %5350 = vdwg.mxu0
  %v5351 = vpack.c.bf16 %v5346, %v5346
  %s5352 = scalar_lea.vmem %s8, 128
  %v5353 = vld [vmem:[%s5352] sm:$0xf]
  %v5354 = vld [vmem:[%s5352 + $0x4] sm:$0xf]
  %v5355 = vld [vmem:[%s5352 + $0x8] sm:$0xf]
  %v5356 = vld [vmem:[%s5352 + $0xc] sm:$0xf]
  %v5357 = vld [vmem:[%s5352 + $0x10] sm:$0xf]
  %v5358 = vld [vmem:[%s5352 + $0x14] sm:$0xf]
  %v5359 = vld [vmem:[%s5352 + $0x18] sm:$0xf]
  %v5360 = vld [vmem:[%s5352 + $0x1c] sm:$0xf]
  %v5361 = vld [vmem:[%s5352 + $0x20] sm:$0xf]
  %v5362 = vld [vmem:[%s5352 + $0x24] sm:$0xf]
  %v5363 = vld [vmem:[%s5352 + $0x28] sm:$0xf]
  %v5364 = vld [vmem:[%s5352 + $0x2c] sm:$0xf]
  %v5365 = vld [vmem:[%s5352 + $0x30] sm:$0xf]
  %v5366 = vld [vmem:[%s5352 + $0x34] sm:$0xf]
  %v5367 = vld [vmem:[%s5352 + $0x38] sm:$0xf]
  %v5368 = vld [vmem:[%s5352 + $0x3c] sm:$0xf]
  %v5385 = vunpack.c.l.b16 %v5353
  %v5386 = vunpack.c.l.b16 %v5354
  %v5387 = vunpack.c.l.b16 %v5355
  %v5388 = vunpack.c.l.b16 %v5356
  %v5389 = vunpack.c.l.b16 %v5357
  %v5390 = vunpack.c.l.b16 %v5358
  %v5391 = vunpack.c.l.b16 %v5359
  %v5392 = vunpack.c.l.b16 %v5360
  %v5393 = vunpack.c.l.b16 %v5361
  %v5394 = vunpack.c.l.b16 %v5362
  %v5395 = vunpack.c.l.b16 %v5363
  %v5396 = vunpack.c.l.b16 %v5364
  %v5397 = vunpack.c.l.b16 %v5365
  %v5398 = vunpack.c.l.b16 %v5366
  %v5399 = vunpack.c.l.b16 %v5367
  %v5400 = vunpack.c.l.b16 %v5368
  %v5401 = vpack.c.b16 %v5386, %v5385
  %v5402 = vpack.c.b16 %v5388, %v5387
  %v5403 = vpack.c.b16 %v5390, %v5389
  %v5404 = vpack.c.b16 %v5392, %v5391
  %v5405 = vpack.c.b16 %v5394, %v5393
  %v5406 = vpack.c.b16 %v5396, %v5395
  %v5407 = vpack.c.b16 %v5398, %v5397
  %v5408 = vpack.c.b16 %v5400, %v5399
  %5417 = vmatprep.subr.bf16.mxu0 0
  %5418 = vmatpush1.bf16.msra.mxu0 %v5401
  %5419 = vmatprep.subr.bf16.mxu0 0
  %5420 = vmatpush1.bf16.msra.mxu0 %v5402
  %5421 = vmatprep.subr.bf16.mxu0 0
  %5422 = vmatpush1.bf16.msra.mxu0 %v5403
  %5423 = vmatprep.subr.bf16.mxu0 0
  %5424 = vmatpush1.bf16.msra.mxu0 %v5404
  %5425 = vmatprep.subr.bf16.mxu0 0
  %5426 = vmatpush1.bf16.msra.mxu0 %v5405
  %5427 = vmatprep.subr.bf16.mxu0 0
  %5428 = vmatpush1.bf16.msra.mxu0 %v5406
  %5429 = vmatprep.subr.bf16.mxu0 0
  %5430 = vmatpush1.bf16.msra.mxu0 %v5407
  %5431 = vmatprep.subr.bf16.mxu0 0
  %5432 = vmatpush1.bf16.msra.mxu0 %v5408
  %5433 = vmatprep.subr.bf16.mxu0 0
  %5434 = vmatpush1.bf16.msra.mxu0 0
  %5435 = vmatprep.subr.bf16.mxu0 0
  %5436 = vmatpush1.bf16.msra.mxu0 0
  %5437 = vmatprep.subr.bf16.mxu0 0
  %5438 = vmatpush1.bf16.msra.mxu0 0
  %5439 = vmatprep.subr.bf16.mxu0 0
  %5440 = vmatpush1.bf16.msra.mxu0 0
  %5441 = vmatprep.subr.bf16.mxu0 0
  %5442 = vmatpush1.bf16.msra.mxu0 0
  %5443 = vmatprep.subr.bf16.mxu0 0
  %5444 = vmatpush1.bf16.msra.mxu0 0
  %5445 = vmatprep.subr.bf16.mxu0 0
  %5446 = vmatpush1.bf16.msra.mxu0 0
  %5447 = vmatprep.subr.bf16.mxu0 0
  %5448 = vmatpush1.bf16.msra.mxu0 0
  %5449 = vmatprep.mubr.bf16.mxu0 0
  %5450 = vmatmul.mubr.bf16.gmra.mrb[0].mxu0 %v5351
  %v5451 = vpop.f32.mrb[0].mxu0
  %v5452 = vadd.f32 0.0, %v5451
  %v5453 = vpop.f32.mrb[0].mxu0
  %v5454 = vpop.f32.mrb[0].mxu0
  %v5455 = vpop.f32.mrb[0].mxu0
  %5456 = vdwg.mxu0
  %v5457 = vadd.f32 %v5301, %v5452
  %s5458 = scalar_lea.vmem %s7, 12
  %v5459 = vld [vmem:[%s5458] sm:$0xf]
  %v5461 = vsel %vm5006, %v5459, 0
  %5463 = vmatprep.subr.bf16.mxu0 0
  %5464 = vmatpush1.bf16.msra.mxu0 %v5003
  %5465 = vmatprep.subr.bf16.mxu0 0
  %5466 = vmatpush1.bf16.msra.mxu0 %v5004
  %5467 = vmatprep.subr.bf16.mxu0 0
  %5468 = vmatpush1.bf16.msra.mxu0 0
  %5469 = vmatprep.subr.bf16.mxu0 0
  %5470 = vmatpush1.bf16.msra.mxu0 0
  %5471 = vmatprep.subr.bf16.mxu0 0
  %5472 = vmatpush1.bf16.msra.mxu0 0
  %5473 = vmatprep.subr.bf16.mxu0 0
  %5474 = vmatpush1.bf16.msra.mxu0 0
  %5475 = vmatprep.subr.bf16.mxu0 0
  %5476 = vmatpush1.bf16.msra.mxu0 0
  %5477 = vmatprep.subr.bf16.mxu0 0
  %5478 = vmatpush1.bf16.msra.mxu0 0
  %5479 = vmatprep.subr.bf16.mxu0 0
  %5480 = vmatpush1.bf16.msra.mxu0 0
  %5481 = vmatprep.subr.bf16.mxu0 0
  %5482 = vmatpush1.bf16.msra.mxu0 0
  %5483 = vmatprep.subr.bf16.mxu0 0
  %5484 = vmatpush1.bf16.msra.mxu0 0
  %5485 = vmatprep.subr.bf16.mxu0 0
  %5486 = vmatpush1.bf16.msra.mxu0 0
  %5487 = vmatprep.subr.bf16.mxu0 0
  %5488 = vmatpush1.bf16.msra.mxu0 0
  %5489 = vmatprep.subr.bf16.mxu0 0
  %5490 = vmatpush1.bf16.msra.mxu0 0
  %5491 = vmatprep.subr.bf16.mxu0 0
  %5492 = vmatpush1.bf16.msra.mxu0 0
  %5493 = vmatprep.subr.bf16.mxu0 0
  %5494 = vmatpush1.bf16.msra.mxu0 0
  %5495 = vmatprep.mubr.bf16.mxu0 0
  %5496 = vmatmul.mubr.bf16.gmra.mrb[0].mxu0 %v5461
  %v5497 = vpop.f32.mrb[0].mxu0
  %v5498 = vadd.f32 0.0, %v5497
  %v5499 = vpop.f32.mrb[0].mxu0
  %v5500 = vpop.f32.mrb[0].mxu0
  %v5501 = vpop.f32.mrb[0].mxu0
  %5502 = vdwg.mxu0
  %v5503 = vpack.c.bf16 %v5498, %v5498
  %s5504 = scalar_lea.vmem %s8, 192
  %v5505 = vld [vmem:[%s5504] sm:$0xf]
  %v5506 = vld [vmem:[%s5504 + $0x4] sm:$0xf]
  %v5507 = vld [vmem:[%s5504 + $0x8] sm:$0xf]
  %v5508 = vld [vmem:[%s5504 + $0xc] sm:$0xf]
  %v5509 = vld [vmem:[%s5504 + $0x10] sm:$0xf]
  %v5510 = vld [vmem:[%s5504 + $0x14] sm:$0xf]
  %v5511 = vld [vmem:[%s5504 + $0x18] sm:$0xf]
  %v5512 = vld [vmem:[%s5504 + $0x1c] sm:$0xf]
  %v5513 = vld [vmem:[%s5504 + $0x20] sm:$0xf]
  %v5514 = vld [vmem:[%s5504 + $0x24] sm:$0xf]
  %v5515 = vld [vmem:[%s5504 + $0x28] sm:$0xf]
  %v5516 = vld [vmem:[%s5504 + $0x2c] sm:$0xf]
  %v5517 = vld [vmem:[%s5504 + $0x30] sm:$0xf]
  %v5518 = vld [vmem:[%s5504 + $0x34] sm:$0xf]
  %v5519 = vld [vmem:[%s5504 + $0x38] sm:$0xf]
  %v5520 = vld [vmem:[%s5504 + $0x3c] sm:$0xf]
  %v5537 = vunpack.c.l.b16 %v5505
  %v5538 = vunpack.c.l.b16 %v5506
  %v5539 = vunpack.c.l.b16 %v5507
  %v5540 = vunpack.c.l.b16 %v5508
  %v5541 = vunpack.c.l.b16 %v5509
  %v5542 = vunpack.c.l.b16 %v5510
  %v5543 = vunpack.c.l.b16 %v5511
  %v5544 = vunpack.c.l.b16 %v5512
  %v5545 = vunpack.c.l.b16 %v5513
  %v5546 = vunpack.c.l.b16 %v5514
  %v5547 = vunpack.c.l.b16 %v5515
  %v5548 = vunpack.c.l.b16 %v5516
  %v5549 = vunpack.c.l.b16 %v5517
  %v5550 = vunpack.c.l.b16 %v5518
  %v5551 = vunpack.c.l.b16 %v5519
  %v5552 = vunpack.c.l.b16 %v5520
  %v5553 = vpack.c.b16 %v5538, %v5537
  %v5554 = vpack.c.b16 %v5540, %v5539
  %v5555 = vpack.c.b16 %v5542, %v5541
  %v5556 = vpack.c.b16 %v5544, %v5543
  %v5557 = vpack.c.b16 %v5546, %v5545
  %v5558 = vpack.c.b16 %v5548, %v5547
  %v5559 = vpack.c.b16 %v5550, %v5549
  %v5560 = vpack.c.b16 %v5552, %v5551
  %5569 = vmatprep.subr.bf16.mxu0 0
  %5570 = vmatpush1.bf16.msra.mxu0 %v5553
  %5571 = vmatprep.subr.bf16.mxu0 0
  %5572 = vmatpush1.bf16.msra.mxu0 %v5554
  %5573 = vmatprep.subr.bf16.mxu0 0
  %5574 = vmatpush1.bf16.msra.mxu0 %v5555
  %5575 = vmatprep.subr.bf16.mxu0 0
  %5576 = vmatpush1.bf16.msra.mxu0 %v5556
  %5577 = vmatprep.subr.bf16.mxu0 0
  %5578 = vmatpush1.bf16.msra.mxu0 %v5557
  %5579 = vmatprep.subr.bf16.mxu0 0
  %5580 = vmatpush1.bf16.msra.mxu0 %v5558
  %5581 = vmatprep.subr.bf16.mxu0 0
  %5582 = vmatpush1.bf16.msra.mxu0 %v5559
  %5583 = vmatprep.subr.bf16.mxu0 0
  %5584 = vmatpush1.bf16.msra.mxu0 %v5560
  %5585 = vmatprep.subr.bf16.mxu0 0
  %5586 = vmatpush1.bf16.msra.mxu0 0
  %5587 = vmatprep.subr.bf16.mxu0 0
  %5588 = vmatpush1.bf16.msra.mxu0 0
  %5589 = vmatprep.subr.bf16.mxu0 0
  %5590 = vmatpush1.bf16.msra.mxu0 0
  %5591 = vmatprep.subr.bf16.mxu0 0
  %5592 = vmatpush1.bf16.msra.mxu0 0
  %5593 = vmatprep.subr.bf16.mxu0 0
  %5594 = vmatpush1.bf16.msra.mxu0 0
  %5595 = vmatprep.subr.bf16.mxu0 0
  %5596 = vmatpush1.bf16.msra.mxu0 0
  %5597 = vmatprep.subr.bf16.mxu0 0
  %5598 = vmatpush1.bf16.msra.mxu0 0
  %5599 = vmatprep.subr.bf16.mxu0 0
  %5600 = vmatpush1.bf16.msra.mxu0 0
  %5601 = vmatprep.mubr.bf16.mxu0 0
  %5602 = vmatmul.mubr.bf16.gmra.mrb[0].mxu0 %v5503
  %v5603 = vpop.f32.mrb[0].mxu0
  %v5604 = vadd.f32 0.0, %v5603
  %v5605 = vpop.f32.mrb[0].mxu0
  %v5606 = vpop.f32.mrb[0].mxu0
  %v5607 = vpop.f32.mrb[0].mxu0
  %5608 = vdwg.mxu0
  %v5609 = vadd.f32 %v5457, %v5604
  %s5610 = scalar_lea.vmem %s7, 16
  %v5611 = vld [vmem:[%s5610] sm:$0xf]
  %v5613 = vsel %vm5006, %v5611, 0
  %5615 = vmatprep.subr.bf16.mxu0 0
  %5616 = vmatpush1.bf16.msra.mxu0 %v5003
  %5617 = vmatprep.subr.bf16.mxu0 0
  %5618 = vmatpush1.bf16.msra.mxu0 %v5004
  %5619 = vmatprep.subr.bf16.mxu0 0
  %5620 = vmatpush1.bf16.msra.mxu0 0
  %5621 = vmatprep.subr.bf16.mxu0 0
  %5622 = vmatpush1.bf16.msra.mxu0 0
  %5623 = vmatprep.subr.bf16.mxu0 0
  %5624 = vmatpush1.bf16.msra.mxu0 0
  %5625 = vmatprep.subr.bf16.mxu0 0
  %5626 = vmatpush1.bf16.msra.mxu0 0
  %5627 = vmatprep.subr.bf16.mxu0 0
  %5628 = vmatpush1.bf16.msra.mxu0 0
  %5629 = vmatprep.subr.bf16.mxu0 0
  %5630 = vmatpush1.bf16.msra.mxu0 0
  %5631 = vmatprep.subr.bf16.mxu0 0
  %5632 = vmatpush1.bf16.msra.mxu0 0
  %5633 = vmatprep.subr.bf16.mxu0 0
  %5634 = vmatpush1.bf16.msra.mxu0 0
  %5635 = vmatprep.subr.bf16.mxu0 0
  %5636 = vmatpush1.bf16.msra.mxu0 0
  %5637 = vmatprep.subr.bf16.mxu0 0
  %5638 = vmatpush1.bf16.msra.mxu0 0
  %5639 = vmatprep.subr.bf16.mxu0 0
  %5640 = vmatpush1.bf16.msra.mxu0 0
  %5641 = vmatprep.subr.bf16.mxu0 0
  %5642 = vmatpush1.bf16.msra.mxu0 0
  %5643 = vmatprep.subr.bf16.mxu0 0
  %5644 = vmatpush1.bf16.msra.mxu0 0
  %5645 = vmatprep.subr.bf16.mxu0 0
  %5646 = vmatpush1.bf16.msra.mxu0 0
  %5647 = vmatprep.mubr.bf16.mxu0 0
  %5648 = vmatmul.mubr.bf16.gmra.mrb[0].mxu0 %v5613
  %v5649 = vpop.f32.mrb[0].mxu0
  %v5650 = vadd.f32 0.0, %v5649
  %v5651 = vpop.f32.mrb[0].mxu0
  %v5652 = vpop.f32.mrb[0].mxu0
  %v5653 = vpop.f32.mrb[0].mxu0
  %5654 = vdwg.mxu0
  %v5655 = vpack.c.bf16 %v5650, %v5650
  %s5656 = scalar_lea.vmem %s8, 256
  %v5657 = vld [vmem:[%s5656] sm:$0xf]
  %v5658 = vld [vmem:[%s5656 + $0x4] sm:$0xf]
  %v5659 = vld [vmem:[%s5656 + $0x8] sm:$0xf]
  %v5660 = vld [vmem:[%s5656 + $0xc] sm:$0xf]
  %v5661 = vld [vmem:[%s5656 + $0x10] sm:$0xf]
  %v5662 = vld [vmem:[%s5656 + $0x14] sm:$0xf]
  %v5663 = vld [vmem:[%s5656 + $0x18] sm:$0xf]
  %v5664 = vld [vmem:[%s5656 + $0x1c] sm:$0xf]
  %v5665 = vld [vmem:[%s5656 + $0x20] sm:$0xf]
  %v5666 = vld [vmem:[%s5656 + $0x24] sm:$0xf]
  %v5667 = vld [vmem:[%s5656 + $0x28] sm:$0xf]
  %v5668 = vld [vmem:[%s5656 + $0x2c] sm:$0xf]
  %v5669 = vld [vmem:[%s5656 + $0x30] sm:$0xf]
  %v5670 = vld [vmem:[%s5656 + $0x34] sm:$0xf]
  %v5671 = vld [vmem:[%s5656 + $0x38] sm:$0xf]
  %v5672 = vld [vmem:[%s5656 + $0x3c] sm:$0xf]
  %v5689 = vunpack.c.l.b16 %v5657
  %v5690 = vunpack.c.l.b16 %v5658
  %v5691 = vunpack.c.l.b16 %v5659
  %v5692 = vunpack.c.l.b16 %v5660
  %v5693 = vunpack.c.l.b16 %v5661
  %v5694 = vunpack.c.l.b16 %v5662
  %v5695 = vunpack.c.l.b16 %v5663
  %v5696 = vunpack.c.l.b16 %v5664
  %v5697 = vunpack.c.l.b16 %v5665
  %v5698 = vunpack.c.l.b16 %v5666
  %v5699 = vunpack.c.l.b16 %v5667
  %v5700 = vunpack.c.l.b16 %v5668
  %v5701 = vunpack.c.l.b16 %v5669
  %v5702 = vunpack.c.l.b16 %v5670
  %v5703 = vunpack.c.l.b16 %v5671
  %v5704 = vunpack.c.l.b16 %v5672
  %v5705 = vpack.c.b16 %v5690, %v5689
  %v5706 = vpack.c.b16 %v5692, %v5691
  %v5707 = vpack.c.b16 %v5694, %v5693
  %v5708 = vpack.c.b16 %v5696, %v5695
  %v5709 = vpack.c.b16 %v5698, %v5697
  %v5710 = vpack.c.b16 %v5700, %v5699
  %v5711 = vpack.c.b16 %v5702, %v5701
  %v5712 = vpack.c.b16 %v5704, %v5703
  %5721 = vmatprep.subr.bf16.mxu0 0
  %5722 = vmatpush1.bf16.msra.mxu0 %v5705
  %5723 = vmatprep.subr.bf16.mxu0 0
  %5724 = vmatpush1.bf16.msra.mxu0 %v5706
  %5725 = vmatprep.subr.bf16.mxu0 0
  %5726 = vmatpush1.bf16.msra.mxu0 %v5707
  %5727 = vmatprep.subr.bf16.mxu0 0
  %5728 = vmatpush1.bf16.msra.mxu0 %v5708
  %5729 = vmatprep.subr.bf16.mxu0 0
  %5730 = vmatpush1.bf16.msra.mxu0 %v5709
  %5731 = vmatprep.subr.bf16.mxu0 0
  %5732 = vmatpush1.bf16.msra.mxu0 %v5710
  %5733 = vmatprep.subr.bf16.mxu0 0
  %5734 = vmatpush1.bf16.msra.mxu0 %v5711
  %5735 = vmatprep.subr.bf16.mxu0 0
  %5736 = vmatpush1.bf16.msra.mxu0 %v5712
  %5737 = vmatprep.subr.bf16.mxu0 0
  %5738 = vmatpush1.bf16.msra.mxu0 0
  %5739 = vmatprep.subr.bf16.mxu0 0
  %5740 = vmatpush1.bf16.msra.mxu0 0
  %5741 = vmatprep.subr.bf16.mxu0 0
  %5742 = vmatpush1.bf16.msra.mxu0 0
  %5743 = vmatprep.subr.bf16.mxu0 0
  %5744 = vmatpush1.bf16.msra.mxu0 0
  %5745 = vmatprep.subr.bf16.mxu0 0
  %5746 = vmatpush1.bf16.msra.mxu0 0
  %5747 = vmatprep.subr.bf16.mxu0 0
  %5748 = vmatpush1.bf16.msra.mxu0 0
  %5749 = vmatprep.subr.bf16.mxu0 0
  %5750 = vmatpush1.bf16.msra.mxu0 0
  %5751 = vmatprep.subr.bf16.mxu0 0
  %5752 = vmatpush1.bf16.msra.mxu0 0
  %5753 = vmatprep.mubr.bf16.mxu0 0
  %5754 = vmatmul.mubr.bf16.gmra.mrb[0].mxu0 %v5655
  %v5755 = vpop.f32.mrb[0].mxu0
  %v5756 = vadd.f32 0.0, %v5755
  %v5757 = vpop.f32.mrb[0].mxu0
  %v5758 = vpop.f32.mrb[0].mxu0
  %v5759 = vpop.f32.mrb[0].mxu0
  %5760 = vdwg.mxu0
  %v5761 = vadd.f32 %v5609, %v5756
  %s5762 = scalar_lea.vmem %s7, 20
  %v5763 = vld [vmem:[%s5762] sm:$0xf]
  %v5765 = vsel %vm5006, %v5763, 0
  %5767 = vmatprep.subr.bf16.mxu0 0
  %5768 = vmatpush1.bf16.msra.mxu0 %v5003
  %5769 = vmatprep.subr.bf16.mxu0 0
  %5770 = vmatpush1.bf16.msra.mxu0 %v5004
  %5771 = vmatprep.subr.bf16.mxu0 0
  %5772 = vmatpush1.bf16.msra.mxu0 0
  %5773 = vmatprep.subr.bf16.mxu0 0
  %5774 = vmatpush1.bf16.msra.mxu0 0
  %5775 = vmatprep.subr.bf16.mxu0 0
  %5776 = vmatpush1.bf16.msra.mxu0 0
  %5777 = vmatprep.subr.bf16.mxu0 0
  %5778 = vmatpush1.bf16.msra.mxu0 0
  %5779 = vmatprep.subr.bf16.mxu0 0
  %5780 = vmatpush1.bf16.msra.mxu0 0
  %5781 = vmatprep.subr.bf16.mxu0 0
  %5782 = vmatpush1.bf16.msra.mxu0 0
  %5783 = vmatprep.subr.bf16.mxu0 0
  %5784 = vmatpush1.bf16.msra.mxu0 0
  %5785 = vmatprep.subr.bf16.mxu0 0
  %5786 = vmatpush1.bf16.msra.mxu0 0
  %5787 = vmatprep.subr.bf16.mxu0 0
  %5788 = vmatpush1.bf16.msra.mxu0 0
  %5789 = vmatprep.subr.bf16.mxu0 0
  %5790 = vmatpush1.bf16.msra.mxu0 0
  %5791 = vmatprep.subr.bf16.mxu0 0
  %5792 = vmatpush1.bf16.msra.mxu0 0
  %5793 = vmatprep.subr.bf16.mxu0 0
  %5794 = vmatpush1.bf16.msra.mxu0 0
  %5795 = vmatprep.subr.bf16.mxu0 0
  %5796 = vmatpush1.bf16.msra.mxu0 0
  %5797 = vmatprep.subr.bf16.mxu0 0
  %5798 = vmatpush1.bf16.msra.mxu0 0
  %5799 = vmatprep.mubr.bf16.mxu0 0
  %5800 = vmatmul.mubr.bf16.gmra.mrb[0].mxu0 %v5765
  %v5801 = vpop.f32.mrb[0].mxu0
  %v5802 = vadd.f32 0.0, %v5801
  %v5803 = vpop.f32.mrb[0].mxu0
  %v5804 = vpop.f32.mrb[0].mxu0
  %v5805 = vpop.f32.mrb[0].mxu0
  %5806 = vdwg.mxu0
  %v5807 = vpack.c.bf16 %v5802, %v5802
  %s5808 = scalar_lea.vmem %s8, 320
  %v5809 = vld [vmem:[%s5808] sm:$0xf]
  %v5810 = vld [vmem:[%s5808 + $0x4] sm:$0xf]
  %v5811 = vld [vmem:[%s5808 + $0x8] sm:$0xf]
  %v5812 = vld [vmem:[%s5808 + $0xc] sm:$0xf]
  %v5813 = vld [vmem:[%s5808 + $0x10] sm:$0xf]
  %v5814 = vld [vmem:[%s5808 + $0x14] sm:$0xf]
  %v5815 = vld [vmem:[%s5808 + $0x18] sm:$0xf]
  %v5816 = vld [vmem:[%s5808 + $0x1c] sm:$0xf]
  %v5817 = vld [vmem:[%s5808 + $0x20] sm:$0xf]
  %v5818 = vld [vmem:[%s5808 + $0x24] sm:$0xf]
  %v5819 = vld [vmem:[%s5808 + $0x28] sm:$0xf]
  %v5820 = vld [vmem:[%s5808 + $0x2c] sm:$0xf]
  %v5821 = vld [vmem:[%s5808 + $0x30] sm:$0xf]
  %v5822 = vld [vmem:[%s5808 + $0x34] sm:$0xf]
  %v5823 = vld [vmem:[%s5808 + $0x38] sm:$0xf]
  %v5824 = vld [vmem:[%s5808 + $0x3c] sm:$0xf]
  %v5841 = vunpack.c.l.b16 %v5809
  %v5842 = vunpack.c.l.b16 %v5810
  %v5843 = vunpack.c.l.b16 %v5811
  %v5844 = vunpack.c.l.b16 %v5812
  %v5845 = vunpack.c.l.b16 %v5813
  %v5846 = vunpack.c.l.b16 %v5814
  %v5847 = vunpack.c.l.b16 %v5815
  %v5848 = vunpack.c.l.b16 %v5816
  %v5849 = vunpack.c.l.b16 %v5817
  %v5850 = vunpack.c.l.b16 %v5818
  %v5851 = vunpack.c.l.b16 %v5819
  %v5852 = vunpack.c.l.b16 %v5820
  %v5853 = vunpack.c.l.b16 %v5821
  %v5854 = vunpack.c.l.b16 %v5822
  %v5855 = vunpack.c.l.b16 %v5823
  %v5856 = vunpack.c.l.b16 %v5824
  %v5857 = vpack.c.b16 %v5842, %v5841
  %v5858 = vpack.c.b16 %v5844, %v5843
  %v5859 = vpack.c.b16 %v5846, %v5845
  %v5860 = vpack.c.b16 %v5848, %v5847
  %v5861 = vpack.c.b16 %v5850, %v5849
  %v5862 = vpack.c.b16 %v5852, %v5851
  %v5863 = vpack.c.b16 %v5854, %v5853
  %v5864 = vpack.c.b16 %v5856, %v5855
  %5873 = vmatprep.subr.bf16.mxu0 0
  %5874 = vmatpush1.bf16.msra.mxu0 %v5857
  %5875 = vmatprep.subr.bf16.mxu0 0
  %5876 = vmatpush1.bf16.msra.mxu0 %v5858
  %5877 = vmatprep.subr.bf16.mxu0 0
  %5878 = vmatpush1.bf16.msra.mxu0 %v5859
  %5879 = vmatprep.subr.bf16.mxu0 0
  %5880 = vmatpush1.bf16.msra.mxu0 %v5860
  %5881 = vmatprep.subr.bf16.mxu0 0
  %5882 = vmatpush1.bf16.msra.mxu0 %v5861
  %5883 = vmatprep.subr.bf16.mxu0 0
  %5884 = vmatpush1.bf16.msra.mxu0 %v5862
  %5885 = vmatprep.subr.bf16.mxu0 0
  %5886 = vmatpush1.bf16.msra.mxu0 %v5863
  %5887 = vmatprep.subr.bf16.mxu0 0
  %5888 = vmatpush1.bf16.msra.mxu0 %v5864
  %5889 = vmatprep.subr.bf16.mxu0 0
  %5890 = vmatpush1.bf16.msra.mxu0 0
  %5891 = vmatprep.subr.bf16.mxu0 0
  %5892 = vmatpush1.bf16.msra.mxu0 0
  %5893 = vmatprep.subr.bf16.mxu0 0
  %5894 = vmatpush1.bf16.msra.mxu0 0
  %5895 = vmatprep.subr.bf16.mxu0 0
  %5896 = vmatpush1.bf16.msra.mxu0 0
  %5897 = vmatprep.subr.bf16.mxu0 0
  %5898 = vmatpush1.bf16.msra.mxu0 0
  %5899 = vmatprep.subr.bf16.mxu0 0
  %5900 = vmatpush1.bf16.msra.mxu0 0
  %5901 = vmatprep.subr.bf16.mxu0 0
  %5902 = vmatpush1.bf16.msra.mxu0 0
  %5903 = vmatprep.subr.bf16.mxu0 0
  %5904 = vmatpush1.bf16.msra.mxu0 0
  %5905 = vmatprep.mubr.bf16.mxu0 0
  %5906 = vmatmul.mubr.bf16.gmra.mrb[0].mxu0 %v5807
  %v5907 = vpop.f32.mrb[0].mxu0
  %v5908 = vadd.f32 0.0, %v5907
  %v5909 = vpop.f32.mrb[0].mxu0
  %v5910 = vpop.f32.mrb[0].mxu0
  %v5911 = vpop.f32.mrb[0].mxu0
  %5912 = vdwg.mxu0
  %v5913 = vadd.f32 %v5761, %v5908
  %s5914 = scalar_lea.vmem %s7, 24
  %v5915 = vld [vmem:[%s5914] sm:$0xf]
  %v5917 = vsel %vm5006, %v5915, 0
  %5919 = vmatprep.subr.bf16.mxu0 0
  %5920 = vmatpush1.bf16.msra.mxu0 %v5003
  %5921 = vmatprep.subr.bf16.mxu0 0
  %5922 = vmatpush1.bf16.msra.mxu0 %v5004
  %5923 = vmatprep.subr.bf16.mxu0 0
  %5924 = vmatpush1.bf16.msra.mxu0 0
  %5925 = vmatprep.subr.bf16.mxu0 0
  %5926 = vmatpush1.bf16.msra.mxu0 0
  %5927 = vmatprep.subr.bf16.mxu0 0
  %5928 = vmatpush1.bf16.msra.mxu0 0
  %5929 = vmatprep.subr.bf16.mxu0 0
  %5930 = vmatpush1.bf16.msra.mxu0 0
  %5931 = vmatprep.subr.bf16.mxu0 0
  %5932 = vmatpush1.bf16.msra.mxu0 0
  %5933 = vmatprep.subr.bf16.mxu0 0
  %5934 = vmatpush1.bf16.msra.mxu0 0
  %5935 = vmatprep.subr.bf16.mxu0 0
  %5936 = vmatpush1.bf16.msra.mxu0 0
  %5937 = vmatprep.subr.bf16.mxu0 0
  %5938 = vmatpush1.bf16.msra.mxu0 0
  %5939 = vmatprep.subr.bf16.mxu0 0
  %5940 = vmatpush1.bf16.msra.mxu0 0
  %5941 = vmatprep.subr.bf16.mxu0 0
  %5942 = vmatpush1.bf16.msra.mxu0 0
  %5943 = vmatprep.subr.bf16.mxu0 0
  %5944 = vmatpush1.bf16.msra.mxu0 0
  %5945 = vmatprep.subr.bf16.mxu0 0
  %5946 = vmatpush1.bf16.msra.mxu0 0
  %5947 = vmatprep.subr.bf16.mxu0 0
  %5948 = vmatpush1.bf16.msra.mxu0 0
  %5949 = vmatprep.subr.bf16.mxu0 0
  %5950 = vmatpush1.bf16.msra.mxu0 0
  %5951 = vmatprep.mubr.bf16.mxu0 0
  %5952 = vmatmul.mubr.bf16.gmra.mrb[0].mxu0 %v5917
  %v5953 = vpop.f32.mrb[0].mxu0
  %v5954 = vadd.f32 0.0, %v5953
  %v5955 = vpop.f32.mrb[0].mxu0
  %v5956 = vpop.f32.mrb[0].mxu0
  %v5957 = vpop.f32.mrb[0].mxu0
  %5958 = vdwg.mxu0
  %v5959 = vpack.c.bf16 %v5954, %v5954
  %s5960 = scalar_lea.vmem %s8, 384
  %v5961 = vld [vmem:[%s5960] sm:$0xf]
  %v5962 = vld [vmem:[%s5960 + $0x4] sm:$0xf]
  %v5963 = vld [vmem:[%s5960 + $0x8] sm:$0xf]
  %v5964 = vld [vmem:[%s5960 + $0xc] sm:$0xf]
  %v5965 = vld [vmem:[%s5960 + $0x10] sm:$0xf]
  %v5966 = vld [vmem:[%s5960 + $0x14] sm:$0xf]
  %v5967 = vld [vmem:[%s5960 + $0x18] sm:$0xf]
  %v5968 = vld [vmem:[%s5960 + $0x1c] sm:$0xf]
  %v5969 = vld [vmem:[%s5960 + $0x20] sm:$0xf]
  %v5970 = vld [vmem:[%s5960 + $0x24] sm:$0xf]
  %v5971 = vld [vmem:[%s5960 + $0x28] sm:$0xf]
  %v5972 = vld [vmem:[%s5960 + $0x2c] sm:$0xf]
  %v5973 = vld [vmem:[%s5960 + $0x30] sm:$0xf]
  %v5974 = vld [vmem:[%s5960 + $0x34] sm:$0xf]
  %v5975 = vld [vmem:[%s5960 + $0x38] sm:$0xf]
  %v5976 = vld [vmem:[%s5960 + $0x3c] sm:$0xf]
  %v5993 = vunpack.c.l.b16 %v5961
  %v5994 = vunpack.c.l.b16 %v5962
  %v5995 = vunpack.c.l.b16 %v5963
  %v5996 = vunpack.c.l.b16 %v5964
  %v5997 = vunpack.c.l.b16 %v5965
  %v5998 = vunpack.c.l.b16 %v5966
  %v5999 = vunpack.c.l.b16 %v5967
  %v6000 = vunpack.c.l.b16 %v5968
  %v6001 = vunpack.c.l.b16 %v5969
  %v6002 = vunpack.c.l.b16 %v5970
  %v6003 = vunpack.c.l.b16 %v5971
  %v6004 = vunpack.c.l.b16 %v5972
  %v6005 = vunpack.c.l.b16 %v5973
  %v6006 = vunpack.c.l.b16 %v5974
  %v6007 = vunpack.c.l.b16 %v5975
  %v6008 = vunpack.c.l.b16 %v5976
  %v6009 = vpack.c.b16 %v5994, %v5993
  %v6010 = vpack.c.b16 %v5996, %v5995
  %v6011 = vpack.c.b16 %v5998, %v5997
  %v6012 = vpack.c.b16 %v6000, %v5999
  %v6013 = vpack.c.b16 %v6002, %v6001
  %v6014 = vpack.c.b16 %v6004, %v6003
  %v6015 = vpack.c.b16 %v6006, %v6005
  %v6016 = vpack.c.b16 %v6008, %v6007
  %6025 = vmatprep.subr.bf16.mxu0 0
  %6026 = vmatpush1.bf16.msra.mxu0 %v6009
  %6027 = vmatprep.subr.bf16.mxu0 0
  %6028 = vmatpush1.bf16.msra.mxu0 %v6010
  %6029 = vmatprep.subr.bf16.mxu0 0
  %6030 = vmatpush1.bf16.msra.mxu0 %v6011
  %6031 = vmatprep.subr.bf16.mxu0 0
  %6032 = vmatpush1.bf16.msra.mxu0 %v6012
  %6033 = vmatprep.subr.bf16.mxu0 0
  %6034 = vmatpush1.bf16.msra.mxu0 %v6013
  %6035 = vmatprep.subr.bf16.mxu0 0
  %6036 = vmatpush1.bf16.msra.mxu0 %v6014
  %6037 = vmatprep.subr.bf16.mxu0 0
  %6038 = vmatpush1.bf16.msra.mxu0 %v6015
  %6039 = vmatprep.subr.bf16.mxu0 0
  %6040 = vmatpush1.bf16.msra.mxu0 %v6016
  %6041 = vmatprep.subr.bf16.mxu0 0
  %6042 = vmatpush1.bf16.msra.mxu0 0
  %6043 = vmatprep.subr.bf16.mxu0 0
  %6044 = vmatpush1.bf16.msra.mxu0 0
  %6045 = vmatprep.subr.bf16.mxu0 0
  %6046 = vmatpush1.bf16.msra.mxu0 0
  %6047 = vmatprep.subr.bf16.mxu0 0
  %6048 = vmatpush1.bf16.msra.mxu0 0
  %6049 = vmatprep.subr.bf16.mxu0 0
  %6050 = vmatpush1.bf16.msra.mxu0 0
  %6051 = vmatprep.subr.bf16.mxu0 0
  %6052 = vmatpush1.bf16.msra.mxu0 0
  %6053 = vmatprep.subr.bf16.mxu0 0
  %6054 = vmatpush1.bf16.msra.mxu0 0
  %6055 = vmatprep.subr.bf16.mxu0 0
  %6056 = vmatpush1.bf16.msra.mxu0 0
  %6057 = vmatprep.mubr.bf16.mxu0 0
  %6058 = vmatmul.mubr.bf16.gmra.mrb[0].mxu0 %v5959
  %v6059 = vpop.f32.mrb[0].mxu0
  %v6060 = vadd.f32 0.0, %v6059
  %v6061 = vpop.f32.mrb[0].mxu0
  %v6062 = vpop.f32.mrb[0].mxu0
  %v6063 = vpop.f32.mrb[0].mxu0
  %6064 = vdwg.mxu0
  %v6065 = vadd.f32 %v5913, %v6060
  %s6066 = scalar_lea.vmem %s7, 28
  %v6067 = vld [vmem:[%s6066] sm:$0xf]
  %v6069 = vsel %vm5006, %v6067, 0
  %6071 = vmatprep.subr.bf16.mxu0 0
  %6072 = vmatpush1.bf16.msra.mxu0 %v5003
  %6073 = vmatprep.subr.bf16.mxu0 0
  %6074 = vmatpush1.bf16.msra.mxu0 %v5004
  %6075 = vmatprep.subr.bf16.mxu0 0
  %6076 = vmatpush1.bf16.msra.mxu0 0
  %6077 = vmatprep.subr.bf16.mxu0 0
  %6078 = vmatpush1.bf16.msra.mxu0 0
  %6079 = vmatprep.subr.bf16.mxu0 0
  %6080 = vmatpush1.bf16.msra.mxu0 0
  %6081 = vmatprep.subr.bf16.mxu0 0
  %6082 = vmatpush1.bf16.msra.mxu0 0
  %6083 = vmatprep.subr.bf16.mxu0 0
  %6084 = vmatpush1.bf16.msra.mxu0 0
  %6085 = vmatprep.subr.bf16.mxu0 0
  %6086 = vmatpush1.bf16.msra.mxu0 0
  %6087 = vmatprep.subr.bf16.mxu0 0
  %6088 = vmatpush1.bf16.msra.mxu0 0
  %6089 = vmatprep.subr.bf16.mxu0 0
  %6090 = vmatpush1.bf16.msra.mxu0 0
  %6091 = vmatprep.subr.bf16.mxu0 0
  %6092 = vmatpush1.bf16.msra.mxu0 0
  %6093 = vmatprep.subr.bf16.mxu0 0
  %6094 = vmatpush1.bf16.msra.mxu0 0
  %6095 = vmatprep.subr.bf16.mxu0 0
  %6096 = vmatpush1.bf16.msra.mxu0 0
  %6097 = vmatprep.subr.bf16.mxu0 0
  %6098 = vmatpush1.bf16.msra.mxu0 0
  %6099 = vmatprep.subr.bf16.mxu0 0
  %6100 = vmatpush1.bf16.msra.mxu0 0
  %6101 = vmatprep.subr.bf16.mxu0 0
  %6102 = vmatpush1.bf16.msra.mxu0 0
  %6103 = vmatprep.mubr.bf16.mxu0 0
  %6104 = vmatmul.mubr.bf16.gmra.mrb[0].mxu0 %v6069
  %v6105 = vpop.f32.mrb[0].mxu0
  %v6106 = vadd.f32 0.0, %v6105
  %v6107 = vpop.f32.mrb[0].mxu0
  %v6108 = vpop.f32.mrb[0].mxu0
  %v6109 = vpop.f32.mrb[0].mxu0
  %6110 = vdwg.mxu0
  %v6111 = vpack.c.bf16 %v6106, %v6106
  %s6112 = scalar_lea.vmem %s8, 448
  %v6113 = vld [vmem:[%s6112] sm:$0xf]
  %v6114 = vld [vmem:[%s6112 + $0x4] sm:$0xf]
  %v6115 = vld [vmem:[%s6112 + $0x8] sm:$0xf]
  %v6116 = vld [vmem:[%s6112 + $0xc] sm:$0xf]
  %v6117 = vld [vmem:[%s6112 + $0x10] sm:$0xf]
  %v6118 = vld [vmem:[%s6112 + $0x14] sm:$0xf]
  %v6119 = vld [vmem:[%s6112 + $0x18] sm:$0xf]
  %v6120 = vld [vmem:[%s6112 + $0x1c] sm:$0xf]
  %v6121 = vld [vmem:[%s6112 + $0x20] sm:$0xf]
  %v6122 = vld [vmem:[%s6112 + $0x24] sm:$0xf]
  %v6123 = vld [vmem:[%s6112 + $0x28] sm:$0xf]
  %v6124 = vld [vmem:[%s6112 + $0x2c] sm:$0xf]
  %v6125 = vld [vmem:[%s6112 + $0x30] sm:$0xf]
  %v6126 = vld [vmem:[%s6112 + $0x34] sm:$0xf]
  %v6127 = vld [vmem:[%s6112 + $0x38] sm:$0xf]
  %v6128 = vld [vmem:[%s6112 + $0x3c] sm:$0xf]
  %v6145 = vunpack.c.l.b16 %v6113
  %v6146 = vunpack.c.l.b16 %v6114
  %v6147 = vunpack.c.l.b16 %v6115
  %v6148 = vunpack.c.l.b16 %v6116
  %v6149 = vunpack.c.l.b16 %v6117
  %v6150 = vunpack.c.l.b16 %v6118
  %v6151 = vunpack.c.l.b16 %v6119
  %v6152 = vunpack.c.l.b16 %v6120
  %v6153 = vunpack.c.l.b16 %v6121
  %v6154 = vunpack.c.l.b16 %v6122
  %v6155 = vunpack.c.l.b16 %v6123
  %v6156 = vunpack.c.l.b16 %v6124
  %v6157 = vunpack.c.l.b16 %v6125
  %v6158 = vunpack.c.l.b16 %v6126
  %v6159 = vunpack.c.l.b16 %v6127
  %v6160 = vunpack.c.l.b16 %v6128
  %v6161 = vpack.c.b16 %v6146, %v6145
  %v6162 = vpack.c.b16 %v6148, %v6147
  %v6163 = vpack.c.b16 %v6150, %v6149
  %v6164 = vpack.c.b16 %v6152, %v6151
  %v6165 = vpack.c.b16 %v6154, %v6153
  %v6166 = vpack.c.b16 %v6156, %v6155
  %v6167 = vpack.c.b16 %v6158, %v6157
  %v6168 = vpack.c.b16 %v6160, %v6159
  %6177 = vmatprep.subr.bf16.mxu0 0
  %6178 = vmatpush1.bf16.msra.mxu0 %v6161
  %6179 = vmatprep.subr.bf16.mxu0 0
  %6180 = vmatpush1.bf16.msra.mxu0 %v6162
  %6181 = vmatprep.subr.bf16.mxu0 0
  %6182 = vmatpush1.bf16.msra.mxu0 %v6163
  %6183 = vmatprep.subr.bf16.mxu0 0
  %6184 = vmatpush1.bf16.msra.mxu0 %v6164
  %6185 = vmatprep.subr.bf16.mxu0 0
  %6186 = vmatpush1.bf16.msra.mxu0 %v6165
  %6187 = vmatprep.subr.bf16.mxu0 0
  %6188 = vmatpush1.bf16.msra.mxu0 %v6166
  %6189 = vmatprep.subr.bf16.mxu0 0
  %6190 = vmatpush1.bf16.msra.mxu0 %v6167
  %6191 = vmatprep.subr.bf16.mxu0 0
  %6192 = vmatpush1.bf16.msra.mxu0 %v6168
  %6193 = vmatprep.subr.bf16.mxu0 0
  %6194 = vmatpush1.bf16.msra.mxu0 0
  %6195 = vmatprep.subr.bf16.mxu0 0
  %6196 = vmatpush1.bf16.msra.mxu0 0
  %6197 = vmatprep.subr.bf16.mxu0 0
  %6198 = vmatpush1.bf16.msra.mxu0 0
  %6199 = vmatprep.subr.bf16.mxu0 0
  %6200 = vmatpush1.bf16.msra.mxu0 0
  %6201 = vmatprep.subr.bf16.mxu0 0
  %6202 = vmatpush1.bf16.msra.mxu0 0
  %6203 = vmatprep.subr.bf16.mxu0 0
  %6204 = vmatpush1.bf16.msra.mxu0 0
  %6205 = vmatprep.subr.bf16.mxu0 0
  %6206 = vmatpush1.bf16.msra.mxu0 0
  %6207 = vmatprep.subr.bf16.mxu0 0
  %6208 = vmatpush1.bf16.msra.mxu0 0
  %6209 = vmatprep.mubr.bf16.mxu0 0
  %6210 = vmatmul.mubr.bf16.gmra.mrb[0].mxu0 %v6111
  %v6211 = vpop.f32.mrb[0].mxu0
  %v6212 = vadd.f32 0.0, %v6211
  %v6213 = vpop.f32.mrb[0].mxu0
  %v6214 = vpop.f32.mrb[0].mxu0
  %v6215 = vpop.f32.mrb[0].mxu0
  %6216 = vdwg.mxu0
  %v6217 = vadd.f32 %v6065, %v6212
  %s6218 = scalar_lea.vmem %s7, 32
  %v6219 = vld [vmem:[%s6218] sm:$0xf]
  %v6221 = vsel %vm5006, %v6219, 0
  %6223 = vmatprep.subr.bf16.mxu0 0
  %6224 = vmatpush1.bf16.msra.mxu0 %v5003
  %6225 = vmatprep.subr.bf16.mxu0 0
  %6226 = vmatpush1.bf16.msra.mxu0 %v5004
  %6227 = vmatprep.subr.bf16.mxu0 0
  %6228 = vmatpush1.bf16.msra.mxu0 0
  %6229 = vmatprep.subr.bf16.mxu0 0
  %6230 = vmatpush1.bf16.msra.mxu0 0
  %6231 = vmatprep.subr.bf16.mxu0 0
  %6232 = vmatpush1.bf16.msra.mxu0 0
  %6233 = vmatprep.subr.bf16.mxu0 0
  %6234 = vmatpush1.bf16.msra.mxu0 0
  %6235 = vmatprep.subr.bf16.mxu0 0
  %6236 = vmatpush1.bf16.msra.mxu0 0
  %6237 = vmatprep.subr.bf16.mxu0 0
  %6238 = vmatpush1.bf16.msra.mxu0 0
  %6239 = vmatprep.subr.bf16.mxu0 0
  %6240 = vmatpush1.bf16.msra.mxu0 0
  %6241 = vmatprep.subr.bf16.mxu0 0
  %6242 = vmatpush1.bf16.msra.mxu0 0
  %6243 = vmatprep.subr.bf16.mxu0 0
  %6244 = vmatpush1.bf16.msra.mxu0 0
  %6245 = vmatprep.subr.bf16.mxu0 0
  %6246 = vmatpush1.bf16.msra.mxu0 0
  %6247 = vmatprep.subr.bf16.mxu0 0
  %6248 = vmatpush1.bf16.msra.mxu0 0
  %6249 = vmatprep.subr.bf16.mxu0 0
  %6250 = vmatpush1.bf16.msra.mxu0 0
  %6251 = vmatprep.subr.bf16.mxu0 0
  %6252 = vmatpush1.bf16.msra.mxu0 0
  %6253 = vmatprep.subr.bf16.mxu0 0
  %6254 = vmatpush1.bf16.msra.mxu0 0
  %6255 = vmatprep.mubr.bf16.mxu0 0
  %6256 = vmatmul.mubr.bf16.gmra.mrb[0].mxu0 %v6221
  %v6257 = vpop.f32.mrb[0].mxu0
  %v6258 = vadd.f32 0.0, %v6257
  %v6259 = vpop.f32.mrb[0].mxu0
  %v6260 = vpop.f32.mrb[0].mxu0
  %v6261 = vpop.f32.mrb[0].mxu0
  %6262 = vdwg.mxu0
  %v6263 = vpack.c.bf16 %v6258, %v6258
  %s6264 = scalar_lea.vmem %s8, 512
  %v6265 = vld [vmem:[%s6264] sm:$0xf]
  %v6266 = vld [vmem:[%s6264 + $0x4] sm:$0xf]
  %v6267 = vld [vmem:[%s6264 + $0x8] sm:$0xf]
  %v6268 = vld [vmem:[%s6264 + $0xc] sm:$0xf]
  %v6269 = vld [vmem:[%s6264 + $0x10] sm:$0xf]
  %v6270 = vld [vmem:[%s6264 + $0x14] sm:$0xf]
  %v6271 = vld [vmem:[%s6264 + $0x18] sm:$0xf]
  %v6272 = vld [vmem:[%s6264 + $0x1c] sm:$0xf]
  %v6273 = vld [vmem:[%s6264 + $0x20] sm:$0xf]
  %v6274 = vld [vmem:[%s6264 + $0x24] sm:$0xf]
  %v6275 = vld [vmem:[%s6264 + $0x28] sm:$0xf]
  %v6276 = vld [vmem:[%s6264 + $0x2c] sm:$0xf]
  %v6277 = vld [vmem:[%s6264 + $0x30] sm:$0xf]
  %v6278 = vld [vmem:[%s6264 + $0x34] sm:$0xf]
  %v6279 = vld [vmem:[%s6264 + $0x38] sm:$0xf]
  %v6280 = vld [vmem:[%s6264 + $0x3c] sm:$0xf]
  %v6297 = vunpack.c.l.b16 %v6265
  %v6298 = vunpack.c.l.b16 %v6266
  %v6299 = vunpack.c.l.b16 %v6267
  %v6300 = vunpack.c.l.b16 %v6268
  %v6301 = vunpack.c.l.b16 %v6269
  %v6302 = vunpack.c.l.b16 %v6270
  %v6303 = vunpack.c.l.b16 %v6271
  %v6304 = vunpack.c.l.b16 %v6272
  %v6305 = vunpack.c.l.b16 %v6273
  %v6306 = vunpack.c.l.b16 %v6274
  %v6307 = vunpack.c.l.b16 %v6275
  %v6308 = vunpack.c.l.b16 %v6276
  %v6309 = vunpack.c.l.b16 %v6277
  %v6310 = vunpack.c.l.b16 %v6278
  %v6311 = vunpack.c.l.b16 %v6279
  %v6312 = vunpack.c.l.b16 %v6280
  %v6313 = vpack.c.b16 %v6298, %v6297
  %v6314 = vpack.c.b16 %v6300, %v6299
  %v6315 = vpack.c.b16 %v6302, %v6301
  %v6316 = vpack.c.b16 %v6304, %v6303
  %v6317 = vpack.c.b16 %v6306, %v6305
  %v6318 = vpack.c.b16 %v6308, %v6307
  %v6319 = vpack.c.b16 %v6310, %v6309
  %v6320 = vpack.c.b16 %v6312, %v6311
  %6329 = vmatprep.subr.bf16.mxu0 0
  %6330 = vmatpush1.bf16.msra.mxu0 %v6313
  %6331 = vmatprep.subr.bf16.mxu0 0
  %6332 = vmatpush1.bf16.msra.mxu0 %v6314
  %6333 = vmatprep.subr.bf16.mxu0 0
  %6334 = vmatpush1.bf16.msra.mxu0 %v6315
  %6335 = vmatprep.subr.bf16.mxu0 0
  %6336 = vmatpush1.bf16.msra.mxu0 %v6316
  %6337 = vmatprep.subr.bf16.mxu0 0
  %6338 = vmatpush1.bf16.msra.mxu0 %v6317
  %6339 = vmatprep.subr.bf16.mxu0 0
  %6340 = vmatpush1.bf16.msra.mxu0 %v6318
  %6341 = vmatprep.subr.bf16.mxu0 0
  %6342 = vmatpush1.bf16.msra.mxu0 %v6319
  %6343 = vmatprep.subr.bf16.mxu0 0
  %6344 = vmatpush1.bf16.msra.mxu0 %v6320
  %6345 = vmatprep.subr.bf16.mxu0 0
  %6346 = vmatpush1.bf16.msra.mxu0 0
  %6347 = vmatprep.subr.bf16.mxu0 0
  %6348 = vmatpush1.bf16.msra.mxu0 0
  %6349 = vmatprep.subr.bf16.mxu0 0
  %6350 = vmatpush1.bf16.msra.mxu0 0
  %6351 = vmatprep.subr.bf16.mxu0 0
  %6352 = vmatpush1.bf16.msra.mxu0 0
  %6353 = vmatprep.subr.bf16.mxu0 0
  %6354 = vmatpush1.bf16.msra.mxu0 0
  %6355 = vmatprep.subr.bf16.mxu0 0
  %6356 = vmatpush1.bf16.msra.mxu0 0
  %6357 = vmatprep.subr.bf16.mxu0 0
  %6358 = vmatpush1.bf16.msra.mxu0 0
  %6359 = vmatprep.subr.bf16.mxu0 0
  %6360 = vmatpush1.bf16.msra.mxu0 0
  %6361 = vmatprep.mubr.bf16.mxu0 0
  %6362 = vmatmul.mubr.bf16.gmra.mrb[0].mxu0 %v6263
  %v6363 = vpop.f32.mrb[0].mxu0
  %v6364 = vadd.f32 0.0, %v6363
  %v6365 = vpop.f32.mrb[0].mxu0
  %v6366 = vpop.f32.mrb[0].mxu0
  %v6367 = vpop.f32.mrb[0].mxu0
  %6368 = vdwg.mxu0
  %v6369 = vadd.f32 %v6217, %v6364
  %v6370 = vld [vmem:[%s9] sm:$0x1]
  %v6372 = vlaneseq
  %v6373 = vshrl.u32 %v6372, 7
  %v6374 = vsub.s32 0, %v6373
  %v6375 = vrot.slane %v6370, %v6374
  %v6377 = vadd.f32 %v6369, %v6375
  %vm6378 = vcmask 523264
  %v6379 = vsel %vm6378, %v6377, 0.0
  %v6380 = vrot.slane %v6379, 4
  %v6381 = vadd.f32 %v6379, %v6380
  %v6382 = vrot.slane %v6381, 2
  %v6383 = vadd.f32 %v6381, %v6382
  %v6384 = vrot.slane %v6383, 1
  %v6385 = vadd.f32 %v6383, %v6384
  %v6386 = vmul.f32 %v6377, %v6377
  %v6387 = vsel %vm6378, %v6386, 0.0
  %v6388 = vrot.slane %v6387, 4
  %v6389 = vadd.f32 %v6387, %v6388
  %v6390 = vrot.slane %v6389, 2
  %v6391 = vadd.f32 %v6389, %v6390
  %v6392 = vrot.slane %v6391, 1
  %v6393 = vadd.f32 %v6391, %v6392
  %v6394 = vmul.f32 %v6385, 0.125
  %v6395 = vmul.f32 %v6393, 0.125
  %v6396 = vmul.f32 %v6394, %v6394
  %v6397 = vsub.f32 %v6395, %v6396
  %v6398 = vsub.f32 %v6377, %v6394
  %v6399 = vadd.f32 %v6397, 1e-05
  %v6400 = vrsqrt.pop %v6399
  %v6401 = vmul.f32 %v6398, %v6400
  %v6402 = vld [vmem:[%s10] sm:$0x1]
  %v6404 = vlaneseq
  %v6405 = vshrl.u32 %v6404, 7
  %v6406 = vsub.s32 0, %v6405
  %v6407 = vrot.slane %v6402, %v6406
  %v6409 = vmul.f32 %v6401, %v6407
  %v6410 = vld [vmem:[%s11] sm:$0x1]
  %v6412 = vlaneseq
  %v6413 = vshrl.u32 %v6412, 7
  %v6414 = vsub.s32 0, %v6413
  %v6415 = vrot.slane %v6410, %v6414
  %v6417 = vadd.f32 %v6409, %v6415
  %v6418 = vmax.f32 %v6417, 0.0
  %v6419 = vpack.c.bf16 %v6418, %v6418
  %v6420 = vld [vmem:[%s12] sm:$0x1]
  %vm6421 = vcmask 64512
  %v6423 = vsel %vm6421, %v6420, 0
  %v6426 = vsel %vm322, %v6419, 0
  %6428 = vmatprep.subr.bf16.mxu0 0
  %6429 = vmatpush1.bf16.msra.mxu0 %v6426
  %6430 = vmatprep.subr.bf16.mxu0 0
  %6431 = vmatpush1.bf16.msra.mxu0 0
  %6432 = vmatprep.subr.bf16.mxu0 0
  %6433 = vmatpush1.bf16.msra.mxu0 0
  %6434 = vmatprep.subr.bf16.mxu0 0
  %6435 = vmatpush1.bf16.msra.mxu0 0
  %6436 = vmatprep.subr.bf16.mxu0 0
  %6437 = vmatpush1.bf16.msra.mxu0 0
  %6438 = vmatprep.subr.bf16.mxu0 0
  %6439 = vmatpush1.bf16.msra.mxu0 0
  %6440 = vmatprep.subr.bf16.mxu0 0
  %6441 = vmatpush1.bf16.msra.mxu0 0
  %6442 = vmatprep.subr.bf16.mxu0 0
  %6443 = vmatpush1.bf16.msra.mxu0 0
  %6444 = vmatprep.subr.bf16.mxu0 0
  %6445 = vmatpush1.bf16.msra.mxu0 0
  %6446 = vmatprep.subr.bf16.mxu0 0
  %6447 = vmatpush1.bf16.msra.mxu0 0
  %6448 = vmatprep.subr.bf16.mxu0 0
  %6449 = vmatpush1.bf16.msra.mxu0 0
  %6450 = vmatprep.subr.bf16.mxu0 0
  %6451 = vmatpush1.bf16.msra.mxu0 0
  %6452 = vmatprep.subr.bf16.mxu0 0
  %6453 = vmatpush1.bf16.msra.mxu0 0
  %6454 = vmatprep.subr.bf16.mxu0 0
  %6455 = vmatpush1.bf16.msra.mxu0 0
  %6456 = vmatprep.subr.bf16.mxu0 0
  %6457 = vmatpush1.bf16.msra.mxu0 0
  %6458 = vmatprep.subr.bf16.mxu0 0
  %6459 = vmatpush1.bf16.msra.mxu0 0
  %6460 = vmatprep.mubr.bf16.mxu0 0
  %6461 = vmatmul.mubr.bf16.gmra.mrb[0].mxu0 %v6423
  %v6462 = vpop.f32.mrb[0].mxu0
  %v6463 = vadd.f32 0.0, %v6462
  %v6464 = vpop.f32.mrb[0].mxu0
  %v6465 = vpop.f32.mrb[0].mxu0
  %v6466 = vpop.f32.mrb[0].mxu0
  %6467 = vdwg.mxu0
  %s6468 = scalar_lea.vmem %s12, 1
  %v6469 = vld [vmem:[%s6468] sm:$0x1]
  %v6471 = vsel %vm6421, %v6469, 0
  %6473 = vmatprep.subr.bf16.mxu0 0
  %6474 = vmatpush1.bf16.msra.mxu0 %v6426
  %6475 = vmatprep.subr.bf16.mxu0 0
  %6476 = vmatpush1.bf16.msra.mxu0 0
  %6477 = vmatprep.subr.bf16.mxu0 0
  %6478 = vmatpush1.bf16.msra.mxu0 0
  %6479 = vmatprep.subr.bf16.mxu0 0
  %6480 = vmatpush1.bf16.msra.mxu0 0
  %6481 = vmatprep.subr.bf16.mxu0 0
  %6482 = vmatpush1.bf16.msra.mxu0 0
  %6483 = vmatprep.subr.bf16.mxu0 0
  %6484 = vmatpush1.bf16.msra.mxu0 0
  %6485 = vmatprep.subr.bf16.mxu0 0
  %6486 = vmatpush1.bf16.msra.mxu0 0
  %6487 = vmatprep.subr.bf16.mxu0 0
  %6488 = vmatpush1.bf16.msra.mxu0 0
  %6489 = vmatprep.subr.bf16.mxu0 0
  %6490 = vmatpush1.bf16.msra.mxu0 0
  %6491 = vmatprep.subr.bf16.mxu0 0
  %6492 = vmatpush1.bf16.msra.mxu0 0
  %6493 = vmatprep.subr.bf16.mxu0 0
  %6494 = vmatpush1.bf16.msra.mxu0 0
  %6495 = vmatprep.subr.bf16.mxu0 0
  %6496 = vmatpush1.bf16.msra.mxu0 0
  %6497 = vmatprep.subr.bf16.mxu0 0
  %6498 = vmatpush1.bf16.msra.mxu0 0
  %6499 = vmatprep.subr.bf16.mxu0 0
  %6500 = vmatpush1.bf16.msra.mxu0 0
  %6501 = vmatprep.subr.bf16.mxu0 0
  %6502 = vmatpush1.bf16.msra.mxu0 0
  %6503 = vmatprep.subr.bf16.mxu0 0
  %6504 = vmatpush1.bf16.msra.mxu0 0
  %6505 = vmatprep.mubr.bf16.mxu0 0
  %6506 = vmatmul.mubr.bf16.gmra.mrb[0].mxu0 %v6471
  %v6507 = vpop.f32.mrb[0].mxu0
  %v6508 = vadd.f32 0.0, %v6507
  %v6509 = vpop.f32.mrb[0].mxu0
  %v6510 = vpop.f32.mrb[0].mxu0
  %v6511 = vpop.f32.mrb[0].mxu0
  %6512 = vdwg.mxu0
  %v6513 = vmax.f32 %v6463, %v6508
  %s6514 = scalar_lea.vmem %s12, 2
  %v6515 = vld [vmem:[%s6514] sm:$0x1]
  %v6517 = vsel %vm6421, %v6515, 0
  %6519 = vmatprep.subr.bf16.mxu0 0
  %6520 = vmatpush1.bf16.msra.mxu0 %v6426
  %6521 = vmatprep.subr.bf16.mxu0 0
  %6522 = vmatpush1.bf16.msra.mxu0 0
  %6523 = vmatprep.subr.bf16.mxu0 0
  %6524 = vmatpush1.bf16.msra.mxu0 0
  %6525 = vmatprep.subr.bf16.mxu0 0
  %6526 = vmatpush1.bf16.msra.mxu0 0
  %6527 = vmatprep.subr.bf16.mxu0 0
  %6528 = vmatpush1.bf16.msra.mxu0 0
  %6529 = vmatprep.subr.bf16.mxu0 0
  %6530 = vmatpush1.bf16.msra.mxu0 0
  %6531 = vmatprep.subr.bf16.mxu0 0
  %6532 = vmatpush1.bf16.msra.mxu0 0
  %6533 = vmatprep.subr.bf16.mxu0 0
  %6534 = vmatpush1.bf16.msra.mxu0 0
  %6535 = vmatprep.subr.bf16.mxu0 0
  %6536 = vmatpush1.bf16.msra.mxu0 0
  %6537 = vmatprep.subr.bf16.mxu0 0
  %6538 = vmatpush1.bf16.msra.mxu0 0
  %6539 = vmatprep.subr.bf16.mxu0 0
  %6540 = vmatpush1.bf16.msra.mxu0 0
  %6541 = vmatprep.subr.bf16.mxu0 0
  %6542 = vmatpush1.bf16.msra.mxu0 0
  %6543 = vmatprep.subr.bf16.mxu0 0
  %6544 = vmatpush1.bf16.msra.mxu0 0
  %6545 = vmatprep.subr.bf16.mxu0 0
  %6546 = vmatpush1.bf16.msra.mxu0 0
  %6547 = vmatprep.subr.bf16.mxu0 0
  %6548 = vmatpush1.bf16.msra.mxu0 0
  %6549 = vmatprep.subr.bf16.mxu0 0
  %6550 = vmatpush1.bf16.msra.mxu0 0
  %6551 = vmatprep.mubr.bf16.mxu0 0
  %6552 = vmatmul.mubr.bf16.gmra.mrb[0].mxu0 %v6517
  %v6553 = vpop.f32.mrb[0].mxu0
  %v6554 = vadd.f32 0.0, %v6553
  %v6555 = vpop.f32.mrb[0].mxu0
  %v6556 = vpop.f32.mrb[0].mxu0
  %v6557 = vpop.f32.mrb[0].mxu0
  %6558 = vdwg.mxu0
  %v6559 = vmax.f32 %v6513, %v6554
  %s6560 = scalar_lea.vmem %s12, 3
  %v6561 = vld [vmem:[%s6560] sm:$0x1]
  %v6563 = vsel %vm6421, %v6561, 0
  %6565 = vmatprep.subr.bf16.mxu0 0
  %6566 = vmatpush1.bf16.msra.mxu0 %v6426
  %6567 = vmatprep.subr.bf16.mxu0 0
  %6568 = vmatpush1.bf16.msra.mxu0 0
  %6569 = vmatprep.subr.bf16.mxu0 0
  %6570 = vmatpush1.bf16.msra.mxu0 0
  %6571 = vmatprep.subr.bf16.mxu0 0
  %6572 = vmatpush1.bf16.msra.mxu0 0
  %6573 = vmatprep.subr.bf16.mxu0 0
  %6574 = vmatpush1.bf16.msra.mxu0 0
  %6575 = vmatprep.subr.bf16.mxu0 0
  %6576 = vmatpush1.bf16.msra.mxu0 0
  %6577 = vmatprep.subr.bf16.mxu0 0
  %6578 = vmatpush1.bf16.msra.mxu0 0
  %6579 = vmatprep.subr.bf16.mxu0 0
  %6580 = vmatpush1.bf16.msra.mxu0 0
  %6581 = vmatprep.subr.bf16.mxu0 0
  %6582 = vmatpush1.bf16.msra.mxu0 0
  %6583 = vmatprep.subr.bf16.mxu0 0
  %6584 = vmatpush1.bf16.msra.mxu0 0
  %6585 = vmatprep.subr.bf16.mxu0 0
  %6586 = vmatpush1.bf16.msra.mxu0 0
  %6587 = vmatprep.subr.bf16.mxu0 0
  %6588 = vmatpush1.bf16.msra.mxu0 0
  %6589 = vmatprep.subr.bf16.mxu0 0
  %6590 = vmatpush1.bf16.msra.mxu0 0
  %6591 = vmatprep.subr.bf16.mxu0 0
  %6592 = vmatpush1.bf16.msra.mxu0 0
  %6593 = vmatprep.subr.bf16.mxu0 0
  %6594 = vmatpush1.bf16.msra.mxu0 0
  %6595 = vmatprep.subr.bf16.mxu0 0
  %6596 = vmatpush1.bf16.msra.mxu0 0
  %6597 = vmatprep.mubr.bf16.mxu0 0
  %6598 = vmatmul.mubr.bf16.gmra.mrb[0].mxu0 %v6563
  %v6599 = vpop.f32.mrb[0].mxu0
  %v6600 = vadd.f32 0.0, %v6599
  %v6601 = vpop.f32.mrb[0].mxu0
  %v6602 = vpop.f32.mrb[0].mxu0
  %v6603 = vpop.f32.mrb[0].mxu0
  %6604 = vdwg.mxu0
  %v6605 = vmax.f32 %v6559, %v6600
  %v6606 = vpack.c.bf16 %v6605, %v6605
  %v6607 = vld [vmem:[%s13] sm:$0xf]
  %v6608 = vld [vmem:[%s13 + $0x4] sm:$0xf]
  %v6609 = vld [vmem:[%s13 + $0x8] sm:$0xf]
  %v6610 = vld [vmem:[%s13 + $0xc] sm:$0xf]
  %v6611 = vld [vmem:[%s13 + $0x10] sm:$0xf]
  %v6612 = vld [vmem:[%s13 + $0x14] sm:$0xf]
  %v6613 = vld [vmem:[%s13 + $0x18] sm:$0xf]
  %v6614 = vld [vmem:[%s13 + $0x1c] sm:$0xf]
  %v6615 = vld [vmem:[%s14] sm:$0x1]
  %v6617 = vlaneseq
  %v6618 = vshrl.u32 %v6617, 7
  %v6619 = vsub.s32 0, %v6618
  %v6620 = vrot.slane %v6615, %v6619
  %v6630 = vunpack.c.l.b16 %v6607
  %v6631 = vunpack.c.l.b16 %v6608
  %v6632 = vunpack.c.l.b16 %v6609
  %v6633 = vunpack.c.l.b16 %v6610
  %v6634 = vunpack.c.l.b16 %v6611
  %v6635 = vunpack.c.l.b16 %v6612
  %v6636 = vunpack.c.l.b16 %v6613
  %v6637 = vunpack.c.l.b16 %v6614
  %v6638 = vpack.c.b16 %v6631, %v6630
  %v6639 = vpack.c.b16 %v6633, %v6632
  %v6640 = vpack.c.b16 %v6635, %v6634
  %v6641 = vpack.c.b16 %v6637, %v6636
  %v6647 = vsel %vm6378, %v6606, 0
  %6649 = vmatprep.subr.bf16.mxu0 0
  %6650 = vmatpush1.bf16.msra.mxu0 %v6638
  %6651 = vmatprep.subr.bf16.mxu0 0
  %6652 = vmatpush1.bf16.msra.mxu0 %v6639
  %6653 = vmatprep.subr.bf16.mxu0 0
  %6654 = vmatpush1.bf16.msra.mxu0 %v6640
  %6655 = vmatprep.subr.bf16.mxu0 0
  %6656 = vmatpush1.bf16.msra.mxu0 %v6641
  %6657 = vmatprep.subr.bf16.mxu0 0
  %6658 = vmatpush1.bf16.msra.mxu0 0
  %6659 = vmatprep.subr.bf16.mxu0 0
  %6660 = vmatpush1.bf16.msra.mxu0 0
  %6661 = vmatprep.subr.bf16.mxu0 0
  %6662 = vmatpush1.bf16.msra.mxu0 0
  %6663 = vmatprep.subr.bf16.mxu0 0
  %6664 = vmatpush1.bf16.msra.mxu0 0
  %6665 = vmatprep.subr.bf16.mxu0 0
  %6666 = vmatpush1.bf16.msra.mxu0 0
  %6667 = vmatprep.subr.bf16.mxu0 0
  %6668 = vmatpush1.bf16.msra.mxu0 0
  %6669 = vmatprep.subr.bf16.mxu0 0
  %6670 = vmatpush1.bf16.msra.mxu0 0
  %6671 = vmatprep.subr.bf16.mxu0 0
  %6672 = vmatpush1.bf16.msra.mxu0 0
  %6673 = vmatprep.subr.bf16.mxu0 0
  %6674 = vmatpush1.bf16.msra.mxu0 0
  %6675 = vmatprep.subr.bf16.mxu0 0
  %6676 = vmatpush1.bf16.msra.mxu0 0
  %6677 = vmatprep.subr.bf16.mxu0 0
  %6678 = vmatpush1.bf16.msra.mxu0 0
  %6679 = vmatprep.subr.bf16.mxu0 0
  %6680 = vmatpush1.bf16.msra.mxu0 0
  %6681 = vmatprep.mubr.bf16.mxu0 0
  %6682 = vmatmul.mubr.bf16.gmra.mrb[0].mxu0 %v6647
  %v6683 = vpop.f32.mrb[0].mxu0
  %v6684 = vadd.f32 %v6620, %v6683
  %v6685 = vpop.f32.mrb[0].mxu0
  %v6686 = vpop.f32.mrb[0].mxu0
  %v6687 = vpop.f32.mrb[0].mxu0
  %6688 = vdwg.mxu0
  %v6689 = vmax.f32 %v6684, 0.0
  %v6690 = vld [vmem:[%s15] sm:$0x1]
  %v6692 = vlaneseq
  %v6693 = vshrl.u32 %v6692, 7
  %v6694 = vsub.s32 0, %v6693
  %v6695 = vrot.slane %v6690, %v6694
  %v6697 = vmul.f32 %v6689, %v6695
  %vm6698 = vcmask 58368
  %v6699 = vsel %vm6698, %v6697, 0.0
  %6700 = vadd.xlane.f32.xlu0 %v6699
  %v6701 = vpop.xlane.xlu0 %6700
  %v6702 = vld [vmem:[#allocation2] sm:$0x1]
  %v6704 = vlaneseq
  %v6705 = vshrl.u32 %v6704, 7
  %v6706 = vsub.s32 0, %v6705
  %v6707 = vrot.slane %v6702, %v6706
  %v6709 = vadd.f32 %v6701, %v6707
  %v6710 = vxor.u32 %v6709, 2147483648
  %v6711 = vmul.f32 %v6710, 1.442695
  %v6712 = vpow.pop %v6711
  %v6713 = vadd.f32 %v6712, 1.0
  %v6714 = vrcp.pop %v6713
  %v6715 = vmul.f32 1.0, %v6714
  %vm6716 = vcmask 1024
  %6717 = vst.msk [vmem:[%s17] sm:$0x3] %vm6716, %v6715
  // Predicated region
  $region70: #{relation_network_forward.1} parent=0 // pred_check
    _
  $region71: #{relation_network_forward.1} parent=0 // pred_check_branch
    %6719 = sbr.rel (0) target = $region73
  $region72: #{relation_network_forward.1} parent=0 // pred_region
    _
  $region73: #{relation_network_forward.1} parent=0 // pred_fallthru
    _
  // Predicated region
  $region74: #{relation_network_forward.1} parent=0 // pred_check
    _
  $region75: #{relation_network_forward.1} parent=0 // pred_check_branch
    %6721 = sbr.rel (0) target = $region77
  $region76: #{relation_network_forward.1} parent=0 // pred_region
    _
  $region77: #{relation_network_forward.1} parent=0 // pred_fallthru
    _

</llo_original>
